<compile_context>
chip_gen: v7x
topology: tpu7x:2x2x1
jax: 0.10.0
libtpu: 0.0.40
codegen_flags: <defaults>
</compile_context>

<pallas_src>
import functools
import math

import numpy as np

import jax
import jax.numpy as jnp
from jax import lax
from jax.experimental import pallas as pl
from jax.experimental.pallas import tpu as pltpu


# ----------------------------- in-kernel pieces ------------------------------

def _shifted_rows(A, off):
    """rows[h] = A[h + off] (zero where out of range).

    Implemented as a sublane rotation (XLU) + row mask (VPU) instead of the
    previous (H, H) shift matmul on the MXU.
    """
    if off == 0:
        return A
    H = A.shape[0]
    rolled = pltpu.roll(A, (-off) % H, 0)          # rolled[h] = A[(h+off) % H]
    row = lax.broadcasted_iota(jnp.int32, (H, 1), 0)
    if off > 0:
        mask = row < (H - off)
    else:
        mask = row >= (-off)
    return jnp.where(mask, rolled, 0.0)


def _conv_layer(A, w_ref, row_off, k_rows, bias_ref, b_off, n_out,
                *, relu=False, res=None):
    """One same-padded conv on a lane-dense activation slab.

    A:        (H, L) f32 value, lane layout col = w*Cin + ci.
    w_ref:    packed bf16 weight buffer; rows [row_off, row_off + k_rows) hold
              the banded matrix of this conv with the KH kernel-row taps
              stacked vertically (K = KH*L); KW taps, the Cin contraction and
              the W zero padding are folded into the K dimension.
    bias_ref: (1, total) f32 packed bias row; this conv's slice starts at b_off.
    """
    H, L = A.shape
    KH = k_rows // L
    p = KH // 2
    parts = [_shifted_rows(A, dh - p).astype(jnp.bfloat16) for dh in range(KH)]
    lhs = parts[0] if KH == 1 else jnp.concatenate(parts, axis=1)  # (H, KH*L)
    rhs = w_ref[row_off:row_off + k_rows, :]                       # (KH*L, n_out)
    acc = jnp.dot(lhs, rhs, preferred_element_type=jnp.float32)
    acc = acc + bias_ref[:, b_off:b_off + n_out]
    if relu:
        acc = jnp.maximum(acc, 0.0)
    if res is not None:
        acc = acc + res
    return acc


def _mdsr_kernel(*refs, schedule, n_pre, n_body, up_rs, n_groups):
    """Whole MDSR forward for one image.

    refs = [x, w_trunk, bias, R_0..R_{S-1}, pf_hbm_1..pf_hbm_{G-1}]
           + [out] + [pf_vmem_1..pf_vmem_{G-1}, dma_sems]
    """
    S = len(up_rs)
    G = n_groups
    n_in = 3 + S + (G - 1)

    x_ref, w0_ref, bias_ref = refs[0], refs[1], refs[2]
    R_refs = refs[3:3 + S]
    pf_hbm = refs[3 + S:n_in]
    o_ref = refs[n_in]
    pf_vmem = refs[n_in + 1:n_in + 1 + (G - 1)]
    sem = refs[n_in + G] if G > 1 else None

    # Kick off the DMA of the late-stage (upsample / tail) banded weights so
    # their HBM traffic overlaps the head / pre_process / body compute.
    copies = []
    for i in range(G - 1):
        cp = pltpu.make_async_copy(pf_hbm[i], pf_vmem[i], sem.at[i])
        cp.start()
        copies.append(cp)

    wrefs = (w0_ref,) + tuple(pf_vmem)
    counter = [0]

    def conv(A, relu=False, res=None):
        g, ro, k_rows, b_off, n_out, first_use = schedule[counter[0]]
        counter[0] += 1
        if first_use and g > 0:            # block only right before first use
            copies[g - 1].wait()
        return _conv_layer(A, wrefs[g], ro, k_rows, bias_ref, b_off, n_out,
                           relu=relu, res=res)

    def resblock(A):                       # conv -> ReLU -> conv, + skip
        h = conv(A, relu=True)
        return conv(h, res=A)

    x = x_ref[...].astype(jnp.float32)     # (H, W*Cin_pad)
    x = conv(x)                            # head: n_colors -> n_feats
    for _ in range(n_pre):                 # pre_process: k=5 ResBlocks
        x = resblock(x)

    r = x
    for _ in range(n_body):                # body: k=3 ResBlocks
        r = resblock(r)
    r = conv(r, res=x)                     # body tail conv, global skip fused

    for si, rr in enumerate(up_rs):        # upsample conv + fused PixelShuffle
        slabs = [conv(r) for _ in range(rr)]          # per output row phase
        ocat = jnp.concatenate(slabs, axis=0).astype(jnp.bfloat16)
        r = jnp.dot(R_refs[si][...], ocat,            # row interleave (tiny)
                    preferred_element_type=jnp.float32)

    y = conv(r)                            # tail: n_feats -> n_colors (padded)
    o_ref[...] = y.astype(o_ref.dtype)


# -------------------- host-side weight pre-expansion (numpy) -----------------

def _band_conv_matrices(w, b, Win):
    """w: (KH,KW,Cin,Cout) -> stacked banded (KH*Win*Cin, Win*Cout) + flat bias."""
    KH, KW, Cin, Cout = w.shape
    p = KW // 2
    B = np.zeros((KH, Win * Cin, Win * Cout), np.float32)
    for wo in range(Win):
        for dw in range(KW):
            wi = wo + dw - p
            if 0 <= wi < Win:                      # W zero-padding is implicit
                B[:, wi * Cin:(wi + 1) * Cin,
                  wo * Cout:(wo + 1) * Cout] = w[:, dw]
    bias = np.tile(np.asarray(b, np.float32), Win)
    return B.reshape(KH * Win * Cin, Win * Cout), bias


def _band_upsample_matrices(w, b, Win, r):
    """Banded matrices for conv(n_feats -> C*r*r) with PixelShuffle(r) fused
    into the output column order.  For each output row-phase i returns
    (B_i, bias_i) s.t. O_i[h, (w*r+j)*C + c] = conv_out[h, w, c*r*r + i*r + j]
    (torch.nn.PixelShuffle channel ordering)."""
    KH, KW, Cin, Cout_full = w.shape
    C = Cout_full // (r * r)
    p = KW // 2
    out = []
    for i in range(r):
        B = np.zeros((KH, Win * Cin, Win * r * C), np.float32)
        bias = np.zeros((Win * r * C,), np.float32)
        for wo in range(Win):
            for j in range(r):
                for c in range(C):
                    col = (wo * r + j) * C + c
                    co = c * r * r + i * r + j
                    bias[col] = b[co]
                    for dw in range(KW):
                        wi = wo + dw - p
                        if 0 <= wi < Win:
                            B[:, wi * Cin:(wi + 1) * Cin, col] = w[:, dw, :, co]
        out.append((B.reshape(KH * Win * Cin, Win * r * C), bias))
    return out


def _row_interleave_matrix(H, r):
    """Permutation matmul that interleaves the r row-phase slabs of a shuffle."""
    R = np.zeros((H * r, H * r), np.float32)
    for h in range(H):
        for i in range(r):
            R[h * r + i, i * H + h] = 1.0
    return R


def _expand_weights(params, scale_idx, H, W):
    w_head = np.asarray(params["head"][0], np.float32)
    b_head = np.asarray(params["head"][1], np.float32)
    n_colors = int(params["tail"][0].shape[-1])
    cin = int(w_head.shape[2])

    # Pad input channels so the input slab lane width (W*Cin) is a multiple
    # of 128 -> 128-aligned lane concatenation and dense loads in the kernel.
    cin_pad = cin
    while (W * cin_pad) % 128 != 0 and cin_pad < cin + 32:
        cin_pad += 1
    if (W * cin_pad) % 128 != 0:
        cin_pad = cin
    if cin_pad > cin:
        w_head = np.concatenate(
            [w_head, np.zeros(w_head.shape[:2] + (cin_pad - cin,
                                                   w_head.shape[3]),
                              np.float32)], axis=2)

    convs = []          # (B_stacked (K, n_out) f32, bias (n_out,) f32, Hin)

    def add(w, b, Win, Hin):
        B, bias = _band_conv_matrices(np.asarray(w, np.float32),
                                      np.asarray(b, np.float32), Win)
        convs.append((B, bias, Hin))

    add(w_head, b_head, W, H)
    for (w1, b1, w2, b2) in params["pre_process"][scale_idx]:
        add(w1, b1, W, H)
        add(w2, b2, W, H)
    for (w1, b1, w2, b2) in params["body_blocks"]:
        add(w1, b1, W, H)
        add(w2, b2, W, H)
    add(*params["body_tail"], W, H)

    cur_H, cur_W = H, W
    R_mats, up_rs = [], []
    for (w, b, r) in params["upsample"][scale_idx]:
        for (B, bias) in _band_upsample_matrices(np.asarray(w, np.float32),
                                                 np.asarray(b, np.float32),
                                                 cur_W, r):
            convs.append((B, bias, cur_H))
        R_mats.append(_row_interleave_matrix(cur_H, r))
        up_rs.append(r)
        cur_H *= r
        cur_W *= r

    # Tail conv: pad Cout so the output slab lane width is a multiple of 128
    # (unmasked stores); the padded channels are sliced off in the wrapper.
    wt = np.asarray(params["tail"][0], np.float32)
    bt = np.asarray(params["tail"][1], np.float32)
    cout_pad = n_colors
    while (cur_W * cout_pad) % 128 != 0 and cout_pad < n_colors + 32:
        cout_pad += 1
    if (cur_W * cout_pad) % 128 != 0:
        cout_pad = n_colors
    if cout_pad > n_colors:
        pad = cout_pad - n_colors
        wt = np.concatenate([wt, np.zeros(wt.shape[:3] + (pad,), np.float32)],
                            axis=-1)
        bt = np.concatenate([bt, np.zeros((pad,), np.float32)])
    add(wt, bt, cur_W, cur_H)

    # Group the banded matrices by output lane width; group 0 (the trunk
    # width, containing head/pre/body) stays VMEM-resident via BlockSpec,
    # all other groups (upsample / tail) are prefetched by manual DMA.
    group_of_width = {}
    group_parts, group_rows = [], []
    schedule, bias_parts, mm = [], [], []
    seen = set()
    b_off = 0
    for (B, bias, Hin) in convs:
        wdt = int(B.shape[1])
        if wdt not in group_of_width:
            group_of_width[wdt] = len(group_parts)
            group_parts.append([])
            group_rows.append(0)
        g = group_of_width[wdt]
        first_use = g not in seen
        seen.add(g)
        schedule.append((g, group_rows[g], int(B.shape[0]), b_off, wdt,
                         bool(first_use)))
        group_parts[g].append(B)
        group_rows[g] += int(B.shape[0])
        bias_parts.append(bias)
        b_off += wdt
        mm.append((Hin, int(B.shape[0]), wdt))

    groups = [np.concatenate(p, axis=0) for p in group_parts]
    bias_row = np.concatenate(bias_parts)[None, :].astype(np.float32)
    return dict(groups=groups, bias_row=bias_row, R_mats=R_mats,
                schedule=tuple(schedule), up_rs=tuple(up_rs),
                out_H=cur_H, out_W=cur_W, cout_pad=cout_pad,
                cin_pad=cin_pad, mm=mm)


# ------------------------------ forward wrapper -------------------------------

def mdsr_forward(params, x_nchw, scale_idx=0):
    N, Cc, H, W = x_nchw.shape
    assert Cc == int(params["head"][0].shape[2])
    n_colors = int(params["tail"][0].shape[-1])

    exp = _expand_weights(params, scale_idx, H, W)
    groups, bias_row = exp["groups"], exp["bias_row"]
    R_mats, schedule = exp["R_mats"], exp["schedule"]
    up_rs = exp["up_rs"]
    out_H, out_W = exp["out_H"], exp["out_W"]
    cout_pad, cin_pad = exp["cout_pad"], exp["cin_pad"]
    G, S = len(groups), len(up_rs)

    # NCHW -> lane-dense (H, W*Cin_pad) slabs (tiny XLA ops on the input only).
    x_nhwc = jnp.transpose(x_nchw, (0, 2, 3, 1))
    if cin_pad > Cc:
        x_nhwc = jnp.pad(x_nhwc, ((0, 0), (0, 0), (0, 0), (0, cin_pad - Cc)))
    x_rows = x_nhwc.reshape(N, H, W * cin_pad)

    args = [x_rows,
            jnp.asarray(groups[0], jnp.bfloat16),     # resident trunk weights
            jnp.asarray(bias_row, jnp.float32)]       # packed bias row (f32)
    args += [jnp.asarray(R, jnp.bfloat16) for R in R_mats]
    args += [jnp.asarray(g, jnp.bfloat16) for g in groups[1:]]  # prefetched

    def full_spec(shape):
        zeros = (0,) * len(shape)
        return pl.BlockSpec(shape, lambda n, _z=zeros: _z)

    in_specs = [pl.BlockSpec((None, H, W * cin_pad), lambda n: (n, 0, 0)),
                full_spec(groups[0].shape),
                full_spec(bias_row.shape)]
    in_specs += [full_spec(R.shape) for R in R_mats]
    in_specs += [pl.BlockSpec(memory_space=pl.ANY) for _ in groups[1:]]

    out_lanes = out_W * cout_pad
    out_specs = pl.BlockSpec((None, out_H, out_lanes), lambda n: (n, 0, 0))

    scratch_shapes = [pltpu.VMEM(g.shape, jnp.bfloat16) for g in groups[1:]]
    if G > 1:
        scratch_shapes.append(pltpu.SemaphoreType.DMA((G - 1,)))

    conv_flops = sum(2 * h * k * w for (h, k, w) in exp["mm"])
    weight_bytes = (sum(int(g.size) for g in groups) * 2
                    + int(bias_row.size) * 4
                    + sum(int(R.size) for R in R_mats) * 2)
    bytes_accessed = int(weight_bytes
                         + N * 4 * (H * W * cin_pad + out_H * out_lanes))

    kernel = functools.partial(
        _mdsr_kernel,
        schedule=schedule,
        n_pre=len(params["pre_process"][scale_idx]),
        n_body=len(params["body_blocks"]),
        up_rs=up_rs,
        n_groups=G)

    y_rows = pl.pallas_call(
        kernel,
        out_shape=jax.ShapeDtypeStruct((N, out_H, out_lanes), x_nchw.dtype),
        grid=(N,),
        in_specs=in_specs,
        out_specs=out_specs,
        scratch_shapes=scratch_shapes,
        compiler_params=pltpu.CompilerParams(
            dimension_semantics=("parallel",),     # 1 image per core on v7x
            vmem_limit_bytes=32 * 1024 * 1024),
        cost_estimate=pl.CostEstimate(flops=int(N * conv_flops),
                                      transcendentals=0,
                                      bytes_accessed=bytes_accessed),
    )(*args)

    y = y_rows.reshape(N, out_H, out_W, cout_pad)[..., :n_colors]
    return jnp.transpose(y, (0, 3, 1, 2))          # back to NCHW


# ------------------------------ init & reference ------------------------------

def init_params(key, n_resblocks, n_feats, n_colors, scale):
    keys = iter(jax.random.split(key, 512))

    def conv_p(cin, cout, k):
        w = np.asarray(jax.random.normal(next(keys), (k, k, cin, cout),
                                         jnp.float32))
        w = (w * (1.0 / math.sqrt(k * k * cin))).astype(np.float32)
        b = (np.asarray(jax.random.normal(next(keys), (cout,), jnp.float32))
             * 0.01).astype(np.float32)
        return w, b

    params = {"head": conv_p(n_colors, n_feats, 3)}

    params["pre_process"] = []
    for _ in scale:
        blocks = []
        for _ in range(2):                              # 2 ResBlocks, kernel=5
            w1, b1 = conv_p(n_feats, n_feats, 5)
            w2, b2 = conv_p(n_feats, n_feats, 5)
            blocks.append((w1, b1, w2, b2))
        params["pre_process"].append(blocks)

    params["body_blocks"] = []
    for _ in range(n_resblocks):
        w1, b1 = conv_p(n_feats, n_feats, 3)
        w2, b2 = conv_p(n_feats, n_feats, 3)
        params["body_blocks"].append((w1, b1, w2, b2))
    params["body_tail"] = conv_p(n_feats, n_feats, 3)

    params["upsample"] = []
    for s in scale:
        stages = []
        if (s & (s - 1)) == 0:                          # power of 2
            for _ in range(int(math.log2(s))):
                w, b = conv_p(n_feats, 4 * n_feats, 3)
                stages.append((w, b, 2))
        elif s == 3:
            w, b = conv_p(n_feats, 9 * n_feats, 3)
            stages.append((w, b, 3))
        else:
            raise NotImplementedError("Upsampler only supports 2^n and 3")
        params["upsample"].append(stages)

    params["tail"] = conv_p(n_feats, n_colors, 3)
    return params


def _conv_ref(x, w, b):
    y = jax.lax.conv_general_dilated(
        x, jnp.asarray(w), window_strides=(1, 1), padding="SAME",
        dimension_numbers=("NHWC", "HWIO", "NHWC"),
        precision=jax.lax.Precision.HIGHEST)
    return y + jnp.asarray(b)


def _pixel_shuffle_ref(x, r):
    N, H, W, C = x.shape
    Co = C // (r * r)
    x = x.reshape(N, H, W, Co, r, r)
    x = x.transpose(0, 1, 4, 2, 5, 3)
    return x.reshape(N, H * r, W * r, Co)


def mdsr_reference(params, x_nchw, scale_idx=0):
    x = jnp.transpose(x_nchw, (0, 2, 3, 1))
    x = _conv_ref(x, *params["head"])
    for (w1, b1, w2, b2) in params["pre_process"][scale_idx]:
        h = jax.nn.relu(_conv_ref(x, w1, b1))
        x = _conv_ref(h, w2, b2) + x
    res = x
    for (w1, b1, w2, b2) in params["body_blocks"]:
        h = jax.nn.relu(_conv_ref(res, w1, b1))
        res = _conv_ref(h, w2, b2) + res
    res = _conv_ref(res, *params["body_tail"]) + x
    y = res
    for (w, b, r) in params["upsample"][scale_idx]:
        y = _pixel_shuffle_ref(_conv_ref(y, w, b), r)
    y = _conv_ref(y, *params["tail"])
    return jnp.transpose(y, (0, 3, 1, 2))


# ------------------------------------ main ------------------------------------

if __name__ == "__main__":
    # Small, module-consistent config: n_resblocks=2, n_feats=8, n_colors=3,
    # scale=[4] (two x2 upsample stages).
    n_resblocks, n_feats, n_colors, scale = 2, 8, 3, [4]
    key = jax.random.PRNGKey(0)
    kp, kx = jax.random.split(key)

    params = init_params(kp, n_resblocks, n_feats, n_colors, scale)
    x = jax.random.normal(kx, (2, n_colors, 16, 16), jnp.float32)   # NCHW

    y = mdsr_forward(params, x, scale_idx=0)
    y = jax.block_until_ready(y)

    assert y.shape == (2, n_colors, 16 * scale[0], 16 * scale[0]), y.shape
    assert bool(jnp.all(jnp.isfinite(y)))

    # Pure-JAX f32 reference check.  Tolerance is loose enough to absorb the
    # bf16 matmul operands (accumulation is f32), tight enough to catch any
    # layout / banding / shuffle indexing error.
    y_ref = jax.block_until_ready(mdsr_reference(params, x, scale_idx=0))
    max_err = float(jnp.max(jnp.abs(y - y_ref)))
    tol = 5e-2 * float(jnp.max(jnp.abs(y_ref))) + 1e-3
    assert max_err < tol, (max_err, tol)

    print("KERNEL_OK")
</pallas_src>

<mosaic_0001>
module attributes {stable_mosaic.version = 11 : i64} {
  func.func @_mdsr_kernel(%arg0: i32, %arg1: memref<1x16x128xf32, #tpu.memory_space<vmem>>, %arg2: memref<4864x128xbf16, #tpu.memory_space<vmem>>, %arg3: memref<1x3072xf32, #tpu.memory_space<vmem>>, %arg4: memref<32x32xbf16, #tpu.memory_space<vmem>>, %arg5: memref<64x64xbf16, #tpu.memory_space<vmem>>, %arg6: memref<2304x256xbf16, #tpu.memory_space<any>>, %arg7: memref<1536x512xbf16, #tpu.memory_space<any>>, %arg8: memref<1x64x256xf32, #tpu.memory_space<vmem>>, %arg9: memref<2304x256xbf16, #tpu.memory_space<vmem>>, %arg10: memref<1536x512xbf16, #tpu.memory_space<vmem>>, %arg11: memref<2x!tpu.dma_semaphore, #tpu.memory_space<semaphore_mem>>) attributes {dimension_semantics = [#tpu.dimension_semantics<parallel>], iteration_bounds = array<i64: 2>, scalar_prefetch = 0 : i64, scratch_operands = 3 : i64, tpu.core_type = #tpu.core_type<tc>, window_params = [{transform_indices = @transform_0, window_bounds = array<i64: 1, 16, 128>}, {pipeline_mode = #tpu.pipeline_mode<synchronous>, transform_indices = @transform_1, window_bounds = array<i64: 4864, 128>}, {pipeline_mode = #tpu.pipeline_mode<synchronous>, transform_indices = @transform_2, window_bounds = array<i64: 1, 3072>}, {pipeline_mode = #tpu.pipeline_mode<synchronous>, transform_indices = @transform_3, window_bounds = array<i64: 32, 32>}, {pipeline_mode = #tpu.pipeline_mode<synchronous>, transform_indices = @transform_4, window_bounds = array<i64: 64, 64>}, {}, {}, {transform_indices = @transform_7, window_bounds = array<i64: 1, 64, 256>}]} {
    %c0_i32 = arith.constant 0 : i32
    %0 = tpu.memref_slice %arg11[%c0_i32] : memref<2x!tpu.dma_semaphore, #tpu.memory_space<semaphore_mem>> -> memref<1x!tpu.dma_semaphore, #tpu.memory_space<semaphore_mem>>
    %1 = tpu.memref_squeeze %0 : memref<1x!tpu.dma_semaphore, #tpu.memory_space<semaphore_mem>> -> memref<!tpu.dma_semaphore, #tpu.memory_space<semaphore_mem>>
    tpu.enqueue_dma source(%arg6 : memref<2304x256xbf16, #tpu.memory_space<any>>) target(%arg9 : memref<2304x256xbf16, #tpu.memory_space<vmem>>) target_semaphore(%1 : memref<!tpu.dma_semaphore, #tpu.memory_space<semaphore_mem>>)
    %c1_i32 = arith.constant 1 : i32
    %2 = tpu.memref_slice %arg11[%c1_i32] : memref<2x!tpu.dma_semaphore, #tpu.memory_space<semaphore_mem>> -> memref<1x!tpu.dma_semaphore, #tpu.memory_space<semaphore_mem>>
    %3 = tpu.memref_squeeze %2 : memref<1x!tpu.dma_semaphore, #tpu.memory_space<semaphore_mem>> -> memref<!tpu.dma_semaphore, #tpu.memory_space<semaphore_mem>>
    tpu.enqueue_dma source(%arg7 : memref<1536x512xbf16, #tpu.memory_space<any>>) target(%arg10 : memref<1536x512xbf16, #tpu.memory_space<vmem>>) target_semaphore(%3 : memref<!tpu.dma_semaphore, #tpu.memory_space<semaphore_mem>>)
    %c0 = arith.constant 0 : index
    %c0_0 = arith.constant 0 : index
    %c0_1 = arith.constant 0 : index
    %4 = vector.load %arg1[%c0, %c0_0, %c0_1] : memref<1x16x128xf32, #tpu.memory_space<vmem>>, vector<1x16x128xf32>
    %5 = vector.shape_cast %4 : vector<1x16x128xf32> to vector<16x128xf32>
    %c1_i32_2 = arith.constant 1 : i32
    %6 = tpu.dynamic_rotate %5 by %c1_i32_2 dim 0 : vector<16x128xf32>, i32 -> vector<16x128xf32>
    %7 = tpu.iota {dimensions = array<i32: 0>} : vector<16x1xi32>
    %c1_i32_3 = arith.constant 1 : i32
    %8 = vector.broadcast %c1_i32_3 : i32 to vector<16x1xi32>
    %9 = arith.cmpi sge, %7, %8 : vector<16x1xi32>
    %cst = arith.constant 0.000000e+00 : f32
    %10 = vector.shape_cast %9 : vector<16x1xi1> to vector<16x1xi1>
    %11 = vector.broadcast %10 : vector<16x1xi1> to vector<16x128xi1>
    %12 = vector.broadcast %cst : f32 to vector<16x128xf32>
    %13 = arith.select %11, %6, %12 : vector<16x128xi1>, vector<16x128xf32>
    %14 = arith.truncf %13 : vector<16x128xf32> to vector<16x128xbf16>
    %15 = arith.truncf %5 : vector<16x128xf32> to vector<16x128xbf16>
    %c15_i32 = arith.constant 15 : i32
    %16 = tpu.dynamic_rotate %5 by %c15_i32 dim 0 : vector<16x128xf32>, i32 -> vector<16x128xf32>
    %17 = tpu.iota {dimensions = array<i32: 0>} : vector<16x1xi32>
    %c15_i32_4 = arith.constant 15 : i32
    %18 = vector.broadcast %c15_i32_4 : i32 to vector<16x1xi32>
    %19 = arith.cmpi slt, %17, %18 : vector<16x1xi32>
    %cst_5 = arith.constant 0.000000e+00 : f32
    %20 = vector.shape_cast %19 : vector<16x1xi1> to vector<16x1xi1>
    %21 = vector.broadcast %20 : vector<16x1xi1> to vector<16x128xi1>
    %22 = vector.broadcast %cst_5 : f32 to vector<16x128xf32>
    %23 = arith.select %21, %16, %22 : vector<16x128xi1>, vector<16x128xf32>
    %24 = arith.truncf %23 : vector<16x128xf32> to vector<16x128xbf16>
    %25 = tpu.concatenate %14, %15, %24 in 1 : vector<16x128xbf16>, vector<16x128xbf16>, vector<16x128xbf16> -> vector<16x384xbf16>
    %c0_6 = arith.constant 0 : index
    %c0_7 = arith.constant 0 : index
    %26 = vector.load %arg2[%c0_6, %c0_7] : memref<4864x128xbf16, #tpu.memory_space<vmem>>, vector<384x128xbf16>
    %cst_8 = arith.constant dense<0.000000e+00> : vector<16x128xf32>
    %27 = tpu.matmul %25, %26, %cst_8 {dimension_numbers = #tpu.dot_dimension_numbers<[1], [0], [0], [1], [0, 0, 1, 1], [], []>} : vector<16x384xbf16>, vector<384x128xbf16>, vector<16x128xf32> -> vector<16x128xf32>
    %c0_9 = arith.constant 0 : index
    %c0_10 = arith.constant 0 : index
    %28 = vector.load %arg3[%c0_9, %c0_10] : memref<1x3072xf32, #tpu.memory_space<vmem>>, vector<1x128xf32>
    %29 = vector.broadcast %28 : vector<1x128xf32> to vector<16x128xf32>
    %30 = arith.addf %27, %29 : vector<16x128xf32>
    %c2_i32 = arith.constant 2 : i32
    %31 = tpu.dynamic_rotate %30 by %c2_i32 dim 0 : vector<16x128xf32>, i32 -> vector<16x128xf32>
    %32 = tpu.iota {dimensions = array<i32: 0>} : vector<16x1xi32>
    %c2_i32_11 = arith.constant 2 : i32
    %33 = vector.broadcast %c2_i32_11 : i32 to vector<16x1xi32>
    %34 = arith.cmpi sge, %32, %33 : vector<16x1xi32>
    %cst_12 = arith.constant 0.000000e+00 : f32
    %35 = vector.shape_cast %34 : vector<16x1xi1> to vector<16x1xi1>
    %36 = vector.broadcast %35 : vector<16x1xi1> to vector<16x128xi1>
    %37 = vector.broadcast %cst_12 : f32 to vector<16x128xf32>
    %38 = arith.select %36, %31, %37 : vector<16x128xi1>, vector<16x128xf32>
    %39 = arith.truncf %38 : vector<16x128xf32> to vector<16x128xbf16>
    %c1_i32_13 = arith.constant 1 : i32
    %40 = tpu.dynamic_rotate %30 by %c1_i32_13 dim 0 : vector<16x128xf32>, i32 -> vector<16x128xf32>
    %41 = tpu.iota {dimensions = array<i32: 0>} : vector<16x1xi32>
    %c1_i32_14 = arith.constant 1 : i32
    %42 = vector.broadcast %c1_i32_14 : i32 to vector<16x1xi32>
    %43 = arith.cmpi sge, %41, %42 : vector<16x1xi32>
    %cst_15 = arith.constant 0.000000e+00 : f32
    %44 = vector.shape_cast %43 : vector<16x1xi1> to vector<16x1xi1>
    %45 = vector.broadcast %44 : vector<16x1xi1> to vector<16x128xi1>
    %46 = vector.broadcast %cst_15 : f32 to vector<16x128xf32>
    %47 = arith.select %45, %40, %46 : vector<16x128xi1>, vector<16x128xf32>
    %48 = arith.truncf %47 : vector<16x128xf32> to vector<16x128xbf16>
    %49 = arith.truncf %30 : vector<16x128xf32> to vector<16x128xbf16>
    %c15_i32_16 = arith.constant 15 : i32
    %50 = tpu.dynamic_rotate %30 by %c15_i32_16 dim 0 : vector<16x128xf32>, i32 -> vector<16x128xf32>
    %51 = tpu.iota {dimensions = array<i32: 0>} : vector<16x1xi32>
    %c15_i32_17 = arith.constant 15 : i32
    %52 = vector.broadcast %c15_i32_17 : i32 to vector<16x1xi32>
    %53 = arith.cmpi slt, %51, %52 : vector<16x1xi32>
    %cst_18 = arith.constant 0.000000e+00 : f32
    %54 = vector.shape_cast %53 : vector<16x1xi1> to vector<16x1xi1>
    %55 = vector.broadcast %54 : vector<16x1xi1> to vector<16x128xi1>
    %56 = vector.broadcast %cst_18 : f32 to vector<16x128xf32>
    %57 = arith.select %55, %50, %56 : vector<16x128xi1>, vector<16x128xf32>
    %58 = arith.truncf %57 : vector<16x128xf32> to vector<16x128xbf16>
    %c14_i32 = arith.constant 14 : i32
    %59 = tpu.dynamic_rotate %30 by %c14_i32 dim 0 : vector<16x128xf32>, i32 -> vector<16x128xf32>
    %60 = tpu.iota {dimensions = array<i32: 0>} : vector<16x1xi32>
    %c14_i32_19 = arith.constant 14 : i32
    %61 = vector.broadcast %c14_i32_19 : i32 to vector<16x1xi32>
    %62 = arith.cmpi slt, %60, %61 : vector<16x1xi32>
    %cst_20 = arith.constant 0.000000e+00 : f32
    %63 = vector.shape_cast %62 : vector<16x1xi1> to vector<16x1xi1>
    %64 = vector.broadcast %63 : vector<16x1xi1> to vector<16x128xi1>
    %65 = vector.broadcast %cst_20 : f32 to vector<16x128xf32>
    %66 = arith.select %64, %59, %65 : vector<16x128xi1>, vector<16x128xf32>
    %67 = arith.truncf %66 : vector<16x128xf32> to vector<16x128xbf16>
    %68 = tpu.concatenate %39, %48, %49, %58, %67 in 1 : vector<16x128xbf16>, vector<16x128xbf16>, vector<16x128xbf16>, vector<16x128xbf16>, vector<16x128xbf16> -> vector<16x640xbf16>
    %c384 = arith.constant 384 : index
    %c0_21 = arith.constant 0 : index
    %69 = vector.load %arg2[%c384, %c0_21] : memref<4864x128xbf16, #tpu.memory_space<vmem>>, vector<640x128xbf16>
    %cst_22 = arith.constant dense<0.000000e+00> : vector<16x128xf32>
    %70 = tpu.matmul %68, %69, %cst_22 {dimension_numbers = #tpu.dot_dimension_numbers<[1], [0], [0], [1], [0, 0, 1, 1], [], []>} : vector<16x640xbf16>, vector<640x128xbf16>, vector<16x128xf32> -> vector<16x128xf32>
    %c0_23 = arith.constant 0 : index
    %c128 = arith.constant 128 : index
    %71 = vector.load %arg3[%c0_23, %c128] : memref<1x3072xf32, #tpu.memory_space<vmem>>, vector<1x128xf32>
    %72 = vector.broadcast %71 : vector<1x128xf32> to vector<16x128xf32>
    %73 = arith.addf %70, %72 : vector<16x128xf32>
    %cst_24 = arith.constant 0.000000e+00 : f32
    %74 = vector.broadcast %cst_24 : f32 to vector<16x128xf32>
    %75 = arith.maximumf %73, %74 : vector<16x128xf32>
    %c2_i32_25 = arith.constant 2 : i32
    %76 = tpu.dynamic_rotate %75 by %c2_i32_25 dim 0 : vector<16x128xf32>, i32 -> vector<16x128xf32>
    %77 = tpu.iota {dimensions = array<i32: 0>} : vector<16x1xi32>
    %c2_i32_26 = arith.constant 2 : i32
    %78 = vector.broadcast %c2_i32_26 : i32 to vector<16x1xi32>
    %79 = arith.cmpi sge, %77, %78 : vector<16x1xi32>
    %cst_27 = arith.constant 0.000000e+00 : f32
    %80 = vector.shape_cast %79 : vector<16x1xi1> to vector<16x1xi1>
    %81 = vector.broadcast %80 : vector<16x1xi1> to vector<16x128xi1>
    %82 = vector.broadcast %cst_27 : f32 to vector<16x128xf32>
    %83 = arith.select %81, %76, %82 : vector<16x128xi1>, vector<16x128xf32>
    %84 = arith.truncf %83 : vector<16x128xf32> to vector<16x128xbf16>
    %c1_i32_28 = arith.constant 1 : i32
    %85 = tpu.dynamic_rotate %75 by %c1_i32_28 dim 0 : vector<16x128xf32>, i32 -> vector<16x128xf32>
    %86 = tpu.iota {dimensions = array<i32: 0>} : vector<16x1xi32>
    %c1_i32_29 = arith.constant 1 : i32
    %87 = vector.broadcast %c1_i32_29 : i32 to vector<16x1xi32>
    %88 = arith.cmpi sge, %86, %87 : vector<16x1xi32>
    %cst_30 = arith.constant 0.000000e+00 : f32
    %89 = vector.shape_cast %88 : vector<16x1xi1> to vector<16x1xi1>
    %90 = vector.broadcast %89 : vector<16x1xi1> to vector<16x128xi1>
    %91 = vector.broadcast %cst_30 : f32 to vector<16x128xf32>
    %92 = arith.select %90, %85, %91 : vector<16x128xi1>, vector<16x128xf32>
    %93 = arith.truncf %92 : vector<16x128xf32> to vector<16x128xbf16>
    %94 = arith.truncf %75 : vector<16x128xf32> to vector<16x128xbf16>
    %c15_i32_31 = arith.constant 15 : i32
    %95 = tpu.dynamic_rotate %75 by %c15_i32_31 dim 0 : vector<16x128xf32>, i32 -> vector<16x128xf32>
    %96 = tpu.iota {dimensions = array<i32: 0>} : vector<16x1xi32>
    %c15_i32_32 = arith.constant 15 : i32
    %97 = vector.broadcast %c15_i32_32 : i32 to vector<16x1xi32>
    %98 = arith.cmpi slt, %96, %97 : vector<16x1xi32>
    %cst_33 = arith.constant 0.000000e+00 : f32
    %99 = vector.shape_cast %98 : vector<16x1xi1> to vector<16x1xi1>
    %100 = vector.broadcast %99 : vector<16x1xi1> to vector<16x128xi1>
    %101 = vector.broadcast %cst_33 : f32 to vector<16x128xf32>
    %102 = arith.select %100, %95, %101 : vector<16x128xi1>, vector<16x128xf32>
    %103 = arith.truncf %102 : vector<16x128xf32> to vector<16x128xbf16>
    %c14_i32_34 = arith.constant 14 : i32
    %104 = tpu.dynamic_rotate %75 by %c14_i32_34 dim 0 : vector<16x128xf32>, i32 -> vector<16x128xf32>
    %105 = tpu.iota {dimensions = array<i32: 0>} : vector<16x1xi32>
    %c14_i32_35 = arith.constant 14 : i32
    %106 = vector.broadcast %c14_i32_35 : i32 to vector<16x1xi32>
    %107 = arith.cmpi slt, %105, %106 : vector<16x1xi32>
    %cst_36 = arith.constant 0.000000e+00 : f32
    %108 = vector.shape_cast %107 : vector<16x1xi1> to vector<16x1xi1>
    %109 = vector.broadcast %108 : vector<16x1xi1> to vector<16x128xi1>
    %110 = vector.broadcast %cst_36 : f32 to vector<16x128xf32>
    %111 = arith.select %109, %104, %110 : vector<16x128xi1>, vector<16x128xf32>
    %112 = arith.truncf %111 : vector<16x128xf32> to vector<16x128xbf16>
    %113 = tpu.concatenate %84, %93, %94, %103, %112 in 1 : vector<16x128xbf16>, vector<16x128xbf16>, vector<16x128xbf16>, vector<16x128xbf16>, vector<16x128xbf16> -> vector<16x640xbf16>
    %c1024 = arith.constant 1024 : index
    %c0_37 = arith.constant 0 : index
    %114 = vector.load %arg2[%c1024, %c0_37] : memref<4864x128xbf16, #tpu.memory_space<vmem>>, vector<640x128xbf16>
    %cst_38 = arith.constant dense<0.000000e+00> : vector<16x128xf32>
    %115 = tpu.matmul %113, %114, %cst_38 {dimension_numbers = #tpu.dot_dimension_numbers<[1], [0], [0], [1], [0, 0, 1, 1], [], []>} : vector<16x640xbf16>, vector<640x128xbf16>, vector<16x128xf32> -> vector<16x128xf32>
    %c0_39 = arith.constant 0 : index
    %c256 = arith.constant 256 : index
    %116 = vector.load %arg3[%c0_39, %c256] : memref<1x3072xf32, #tpu.memory_space<vmem>>, vector<1x128xf32>
    %117 = vector.broadcast %116 : vector<1x128xf32> to vector<16x128xf32>
    %118 = arith.addf %115, %117 : vector<16x128xf32>
    %119 = arith.addf %118, %30 : vector<16x128xf32>
    %c2_i32_40 = arith.constant 2 : i32
    %120 = tpu.dynamic_rotate %119 by %c2_i32_40 dim 0 : vector<16x128xf32>, i32 -> vector<16x128xf32>
    %121 = tpu.iota {dimensions = array<i32: 0>} : vector<16x1xi32>
    %c2_i32_41 = arith.constant 2 : i32
    %122 = vector.broadcast %c2_i32_41 : i32 to vector<16x1xi32>
    %123 = arith.cmpi sge, %121, %122 : vector<16x1xi32>
    %cst_42 = arith.constant 0.000000e+00 : f32
    %124 = vector.shape_cast %123 : vector<16x1xi1> to vector<16x1xi1>
    %125 = vector.broadcast %124 : vector<16x1xi1> to vector<16x128xi1>
    %126 = vector.broadcast %cst_42 : f32 to vector<16x128xf32>
    %127 = arith.select %125, %120, %126 : vector<16x128xi1>, vector<16x128xf32>
    %128 = arith.truncf %127 : vector<16x128xf32> to vector<16x128xbf16>
    %c1_i32_43 = arith.constant 1 : i32
    %129 = tpu.dynamic_rotate %119 by %c1_i32_43 dim 0 : vector<16x128xf32>, i32 -> vector<16x128xf32>
    %130 = tpu.iota {dimensions = array<i32: 0>} : vector<16x1xi32>
    %c1_i32_44 = arith.constant 1 : i32
    %131 = vector.broadcast %c1_i32_44 : i32 to vector<16x1xi32>
    %132 = arith.cmpi sge, %130, %131 : vector<16x1xi32>
    %cst_45 = arith.constant 0.000000e+00 : f32
    %133 = vector.shape_cast %132 : vector<16x1xi1> to vector<16x1xi1>
    %134 = vector.broadcast %133 : vector<16x1xi1> to vector<16x128xi1>
    %135 = vector.broadcast %cst_45 : f32 to vector<16x128xf32>
    %136 = arith.select %134, %129, %135 : vector<16x128xi1>, vector<16x128xf32>
    %137 = arith.truncf %136 : vector<16x128xf32> to vector<16x128xbf16>
    %138 = arith.truncf %119 : vector<16x128xf32> to vector<16x128xbf16>
    %c15_i32_46 = arith.constant 15 : i32
    %139 = tpu.dynamic_rotate %119 by %c15_i32_46 dim 0 : vector<16x128xf32>, i32 -> vector<16x128xf32>
    %140 = tpu.iota {dimensions = array<i32: 0>} : vector<16x1xi32>
    %c15_i32_47 = arith.constant 15 : i32
    %141 = vector.broadcast %c15_i32_47 : i32 to vector<16x1xi32>
    %142 = arith.cmpi slt, %140, %141 : vector<16x1xi32>
    %cst_48 = arith.constant 0.000000e+00 : f32
    %143 = vector.shape_cast %142 : vector<16x1xi1> to vector<16x1xi1>
    %144 = vector.broadcast %143 : vector<16x1xi1> to vector<16x128xi1>
    %145 = vector.broadcast %cst_48 : f32 to vector<16x128xf32>
    %146 = arith.select %144, %139, %145 : vector<16x128xi1>, vector<16x128xf32>
    %147 = arith.truncf %146 : vector<16x128xf32> to vector<16x128xbf16>
    %c14_i32_49 = arith.constant 14 : i32
    %148 = tpu.dynamic_rotate %119 by %c14_i32_49 dim 0 : vector<16x128xf32>, i32 -> vector<16x128xf32>
    %149 = tpu.iota {dimensions = array<i32: 0>} : vector<16x1xi32>
    %c14_i32_50 = arith.constant 14 : i32
    %150 = vector.broadcast %c14_i32_50 : i32 to vector<16x1xi32>
    %151 = arith.cmpi slt, %149, %150 : vector<16x1xi32>
    %cst_51 = arith.constant 0.000000e+00 : f32
    %152 = vector.shape_cast %151 : vector<16x1xi1> to vector<16x1xi1>
    %153 = vector.broadcast %152 : vector<16x1xi1> to vector<16x128xi1>
    %154 = vector.broadcast %cst_51 : f32 to vector<16x128xf32>
    %155 = arith.select %153, %148, %154 : vector<16x128xi1>, vector<16x128xf32>
    %156 = arith.truncf %155 : vector<16x128xf32> to vector<16x128xbf16>
    %157 = tpu.concatenate %128, %137, %138, %147, %156 in 1 : vector<16x128xbf16>, vector<16x128xbf16>, vector<16x128xbf16>, vector<16x128xbf16>, vector<16x128xbf16> -> vector<16x640xbf16>
    %c1664 = arith.constant 1664 : index
    %c0_52 = arith.constant 0 : index
    %158 = vector.load %arg2[%c1664, %c0_52] : memref<4864x128xbf16, #tpu.memory_space<vmem>>, vector<640x128xbf16>
    %cst_53 = arith.constant dense<0.000000e+00> : vector<16x128xf32>
    %159 = tpu.matmul %157, %158, %cst_53 {dimension_numbers = #tpu.dot_dimension_numbers<[1], [0], [0], [1], [0, 0, 1, 1], [], []>} : vector<16x640xbf16>, vector<640x128xbf16>, vector<16x128xf32> -> vector<16x128xf32>
    %c0_54 = arith.constant 0 : index
    %c384_55 = arith.constant 384 : index
    %160 = vector.load %arg3[%c0_54, %c384_55] : memref<1x3072xf32, #tpu.memory_space<vmem>>, vector<1x128xf32>
    %161 = vector.broadcast %160 : vector<1x128xf32> to vector<16x128xf32>
    %162 = arith.addf %159, %161 : vector<16x128xf32>
    %cst_56 = arith.constant 0.000000e+00 : f32
    %163 = vector.broadcast %cst_56 : f32 to vector<16x128xf32>
    %164 = arith.maximumf %162, %163 : vector<16x128xf32>
    %c2_i32_57 = arith.constant 2 : i32
    %165 = tpu.dynamic_rotate %164 by %c2_i32_57 dim 0 : vector<16x128xf32>, i32 -> vector<16x128xf32>
    %166 = tpu.iota {dimensions = array<i32: 0>} : vector<16x1xi32>
    %c2_i32_58 = arith.constant 2 : i32
    %167 = vector.broadcast %c2_i32_58 : i32 to vector<16x1xi32>
    %168 = arith.cmpi sge, %166, %167 : vector<16x1xi32>
    %cst_59 = arith.constant 0.000000e+00 : f32
    %169 = vector.shape_cast %168 : vector<16x1xi1> to vector<16x1xi1>
    %170 = vector.broadcast %169 : vector<16x1xi1> to vector<16x128xi1>
    %171 = vector.broadcast %cst_59 : f32 to vector<16x128xf32>
    %172 = arith.select %170, %165, %171 : vector<16x128xi1>, vector<16x128xf32>
    %173 = arith.truncf %172 : vector<16x128xf32> to vector<16x128xbf16>
    %c1_i32_60 = arith.constant 1 : i32
    %174 = tpu.dynamic_rotate %164 by %c1_i32_60 dim 0 : vector<16x128xf32>, i32 -> vector<16x128xf32>
    %175 = tpu.iota {dimensions = array<i32: 0>} : vector<16x1xi32>
    %c1_i32_61 = arith.constant 1 : i32
    %176 = vector.broadcast %c1_i32_61 : i32 to vector<16x1xi32>
    %177 = arith.cmpi sge, %175, %176 : vector<16x1xi32>
    %cst_62 = arith.constant 0.000000e+00 : f32
    %178 = vector.shape_cast %177 : vector<16x1xi1> to vector<16x1xi1>
    %179 = vector.broadcast %178 : vector<16x1xi1> to vector<16x128xi1>
    %180 = vector.broadcast %cst_62 : f32 to vector<16x128xf32>
    %181 = arith.select %179, %174, %180 : vector<16x128xi1>, vector<16x128xf32>
    %182 = arith.truncf %181 : vector<16x128xf32> to vector<16x128xbf16>
    %183 = arith.truncf %164 : vector<16x128xf32> to vector<16x128xbf16>
    %c15_i32_63 = arith.constant 15 : i32
    %184 = tpu.dynamic_rotate %164 by %c15_i32_63 dim 0 : vector<16x128xf32>, i32 -> vector<16x128xf32>
    %185 = tpu.iota {dimensions = array<i32: 0>} : vector<16x1xi32>
    %c15_i32_64 = arith.constant 15 : i32
    %186 = vector.broadcast %c15_i32_64 : i32 to vector<16x1xi32>
    %187 = arith.cmpi slt, %185, %186 : vector<16x1xi32>
    %cst_65 = arith.constant 0.000000e+00 : f32
    %188 = vector.shape_cast %187 : vector<16x1xi1> to vector<16x1xi1>
    %189 = vector.broadcast %188 : vector<16x1xi1> to vector<16x128xi1>
    %190 = vector.broadcast %cst_65 : f32 to vector<16x128xf32>
    %191 = arith.select %189, %184, %190 : vector<16x128xi1>, vector<16x128xf32>
    %192 = arith.truncf %191 : vector<16x128xf32> to vector<16x128xbf16>
    %c14_i32_66 = arith.constant 14 : i32
    %193 = tpu.dynamic_rotate %164 by %c14_i32_66 dim 0 : vector<16x128xf32>, i32 -> vector<16x128xf32>
    %194 = tpu.iota {dimensions = array<i32: 0>} : vector<16x1xi32>
    %c14_i32_67 = arith.constant 14 : i32
    %195 = vector.broadcast %c14_i32_67 : i32 to vector<16x1xi32>
    %196 = arith.cmpi slt, %194, %195 : vector<16x1xi32>
    %cst_68 = arith.constant 0.000000e+00 : f32
    %197 = vector.shape_cast %196 : vector<16x1xi1> to vector<16x1xi1>
    %198 = vector.broadcast %197 : vector<16x1xi1> to vector<16x128xi1>
    %199 = vector.broadcast %cst_68 : f32 to vector<16x128xf32>
    %200 = arith.select %198, %193, %199 : vector<16x128xi1>, vector<16x128xf32>
    %201 = arith.truncf %200 : vector<16x128xf32> to vector<16x128xbf16>
    %202 = tpu.concatenate %173, %182, %183, %192, %201 in 1 : vector<16x128xbf16>, vector<16x128xbf16>, vector<16x128xbf16>, vector<16x128xbf16>, vector<16x128xbf16> -> vector<16x640xbf16>
    %c2304 = arith.constant 2304 : index
    %c0_69 = arith.constant 0 : index
    %203 = vector.load %arg2[%c2304, %c0_69] : memref<4864x128xbf16, #tpu.memory_space<vmem>>, vector<640x128xbf16>
    %cst_70 = arith.constant dense<0.000000e+00> : vector<16x128xf32>
    %204 = tpu.matmul %202, %203, %cst_70 {dimension_numbers = #tpu.dot_dimension_numbers<[1], [0], [0], [1], [0, 0, 1, 1], [], []>} : vector<16x640xbf16>, vector<640x128xbf16>, vector<16x128xf32> -> vector<16x128xf32>
    %c0_71 = arith.constant 0 : index
    %c512 = arith.constant 512 : index
    %205 = vector.load %arg3[%c0_71, %c512] : memref<1x3072xf32, #tpu.memory_space<vmem>>, vector<1x128xf32>
    %206 = vector.broadcast %205 : vector<1x128xf32> to vector<16x128xf32>
    %207 = arith.addf %204, %206 : vector<16x128xf32>
    %208 = arith.addf %207, %119 : vector<16x128xf32>
    %c1_i32_72 = arith.constant 1 : i32
    %209 = tpu.dynamic_rotate %208 by %c1_i32_72 dim 0 : vector<16x128xf32>, i32 -> vector<16x128xf32>
    %210 = tpu.iota {dimensions = array<i32: 0>} : vector<16x1xi32>
    %c1_i32_73 = arith.constant 1 : i32
    %211 = vector.broadcast %c1_i32_73 : i32 to vector<16x1xi32>
    %212 = arith.cmpi sge, %210, %211 : vector<16x1xi32>
    %cst_74 = arith.constant 0.000000e+00 : f32
    %213 = vector.shape_cast %212 : vector<16x1xi1> to vector<16x1xi1>
    %214 = vector.broadcast %213 : vector<16x1xi1> to vector<16x128xi1>
    %215 = vector.broadcast %cst_74 : f32 to vector<16x128xf32>
    %216 = arith.select %214, %209, %215 : vector<16x128xi1>, vector<16x128xf32>
    %217 = arith.truncf %216 : vector<16x128xf32> to vector<16x128xbf16>
    %218 = arith.truncf %208 : vector<16x128xf32> to vector<16x128xbf16>
    %c15_i32_75 = arith.constant 15 : i32
    %219 = tpu.dynamic_rotate %208 by %c15_i32_75 dim 0 : vector<16x128xf32>, i32 -> vector<16x128xf32>
    %220 = tpu.iota {dimensions = array<i32: 0>} : vector<16x1xi32>
    %c15_i32_76 = arith.constant 15 : i32
    %221 = vector.broadcast %c15_i32_76 : i32 to vector<16x1xi32>
    %222 = arith.cmpi slt, %220, %221 : vector<16x1xi32>
    %cst_77 = arith.constant 0.000000e+00 : f32
    %223 = vector.shape_cast %222 : vector<16x1xi1> to vector<16x1xi1>
    %224 = vector.broadcast %223 : vector<16x1xi1> to vector<16x128xi1>
    %225 = vector.broadcast %cst_77 : f32 to vector<16x128xf32>
    %226 = arith.select %224, %219, %225 : vector<16x128xi1>, vector<16x128xf32>
    %227 = arith.truncf %226 : vector<16x128xf32> to vector<16x128xbf16>
    %228 = tpu.concatenate %217, %218, %227 in 1 : vector<16x128xbf16>, vector<16x128xbf16>, vector<16x128xbf16> -> vector<16x384xbf16>
    %c2944 = arith.constant 2944 : index
    %c0_78 = arith.constant 0 : index
    %229 = vector.load %arg2[%c2944, %c0_78] : memref<4864x128xbf16, #tpu.memory_space<vmem>>, vector<384x128xbf16>
    %cst_79 = arith.constant dense<0.000000e+00> : vector<16x128xf32>
    %230 = tpu.matmul %228, %229, %cst_79 {dimension_numbers = #tpu.dot_dimension_numbers<[1], [0], [0], [1], [0, 0, 1, 1], [], []>} : vector<16x384xbf16>, vector<384x128xbf16>, vector<16x128xf32> -> vector<16x128xf32>
    %c0_80 = arith.constant 0 : index
    %c640 = arith.constant 640 : index
    %231 = vector.load %arg3[%c0_80, %c640] : memref<1x3072xf32, #tpu.memory_space<vmem>>, vector<1x128xf32>
    %232 = vector.broadcast %231 : vector<1x128xf32> to vector<16x128xf32>
    %233 = arith.addf %230, %232 : vector<16x128xf32>
    %cst_81 = arith.constant 0.000000e+00 : f32
    %234 = vector.broadcast %cst_81 : f32 to vector<16x128xf32>
    %235 = arith.maximumf %233, %234 : vector<16x128xf32>
    %c1_i32_82 = arith.constant 1 : i32
    %236 = tpu.dynamic_rotate %235 by %c1_i32_82 dim 0 : vector<16x128xf32>, i32 -> vector<16x128xf32>
    %237 = tpu.iota {dimensions = array<i32: 0>} : vector<16x1xi32>
    %c1_i32_83 = arith.constant 1 : i32
    %238 = vector.broadcast %c1_i32_83 : i32 to vector<16x1xi32>
    %239 = arith.cmpi sge, %237, %238 : vector<16x1xi32>
    %cst_84 = arith.constant 0.000000e+00 : f32
    %240 = vector.shape_cast %239 : vector<16x1xi1> to vector<16x1xi1>
    %241 = vector.broadcast %240 : vector<16x1xi1> to vector<16x128xi1>
    %242 = vector.broadcast %cst_84 : f32 to vector<16x128xf32>
    %243 = arith.select %241, %236, %242 : vector<16x128xi1>, vector<16x128xf32>
    %244 = arith.truncf %243 : vector<16x128xf32> to vector<16x128xbf16>
    %245 = arith.truncf %235 : vector<16x128xf32> to vector<16x128xbf16>
    %c15_i32_85 = arith.constant 15 : i32
    %246 = tpu.dynamic_rotate %235 by %c15_i32_85 dim 0 : vector<16x128xf32>, i32 -> vector<16x128xf32>
    %247 = tpu.iota {dimensions = array<i32: 0>} : vector<16x1xi32>
    %c15_i32_86 = arith.constant 15 : i32
    %248 = vector.broadcast %c15_i32_86 : i32 to vector<16x1xi32>
    %249 = arith.cmpi slt, %247, %248 : vector<16x1xi32>
    %cst_87 = arith.constant 0.000000e+00 : f32
    %250 = vector.shape_cast %249 : vector<16x1xi1> to vector<16x1xi1>
    %251 = vector.broadcast %250 : vector<16x1xi1> to vector<16x128xi1>
    %252 = vector.broadcast %cst_87 : f32 to vector<16x128xf32>
    %253 = arith.select %251, %246, %252 : vector<16x128xi1>, vector<16x128xf32>
    %254 = arith.truncf %253 : vector<16x128xf32> to vector<16x128xbf16>
    %255 = tpu.concatenate %244, %245, %254 in 1 : vector<16x128xbf16>, vector<16x128xbf16>, vector<16x128xbf16> -> vector<16x384xbf16>
    %c3328 = arith.constant 3328 : index
    %c0_88 = arith.constant 0 : index
    %256 = vector.load %arg2[%c3328, %c0_88] : memref<4864x128xbf16, #tpu.memory_space<vmem>>, vector<384x128xbf16>
    %cst_89 = arith.constant dense<0.000000e+00> : vector<16x128xf32>
    %257 = tpu.matmul %255, %256, %cst_89 {dimension_numbers = #tpu.dot_dimension_numbers<[1], [0], [0], [1], [0, 0, 1, 1], [], []>} : vector<16x384xbf16>, vector<384x128xbf16>, vector<16x128xf32> -> vector<16x128xf32>
    %c0_90 = arith.constant 0 : index
    %c768 = arith.constant 768 : index
    %258 = vector.load %arg3[%c0_90, %c768] : memref<1x3072xf32, #tpu.memory_space<vmem>>, vector<1x128xf32>
    %259 = vector.broadcast %258 : vector<1x128xf32> to vector<16x128xf32>
    %260 = arith.addf %257, %259 : vector<16x128xf32>
    %261 = arith.addf %260, %208 : vector<16x128xf32>
    %c1_i32_91 = arith.constant 1 : i32
    %262 = tpu.dynamic_rotate %261 by %c1_i32_91 dim 0 : vector<16x128xf32>, i32 -> vector<16x128xf32>
    %263 = tpu.iota {dimensions = array<i32: 0>} : vector<16x1xi32>
    %c1_i32_92 = arith.constant 1 : i32
    %264 = vector.broadcast %c1_i32_92 : i32 to vector<16x1xi32>
    %265 = arith.cmpi sge, %263, %264 : vector<16x1xi32>
    %cst_93 = arith.constant 0.000000e+00 : f32
    %266 = vector.shape_cast %265 : vector<16x1xi1> to vector<16x1xi1>
    %267 = vector.broadcast %266 : vector<16x1xi1> to vector<16x128xi1>
    %268 = vector.broadcast %cst_93 : f32 to vector<16x128xf32>
    %269 = arith.select %267, %262, %268 : vector<16x128xi1>, vector<16x128xf32>
    %270 = arith.truncf %269 : vector<16x128xf32> to vector<16x128xbf16>
    %271 = arith.truncf %261 : vector<16x128xf32> to vector<16x128xbf16>
    %c15_i32_94 = arith.constant 15 : i32
    %272 = tpu.dynamic_rotate %261 by %c15_i32_94 dim 0 : vector<16x128xf32>, i32 -> vector<16x128xf32>
    %273 = tpu.iota {dimensions = array<i32: 0>} : vector<16x1xi32>
    %c15_i32_95 = arith.constant 15 : i32
    %274 = vector.broadcast %c15_i32_95 : i32 to vector<16x1xi32>
    %275 = arith.cmpi slt, %273, %274 : vector<16x1xi32>
    %cst_96 = arith.constant 0.000000e+00 : f32
    %276 = vector.shape_cast %275 : vector<16x1xi1> to vector<16x1xi1>
    %277 = vector.broadcast %276 : vector<16x1xi1> to vector<16x128xi1>
    %278 = vector.broadcast %cst_96 : f32 to vector<16x128xf32>
    %279 = arith.select %277, %272, %278 : vector<16x128xi1>, vector<16x128xf32>
    %280 = arith.truncf %279 : vector<16x128xf32> to vector<16x128xbf16>
    %281 = tpu.concatenate %270, %271, %280 in 1 : vector<16x128xbf16>, vector<16x128xbf16>, vector<16x128xbf16> -> vector<16x384xbf16>
    %c3712 = arith.constant 3712 : index
    %c0_97 = arith.constant 0 : index
    %282 = vector.load %arg2[%c3712, %c0_97] : memref<4864x128xbf16, #tpu.memory_space<vmem>>, vector<384x128xbf16>
    %cst_98 = arith.constant dense<0.000000e+00> : vector<16x128xf32>
    %283 = tpu.matmul %281, %282, %cst_98 {dimension_numbers = #tpu.dot_dimension_numbers<[1], [0], [0], [1], [0, 0, 1, 1], [], []>} : vector<16x384xbf16>, vector<384x128xbf16>, vector<16x128xf32> -> vector<16x128xf32>
    %c0_99 = arith.constant 0 : index
    %c896 = arith.constant 896 : index
    %284 = vector.load %arg3[%c0_99, %c896] : memref<1x3072xf32, #tpu.memory_space<vmem>>, vector<1x128xf32>
    %285 = vector.broadcast %284 : vector<1x128xf32> to vector<16x128xf32>
    %286 = arith.addf %283, %285 : vector<16x128xf32>
    %cst_100 = arith.constant 0.000000e+00 : f32
    %287 = vector.broadcast %cst_100 : f32 to vector<16x128xf32>
    %288 = arith.maximumf %286, %287 : vector<16x128xf32>
    %c1_i32_101 = arith.constant 1 : i32
    %289 = tpu.dynamic_rotate %288 by %c1_i32_101 dim 0 : vector<16x128xf32>, i32 -> vector<16x128xf32>
    %290 = tpu.iota {dimensions = array<i32: 0>} : vector<16x1xi32>
    %c1_i32_102 = arith.constant 1 : i32
    %291 = vector.broadcast %c1_i32_102 : i32 to vector<16x1xi32>
    %292 = arith.cmpi sge, %290, %291 : vector<16x1xi32>
    %cst_103 = arith.constant 0.000000e+00 : f32
    %293 = vector.shape_cast %292 : vector<16x1xi1> to vector<16x1xi1>
    %294 = vector.broadcast %293 : vector<16x1xi1> to vector<16x128xi1>
    %295 = vector.broadcast %cst_103 : f32 to vector<16x128xf32>
    %296 = arith.select %294, %289, %295 : vector<16x128xi1>, vector<16x128xf32>
    %297 = arith.truncf %296 : vector<16x128xf32> to vector<16x128xbf16>
    %298 = arith.truncf %288 : vector<16x128xf32> to vector<16x128xbf16>
    %c15_i32_104 = arith.constant 15 : i32
    %299 = tpu.dynamic_rotate %288 by %c15_i32_104 dim 0 : vector<16x128xf32>, i32 -> vector<16x128xf32>
    %300 = tpu.iota {dimensions = array<i32: 0>} : vector<16x1xi32>
    %c15_i32_105 = arith.constant 15 : i32
    %301 = vector.broadcast %c15_i32_105 : i32 to vector<16x1xi32>
    %302 = arith.cmpi slt, %300, %301 : vector<16x1xi32>
    %cst_106 = arith.constant 0.000000e+00 : f32
    %303 = vector.shape_cast %302 : vector<16x1xi1> to vector<16x1xi1>
    %304 = vector.broadcast %303 : vector<16x1xi1> to vector<16x128xi1>
    %305 = vector.broadcast %cst_106 : f32 to vector<16x128xf32>
    %306 = arith.select %304, %299, %305 : vector<16x128xi1>, vector<16x128xf32>
    %307 = arith.truncf %306 : vector<16x128xf32> to vector<16x128xbf16>
    %308 = tpu.concatenate %297, %298, %307 in 1 : vector<16x128xbf16>, vector<16x128xbf16>, vector<16x128xbf16> -> vector<16x384xbf16>
    %c4096 = arith.constant 4096 : index
    %c0_107 = arith.constant 0 : index
    %309 = vector.load %arg2[%c4096, %c0_107] : memref<4864x128xbf16, #tpu.memory_space<vmem>>, vector<384x128xbf16>
    %cst_108 = arith.constant dense<0.000000e+00> : vector<16x128xf32>
    %310 = tpu.matmul %308, %309, %cst_108 {dimension_numbers = #tpu.dot_dimension_numbers<[1], [0], [0], [1], [0, 0, 1, 1], [], []>} : vector<16x384xbf16>, vector<384x128xbf16>, vector<16x128xf32> -> vector<16x128xf32>
    %c0_109 = arith.constant 0 : index
    %c1024_110 = arith.constant 1024 : index
    %311 = vector.load %arg3[%c0_109, %c1024_110] : memref<1x3072xf32, #tpu.memory_space<vmem>>, vector<1x128xf32>
    %312 = vector.broadcast %311 : vector<1x128xf32> to vector<16x128xf32>
    %313 = arith.addf %310, %312 : vector<16x128xf32>
    %314 = arith.addf %313, %261 : vector<16x128xf32>
    %c1_i32_111 = arith.constant 1 : i32
    %315 = tpu.dynamic_rotate %314 by %c1_i32_111 dim 0 : vector<16x128xf32>, i32 -> vector<16x128xf32>
    %316 = tpu.iota {dimensions = array<i32: 0>} : vector<16x1xi32>
    %c1_i32_112 = arith.constant 1 : i32
    %317 = vector.broadcast %c1_i32_112 : i32 to vector<16x1xi32>
    %318 = arith.cmpi sge, %316, %317 : vector<16x1xi32>
    %cst_113 = arith.constant 0.000000e+00 : f32
    %319 = vector.shape_cast %318 : vector<16x1xi1> to vector<16x1xi1>
    %320 = vector.broadcast %319 : vector<16x1xi1> to vector<16x128xi1>
    %321 = vector.broadcast %cst_113 : f32 to vector<16x128xf32>
    %322 = arith.select %320, %315, %321 : vector<16x128xi1>, vector<16x128xf32>
    %323 = arith.truncf %322 : vector<16x128xf32> to vector<16x128xbf16>
    %324 = arith.truncf %314 : vector<16x128xf32> to vector<16x128xbf16>
    %c15_i32_114 = arith.constant 15 : i32
    %325 = tpu.dynamic_rotate %314 by %c15_i32_114 dim 0 : vector<16x128xf32>, i32 -> vector<16x128xf32>
    %326 = tpu.iota {dimensions = array<i32: 0>} : vector<16x1xi32>
    %c15_i32_115 = arith.constant 15 : i32
    %327 = vector.broadcast %c15_i32_115 : i32 to vector<16x1xi32>
    %328 = arith.cmpi slt, %326, %327 : vector<16x1xi32>
    %cst_116 = arith.constant 0.000000e+00 : f32
    %329 = vector.shape_cast %328 : vector<16x1xi1> to vector<16x1xi1>
    %330 = vector.broadcast %329 : vector<16x1xi1> to vector<16x128xi1>
    %331 = vector.broadcast %cst_116 : f32 to vector<16x128xf32>
    %332 = arith.select %330, %325, %331 : vector<16x128xi1>, vector<16x128xf32>
    %333 = arith.truncf %332 : vector<16x128xf32> to vector<16x128xbf16>
    %334 = tpu.concatenate %323, %324, %333 in 1 : vector<16x128xbf16>, vector<16x128xbf16>, vector<16x128xbf16> -> vector<16x384xbf16>
    %c4480 = arith.constant 4480 : index
    %c0_117 = arith.constant 0 : index
    %335 = vector.load %arg2[%c4480, %c0_117] : memref<4864x128xbf16, #tpu.memory_space<vmem>>, vector<384x128xbf16>
    %cst_118 = arith.constant dense<0.000000e+00> : vector<16x128xf32>
    %336 = tpu.matmul %334, %335, %cst_118 {dimension_numbers = #tpu.dot_dimension_numbers<[1], [0], [0], [1], [0, 0, 1, 1], [], []>} : vector<16x384xbf16>, vector<384x128xbf16>, vector<16x128xf32> -> vector<16x128xf32>
    %c0_119 = arith.constant 0 : index
    %c1152 = arith.constant 1152 : index
    %337 = vector.load %arg3[%c0_119, %c1152] : memref<1x3072xf32, #tpu.memory_space<vmem>>, vector<1x128xf32>
    %338 = vector.broadcast %337 : vector<1x128xf32> to vector<16x128xf32>
    %339 = arith.addf %336, %338 : vector<16x128xf32>
    %340 = arith.addf %339, %208 : vector<16x128xf32>
    %c0_i32_120 = arith.constant 0 : i32
    %341 = tpu.memref_slice %arg11[%c0_i32_120] : memref<2x!tpu.dma_semaphore, #tpu.memory_space<semaphore_mem>> -> memref<1x!tpu.dma_semaphore, #tpu.memory_space<semaphore_mem>>
    %342 = tpu.memref_squeeze %341 : memref<1x!tpu.dma_semaphore, #tpu.memory_space<semaphore_mem>> -> memref<!tpu.dma_semaphore, #tpu.memory_space<semaphore_mem>>
    tpu.wait_dma2 semaphore(%342 : memref<!tpu.dma_semaphore, #tpu.memory_space<semaphore_mem>>) src(%arg6 : memref<2304x256xbf16, #tpu.memory_space<any>>) dst(%arg9 : memref<2304x256xbf16, #tpu.memory_space<vmem>>)
    %c1_i32_121 = arith.constant 1 : i32
    %343 = tpu.dynamic_rotate %340 by %c1_i32_121 dim 0 : vector<16x128xf32>, i32 -> vector<16x128xf32>
    %344 = tpu.iota {dimensions = array<i32: 0>} : vector<16x1xi32>
    %c1_i32_122 = arith.constant 1 : i32
    %345 = vector.broadcast %c1_i32_122 : i32 to vector<16x1xi32>
    %346 = arith.cmpi sge, %344, %345 : vector<16x1xi32>
    %cst_123 = arith.constant 0.000000e+00 : f32
    %347 = vector.shape_cast %346 : vector<16x1xi1> to vector<16x1xi1>
    %348 = vector.broadcast %347 : vector<16x1xi1> to vector<16x128xi1>
    %349 = vector.broadcast %cst_123 : f32 to vector<16x128xf32>
    %350 = arith.select %348, %343, %349 : vector<16x128xi1>, vector<16x128xf32>
    %351 = arith.truncf %350 : vector<16x128xf32> to vector<16x128xbf16>
    %352 = arith.truncf %340 : vector<16x128xf32> to vector<16x128xbf16>
    %c15_i32_124 = arith.constant 15 : i32
    %353 = tpu.dynamic_rotate %340 by %c15_i32_124 dim 0 : vector<16x128xf32>, i32 -> vector<16x128xf32>
    %354 = tpu.iota {dimensions = array<i32: 0>} : vector<16x1xi32>
    %c15_i32_125 = arith.constant 15 : i32
    %355 = vector.broadcast %c15_i32_125 : i32 to vector<16x1xi32>
    %356 = arith.cmpi slt, %354, %355 : vector<16x1xi32>
    %cst_126 = arith.constant 0.000000e+00 : f32
    %357 = vector.shape_cast %356 : vector<16x1xi1> to vector<16x1xi1>
    %358 = vector.broadcast %357 : vector<16x1xi1> to vector<16x128xi1>
    %359 = vector.broadcast %cst_126 : f32 to vector<16x128xf32>
    %360 = arith.select %358, %353, %359 : vector<16x128xi1>, vector<16x128xf32>
    %361 = arith.truncf %360 : vector<16x128xf32> to vector<16x128xbf16>
    %362 = tpu.concatenate %351, %352, %361 in 1 : vector<16x128xbf16>, vector<16x128xbf16>, vector<16x128xbf16> -> vector<16x384xbf16>
    %c0_127 = arith.constant 0 : index
    %c0_128 = arith.constant 0 : index
    %363 = vector.load %arg9[%c0_127, %c0_128] : memref<2304x256xbf16, #tpu.memory_space<vmem>>, vector<384x256xbf16>
    %cst_129 = arith.constant dense<0.000000e+00> : vector<16x256xf32>
    %364 = tpu.matmul %362, %363, %cst_129 {dimension_numbers = #tpu.dot_dimension_numbers<[1], [0], [0], [1], [0, 0, 1, 1], [], []>} : vector<16x384xbf16>, vector<384x256xbf16>, vector<16x256xf32> -> vector<16x256xf32>
    %c0_130 = arith.constant 0 : index
    %c1280 = arith.constant 1280 : index
    %365 = vector.load %arg3[%c0_130, %c1280] : memref<1x3072xf32, #tpu.memory_space<vmem>>, vector<1x256xf32>
    %366 = vector.broadcast %365 : vector<1x256xf32> to vector<16x256xf32>
    %367 = arith.addf %364, %366 : vector<16x256xf32>
    %c1_i32_131 = arith.constant 1 : i32
    %368 = tpu.dynamic_rotate %340 by %c1_i32_131 dim 0 : vector<16x128xf32>, i32 -> vector<16x128xf32>
    %369 = tpu.iota {dimensions = array<i32: 0>} : vector<16x1xi32>
    %c1_i32_132 = arith.constant 1 : i32
    %370 = vector.broadcast %c1_i32_132 : i32 to vector<16x1xi32>
    %371 = arith.cmpi sge, %369, %370 : vector<16x1xi32>
    %cst_133 = arith.constant 0.000000e+00 : f32
    %372 = vector.shape_cast %371 : vector<16x1xi1> to vector<16x1xi1>
    %373 = vector.broadcast %372 : vector<16x1xi1> to vector<16x128xi1>
    %374 = vector.broadcast %cst_133 : f32 to vector<16x128xf32>
    %375 = arith.select %373, %368, %374 : vector<16x128xi1>, vector<16x128xf32>
    %376 = arith.truncf %375 : vector<16x128xf32> to vector<16x128xbf16>
    %377 = arith.truncf %340 : vector<16x128xf32> to vector<16x128xbf16>
    %c15_i32_134 = arith.constant 15 : i32
    %378 = tpu.dynamic_rotate %340 by %c15_i32_134 dim 0 : vector<16x128xf32>, i32 -> vector<16x128xf32>
    %379 = tpu.iota {dimensions = array<i32: 0>} : vector<16x1xi32>
    %c15_i32_135 = arith.constant 15 : i32
    %380 = vector.broadcast %c15_i32_135 : i32 to vector<16x1xi32>
    %381 = arith.cmpi slt, %379, %380 : vector<16x1xi32>
    %cst_136 = arith.constant 0.000000e+00 : f32
    %382 = vector.shape_cast %381 : vector<16x1xi1> to vector<16x1xi1>
    %383 = vector.broadcast %382 : vector<16x1xi1> to vector<16x128xi1>
    %384 = vector.broadcast %cst_136 : f32 to vector<16x128xf32>
    %385 = arith.select %383, %378, %384 : vector<16x128xi1>, vector<16x128xf32>
    %386 = arith.truncf %385 : vector<16x128xf32> to vector<16x128xbf16>
    %387 = tpu.concatenate %376, %377, %386 in 1 : vector<16x128xbf16>, vector<16x128xbf16>, vector<16x128xbf16> -> vector<16x384xbf16>
    %c384_137 = arith.constant 384 : index
    %c0_138 = arith.constant 0 : index
    %388 = vector.load %arg9[%c384_137, %c0_138] : memref<2304x256xbf16, #tpu.memory_space<vmem>>, vector<384x256xbf16>
    %cst_139 = arith.constant dense<0.000000e+00> : vector<16x256xf32>
    %389 = tpu.matmul %387, %388, %cst_139 {dimension_numbers = #tpu.dot_dimension_numbers<[1], [0], [0], [1], [0, 0, 1, 1], [], []>} : vector<16x384xbf16>, vector<384x256xbf16>, vector<16x256xf32> -> vector<16x256xf32>
    %c0_140 = arith.constant 0 : index
    %c1536 = arith.constant 1536 : index
    %390 = vector.load %arg3[%c0_140, %c1536] : memref<1x3072xf32, #tpu.memory_space<vmem>>, vector<1x256xf32>
    %391 = vector.broadcast %390 : vector<1x256xf32> to vector<16x256xf32>
    %392 = arith.addf %389, %391 : vector<16x256xf32>
    %393 = tpu.concatenate %367, %392 in 0 : vector<16x256xf32>, vector<16x256xf32> -> vector<32x256xf32>
    %394 = arith.truncf %393 : vector<32x256xf32> to vector<32x256xbf16>
    %c0_141 = arith.constant 0 : index
    %c0_142 = arith.constant 0 : index
    %395 = vector.load %arg4[%c0_141, %c0_142] : memref<32x32xbf16, #tpu.memory_space<vmem>>, vector<32x32xbf16>
    %cst_143 = arith.constant dense<0.000000e+00> : vector<32x256xf32>
    %396 = tpu.matmul %395, %394, %cst_143 {dimension_numbers = #tpu.dot_dimension_numbers<[1], [0], [0], [1], [0, 0, 1, 1], [], []>} : vector<32x32xbf16>, vector<32x256xbf16>, vector<32x256xf32> -> vector<32x256xf32>
    %c1_i32_144 = arith.constant 1 : i32
    %397 = tpu.memref_slice %arg11[%c1_i32_144] : memref<2x!tpu.dma_semaphore, #tpu.memory_space<semaphore_mem>> -> memref<1x!tpu.dma_semaphore, #tpu.memory_space<semaphore_mem>>
    %398 = tpu.memref_squeeze %397 : memref<1x!tpu.dma_semaphore, #tpu.memory_space<semaphore_mem>> -> memref<!tpu.dma_semaphore, #tpu.memory_space<semaphore_mem>>
    tpu.wait_dma2 semaphore(%398 : memref<!tpu.dma_semaphore, #tpu.memory_space<semaphore_mem>>) src(%arg7 : memref<1536x512xbf16, #tpu.memory_space<any>>) dst(%arg10 : memref<1536x512xbf16, #tpu.memory_space<vmem>>)
    %c1_i32_145 = arith.constant 1 : i32
    %399 = tpu.dynamic_rotate %396 by %c1_i32_145 dim 0 : vector<32x256xf32>, i32 -> vector<32x256xf32>
    %400 = tpu.iota {dimensions = array<i32: 0>} : vector<32x1xi32>
    %c1_i32_146 = arith.constant 1 : i32
    %401 = vector.broadcast %c1_i32_146 : i32 to vector<32x1xi32>
    %402 = arith.cmpi sge, %400, %401 : vector<32x1xi32>
    %cst_147 = arith.constant 0.000000e+00 : f32
    %403 = vector.shape_cast %402 : vector<32x1xi1> to vector<32x1xi1>
    %404 = vector.broadcast %403 : vector<32x1xi1> to vector<32x256xi1>
    %405 = vector.broadcast %cst_147 : f32 to vector<32x256xf32>
    %406 = arith.select %404, %399, %405 : vector<32x256xi1>, vector<32x256xf32>
    %407 = arith.truncf %406 : vector<32x256xf32> to vector<32x256xbf16>
    %408 = arith.truncf %396 : vector<32x256xf32> to vector<32x256xbf16>
    %c31_i32 = arith.constant 31 : i32
    %409 = tpu.dynamic_rotate %396 by %c31_i32 dim 0 : vector<32x256xf32>, i32 -> vector<32x256xf32>
    %410 = tpu.iota {dimensions = array<i32: 0>} : vector<32x1xi32>
    %c31_i32_148 = arith.constant 31 : i32
    %411 = vector.broadcast %c31_i32_148 : i32 to vector<32x1xi32>
    %412 = arith.cmpi slt, %410, %411 : vector<32x1xi32>
    %cst_149 = arith.constant 0.000000e+00 : f32
    %413 = vector.shape_cast %412 : vector<32x1xi1> to vector<32x1xi1>
    %414 = vector.broadcast %413 : vector<32x1xi1> to vector<32x256xi1>
    %415 = vector.broadcast %cst_149 : f32 to vector<32x256xf32>
    %416 = arith.select %414, %409, %415 : vector<32x256xi1>, vector<32x256xf32>
    %417 = arith.truncf %416 : vector<32x256xf32> to vector<32x256xbf16>
    %418 = tpu.concatenate %407, %408, %417 in 1 : vector<32x256xbf16>, vector<32x256xbf16>, vector<32x256xbf16> -> vector<32x768xbf16>
    %c0_150 = arith.constant 0 : index
    %c0_151 = arith.constant 0 : index
    %419 = vector.load %arg10[%c0_150, %c0_151] : memref<1536x512xbf16, #tpu.memory_space<vmem>>, vector<768x512xbf16>
    %cst_152 = arith.constant dense<0.000000e+00> : vector<32x512xf32>
    %420 = tpu.matmul %418, %419, %cst_152 {dimension_numbers = #tpu.dot_dimension_numbers<[1], [0], [0], [1], [0, 0, 1, 1], [], []>} : vector<32x768xbf16>, vector<768x512xbf16>, vector<32x512xf32> -> vector<32x512xf32>
    %c0_153 = arith.constant 0 : index
    %c1792 = arith.constant 1792 : index
    %421 = vector.load %arg3[%c0_153, %c1792] : memref<1x3072xf32, #tpu.memory_space<vmem>>, vector<1x512xf32>
    %422 = vector.broadcast %421 : vector<1x512xf32> to vector<32x512xf32>
    %423 = arith.addf %420, %422 : vector<32x512xf32>
    %c1_i32_154 = arith.constant 1 : i32
    %424 = tpu.dynamic_rotate %396 by %c1_i32_154 dim 0 : vector<32x256xf32>, i32 -> vector<32x256xf32>
    %425 = tpu.iota {dimensions = array<i32: 0>} : vector<32x1xi32>
    %c1_i32_155 = arith.constant 1 : i32
    %426 = vector.broadcast %c1_i32_155 : i32 to vector<32x1xi32>
    %427 = arith.cmpi sge, %425, %426 : vector<32x1xi32>
    %cst_156 = arith.constant 0.000000e+00 : f32
    %428 = vector.shape_cast %427 : vector<32x1xi1> to vector<32x1xi1>
    %429 = vector.broadcast %428 : vector<32x1xi1> to vector<32x256xi1>
    %430 = vector.broadcast %cst_156 : f32 to vector<32x256xf32>
    %431 = arith.select %429, %424, %430 : vector<32x256xi1>, vector<32x256xf32>
    %432 = arith.truncf %431 : vector<32x256xf32> to vector<32x256xbf16>
    %433 = arith.truncf %396 : vector<32x256xf32> to vector<32x256xbf16>
    %c31_i32_157 = arith.constant 31 : i32
    %434 = tpu.dynamic_rotate %396 by %c31_i32_157 dim 0 : vector<32x256xf32>, i32 -> vector<32x256xf32>
    %435 = tpu.iota {dimensions = array<i32: 0>} : vector<32x1xi32>
    %c31_i32_158 = arith.constant 31 : i32
    %436 = vector.broadcast %c31_i32_158 : i32 to vector<32x1xi32>
    %437 = arith.cmpi slt, %435, %436 : vector<32x1xi32>
    %cst_159 = arith.constant 0.000000e+00 : f32
    %438 = vector.shape_cast %437 : vector<32x1xi1> to vector<32x1xi1>
    %439 = vector.broadcast %438 : vector<32x1xi1> to vector<32x256xi1>
    %440 = vector.broadcast %cst_159 : f32 to vector<32x256xf32>
    %441 = arith.select %439, %434, %440 : vector<32x256xi1>, vector<32x256xf32>
    %442 = arith.truncf %441 : vector<32x256xf32> to vector<32x256xbf16>
    %443 = tpu.concatenate %432, %433, %442 in 1 : vector<32x256xbf16>, vector<32x256xbf16>, vector<32x256xbf16> -> vector<32x768xbf16>
    %c768_160 = arith.constant 768 : index
    %c0_161 = arith.constant 0 : index
    %444 = vector.load %arg10[%c768_160, %c0_161] : memref<1536x512xbf16, #tpu.memory_space<vmem>>, vector<768x512xbf16>
    %cst_162 = arith.constant dense<0.000000e+00> : vector<32x512xf32>
    %445 = tpu.matmul %443, %444, %cst_162 {dimension_numbers = #tpu.dot_dimension_numbers<[1], [0], [0], [1], [0, 0, 1, 1], [], []>} : vector<32x768xbf16>, vector<768x512xbf16>, vector<32x512xf32> -> vector<32x512xf32>
    %c0_163 = arith.constant 0 : index
    %c2304_164 = arith.constant 2304 : index
    %446 = vector.load %arg3[%c0_163, %c2304_164] : memref<1x3072xf32, #tpu.memory_space<vmem>>, vector<1x512xf32>
    %447 = vector.broadcast %446 : vector<1x512xf32> to vector<32x512xf32>
    %448 = arith.addf %445, %447 : vector<32x512xf32>
    %449 = tpu.concatenate %423, %448 in 0 : vector<32x512xf32>, vector<32x512xf32> -> vector<64x512xf32>
    %450 = arith.truncf %449 : vector<64x512xf32> to vector<64x512xbf16>
    %c0_165 = arith.constant 0 : index
    %c0_166 = arith.constant 0 : index
    %451 = vector.load %arg5[%c0_165, %c0_166] : memref<64x64xbf16, #tpu.memory_space<vmem>>, vector<64x64xbf16>
    %cst_167 = arith.constant dense<0.000000e+00> : vector<64x512xf32>
    %452 = tpu.matmul %451, %450, %cst_167 {dimension_numbers = #tpu.dot_dimension_numbers<[1], [0], [0], [1], [0, 0, 1, 1], [], []>} : vector<64x64xbf16>, vector<64x512xbf16>, vector<64x512xf32> -> vector<64x512xf32>
    %c1_i32_168 = arith.constant 1 : i32
    %453 = tpu.dynamic_rotate %452 by %c1_i32_168 dim 0 : vector<64x512xf32>, i32 -> vector<64x512xf32>
    %454 = tpu.iota {dimensions = array<i32: 0>} : vector<64x1xi32>
    %c1_i32_169 = arith.constant 1 : i32
    %455 = vector.broadcast %c1_i32_169 : i32 to vector<64x1xi32>
    %456 = arith.cmpi sge, %454, %455 : vector<64x1xi32>
    %cst_170 = arith.constant 0.000000e+00 : f32
    %457 = vector.shape_cast %456 : vector<64x1xi1> to vector<64x1xi1>
    %458 = vector.broadcast %457 : vector<64x1xi1> to vector<64x512xi1>
    %459 = vector.broadcast %cst_170 : f32 to vector<64x512xf32>
    %460 = arith.select %458, %453, %459 : vector<64x512xi1>, vector<64x512xf32>
    %461 = arith.truncf %460 : vector<64x512xf32> to vector<64x512xbf16>
    %462 = arith.truncf %452 : vector<64x512xf32> to vector<64x512xbf16>
    %c63_i32 = arith.constant 63 : i32
    %463 = tpu.dynamic_rotate %452 by %c63_i32 dim 0 : vector<64x512xf32>, i32 -> vector<64x512xf32>
    %464 = tpu.iota {dimensions = array<i32: 0>} : vector<64x1xi32>
    %c63_i32_171 = arith.constant 63 : i32
    %465 = vector.broadcast %c63_i32_171 : i32 to vector<64x1xi32>
    %466 = arith.cmpi slt, %464, %465 : vector<64x1xi32>
    %cst_172 = arith.constant 0.000000e+00 : f32
    %467 = vector.shape_cast %466 : vector<64x1xi1> to vector<64x1xi1>
    %468 = vector.broadcast %467 : vector<64x1xi1> to vector<64x512xi1>
    %469 = vector.broadcast %cst_172 : f32 to vector<64x512xf32>
    %470 = arith.select %468, %463, %469 : vector<64x512xi1>, vector<64x512xf32>
    %471 = arith.truncf %470 : vector<64x512xf32> to vector<64x512xbf16>
    %472 = tpu.concatenate %461, %462, %471 in 1 : vector<64x512xbf16>, vector<64x512xbf16>, vector<64x512xbf16> -> vector<64x1536xbf16>
    %c768_173 = arith.constant 768 : index
    %c0_174 = arith.constant 0 : index
    %473 = vector.load %arg9[%c768_173, %c0_174] : memref<2304x256xbf16, #tpu.memory_space<vmem>>, vector<1536x256xbf16>
    %cst_175 = arith.constant dense<0.000000e+00> : vector<64x256xf32>
    %474 = tpu.matmul %472, %473, %cst_175 {dimension_numbers = #tpu.dot_dimension_numbers<[1], [0], [0], [1], [0, 0, 1, 1], [], []>} : vector<64x1536xbf16>, vector<1536x256xbf16>, vector<64x256xf32> -> vector<64x256xf32>
    %c0_176 = arith.constant 0 : index
    %c2816 = arith.constant 2816 : index
    %475 = vector.load %arg3[%c0_176, %c2816] : memref<1x3072xf32, #tpu.memory_space<vmem>>, vector<1x256xf32>
    %476 = vector.broadcast %475 : vector<1x256xf32> to vector<64x256xf32>
    %477 = arith.addf %474, %476 : vector<64x256xf32>
    %c0_177 = arith.constant 0 : index
    %c0_178 = arith.constant 0 : index
    %c0_179 = arith.constant 0 : index
    %478 = vector.load %arg8[%c0_177, %c0_178, %c0_179] : memref<1x64x256xf32, #tpu.memory_space<vmem>>, vector<1x64x256xf32>
    %479 = vector.shape_cast %478 : vector<1x64x256xf32> to vector<64x256xf32>
    %480 = vector.shape_cast %477 : vector<64x256xf32> to vector<1x64x256xf32>
    tpu.vector_store %arg8[%c0_177, %c0_178, %c0_179], %480 {strides = array<i32>} : memref<1x64x256xf32, #tpu.memory_space<vmem>>, vector<1x64x256xf32>,
    return
  }
  func.func @transform_0(%arg0: i32) -> (i32, i32, i32) {
    %c0_i32 = arith.constant 0 : i32
    %c0_i32_0 = arith.constant 0 : i32
    %c0_i32_1 = arith.constant 0 : i32
    return %arg0, %c0_i32, %c0_i32_0 : i32, i32, i32
  }
  func.func @transform_1(%arg0: i32) -> (i32, i32) {
    %c0_i32 = arith.constant 0 : i32
    %c0_i32_0 = arith.constant 0 : i32
    %c0_i32_1 = arith.constant 0 : i32
    return %c0_i32, %c0_i32_0 : i32, i32
  }
  func.func @transform_2(%arg0: i32) -> (i32, i32) {
    %c0_i32 = arith.constant 0 : i32
    %c0_i32_0 = arith.constant 0 : i32
    %c0_i32_1 = arith.constant 0 : i32
    return %c0_i32, %c0_i32_0 : i32, i32
  }
  func.func @transform_3(%arg0: i32) -> (i32, i32) {
    %c0_i32 = arith.constant 0 : i32
    %c0_i32_0 = arith.constant 0 : i32
    %c0_i32_1 = arith.constant 0 : i32
    return %c0_i32, %c0_i32_0 : i32, i32
  }
  func.func @transform_4(%arg0: i32) -> (i32, i32) {
    %c0_i32 = arith.constant 0 : i32
    %c0_i32_0 = arith.constant 0 : i32
    %c0_i32_1 = arith.constant 0 : i32
    return %c0_i32, %c0_i32_0 : i32, i32
  }
  func.func @transform_7(%arg0: i32) -> (i32, i32, i32) {
    %c0_i32 = arith.constant 0 : i32
    %c0_i32_0 = arith.constant 0 : i32
    %c0_i32_1 = arith.constant 0 : i32
    return %arg0, %c0_i32, %c0_i32_0 : i32, i32, i32
  }
}

</mosaic_0001>

<llo_original>
// kernel: tpu_custom_call.1
$region0: #{tpu_custom_call.1}
  #allocation0 [shape = 'u32[]', space=smem, size = 0x4, offset = 0x4, fixed_abs, tag = 'smem constant byte address 0x4 - core index']
  #allocation1 [shape = 'u32[144,128]{1,0:T(1,128)}', space=vmem, size = 0x12000, scoped, tag = 'internal scratch']
  #allocation2 [shape = 'bf16[2304,256]{1,0:T(16,128)(2,1)}', space=vmem, size = 0x120000, scoped, tag = 'scratch operand']
  #allocation3 [shape = 'bf16[1536,512]{1,0:T(16,128)(2,1)}', space=vmem, size = 0x180000, scoped, tag = 'scratch operand']
  #allocation4 [shape = 's32[2]{0}', space=sflag, size = 0x8, scoped, tag = 'scratch operand']
  #allocation15 [shape = 's32[]', space=sflag, size = 0x4, offset = 0, fixed_abs, tag = 'sflag constant byte address 0x0 - dummy sync flag']
  #allocation17 [shape = 's32[]', space=sflag, size = 0x4, offset = 0, fixed_abs, tag = 'sflag constant byte address 0x0 - dummy sync flag']
  %s0 = inlined_call_operand.hbm [shape: f32[2,16,128], index: 0, kind: input, shape index: {}]
  %s1 = inlined_call_operand.hbm [shape: bf16[4864,128], index: 1, kind: input, shape index: {}]
  %s2 = inlined_call_operand.hbm [shape: f32[1,3072], index: 2, kind: input, shape index: {}]
  %s3 = inlined_call_operand.hbm [shape: bf16[32,32], index: 3, kind: input, shape index: {}]
  %s4 = inlined_call_operand.hbm [shape: bf16[64,64], index: 4, kind: input, shape index: {}]
  %s5 = inlined_call_operand.hbm [shape: bf16[2304,256], index: 5, kind: input, shape index: {}]
  %s6 = inlined_call_operand.hbm [shape: bf16[1536,512], index: 6, kind: input, shape index: {}]
  %s7 = inlined_call_operand.hbm [shape: f32[2,64,256], index: 7, kind: output, shape index: {}]
  %s8 = sld [smem:[#allocation0]]
  $region73: #{tpu_custom_call.1} parent=0
    _
  %s10 = ssub.s32 1, %s8
  %s11 = scalar_select 0, %s10, %s8
  $region1: #{tpu_custom_call.1} parent=0
    #allocation5 [shape = 'u8[16384]{0}', space=vmem, size = 0x4000, scoped, tag = 'input window, operand 0']
    #allocation6 [shape = 's32[2]{0}', space=sflag, size = 0x8, scoped, tag = 'scoped memory for tpu_custom_call.1']
    #allocation7 [shape = 's32[2]{0}', space=sflag, size = 0x8, scoped, tag = 'scoped memory for tpu_custom_call.1']
    #allocation8 [shape = 'u8[1245184]{0}', space=vmem, size = 0x130000, scoped, tag = 'input window, operand 1, single buffered']
    #allocation9 [shape = 's32[1]{0}', space=sflag, size = 0x4, scoped, tag = 'scoped memory for tpu_custom_call.1']
    #allocation10 [shape = 'u8[12288]{0}', space=vmem, size = 0x3000, scoped, tag = 'input window, operand 2, single buffered']
    #allocation11 [shape = 'u8[8192]{0}', space=vmem, size = 0x2000, scoped, tag = 'input window, operand 3, single buffered']
    #allocation12 [shape = 's32[1]{0}', space=sflag, size = 0x4, scoped, tag = 'scoped memory for tpu_custom_call.1']
    #allocation13 [shape = 'u8[16384]{0}', space=vmem, size = 0x4000, scoped, tag = 'input window, operand 4, single buffered']
    #allocation14 [shape = 'u8[131072]{0}', space=vmem, size = 0x20000, scoped, tag = 'output window, operand 0']
    %12 = vsyncpa [#allocation6], 0
    %s13 = scalar_lea.sflag [#allocation6], 1
    %14 = vsyncpa %s13, 0
    %15 = vsyncpa [#allocation9], 0
    %16 = vsyncpa [#allocation12], 0
    %17 = vsyncpa [#allocation7], 0
    %s18 = scalar_lea.sflag [#allocation7], 1
    %19 = vsyncpa %s18, 0
    loop: start=0, step=1, limit=4
    $region2: #{tpu_custom_call.1} parent=1 // loop_pre_header
      _
    $region3: #{tpu_custom_call.1} parent=1 // loop_header
      %s21 = sphi 0, %s25
      %p22 = scmp.ge.s32.totalorder %s21, 4
      %s31 = sphi 0, %s33
      %s34 = sphi 0, %s31
      %s35 = sphi 0, %s34
      %s51 = sphi 0, %s35
      %s55 = sphi 0, %s55
      %s57 = sphi 0, %s55
      %s58 = sphi 0, %s57
      %s72 = sphi 0, %s58
      %s76 = sphi 0, %s76
      %s78 = sphi 0, %s76
      %s79 = sphi 0, %s78
      %s93 = sphi 0, %s79
      %s97 = sphi 0, %s97
      %s99 = sphi 0, %s97
      %s100 = sphi 0, %s99
      %s114 = sphi 0, %s100
      %s118 = sphi 0, %s118
      %s120 = sphi 0, %s118
      %s121 = sphi 0, %s120
      %s135 = sphi 0, %s121
      %s141 = sphi 0, %s143
      %s144 = sphi 0, %s141
      %s145 = sphi 0, %s144
      %s161 = sphi 0, %s145
    $region4: #{tpu_custom_call.1} parent=1 // loop_header_branch
      %24 = sbr.rel (%p22) target = $region8
    $region5: #{tpu_custom_call.1} parent=1 // loop_body
      %s26 = ssub.s32 %s21, 1
      %s27 = ssub.s32 %s21, 2
      %s28 = sadd.s32 %s21, 1
      %s29 = ssub.s32 %s21, %s28
      %p30 = scmp.eq.s32.totalorder %s29, 0
      %s32 = sadd.s32 %s31, 1
      %s33 = scalar_select %p30, %s31, %s32
      %p36 = pneg %p30
      %p37 = scmp.eq.s32.totalorder %s21, 1
      %p38 = por %p36, %p37
      %p39 = scmp.ne.s32.totalorder %s31, %s34
      %p40 = scmp.eq.s32.totalorder %s21, 0
      %p41 = por %p39, %p40
      %p42 = scmp.ne.s32.totalorder %s31, %s34
      %p43 = scmp.eq.s32.totalorder %s26, 1
      %p44 = por %p42, %p43
      %p45 = scmp.ne.s32.totalorder %s34, %s35
      %p46 = scmp.eq.s32.totalorder %s26, 0
      %p47 = por %p45, %p46
      %p48 = scmp.ne.s32.totalorder %s34, %s35
      %p49 = scmp.eq.s32.totalorder %s27, 1
      %p50 = por %p48, %p49
      %p52 = scmp.ne.s32.totalorder %s35, %s51
      %p53 = scmp.eq.s32.totalorder %s27, 0
      %p54 = por %p52, %p53
      %s56 = sadd.s32 %s55, 1
      %p59 = scmp.eq.s32.totalorder %s21, 1
      %p60 = scmp.ne.s32.totalorder %s55, %s57
      %p61 = scmp.eq.s32.totalorder %s21, 0
      %p62 = por %p60, %p61
      %p63 = scmp.ne.s32.totalorder %s55, %s57
      %p64 = scmp.eq.s32.totalorder %s26, 1
      %p65 = por %p63, %p64
      %p66 = scmp.ne.s32.totalorder %s57, %s58
      %p67 = scmp.eq.s32.totalorder %s26, 0
      %p68 = por %p66, %p67
      %p69 = scmp.ne.s32.totalorder %s57, %s58
      %p70 = scmp.eq.s32.totalorder %s27, 1
      %p71 = por %p69, %p70
      %p73 = scmp.ne.s32.totalorder %s58, %s72
      %p74 = scmp.eq.s32.totalorder %s27, 0
      %p75 = por %p73, %p74
      %s77 = sadd.s32 %s76, 1
      %p80 = scmp.eq.s32.totalorder %s21, 1
      %p81 = scmp.ne.s32.totalorder %s76, %s78
      %p82 = scmp.eq.s32.totalorder %s21, 0
      %p83 = por %p81, %p82
      %p84 = scmp.ne.s32.totalorder %s76, %s78
      %p85 = scmp.eq.s32.totalorder %s26, 1
      %p86 = por %p84, %p85
      %p87 = scmp.ne.s32.totalorder %s78, %s79
      %p88 = scmp.eq.s32.totalorder %s26, 0
      %p89 = por %p87, %p88
      %p90 = scmp.ne.s32.totalorder %s78, %s79
      %p91 = scmp.eq.s32.totalorder %s27, 1
      %p92 = por %p90, %p91
      %p94 = scmp.ne.s32.totalorder %s79, %s93
      %p95 = scmp.eq.s32.totalorder %s27, 0
      %p96 = por %p94, %p95
      %s98 = sadd.s32 %s97, 1
      %p101 = scmp.eq.s32.totalorder %s21, 1
      %p102 = scmp.ne.s32.totalorder %s97, %s99
      %p103 = scmp.eq.s32.totalorder %s21, 0
      %p104 = por %p102, %p103
      %p105 = scmp.ne.s32.totalorder %s97, %s99
      %p106 = scmp.eq.s32.totalorder %s26, 1
      %p107 = por %p105, %p106
      %p108 = scmp.ne.s32.totalorder %s99, %s100
      %p109 = scmp.eq.s32.totalorder %s26, 0
      %p110 = por %p108, %p109
      %p111 = scmp.ne.s32.totalorder %s99, %s100
      %p112 = scmp.eq.s32.totalorder %s27, 1
      %p113 = por %p111, %p112
      %p115 = scmp.ne.s32.totalorder %s100, %s114
      %p116 = scmp.eq.s32.totalorder %s27, 0
      %p117 = por %p115, %p116
      %s119 = sadd.s32 %s118, 1
      %p122 = scmp.eq.s32.totalorder %s21, 1
      %p123 = scmp.ne.s32.totalorder %s118, %s120
      %p124 = scmp.eq.s32.totalorder %s21, 0
      %p125 = por %p123, %p124
      %p126 = scmp.ne.s32.totalorder %s118, %s120
      %p127 = scmp.eq.s32.totalorder %s26, 1
      %p128 = por %p126, %p127
      %p129 = scmp.ne.s32.totalorder %s120, %s121
      %p130 = scmp.eq.s32.totalorder %s26, 0
      %p131 = por %p129, %p130
      %p132 = scmp.ne.s32.totalorder %s120, %s121
      %p133 = scmp.eq.s32.totalorder %s27, 1
      %p134 = por %p132, %p133
      %p136 = scmp.ne.s32.totalorder %s121, %s135
      %p137 = scmp.eq.s32.totalorder %s27, 0
      %p138 = por %p136, %p137
      %s139 = ssub.s32 %s21, %s28
      %p140 = scmp.eq.s32.totalorder %s139, 0
      %s142 = sadd.s32 %s141, 1
      %s143 = scalar_select %p140, %s141, %s142
      %p146 = pneg %p140
      %p147 = scmp.eq.s32.totalorder %s21, 1
      %p148 = por %p146, %p147
      %p149 = scmp.ne.s32.totalorder %s141, %s144
      %p150 = scmp.eq.s32.totalorder %s21, 0
      %p151 = por %p149, %p150
      %p152 = scmp.ne.s32.totalorder %s141, %s144
      %p153 = scmp.eq.s32.totalorder %s26, 1
      %p154 = por %p152, %p153
      %p155 = scmp.ne.s32.totalorder %s144, %s145
      %p156 = scmp.eq.s32.totalorder %s26, 0
      %p157 = por %p155, %p156
      %p158 = scmp.ne.s32.totalorder %s144, %s145
      %p159 = scmp.eq.s32.totalorder %s27, 1
      %p160 = por %p158, %p159
      %p162 = scmp.ne.s32.totalorder %s145, %s161
      %p163 = scmp.eq.s32.totalorder %s27, 0
      %p164 = por %p162, %p163
      %p165 = scmp.le.s32.totalorder 1, %s21
      %p166 = scmp.lt.s32.totalorder %s21, 3
      %p167 = pnand %p165, %p166
      %p168 = pneg %p167
      // Predicated region
      $region9: #{tpu_custom_call.1} parent=5 // pred_check
        _
      $region10: #{tpu_custom_call.1} parent=5 // pred_check_branch
        %170 = sbr.rel (%p167) target = $region12
      $region11: #{tpu_custom_call.1} parent=5 // pred_region
        %s171 = ssub.s32 %s21, 1
        // Predicated region
        $region13: #{tpu_custom_call.1} parent=11 // pred_check
          %p172 = pneg %p68
        $region14: #{tpu_custom_call.1} parent=11 // pred_check_branch
          %174 = sbr.rel (%p172) target = $region16
        $region15: #{tpu_custom_call.1} parent=11 // pred_region
          %s176 = ssub.s32 38912, 38912
          %177 = vsyncadd [#allocation9], %s176
          %s178 = sshll.u32 [#allocation8], 4
          %s179 = int_to_ptr.vmem [resolvable:$true] %s178
          %184 = dma.hbm_to_vmem [thread:$0]  %s1, 38912, %s179, [#allocation9], 64, 64, 4
        $region16: #{tpu_custom_call.1} parent=11 // pred_fallthru
          _
        // Predicated region
        $region17: #{tpu_custom_call.1} parent=11 // pred_check
          %p185 = pneg %p89
        $region18: #{tpu_custom_call.1} parent=11 // pred_check_branch
          %187 = sbr.rel (%p185) target = $region20
        $region19: #{tpu_custom_call.1} parent=11 // pred_region
          %s189 = ssub.s32 384, 384
          %190 = vsyncadd [#allocation9], %s189
          %s192 = sshll.u32 [#allocation10], 4
          %s193 = int_to_ptr.vmem [resolvable:$true] %s192
          %195 = dma.hbm_to_vmem [thread:$0]  %s2, 384, %s193, [#allocation9]
        $region20: #{tpu_custom_call.1} parent=11 // pred_fallthru
          _
        // Predicated region
        $region21: #{tpu_custom_call.1} parent=11 // pred_check
          %p196 = pneg %p110
        $region22: #{tpu_custom_call.1} parent=11 // pred_check_branch
          %198 = sbr.rel (%p196) target = $region24
        $region23: #{tpu_custom_call.1} parent=11 // pred_region
          %s200 = ssub.s32 256, 256
          %201 = vsyncadd [#allocation12], %s200
          %s202 = sshll.u32 [#allocation11], 4
          %s203 = int_to_ptr.vmem [resolvable:$true] %s202
          %208 = dma.hbm_to_vmem [thread:$0]  %s3, 256, %s203, [#allocation12], 64, 64, 4
        $region24: #{tpu_custom_call.1} parent=11 // pred_fallthru
          _
        // Predicated region
        $region25: #{tpu_custom_call.1} parent=11 // pred_check
          %p209 = pneg %p131
        $region26: #{tpu_custom_call.1} parent=11 // pred_check_branch
          %211 = sbr.rel (%p209) target = $region28
        $region27: #{tpu_custom_call.1} parent=11 // pred_region
          %s213 = ssub.s32 512, 512
          %214 = vsyncadd [#allocation12], %s213
          %s215 = sshll.u32 [#allocation13], 4
          %s216 = int_to_ptr.vmem [resolvable:$true] %s215
          %221 = dma.hbm_to_vmem [thread:$0]  %s4, 512, %s216, [#allocation12], 64, 64, 4
        $region28: #{tpu_custom_call.1} parent=11 // pred_fallthru
          _
      $region12: #{tpu_custom_call.1} parent=5 // pred_fallthru
        _
      %p222 = scmp.lt.s32.totalorder %s21, 2
      // Predicated region
      $region29: #{tpu_custom_call.1} parent=5 // pred_check
        %p223 = pneg %p222
      $region30: #{tpu_custom_call.1} parent=5 // pred_check_branch
        %225 = sbr.rel (%p223) target = $region32
      $region31: #{tpu_custom_call.1} parent=5 // pred_region
        // Predicated region
        $region33: #{tpu_custom_call.1} parent=31 // pred_check
          %p226 = pneg %p41
        $region34: #{tpu_custom_call.1} parent=31 // pred_check_branch
          %228 = sbr.rel (%p226) target = $region36
        $region35: #{tpu_custom_call.1} parent=31 // pred_region
          %s229 = sand.u32 %s31, 1
          %s230 = scalar_lea.sflag [#allocation6], %s229
          %s231 = sand.u32 %s31, 1
          %s232 = smul.addr %s231, 16
          %s233 = scalar_lea.vmem [#allocation5], %s232
          %s235 = ssub.s32 256, 256
          %236 = vsyncadd %s230, %s235
          %s237 = smul.addr %s21, 2
          %s238 = smul.addr %s237, 128
          %s239 = scalar_lea.hbm %s0, %s238
          %s240 = sshll.u32 %s233, 4
          %s241 = int_to_ptr.vmem [resolvable:$true] %s240
          %246 = dma.hbm_to_vmem [thread:$0]  %s239, 256, %s241, %s230, 128, 128, 8
        $region36: #{tpu_custom_call.1} parent=31 // pred_fallthru
          _
      $region32: #{tpu_custom_call.1} parent=5 // pred_fallthru
        _
      %p247 = scmp.le.s32.totalorder 1, %s21
      %p248 = scmp.lt.s32.totalorder %s21, 3
      %p249 = pnand %p247, %p248
      %p250 = pneg %p249
      // Predicated region
      $region37: #{tpu_custom_call.1} parent=5 // pred_check
        _
      $region38: #{tpu_custom_call.1} parent=5 // pred_check_branch
        %252 = sbr.rel (%p249) target = $region40
      $region39: #{tpu_custom_call.1} parent=5 // pred_region
        #allocation16 [shape = 'u32[9]{0}', space=smem, size = 0x24, scoped, tag = 'DMA stride descriptor']
        #allocation18 [shape = 'u32[9]{0}', space=smem, size = 0x24, scoped, tag = 'DMA stride descriptor']
        %s253 = ssub.s32 %s21, 1
        %s254 = sand.u32 %s34, 1
        %s255 = scalar_lea.sflag [#allocation6], %s254
        %s256 = sand.u32 %s34, 1
        %s257 = smul.addr %s256, 16
        %s258 = scalar_lea.vmem [#allocation5], %s257
        // Predicated region
        $region41: #{tpu_custom_call.1} parent=39 // pred_check
          %p259 = pneg %p47
        $region42: #{tpu_custom_call.1} parent=39 // pred_check_branch
          %261 = sbr.rel (%p259) target = $region44
        $region43: #{tpu_custom_call.1} parent=39 // pred_region
          %262 = dma.done %s255, 256
        $region44: #{tpu_custom_call.1} parent=39 // pred_fallthru
          _
        // Predicated region
        $region45: #{tpu_custom_call.1} parent=39 // pred_check
          %p263 = pneg %p68
        $region46: #{tpu_custom_call.1} parent=39 // pred_check_branch
          %265 = sbr.rel (%p263) target = $region48
        $region47: #{tpu_custom_call.1} parent=39 // pred_region
          %266 = dma.done [#allocation9], 38912
        $region48: #{tpu_custom_call.1} parent=39 // pred_fallthru
          _
        // Predicated region
        $region49: #{tpu_custom_call.1} parent=39 // pred_check
          %p267 = pneg %p89
        $region50: #{tpu_custom_call.1} parent=39 // pred_check_branch
          %269 = sbr.rel (%p267) target = $region52
        $region51: #{tpu_custom_call.1} parent=39 // pred_region
          %270 = dma.done [#allocation9], 384
        $region52: #{tpu_custom_call.1} parent=39 // pred_fallthru
          _
        // Predicated region
        $region53: #{tpu_custom_call.1} parent=39 // pred_check
          %p271 = pneg %p110
        $region54: #{tpu_custom_call.1} parent=39 // pred_check_branch
          %273 = sbr.rel (%p271) target = $region56
        $region55: #{tpu_custom_call.1} parent=39 // pred_region
          %274 = dma.done [#allocation12], 256
        $region56: #{tpu_custom_call.1} parent=39 // pred_fallthru
          _
        // Predicated region
        $region57: #{tpu_custom_call.1} parent=39 // pred_check
          %p275 = pneg %p131
        $region58: #{tpu_custom_call.1} parent=39 // pred_check_branch
          %277 = sbr.rel (%p275) target = $region60
        $region59: #{tpu_custom_call.1} parent=39 // pred_region
          %278 = dma.done [#allocation12], 512
        $region60: #{tpu_custom_call.1} parent=39 // pred_fallthru
          _
        %s279 = sand.u32 %s34, 1
        %s280 = scalar_lea.sflag [#allocation6], %s279
        %s281 = sand.u32 %s34, 1
        %s282 = smul.addr %s281, 16
        %s283 = scalar_lea.vmem [#allocation5], %s282
        %p284 = pneg %p47
        %p285 = pneg %p44
        %p286 = pneg %p68
        %p287 = pneg %p65
        %p288 = pneg %p89
        %p289 = pneg %p86
        %p290 = pneg %p110
        %p291 = pneg %p107
        %p292 = pneg %p131
        %p293 = pneg %p128
        %p294 = pneg %p157
        %p295 = pneg %p154
        %s296 = sand.u32 %s144, 1
        %s297 = scalar_lea.sflag [#allocation7], %s296
        %s298 = sand.u32 %s144, 1
        %s299 = smul.addr %s298, 128
        %s300 = scalar_lea.vmem [#allocation14], %s299
        %s303 = sshll.u32 1, 14
        %s304 = sxor.u32 4294967295, %s303
        %s306 = sld [smem:[#allocation0]]
        %s307 = sadd.s32 2, %s306
        %s309 = sshll.u32 7, 26
        %s310 = sxor.u32 4294967295, %s309
        %s311 = sand.u32 0, %s310
        %s312 = sshll.u32 %s307, 26
        %s313 = sor.u32 %s311, %s312
        %s314 = sshll.u32 [#allocation2], 4
        %s315 = int_to_ptr.vmem [resolvable:$true] %s314
        %318 = sst [smem:[#allocation16]] 256
        %s319 = scalar_lea.smem [#allocation16], 1
        %320 = sst [smem:[%s319]] 256
        %s321 = scalar_lea.smem [#allocation16], 2
        %322 = sst [smem:[%s321]] 2
        %s323 = scalar_lea.smem [#allocation16], 3
        %324 = sst [smem:[%s323]] 64
        %s325 = scalar_lea.smem [#allocation16], 4
        %326 = sst [smem:[%s325]] 128
        %s327 = scalar_lea.smem [#allocation16], 5
        %328 = sst [smem:[%s327]] 2
        %s329 = scalar_lea.smem [#allocation16], 6
        %330 = sst [smem:[%s329]] 128
        %s331 = scalar_lea.smem [#allocation16], 7
        %332 = sst [smem:[%s331]] 64
        %s333 = scalar_lea.smem [#allocation16], 8
        %334 = sst [smem:[%s333]] 4
        %336 = dma.general %s5, 36864, %s315, [#allocation4], [#allocation15], [#allocation16], %s313, 0
        %s337 = scalar_lea.sflag [#allocation4], 1
        %s339 = sshll.u32 1, 14
        %s340 = sxor.u32 4294967295, %s339
        %s342 = sadd.s32 2, %s306
        %s344 = sshll.u32 7, 26
        %s345 = sxor.u32 4294967295, %s344
        %s346 = sand.u32 0, %s345
        %s347 = sshll.u32 %s342, 26
        %s348 = sor.u32 %s346, %s347
        %s349 = sshll.u32 [#allocation3], 4
        %s350 = int_to_ptr.vmem [resolvable:$true] %s349
        %353 = sst [smem:[#allocation18]] 512
        %s354 = scalar_lea.smem [#allocation18], 1
        %355 = sst [smem:[%s354]] 512
        %s356 = scalar_lea.smem [#allocation18], 2
        %357 = sst [smem:[%s356]] 4
        %s358 = scalar_lea.smem [#allocation18], 3
        %359 = sst [smem:[%s358]] 64
        %s360 = scalar_lea.smem [#allocation18], 4
        %361 = sst [smem:[%s360]] 128
        %s362 = scalar_lea.smem [#allocation18], 5
        %363 = sst [smem:[%s362]] 2
        %s364 = scalar_lea.smem [#allocation18], 6
        %365 = sst [smem:[%s364]] 256
        %s366 = scalar_lea.smem [#allocation18], 7
        %367 = sst [smem:[%s366]] 64
        %s368 = scalar_lea.smem [#allocation18], 8
        %369 = sst [smem:[%s368]] 4
        %371 = dma.general %s6, 49152, %s350, %s337, [#allocation17], [#allocation18], %s348, 0
        %v372 = vld [vmem:[%s258] sm:$0xff]
        %v373 = vld [vmem:[%s258 + $0x8] sm:$0xff]
        %v374 = vrot.slane %v372, 7
        %v375 = vrot.slane %v373, 7
        %v376 = vlaneseq
        %v377 = vshrl.u32 %v376, 7
        %vm378 = vcmp.lt.s32.totalorder %v377, 1
        %v379 = vsel %vm378, %v374, %v375
        %v380 = vsel %vm378, %v375, %v374
        %v381 = vadd.s32 %v377, 8
        %vm382 = vcmp.ge.s32.totalorder %v377, 1
        %vm383 = vcmp.ge.s32.totalorder %v381, 1
        %v384 = vsel %vm382, 1, 0
        %v385 = vsel %vm383, 1, 0
        %vm386 = vcmp.eq.s32.totalorder %v384, 1
        %vm387 = vcmp.eq.s32.totalorder %v385, 1
        %v388 = vsel %vm386, %v380, 0.0
        %v389 = vsel %vm387, %v379, 0.0
        %v390 = vpack.c.bf16 %v389, %v388
        %v391 = vpack.c.bf16 %v373, %v372
        %v392 = vrot.slane %v372, 1
        %v393 = vrot.slane %v373, 1
        %vm394 = vcmp.lt.s32.totalorder %v377, 7
        %v395 = vsel %vm394, %v392, %v393
        %v396 = vsel %vm394, %v393, %v392
        %vm397 = vcmp.lt.s32.totalorder %v377, 15
        %vm398 = vcmp.lt.s32.totalorder %v381, 15
        %v399 = vsel %vm397, 1, 0
        %v400 = vsel %vm398, 1, 0
        %vm401 = vcmp.eq.s32.totalorder %v399, 1
        %vm402 = vcmp.eq.s32.totalorder %v400, 1
        %v403 = vsel %vm401, %v395, 0.0
        %v404 = vsel %vm402, %v396, 0.0
        %v405 = vpack.c.bf16 %v404, %v403
        %v406 = vld [vmem:[#allocation8] sm:$0xf]
        %v407 = vld [vmem:[#allocation8 + $0x4] sm:$0xf]
        %v408 = vld [vmem:[#allocation8 + $0x8] sm:$0xf]
        %v409 = vld [vmem:[#allocation8 + $0xc] sm:$0xf]
        %v410 = vld [vmem:[#allocation8 + $0x10] sm:$0xf]
        %v411 = vld [vmem:[#allocation8 + $0x14] sm:$0xf]
        %v412 = vld [vmem:[#allocation8 + $0x18] sm:$0xf]
        %v413 = vld [vmem:[#allocation8 + $0x1c] sm:$0xf]
        %v414 = vld [vmem:[#allocation8 + $0x20] sm:$0xf]
        %v415 = vld [vmem:[#allocation8 + $0x24] sm:$0xf]
        %v416 = vld [vmem:[#allocation8 + $0x28] sm:$0xf]
        %v417 = vld [vmem:[#allocation8 + $0x2c] sm:$0xf]
        %v418 = vld [vmem:[#allocation8 + $0x30] sm:$0xf]
        %v419 = vld [vmem:[#allocation8 + $0x34] sm:$0xf]
        %v420 = vld [vmem:[#allocation8 + $0x38] sm:$0xf]
        %v421 = vld [vmem:[#allocation8 + $0x3c] sm:$0xf]
        %v422 = vld [vmem:[#allocation8 + $0x40] sm:$0xf]
        %v423 = vld [vmem:[#allocation8 + $0x44] sm:$0xf]
        %v424 = vld [vmem:[#allocation8 + $0x48] sm:$0xf]
        %v425 = vld [vmem:[#allocation8 + $0x4c] sm:$0xf]
        %v426 = vld [vmem:[#allocation8 + $0x50] sm:$0xf]
        %v427 = vld [vmem:[#allocation8 + $0x54] sm:$0xf]
        %v428 = vld [vmem:[#allocation8 + $0x58] sm:$0xf]
        %v429 = vld [vmem:[#allocation8 + $0x5c] sm:$0xf]
        %v430 = vld [vmem:[#allocation8 + $0x60] sm:$0xf]
        %v431 = vld [vmem:[#allocation8 + $0x64] sm:$0xf]
        %v432 = vld [vmem:[#allocation8 + $0x68] sm:$0xf]
        %v433 = vld [vmem:[#allocation8 + $0x6c] sm:$0xf]
        %v434 = vld [vmem:[#allocation8 + $0x70] sm:$0xf]
        %v435 = vld [vmem:[#allocation8 + $0x74] sm:$0xf]
        %v436 = vld [vmem:[#allocation8 + $0x78] sm:$0xf]
        %v437 = vld [vmem:[#allocation8 + $0x7c] sm:$0xf]
        %v438 = vld [vmem:[#allocation8 + $0x80] sm:$0xf]
        %v439 = vld [vmem:[#allocation8 + $0x84] sm:$0xf]
        %v440 = vld [vmem:[#allocation8 + $0x88] sm:$0xf]
        %v441 = vld [vmem:[#allocation8 + $0x8c] sm:$0xf]
        %v442 = vld [vmem:[#allocation8 + $0x90] sm:$0xf]
        %v443 = vld [vmem:[#allocation8 + $0x94] sm:$0xf]
        %v444 = vld [vmem:[#allocation8 + $0x98] sm:$0xf]
        %v445 = vld [vmem:[#allocation8 + $0x9c] sm:$0xf]
        %v446 = vld [vmem:[#allocation8 + $0xa0] sm:$0xf]
        %v447 = vld [vmem:[#allocation8 + $0xa4] sm:$0xf]
        %v448 = vld [vmem:[#allocation8 + $0xa8] sm:$0xf]
        %v449 = vld [vmem:[#allocation8 + $0xac] sm:$0xf]
        %v450 = vld [vmem:[#allocation8 + $0xb0] sm:$0xf]
        %v451 = vld [vmem:[#allocation8 + $0xb4] sm:$0xf]
        %v452 = vld [vmem:[#allocation8 + $0xb8] sm:$0xf]
        %v453 = vld [vmem:[#allocation8 + $0xbc] sm:$0xf]
        %v454 = vld [vmem:[#allocation10] sm:$0x1]
        %v456 = vlaneseq
        %v457 = vshrl.u32 %v456, 7
        %v458 = vsub.s32 0, %v457
        %v459 = vrot.slane %v454, %v458
        %v509 = vunpack.c.l.b16 %v406
        %v510 = vunpack.c.l.b16 %v407
        %v511 = vunpack.c.l.b16 %v408
        %v512 = vunpack.c.l.b16 %v409
        %v513 = vunpack.c.l.b16 %v410
        %v514 = vunpack.c.l.b16 %v411
        %v515 = vunpack.c.l.b16 %v412
        %v516 = vunpack.c.l.b16 %v413
        %v517 = vunpack.c.l.b16 %v414
        %v518 = vunpack.c.l.b16 %v415
        %v519 = vunpack.c.l.b16 %v416
        %v520 = vunpack.c.l.b16 %v417
        %v521 = vunpack.c.l.b16 %v418
        %v522 = vunpack.c.l.b16 %v419
        %v523 = vunpack.c.l.b16 %v420
        %v524 = vunpack.c.l.b16 %v421
        %v525 = vunpack.c.l.b16 %v422
        %v526 = vunpack.c.l.b16 %v423
        %v527 = vunpack.c.l.b16 %v424
        %v528 = vunpack.c.l.b16 %v425
        %v529 = vunpack.c.l.b16 %v426
        %v530 = vunpack.c.l.b16 %v427
        %v531 = vunpack.c.l.b16 %v428
        %v532 = vunpack.c.l.b16 %v429
        %v533 = vunpack.c.l.b16 %v430
        %v534 = vunpack.c.l.b16 %v431
        %v535 = vunpack.c.l.b16 %v432
        %v536 = vunpack.c.l.b16 %v433
        %v537 = vunpack.c.l.b16 %v434
        %v538 = vunpack.c.l.b16 %v435
        %v539 = vunpack.c.l.b16 %v436
        %v540 = vunpack.c.l.b16 %v437
        %v541 = vunpack.c.l.b16 %v438
        %v542 = vunpack.c.l.b16 %v439
        %v543 = vunpack.c.l.b16 %v440
        %v544 = vunpack.c.l.b16 %v441
        %v545 = vunpack.c.l.b16 %v442
        %v546 = vunpack.c.l.b16 %v443
        %v547 = vunpack.c.l.b16 %v444
        %v548 = vunpack.c.l.b16 %v445
        %v549 = vunpack.c.l.b16 %v446
        %v550 = vunpack.c.l.b16 %v447
        %v551 = vunpack.c.l.b16 %v448
        %v552 = vunpack.c.l.b16 %v449
        %v553 = vunpack.c.l.b16 %v450
        %v554 = vunpack.c.l.b16 %v451
        %v555 = vunpack.c.l.b16 %v452
        %v556 = vunpack.c.l.b16 %v453
        %v557 = vpack.c.b16 %v510, %v509
        %v558 = vpack.c.b16 %v512, %v511
        %v559 = vpack.c.b16 %v514, %v513
        %v560 = vpack.c.b16 %v516, %v515
        %v561 = vpack.c.b16 %v518, %v517
        %v562 = vpack.c.b16 %v520, %v519
        %v563 = vpack.c.b16 %v522, %v521
        %v564 = vpack.c.b16 %v524, %v523
        %v565 = vpack.c.b16 %v526, %v525
        %v566 = vpack.c.b16 %v528, %v527
        %v567 = vpack.c.b16 %v530, %v529
        %v568 = vpack.c.b16 %v532, %v531
        %v569 = vpack.c.b16 %v534, %v533
        %v570 = vpack.c.b16 %v536, %v535
        %v571 = vpack.c.b16 %v538, %v537
        %v572 = vpack.c.b16 %v540, %v539
        %v573 = vpack.c.b16 %v542, %v541
        %v574 = vpack.c.b16 %v544, %v543
        %v575 = vpack.c.b16 %v546, %v545
        %v576 = vpack.c.b16 %v548, %v547
        %v577 = vpack.c.b16 %v550, %v549
        %v578 = vpack.c.b16 %v552, %v551
        %v579 = vpack.c.b16 %v554, %v553
        %v580 = vpack.c.b16 %v556, %v555
        %605 = vmatprep.subr.bf16.mxu0 0
        %606 = vmatpush1.bf16.msra.mxu0 %v557
        %607 = vmatprep.subr.bf16.mxu0 0
        %608 = vmatpush1.bf16.msra.mxu0 %v558
        %609 = vmatprep.subr.bf16.mxu0 0
        %610 = vmatpush1.bf16.msra.mxu0 %v559
        %611 = vmatprep.subr.bf16.mxu0 0
        %612 = vmatpush1.bf16.msra.mxu0 %v560
        %613 = vmatprep.subr.bf16.mxu0 0
        %614 = vmatpush1.bf16.msra.mxu0 %v561
        %615 = vmatprep.subr.bf16.mxu0 0
        %616 = vmatpush1.bf16.msra.mxu0 %v562
        %617 = vmatprep.subr.bf16.mxu0 0
        %618 = vmatpush1.bf16.msra.mxu0 %v563
        %619 = vmatprep.subr.bf16.mxu0 0
        %620 = vmatpush1.bf16.msra.mxu0 %v564
        %621 = vmatprep.subr.bf16.mxu0 0
        %622 = vmatpush1.bf16.msra.mxu0 %v565
        %623 = vmatprep.subr.bf16.mxu0 0
        %624 = vmatpush1.bf16.msra.mxu0 %v566
        %625 = vmatprep.subr.bf16.mxu0 0
        %626 = vmatpush1.bf16.msra.mxu0 %v567
        %627 = vmatprep.subr.bf16.mxu0 0
        %628 = vmatpush1.bf16.msra.mxu0 %v568
        %629 = vmatprep.subr.bf16.mxu0 0
        %630 = vmatpush1.bf16.msra.mxu0 %v569
        %631 = vmatprep.subr.bf16.mxu0 0
        %632 = vmatpush1.bf16.msra.mxu0 %v570
        %633 = vmatprep.subr.bf16.mxu0 0
        %634 = vmatpush1.bf16.msra.mxu0 %v571
        %635 = vmatprep.subr.bf16.mxu0 0
        %636 = vmatpush1.bf16.msra.mxu0 %v572
        %637 = vmatprep.mubr.bf16.mxu0 %v391
        %638 = vmatmul.mubr.bf16.gmra.mrb[0].mxu0 %v390
        %v639 = vpop.f32.mrb[0].mxu0
        %v640 = vadd.f32 %v459, %v639
        %v641 = vpop.f32.mrb[0].mxu0
        %v642 = vpop.f32.mrb[0].mxu0
        %v643 = vadd.f32 %v459, %v642
        %v644 = vpop.f32.mrb[0].mxu0
        %645 = vdwg.mxu0
        %646 = vmatprep.subr.bf16.mxu0 0
        %647 = vmatpush1.bf16.msra.mxu0 %v573
        %648 = vmatprep.subr.bf16.mxu0 0
        %649 = vmatpush1.bf16.msra.mxu0 %v574
        %650 = vmatprep.subr.bf16.mxu0 0
        %651 = vmatpush1.bf16.msra.mxu0 %v575
        %652 = vmatprep.subr.bf16.mxu0 0
        %653 = vmatpush1.bf16.msra.mxu0 %v576
        %654 = vmatprep.subr.bf16.mxu0 0
        %655 = vmatpush1.bf16.msra.mxu0 %v577
        %656 = vmatprep.subr.bf16.mxu0 0
        %657 = vmatpush1.bf16.msra.mxu0 %v578
        %658 = vmatprep.subr.bf16.mxu0 0
        %659 = vmatpush1.bf16.msra.mxu0 %v579
        %660 = vmatprep.subr.bf16.mxu0 0
        %661 = vmatpush1.bf16.msra.mxu0 %v580
        %662 = vmatprep.subr.bf16.mxu0 0
        %663 = vmatpush1.bf16.msra.mxu0 0
        %664 = vmatprep.subr.bf16.mxu0 0
        %665 = vmatpush1.bf16.msra.mxu0 0
        %666 = vmatprep.subr.bf16.mxu0 0
        %667 = vmatpush1.bf16.msra.mxu0 0
        %668 = vmatprep.subr.bf16.mxu0 0
        %669 = vmatpush1.bf16.msra.mxu0 0
        %670 = vmatprep.subr.bf16.mxu0 0
        %671 = vmatpush1.bf16.msra.mxu0 0
        %672 = vmatprep.subr.bf16.mxu0 0
        %673 = vmatpush1.bf16.msra.mxu0 0
        %674 = vmatprep.subr.bf16.mxu0 0
        %675 = vmatpush1.bf16.msra.mxu0 0
        %676 = vmatprep.subr.bf16.mxu0 0
        %677 = vmatpush1.bf16.msra.mxu0 0
        %678 = vmatprep.mubr.bf16.mxu0 0
        %679 = vmatmul.mubr.bf16.gmra.mrb[0].mxu0 %v405
        %v680 = vpop.f32.mrb[0].mxu0
        %v681 = vadd.f32 %v640, %v680
        %v682 = vpop.f32.mrb[0].mxu0
        %v683 = vpop.f32.mrb[0].mxu0
        %v684 = vadd.f32 %v643, %v683
        %v685 = vpop.f32.mrb[0].mxu0
        %686 = vdwg.mxu0
        %v687 = vrot.slane %v681, 6
        %v688 = vrot.slane %v684, 6
        %vm689 = vcmp.lt.s32.totalorder %v377, 2
        %v690 = vsel %vm689, %v687, %v688
        %v691 = vsel %vm689, %v688, %v687
        %vm692 = vcmp.ge.s32.totalorder %v377, 2
        %vm693 = vcmp.ge.s32.totalorder %v381, 2
        %v694 = vsel %vm692, 1, 0
        %v695 = vsel %vm693, 1, 0
        %vm696 = vcmp.eq.s32.totalorder %v694, 1
        %vm697 = vcmp.eq.s32.totalorder %v695, 1
        %v698 = vsel %vm696, %v691, 0.0
        %v699 = vsel %vm697, %v690, 0.0
        %v700 = vpack.c.bf16 %v699, %v698
        %v701 = vrot.slane %v681, 7
        %v702 = vrot.slane %v684, 7
        %v703 = vsel %vm378, %v701, %v702
        %v704 = vsel %vm378, %v702, %v701
        %v705 = vsel %vm386, %v704, 0.0
        %v706 = vsel %vm387, %v703, 0.0
        %v707 = vpack.c.bf16 %v706, %v705
        %v708 = vpack.c.bf16 %v684, %v681
        %v709 = vrot.slane %v681, 1
        %v710 = vrot.slane %v684, 1
        %v711 = vsel %vm394, %v709, %v710
        %v712 = vsel %vm394, %v710, %v709
        %v713 = vsel %vm401, %v711, 0.0
        %v714 = vsel %vm402, %v712, 0.0
        %v715 = vpack.c.bf16 %v714, %v713
        %v716 = vrot.slane %v681, 2
        %v717 = vrot.slane %v684, 2
        %vm718 = vcmp.lt.s32.totalorder %v377, 6
        %v719 = vsel %vm718, %v716, %v717
        %v720 = vsel %vm718, %v717, %v716
        %vm721 = vcmp.lt.s32.totalorder %v377, 14
        %vm722 = vcmp.lt.s32.totalorder %v381, 14
        %v723 = vsel %vm721, 1, 0
        %v724 = vsel %vm722, 1, 0
        %vm725 = vcmp.eq.s32.totalorder %v723, 1
        %vm726 = vcmp.eq.s32.totalorder %v724, 1
        %v727 = vsel %vm725, %v719, 0.0
        %v728 = vsel %vm726, %v720, 0.0
        %v729 = vpack.c.bf16 %v728, %v727
        %v730 = vld [vmem:[#allocation8 + $0xc0] sm:$0xf]
        %v731 = vld [vmem:[#allocation8 + $0xc4] sm:$0xf]
        %v732 = vld [vmem:[#allocation8 + $0xc8] sm:$0xf]
        %v733 = vld [vmem:[#allocation8 + $0xcc] sm:$0xf]
        %v734 = vld [vmem:[#allocation8 + $0xd0] sm:$0xf]
        %v735 = vld [vmem:[#allocation8 + $0xd4] sm:$0xf]
        %v736 = vld [vmem:[#allocation8 + $0xd8] sm:$0xf]
        %v737 = vld [vmem:[#allocation8 + $0xdc] sm:$0xf]
        %v738 = vld [vmem:[#allocation8 + $0xe0] sm:$0xf]
        %v739 = vld [vmem:[#allocation8 + $0xe4] sm:$0xf]
        %v740 = vld [vmem:[#allocation8 + $0xe8] sm:$0xf]
        %v741 = vld [vmem:[#allocation8 + $0xec] sm:$0xf]
        %v742 = vld [vmem:[#allocation8 + $0xf0] sm:$0xf]
        %v743 = vld [vmem:[#allocation8 + $0xf4] sm:$0xf]
        %v744 = vld [vmem:[#allocation8 + $0xf8] sm:$0xf]
        %v745 = vld [vmem:[#allocation8 + $0xfc] sm:$0xf]
        %v746 = vld [vmem:[#allocation8 + $0x100] sm:$0xf]
        %v747 = vld [vmem:[#allocation8 + $0x104] sm:$0xf]
        %v748 = vld [vmem:[#allocation8 + $0x108] sm:$0xf]
        %v749 = vld [vmem:[#allocation8 + $0x10c] sm:$0xf]
        %v750 = vld [vmem:[#allocation8 + $0x110] sm:$0xf]
        %v751 = vld [vmem:[#allocation8 + $0x114] sm:$0xf]
        %v752 = vld [vmem:[#allocation8 + $0x118] sm:$0xf]
        %v753 = vld [vmem:[#allocation8 + $0x11c] sm:$0xf]
        %v754 = vld [vmem:[#allocation8 + $0x120] sm:$0xf]
        %v755 = vld [vmem:[#allocation8 + $0x124] sm:$0xf]
        %v756 = vld [vmem:[#allocation8 + $0x128] sm:$0xf]
        %v757 = vld [vmem:[#allocation8 + $0x12c] sm:$0xf]
        %v758 = vld [vmem:[#allocation8 + $0x130] sm:$0xf]
        %v759 = vld [vmem:[#allocation8 + $0x134] sm:$0xf]
        %v760 = vld [vmem:[#allocation8 + $0x138] sm:$0xf]
        %v761 = vld [vmem:[#allocation8 + $0x13c] sm:$0xf]
        %v762 = vld [vmem:[#allocation8 + $0x140] sm:$0xf]
        %v763 = vld [vmem:[#allocation8 + $0x144] sm:$0xf]
        %v764 = vld [vmem:[#allocation8 + $0x148] sm:$0xf]
        %v765 = vld [vmem:[#allocation8 + $0x14c] sm:$0xf]
        %v766 = vld [vmem:[#allocation8 + $0x150] sm:$0xf]
        %v767 = vld [vmem:[#allocation8 + $0x154] sm:$0xf]
        %v768 = vld [vmem:[#allocation8 + $0x158] sm:$0xf]
        %v769 = vld [vmem:[#allocation8 + $0x15c] sm:$0xf]
        %v770 = vld [vmem:[#allocation8 + $0x160] sm:$0xf]
        %v771 = vld [vmem:[#allocation8 + $0x164] sm:$0xf]
        %v772 = vld [vmem:[#allocation8 + $0x168] sm:$0xf]
        %v773 = vld [vmem:[#allocation8 + $0x16c] sm:$0xf]
        %v774 = vld [vmem:[#allocation8 + $0x170] sm:$0xf]
        %v775 = vld [vmem:[#allocation8 + $0x174] sm:$0xf]
        %v776 = vld [vmem:[#allocation8 + $0x178] sm:$0xf]
        %v777 = vld [vmem:[#allocation8 + $0x17c] sm:$0xf]
        %v778 = vld [vmem:[#allocation8 + $0x180] sm:$0xf]
        %v779 = vld [vmem:[#allocation8 + $0x184] sm:$0xf]
        %v780 = vld [vmem:[#allocation8 + $0x188] sm:$0xf]
        %v781 = vld [vmem:[#allocation8 + $0x18c] sm:$0xf]
        %v782 = vld [vmem:[#allocation8 + $0x190] sm:$0xf]
        %v783 = vld [vmem:[#allocation8 + $0x194] sm:$0xf]
        %v784 = vld [vmem:[#allocation8 + $0x198] sm:$0xf]
        %v785 = vld [vmem:[#allocation8 + $0x19c] sm:$0xf]
        %v786 = vld [vmem:[#allocation8 + $0x1a0] sm:$0xf]
        %v787 = vld [vmem:[#allocation8 + $0x1a4] sm:$0xf]
        %v788 = vld [vmem:[#allocation8 + $0x1a8] sm:$0xf]
        %v789 = vld [vmem:[#allocation8 + $0x1ac] sm:$0xf]
        %v790 = vld [vmem:[#allocation8 + $0x1b0] sm:$0xf]
        %v791 = vld [vmem:[#allocation8 + $0x1b4] sm:$0xf]
        %v792 = vld [vmem:[#allocation8 + $0x1b8] sm:$0xf]
        %v793 = vld [vmem:[#allocation8 + $0x1bc] sm:$0xf]
        %v794 = vld [vmem:[#allocation8 + $0x1c0] sm:$0xf]
        %v795 = vld [vmem:[#allocation8 + $0x1c4] sm:$0xf]
        %v796 = vld [vmem:[#allocation8 + $0x1c8] sm:$0xf]
        %v797 = vld [vmem:[#allocation8 + $0x1cc] sm:$0xf]
        %v798 = vld [vmem:[#allocation8 + $0x1d0] sm:$0xf]
        %v799 = vld [vmem:[#allocation8 + $0x1d4] sm:$0xf]
        %v800 = vld [vmem:[#allocation8 + $0x1d8] sm:$0xf]
        %v801 = vld [vmem:[#allocation8 + $0x1dc] sm:$0xf]
        %v802 = vld [vmem:[#allocation8 + $0x1e0] sm:$0xf]
        %v803 = vld [vmem:[#allocation8 + $0x1e4] sm:$0xf]
        %v804 = vld [vmem:[#allocation8 + $0x1e8] sm:$0xf]
        %v805 = vld [vmem:[#allocation8 + $0x1ec] sm:$0xf]
        %v806 = vld [vmem:[#allocation8 + $0x1f0] sm:$0xf]
        %v807 = vld [vmem:[#allocation8 + $0x1f4] sm:$0xf]
        %v808 = vld [vmem:[#allocation8 + $0x1f8] sm:$0xf]
        %v809 = vld [vmem:[#allocation8 + $0x1fc] sm:$0xf]
        %v810 = vld [vmem:[#allocation10 + $0x1] sm:$0x1]
        %v812 = vlaneseq
        %v813 = vshrl.u32 %v812, 7
        %v814 = vsub.s32 0, %v813
        %v815 = vrot.slane %v810, %v814
        %v897 = vunpack.c.l.b16 %v730
        %v898 = vunpack.c.l.b16 %v731
        %v899 = vunpack.c.l.b16 %v732
        %v900 = vunpack.c.l.b16 %v733
        %v901 = vunpack.c.l.b16 %v734
        %v902 = vunpack.c.l.b16 %v735
        %v903 = vunpack.c.l.b16 %v736
        %v904 = vunpack.c.l.b16 %v737
        %v905 = vunpack.c.l.b16 %v738
        %v906 = vunpack.c.l.b16 %v739
        %v907 = vunpack.c.l.b16 %v740
        %v908 = vunpack.c.l.b16 %v741
        %v909 = vunpack.c.l.b16 %v742
        %v910 = vunpack.c.l.b16 %v743
        %v911 = vunpack.c.l.b16 %v744
        %v912 = vunpack.c.l.b16 %v745
        %v913 = vunpack.c.l.b16 %v746
        %v914 = vunpack.c.l.b16 %v747
        %v915 = vunpack.c.l.b16 %v748
        %v916 = vunpack.c.l.b16 %v749
        %v917 = vunpack.c.l.b16 %v750
        %v918 = vunpack.c.l.b16 %v751
        %v919 = vunpack.c.l.b16 %v752
        %v920 = vunpack.c.l.b16 %v753
        %v921 = vunpack.c.l.b16 %v754
        %v922 = vunpack.c.l.b16 %v755
        %v923 = vunpack.c.l.b16 %v756
        %v924 = vunpack.c.l.b16 %v757
        %v925 = vunpack.c.l.b16 %v758
        %v926 = vunpack.c.l.b16 %v759
        %v927 = vunpack.c.l.b16 %v760
        %v928 = vunpack.c.l.b16 %v761
        %v929 = vunpack.c.l.b16 %v762
        %v930 = vunpack.c.l.b16 %v763
        %v931 = vunpack.c.l.b16 %v764
        %v932 = vunpack.c.l.b16 %v765
        %v933 = vunpack.c.l.b16 %v766
        %v934 = vunpack.c.l.b16 %v767
        %v935 = vunpack.c.l.b16 %v768
        %v936 = vunpack.c.l.b16 %v769
        %v937 = vunpack.c.l.b16 %v770
        %v938 = vunpack.c.l.b16 %v771
        %v939 = vunpack.c.l.b16 %v772
        %v940 = vunpack.c.l.b16 %v773
        %v941 = vunpack.c.l.b16 %v774
        %v942 = vunpack.c.l.b16 %v775
        %v943 = vunpack.c.l.b16 %v776
        %v944 = vunpack.c.l.b16 %v777
        %v945 = vunpack.c.l.b16 %v778
        %v946 = vunpack.c.l.b16 %v779
        %v947 = vunpack.c.l.b16 %v780
        %v948 = vunpack.c.l.b16 %v781
        %v949 = vunpack.c.l.b16 %v782
        %v950 = vunpack.c.l.b16 %v783
        %v951 = vunpack.c.l.b16 %v784
        %v952 = vunpack.c.l.b16 %v785
        %v953 = vunpack.c.l.b16 %v786
        %v954 = vunpack.c.l.b16 %v787
        %v955 = vunpack.c.l.b16 %v788
        %v956 = vunpack.c.l.b16 %v789
        %v957 = vunpack.c.l.b16 %v790
        %v958 = vunpack.c.l.b16 %v791
        %v959 = vunpack.c.l.b16 %v792
        %v960 = vunpack.c.l.b16 %v793
        %v961 = vunpack.c.l.b16 %v794
        %v962 = vunpack.c.l.b16 %v795
        %v963 = vunpack.c.l.b16 %v796
        %v964 = vunpack.c.l.b16 %v797
        %v965 = vunpack.c.l.b16 %v798
        %v966 = vunpack.c.l.b16 %v799
        %v967 = vunpack.c.l.b16 %v800
        %v968 = vunpack.c.l.b16 %v801
        %v969 = vunpack.c.l.b16 %v802
        %v970 = vunpack.c.l.b16 %v803
        %v971 = vunpack.c.l.b16 %v804
        %v972 = vunpack.c.l.b16 %v805
        %v973 = vunpack.c.l.b16 %v806
        %v974 = vunpack.c.l.b16 %v807
        %v975 = vunpack.c.l.b16 %v808
        %v976 = vunpack.c.l.b16 %v809
        %v977 = vpack.c.b16 %v898, %v897
        %v978 = vpack.c.b16 %v900, %v899
        %v979 = vpack.c.b16 %v902, %v901
        %v980 = vpack.c.b16 %v904, %v903
        %v981 = vpack.c.b16 %v906, %v905
        %v982 = vpack.c.b16 %v908, %v907
        %v983 = vpack.c.b16 %v910, %v909
        %v984 = vpack.c.b16 %v912, %v911
        %v985 = vpack.c.b16 %v914, %v913
        %v986 = vpack.c.b16 %v916, %v915
        %v987 = vpack.c.b16 %v918, %v917
        %v988 = vpack.c.b16 %v920, %v919
        %v989 = vpack.c.b16 %v922, %v921
        %v990 = vpack.c.b16 %v924, %v923
        %v991 = vpack.c.b16 %v926, %v925
        %v992 = vpack.c.b16 %v928, %v927
        %v993 = vpack.c.b16 %v930, %v929
        %v994 = vpack.c.b16 %v932, %v931
        %v995 = vpack.c.b16 %v934, %v933
        %v996 = vpack.c.b16 %v936, %v935
        %v997 = vpack.c.b16 %v938, %v937
        %v998 = vpack.c.b16 %v940, %v939
        %v999 = vpack.c.b16 %v942, %v941
        %v1000 = vpack.c.b16 %v944, %v943
        %v1001 = vpack.c.b16 %v946, %v945
        %v1002 = vpack.c.b16 %v948, %v947
        %v1003 = vpack.c.b16 %v950, %v949
        %v1004 = vpack.c.b16 %v952, %v951
        %v1005 = vpack.c.b16 %v954, %v953
        %v1006 = vpack.c.b16 %v956, %v955
        %v1007 = vpack.c.b16 %v958, %v957
        %v1008 = vpack.c.b16 %v960, %v959
        %v1009 = vpack.c.b16 %v962, %v961
        %v1010 = vpack.c.b16 %v964, %v963
        %v1011 = vpack.c.b16 %v966, %v965
        %v1012 = vpack.c.b16 %v968, %v967
        %v1013 = vpack.c.b16 %v970, %v969
        %v1014 = vpack.c.b16 %v972, %v971
        %v1015 = vpack.c.b16 %v974, %v973
        %v1016 = vpack.c.b16 %v976, %v975
        %1057 = vmatprep.subr.bf16.mxu0 0
        %1058 = vmatpush1.bf16.msra.mxu0 %v977
        %1059 = vmatprep.subr.bf16.mxu0 0
        %1060 = vmatpush1.bf16.msra.mxu0 %v978
        %1061 = vmatprep.subr.bf16.mxu0 0
        %1062 = vmatpush1.bf16.msra.mxu0 %v979
        %1063 = vmatprep.subr.bf16.mxu0 0
        %1064 = vmatpush1.bf16.msra.mxu0 %v980
        %1065 = vmatprep.subr.bf16.mxu0 0
        %1066 = vmatpush1.bf16.msra.mxu0 %v981
        %1067 = vmatprep.subr.bf16.mxu0 0
        %1068 = vmatpush1.bf16.msra.mxu0 %v982
        %1069 = vmatprep.subr.bf16.mxu0 0
        %1070 = vmatpush1.bf16.msra.mxu0 %v983
        %1071 = vmatprep.subr.bf16.mxu0 0
        %1072 = vmatpush1.bf16.msra.mxu0 %v984
        %1073 = vmatprep.subr.bf16.mxu0 0
        %1074 = vmatpush1.bf16.msra.mxu0 %v985
        %1075 = vmatprep.subr.bf16.mxu0 0
        %1076 = vmatpush1.bf16.msra.mxu0 %v986
        %1077 = vmatprep.subr.bf16.mxu0 0
        %1078 = vmatpush1.bf16.msra.mxu0 %v987
        %1079 = vmatprep.subr.bf16.mxu0 0
        %1080 = vmatpush1.bf16.msra.mxu0 %v988
        %1081 = vmatprep.subr.bf16.mxu0 0
        %1082 = vmatpush1.bf16.msra.mxu0 %v989
        %1083 = vmatprep.subr.bf16.mxu0 0
        %1084 = vmatpush1.bf16.msra.mxu0 %v990
        %1085 = vmatprep.subr.bf16.mxu0 0
        %1086 = vmatpush1.bf16.msra.mxu0 %v991
        %1087 = vmatprep.subr.bf16.mxu0 0
        %1088 = vmatpush1.bf16.msra.mxu0 %v992
        %1089 = vmatprep.mubr.bf16.mxu0 %v707
        %1090 = vmatmul.mubr.bf16.gmra.mrb[0].mxu0 %v700
        %v1091 = vpop.f32.mrb[0].mxu0
        %v1092 = vadd.f32 %v815, %v1091
        %v1093 = vpop.f32.mrb[0].mxu0
        %v1094 = vpop.f32.mrb[0].mxu0
        %v1095 = vadd.f32 %v815, %v1094
        %v1096 = vpop.f32.mrb[0].mxu0
        %1097 = vdwg.mxu0
        %1098 = vmatprep.subr.bf16.mxu0 0
        %1099 = vmatpush1.bf16.msra.mxu0 %v993
        %1100 = vmatprep.subr.bf16.mxu0 0
        %1101 = vmatpush1.bf16.msra.mxu0 %v994
        %1102 = vmatprep.subr.bf16.mxu0 0
        %1103 = vmatpush1.bf16.msra.mxu0 %v995
        %1104 = vmatprep.subr.bf16.mxu0 0
        %1105 = vmatpush1.bf16.msra.mxu0 %v996
        %1106 = vmatprep.subr.bf16.mxu0 0
        %1107 = vmatpush1.bf16.msra.mxu0 %v997
        %1108 = vmatprep.subr.bf16.mxu0 0
        %1109 = vmatpush1.bf16.msra.mxu0 %v998
        %1110 = vmatprep.subr.bf16.mxu0 0
        %1111 = vmatpush1.bf16.msra.mxu0 %v999
        %1112 = vmatprep.subr.bf16.mxu0 0
        %1113 = vmatpush1.bf16.msra.mxu0 %v1000
        %1114 = vmatprep.subr.bf16.mxu0 0
        %1115 = vmatpush1.bf16.msra.mxu0 %v1001
        %1116 = vmatprep.subr.bf16.mxu0 0
        %1117 = vmatpush1.bf16.msra.mxu0 %v1002
        %1118 = vmatprep.subr.bf16.mxu0 0
        %1119 = vmatpush1.bf16.msra.mxu0 %v1003
        %1120 = vmatprep.subr.bf16.mxu0 0
        %1121 = vmatpush1.bf16.msra.mxu0 %v1004
        %1122 = vmatprep.subr.bf16.mxu0 0
        %1123 = vmatpush1.bf16.msra.mxu0 %v1005
        %1124 = vmatprep.subr.bf16.mxu0 0
        %1125 = vmatpush1.bf16.msra.mxu0 %v1006
        %1126 = vmatprep.subr.bf16.mxu0 0
        %1127 = vmatpush1.bf16.msra.mxu0 %v1007
        %1128 = vmatprep.subr.bf16.mxu0 0
        %1129 = vmatpush1.bf16.msra.mxu0 %v1008
        %1130 = vmatprep.mubr.bf16.mxu0 %v715
        %1131 = vmatmul.mubr.bf16.gmra.mrb[0].mxu0 %v708
        %v1132 = vpop.f32.mrb[0].mxu0
        %v1133 = vadd.f32 %v1092, %v1132
        %v1134 = vpop.f32.mrb[0].mxu0
        %v1135 = vpop.f32.mrb[0].mxu0
        %v1136 = vadd.f32 %v1095, %v1135
        %v1137 = vpop.f32.mrb[0].mxu0
        %1138 = vdwg.mxu0
        %1139 = vmatprep.subr.bf16.mxu0 0
        %1140 = vmatpush1.bf16.msra.mxu0 %v1009
        %1141 = vmatprep.subr.bf16.mxu0 0
        %1142 = vmatpush1.bf16.msra.mxu0 %v1010
        %1143 = vmatprep.subr.bf16.mxu0 0
        %1144 = vmatpush1.bf16.msra.mxu0 %v1011
        %1145 = vmatprep.subr.bf16.mxu0 0
        %1146 = vmatpush1.bf16.msra.mxu0 %v1012
        %1147 = vmatprep.subr.bf16.mxu0 0
        %1148 = vmatpush1.bf16.msra.mxu0 %v1013
        %1149 = vmatprep.subr.bf16.mxu0 0
        %1150 = vmatpush1.bf16.msra.mxu0 %v1014
        %1151 = vmatprep.subr.bf16.mxu0 0
        %1152 = vmatpush1.bf16.msra.mxu0 %v1015
        %1153 = vmatprep.subr.bf16.mxu0 0
        %1154 = vmatpush1.bf16.msra.mxu0 %v1016
        %1155 = vmatprep.subr.bf16.mxu0 0
        %1156 = vmatpush1.bf16.msra.mxu0 0
        %1157 = vmatprep.subr.bf16.mxu0 0
        %1158 = vmatpush1.bf16.msra.mxu0 0
        %1159 = vmatprep.subr.bf16.mxu0 0
        %1160 = vmatpush1.bf16.msra.mxu0 0
        %1161 = vmatprep.subr.bf16.mxu0 0
        %1162 = vmatpush1.bf16.msra.mxu0 0
        %1163 = vmatprep.subr.bf16.mxu0 0
        %1164 = vmatpush1.bf16.msra.mxu0 0
        %1165 = vmatprep.subr.bf16.mxu0 0
        %1166 = vmatpush1.bf16.msra.mxu0 0
        %1167 = vmatprep.subr.bf16.mxu0 0
        %1168 = vmatpush1.bf16.msra.mxu0 0
        %1169 = vmatprep.subr.bf16.mxu0 0
        %1170 = vmatpush1.bf16.msra.mxu0 0
        %1171 = vmatprep.mubr.bf16.mxu0 0
        %1172 = vmatmul.mubr.bf16.gmra.mrb[0].mxu0 %v729
        %v1173 = vpop.f32.mrb[0].mxu0
        %v1174 = vadd.f32 %v1133, %v1173
        %v1175 = vpop.f32.mrb[0].mxu0
        %v1176 = vpop.f32.mrb[0].mxu0
        %v1177 = vadd.f32 %v1136, %v1176
        %v1178 = vpop.f32.mrb[0].mxu0
        %1179 = vdwg.mxu0
        %v1180 = vmax.f32 %v1174, 0.0
        %v1181 = vmax.f32 %v1177, 0.0
        %v1182 = vrot.slane %v1180, 6
        %v1183 = vrot.slane %v1181, 6
        %v1184 = vsel %vm689, %v1182, %v1183
        %v1185 = vsel %vm689, %v1183, %v1182
        %v1186 = vsel %vm696, %v1185, 0.0
        %v1187 = vsel %vm697, %v1184, 0.0
        %v1188 = vpack.c.bf16 %v1187, %v1186
        %v1189 = vrot.slane %v1180, 7
        %v1190 = vrot.slane %v1181, 7
        %v1191 = vsel %vm378, %v1189, %v1190
        %v1192 = vsel %vm378, %v1190, %v1189
        %v1193 = vsel %vm386, %v1192, 0.0
        %v1194 = vsel %vm387, %v1191, 0.0
        %v1195 = vpack.c.bf16 %v1194, %v1193
        %v1196 = vpack.c.bf16 %v1181, %v1180
        %v1197 = vrot.slane %v1180, 1
        %v1198 = vrot.slane %v1181, 1
        %v1199 = vsel %vm394, %v1197, %v1198
        %v1200 = vsel %vm394, %v1198, %v1197
        %v1201 = vsel %vm401, %v1199, 0.0
        %v1202 = vsel %vm402, %v1200, 0.0
        %v1203 = vpack.c.bf16 %v1202, %v1201
        %v1204 = vrot.slane %v1180, 2
        %v1205 = vrot.slane %v1181, 2
        %v1206 = vsel %vm718, %v1204, %v1205
        %v1207 = vsel %vm718, %v1205, %v1204
        %v1208 = vsel %vm725, %v1206, 0.0
        %v1209 = vsel %vm726, %v1207, 0.0
        %v1210 = vpack.c.bf16 %v1209, %v1208
        %v1211 = vld [vmem:[#allocation8 + $0x200] sm:$0xf]
        %v1212 = vld [vmem:[#allocation8 + $0x204] sm:$0xf]
        %v1213 = vld [vmem:[#allocation8 + $0x208] sm:$0xf]
        %v1214 = vld [vmem:[#allocation8 + $0x20c] sm:$0xf]
        %v1215 = vld [vmem:[#allocation8 + $0x210] sm:$0xf]
        %v1216 = vld [vmem:[#allocation8 + $0x214] sm:$0xf]
        %v1217 = vld [vmem:[#allocation8 + $0x218] sm:$0xf]
        %v1218 = vld [vmem:[#allocation8 + $0x21c] sm:$0xf]
        %v1219 = vld [vmem:[#allocation8 + $0x220] sm:$0xf]
        %v1220 = vld [vmem:[#allocation8 + $0x224] sm:$0xf]
        %v1221 = vld [vmem:[#allocation8 + $0x228] sm:$0xf]
        %v1222 = vld [vmem:[#allocation8 + $0x22c] sm:$0xf]
        %v1223 = vld [vmem:[#allocation8 + $0x230] sm:$0xf]
        %v1224 = vld [vmem:[#allocation8 + $0x234] sm:$0xf]
        %v1225 = vld [vmem:[#allocation8 + $0x238] sm:$0xf]
        %v1226 = vld [vmem:[#allocation8 + $0x23c] sm:$0xf]
        %v1227 = vld [vmem:[#allocation8 + $0x240] sm:$0xf]
        %v1228 = vld [vmem:[#allocation8 + $0x244] sm:$0xf]
        %v1229 = vld [vmem:[#allocation8 + $0x248] sm:$0xf]
        %v1230 = vld [vmem:[#allocation8 + $0x24c] sm:$0xf]
        %v1231 = vld [vmem:[#allocation8 + $0x250] sm:$0xf]
        %v1232 = vld [vmem:[#allocation8 + $0x254] sm:$0xf]
        %v1233 = vld [vmem:[#allocation8 + $0x258] sm:$0xf]
        %v1234 = vld [vmem:[#allocation8 + $0x25c] sm:$0xf]
        %v1235 = vld [vmem:[#allocation8 + $0x260] sm:$0xf]
        %v1236 = vld [vmem:[#allocation8 + $0x264] sm:$0xf]
        %v1237 = vld [vmem:[#allocation8 + $0x268] sm:$0xf]
        %v1238 = vld [vmem:[#allocation8 + $0x26c] sm:$0xf]
        %v1239 = vld [vmem:[#allocation8 + $0x270] sm:$0xf]
        %v1240 = vld [vmem:[#allocation8 + $0x274] sm:$0xf]
        %v1241 = vld [vmem:[#allocation8 + $0x278] sm:$0xf]
        %v1242 = vld [vmem:[#allocation8 + $0x27c] sm:$0xf]
        %v1243 = vld [vmem:[#allocation8 + $0x280] sm:$0xf]
        %v1244 = vld [vmem:[#allocation8 + $0x284] sm:$0xf]
        %v1245 = vld [vmem:[#allocation8 + $0x288] sm:$0xf]
        %v1246 = vld [vmem:[#allocation8 + $0x28c] sm:$0xf]
        %v1247 = vld [vmem:[#allocation8 + $0x290] sm:$0xf]
        %v1248 = vld [vmem:[#allocation8 + $0x294] sm:$0xf]
        %v1249 = vld [vmem:[#allocation8 + $0x298] sm:$0xf]
        %v1250 = vld [vmem:[#allocation8 + $0x29c] sm:$0xf]
        %v1251 = vld [vmem:[#allocation8 + $0x2a0] sm:$0xf]
        %v1252 = vld [vmem:[#allocation8 + $0x2a4] sm:$0xf]
        %v1253 = vld [vmem:[#allocation8 + $0x2a8] sm:$0xf]
        %v1254 = vld [vmem:[#allocation8 + $0x2ac] sm:$0xf]
        %v1255 = vld [vmem:[#allocation8 + $0x2b0] sm:$0xf]
        %v1256 = vld [vmem:[#allocation8 + $0x2b4] sm:$0xf]
        %v1257 = vld [vmem:[#allocation8 + $0x2b8] sm:$0xf]
        %v1258 = vld [vmem:[#allocation8 + $0x2bc] sm:$0xf]
        %v1259 = vld [vmem:[#allocation8 + $0x2c0] sm:$0xf]
        %v1260 = vld [vmem:[#allocation8 + $0x2c4] sm:$0xf]
        %v1261 = vld [vmem:[#allocation8 + $0x2c8] sm:$0xf]
        %v1262 = vld [vmem:[#allocation8 + $0x2cc] sm:$0xf]
        %v1263 = vld [vmem:[#allocation8 + $0x2d0] sm:$0xf]
        %v1264 = vld [vmem:[#allocation8 + $0x2d4] sm:$0xf]
        %v1265 = vld [vmem:[#allocation8 + $0x2d8] sm:$0xf]
        %v1266 = vld [vmem:[#allocation8 + $0x2dc] sm:$0xf]
        %v1267 = vld [vmem:[#allocation8 + $0x2e0] sm:$0xf]
        %v1268 = vld [vmem:[#allocation8 + $0x2e4] sm:$0xf]
        %v1269 = vld [vmem:[#allocation8 + $0x2e8] sm:$0xf]
        %v1270 = vld [vmem:[#allocation8 + $0x2ec] sm:$0xf]
        %v1271 = vld [vmem:[#allocation8 + $0x2f0] sm:$0xf]
        %v1272 = vld [vmem:[#allocation8 + $0x2f4] sm:$0xf]
        %v1273 = vld [vmem:[#allocation8 + $0x2f8] sm:$0xf]
        %v1274 = vld [vmem:[#allocation8 + $0x2fc] sm:$0xf]
        %v1275 = vld [vmem:[#allocation8 + $0x300] sm:$0xf]
        %v1276 = vld [vmem:[#allocation8 + $0x304] sm:$0xf]
        %v1277 = vld [vmem:[#allocation8 + $0x308] sm:$0xf]
        %v1278 = vld [vmem:[#allocation8 + $0x30c] sm:$0xf]
        %v1279 = vld [vmem:[#allocation8 + $0x310] sm:$0xf]
        %v1280 = vld [vmem:[#allocation8 + $0x314] sm:$0xf]
        %v1281 = vld [vmem:[#allocation8 + $0x318] sm:$0xf]
        %v1282 = vld [vmem:[#allocation8 + $0x31c] sm:$0xf]
        %v1283 = vld [vmem:[#allocation8 + $0x320] sm:$0xf]
        %v1284 = vld [vmem:[#allocation8 + $0x324] sm:$0xf]
        %v1285 = vld [vmem:[#allocation8 + $0x328] sm:$0xf]
        %v1286 = vld [vmem:[#allocation8 + $0x32c] sm:$0xf]
        %v1287 = vld [vmem:[#allocation8 + $0x330] sm:$0xf]
        %v1288 = vld [vmem:[#allocation8 + $0x334] sm:$0xf]
        %v1289 = vld [vmem:[#allocation8 + $0x338] sm:$0xf]
        %v1290 = vld [vmem:[#allocation8 + $0x33c] sm:$0xf]
        %v1291 = vld [vmem:[#allocation10 + $0x2] sm:$0x1]
        %v1293 = vlaneseq
        %v1294 = vshrl.u32 %v1293, 7
        %v1295 = vsub.s32 0, %v1294
        %v1296 = vrot.slane %v1291, %v1295
        %v1378 = vunpack.c.l.b16 %v1211
        %v1379 = vunpack.c.l.b16 %v1212
        %v1380 = vunpack.c.l.b16 %v1213
        %v1381 = vunpack.c.l.b16 %v1214
        %v1382 = vunpack.c.l.b16 %v1215
        %v1383 = vunpack.c.l.b16 %v1216
        %v1384 = vunpack.c.l.b16 %v1217
        %v1385 = vunpack.c.l.b16 %v1218
        %v1386 = vunpack.c.l.b16 %v1219
        %v1387 = vunpack.c.l.b16 %v1220
        %v1388 = vunpack.c.l.b16 %v1221
        %v1389 = vunpack.c.l.b16 %v1222
        %v1390 = vunpack.c.l.b16 %v1223
        %v1391 = vunpack.c.l.b16 %v1224
        %v1392 = vunpack.c.l.b16 %v1225
        %v1393 = vunpack.c.l.b16 %v1226
        %v1394 = vunpack.c.l.b16 %v1227
        %v1395 = vunpack.c.l.b16 %v1228
        %v1396 = vunpack.c.l.b16 %v1229
        %v1397 = vunpack.c.l.b16 %v1230
        %v1398 = vunpack.c.l.b16 %v1231
        %v1399 = vunpack.c.l.b16 %v1232
        %v1400 = vunpack.c.l.b16 %v1233
        %v1401 = vunpack.c.l.b16 %v1234
        %v1402 = vunpack.c.l.b16 %v1235
        %v1403 = vunpack.c.l.b16 %v1236
        %v1404 = vunpack.c.l.b16 %v1237
        %v1405 = vunpack.c.l.b16 %v1238
        %v1406 = vunpack.c.l.b16 %v1239
        %v1407 = vunpack.c.l.b16 %v1240
        %v1408 = vunpack.c.l.b16 %v1241
        %v1409 = vunpack.c.l.b16 %v1242
        %v1410 = vunpack.c.l.b16 %v1243
        %v1411 = vunpack.c.l.b16 %v1244
        %v1412 = vunpack.c.l.b16 %v1245
        %v1413 = vunpack.c.l.b16 %v1246
        %v1414 = vunpack.c.l.b16 %v1247
        %v1415 = vunpack.c.l.b16 %v1248
        %v1416 = vunpack.c.l.b16 %v1249
        %v1417 = vunpack.c.l.b16 %v1250
        %v1418 = vunpack.c.l.b16 %v1251
        %v1419 = vunpack.c.l.b16 %v1252
        %v1420 = vunpack.c.l.b16 %v1253
        %v1421 = vunpack.c.l.b16 %v1254
        %v1422 = vunpack.c.l.b16 %v1255
        %v1423 = vunpack.c.l.b16 %v1256
        %v1424 = vunpack.c.l.b16 %v1257
        %v1425 = vunpack.c.l.b16 %v1258
        %v1426 = vunpack.c.l.b16 %v1259
        %v1427 = vunpack.c.l.b16 %v1260
        %v1428 = vunpack.c.l.b16 %v1261
        %v1429 = vunpack.c.l.b16 %v1262
        %v1430 = vunpack.c.l.b16 %v1263
        %v1431 = vunpack.c.l.b16 %v1264
        %v1432 = vunpack.c.l.b16 %v1265
        %v1433 = vunpack.c.l.b16 %v1266
        %v1434 = vunpack.c.l.b16 %v1267
        %v1435 = vunpack.c.l.b16 %v1268
        %v1436 = vunpack.c.l.b16 %v1269
        %v1437 = vunpack.c.l.b16 %v1270
        %v1438 = vunpack.c.l.b16 %v1271
        %v1439 = vunpack.c.l.b16 %v1272
        %v1440 = vunpack.c.l.b16 %v1273
        %v1441 = vunpack.c.l.b16 %v1274
        %v1442 = vunpack.c.l.b16 %v1275
        %v1443 = vunpack.c.l.b16 %v1276
        %v1444 = vunpack.c.l.b16 %v1277
        %v1445 = vunpack.c.l.b16 %v1278
        %v1446 = vunpack.c.l.b16 %v1279
        %v1447 = vunpack.c.l.b16 %v1280
        %v1448 = vunpack.c.l.b16 %v1281
        %v1449 = vunpack.c.l.b16 %v1282
        %v1450 = vunpack.c.l.b16 %v1283
        %v1451 = vunpack.c.l.b16 %v1284
        %v1452 = vunpack.c.l.b16 %v1285
        %v1453 = vunpack.c.l.b16 %v1286
        %v1454 = vunpack.c.l.b16 %v1287
        %v1455 = vunpack.c.l.b16 %v1288
        %v1456 = vunpack.c.l.b16 %v1289
        %v1457 = vunpack.c.l.b16 %v1290
        %v1458 = vpack.c.b16 %v1379, %v1378
        %v1459 = vpack.c.b16 %v1381, %v1380
        %v1460 = vpack.c.b16 %v1383, %v1382
        %v1461 = vpack.c.b16 %v1385, %v1384
        %v1462 = vpack.c.b16 %v1387, %v1386
        %v1463 = vpack.c.b16 %v1389, %v1388
        %v1464 = vpack.c.b16 %v1391, %v1390
        %v1465 = vpack.c.b16 %v1393, %v1392
        %v1466 = vpack.c.b16 %v1395, %v1394
        %v1467 = vpack.c.b16 %v1397, %v1396
        %v1468 = vpack.c.b16 %v1399, %v1398
        %v1469 = vpack.c.b16 %v1401, %v1400
        %v1470 = vpack.c.b16 %v1403, %v1402
        %v1471 = vpack.c.b16 %v1405, %v1404
        %v1472 = vpack.c.b16 %v1407, %v1406
        %v1473 = vpack.c.b16 %v1409, %v1408
        %v1474 = vpack.c.b16 %v1411, %v1410
        %v1475 = vpack.c.b16 %v1413, %v1412
        %v1476 = vpack.c.b16 %v1415, %v1414
        %v1477 = vpack.c.b16 %v1417, %v1416
        %v1478 = vpack.c.b16 %v1419, %v1418
        %v1479 = vpack.c.b16 %v1421, %v1420
        %v1480 = vpack.c.b16 %v1423, %v1422
        %v1481 = vpack.c.b16 %v1425, %v1424
        %v1482 = vpack.c.b16 %v1427, %v1426
        %v1483 = vpack.c.b16 %v1429, %v1428
        %v1484 = vpack.c.b16 %v1431, %v1430
        %v1485 = vpack.c.b16 %v1433, %v1432
        %v1486 = vpack.c.b16 %v1435, %v1434
        %v1487 = vpack.c.b16 %v1437, %v1436
        %v1488 = vpack.c.b16 %v1439, %v1438
        %v1489 = vpack.c.b16 %v1441, %v1440
        %v1490 = vpack.c.b16 %v1443, %v1442
        %v1491 = vpack.c.b16 %v1445, %v1444
        %v1492 = vpack.c.b16 %v1447, %v1446
        %v1493 = vpack.c.b16 %v1449, %v1448
        %v1494 = vpack.c.b16 %v1451, %v1450
        %v1495 = vpack.c.b16 %v1453, %v1452
        %v1496 = vpack.c.b16 %v1455, %v1454
        %v1497 = vpack.c.b16 %v1457, %v1456
        %1538 = vmatprep.subr.bf16.mxu0 0
        %1539 = vmatpush1.bf16.msra.mxu0 %v1458
        %1540 = vmatprep.subr.bf16.mxu0 0
        %1541 = vmatpush1.bf16.msra.mxu0 %v1459
        %1542 = vmatprep.subr.bf16.mxu0 0
        %1543 = vmatpush1.bf16.msra.mxu0 %v1460
        %1544 = vmatprep.subr.bf16.mxu0 0
        %1545 = vmatpush1.bf16.msra.mxu0 %v1461
        %1546 = vmatprep.subr.bf16.mxu0 0
        %1547 = vmatpush1.bf16.msra.mxu0 %v1462
        %1548 = vmatprep.subr.bf16.mxu0 0
        %1549 = vmatpush1.bf16.msra.mxu0 %v1463
        %1550 = vmatprep.subr.bf16.mxu0 0
        %1551 = vmatpush1.bf16.msra.mxu0 %v1464
        %1552 = vmatprep.subr.bf16.mxu0 0
        %1553 = vmatpush1.bf16.msra.mxu0 %v1465
        %1554 = vmatprep.subr.bf16.mxu0 0
        %1555 = vmatpush1.bf16.msra.mxu0 %v1466
        %1556 = vmatprep.subr.bf16.mxu0 0
        %1557 = vmatpush1.bf16.msra.mxu0 %v1467
        %1558 = vmatprep.subr.bf16.mxu0 0
        %1559 = vmatpush1.bf16.msra.mxu0 %v1468
        %1560 = vmatprep.subr.bf16.mxu0 0
        %1561 = vmatpush1.bf16.msra.mxu0 %v1469
        %1562 = vmatprep.subr.bf16.mxu0 0
        %1563 = vmatpush1.bf16.msra.mxu0 %v1470
        %1564 = vmatprep.subr.bf16.mxu0 0
        %1565 = vmatpush1.bf16.msra.mxu0 %v1471
        %1566 = vmatprep.subr.bf16.mxu0 0
        %1567 = vmatpush1.bf16.msra.mxu0 %v1472
        %1568 = vmatprep.subr.bf16.mxu0 0
        %1569 = vmatpush1.bf16.msra.mxu0 %v1473
        %1570 = vmatprep.mubr.bf16.mxu0 %v1195
        %1571 = vmatmul.mubr.bf16.gmra.mrb[0].mxu0 %v1188
        %v1572 = vpop.f32.mrb[0].mxu0
        %v1573 = vadd.f32 %v1296, %v1572
        %v1574 = vpop.f32.mrb[0].mxu0
        %v1575 = vpop.f32.mrb[0].mxu0
        %v1576 = vadd.f32 %v1296, %v1575
        %v1577 = vpop.f32.mrb[0].mxu0
        %1578 = vdwg.mxu0
        %1579 = vmatprep.subr.bf16.mxu0 0
        %1580 = vmatpush1.bf16.msra.mxu0 %v1474
        %1581 = vmatprep.subr.bf16.mxu0 0
        %1582 = vmatpush1.bf16.msra.mxu0 %v1475
        %1583 = vmatprep.subr.bf16.mxu0 0
        %1584 = vmatpush1.bf16.msra.mxu0 %v1476
        %1585 = vmatprep.subr.bf16.mxu0 0
        %1586 = vmatpush1.bf16.msra.mxu0 %v1477
        %1587 = vmatprep.subr.bf16.mxu0 0
        %1588 = vmatpush1.bf16.msra.mxu0 %v1478
        %1589 = vmatprep.subr.bf16.mxu0 0
        %1590 = vmatpush1.bf16.msra.mxu0 %v1479
        %1591 = vmatprep.subr.bf16.mxu0 0
        %1592 = vmatpush1.bf16.msra.mxu0 %v1480
        %1593 = vmatprep.subr.bf16.mxu0 0
        %1594 = vmatpush1.bf16.msra.mxu0 %v1481
        %1595 = vmatprep.subr.bf16.mxu0 0
        %1596 = vmatpush1.bf16.msra.mxu0 %v1482
        %1597 = vmatprep.subr.bf16.mxu0 0
        %1598 = vmatpush1.bf16.msra.mxu0 %v1483
        %1599 = vmatprep.subr.bf16.mxu0 0
        %1600 = vmatpush1.bf16.msra.mxu0 %v1484
        %1601 = vmatprep.subr.bf16.mxu0 0
        %1602 = vmatpush1.bf16.msra.mxu0 %v1485
        %1603 = vmatprep.subr.bf16.mxu0 0
        %1604 = vmatpush1.bf16.msra.mxu0 %v1486
        %1605 = vmatprep.subr.bf16.mxu0 0
        %1606 = vmatpush1.bf16.msra.mxu0 %v1487
        %1607 = vmatprep.subr.bf16.mxu0 0
        %1608 = vmatpush1.bf16.msra.mxu0 %v1488
        %1609 = vmatprep.subr.bf16.mxu0 0
        %1610 = vmatpush1.bf16.msra.mxu0 %v1489
        %1611 = vmatprep.mubr.bf16.mxu0 %v1203
        %1612 = vmatmul.mubr.bf16.gmra.mrb[0].mxu0 %v1196
        %v1613 = vpop.f32.mrb[0].mxu0
        %v1614 = vadd.f32 %v1573, %v1613
        %v1615 = vpop.f32.mrb[0].mxu0
        %v1616 = vpop.f32.mrb[0].mxu0
        %v1617 = vadd.f32 %v1576, %v1616
        %v1618 = vpop.f32.mrb[0].mxu0
        %1619 = vdwg.mxu0
        %1620 = vmatprep.subr.bf16.mxu0 0
        %1621 = vmatpush1.bf16.msra.mxu0 %v1490
        %1622 = vmatprep.subr.bf16.mxu0 0
        %1623 = vmatpush1.bf16.msra.mxu0 %v1491
        %1624 = vmatprep.subr.bf16.mxu0 0
        %1625 = vmatpush1.bf16.msra.mxu0 %v1492
        %1626 = vmatprep.subr.bf16.mxu0 0
        %1627 = vmatpush1.bf16.msra.mxu0 %v1493
        %1628 = vmatprep.subr.bf16.mxu0 0
        %1629 = vmatpush1.bf16.msra.mxu0 %v1494
        %1630 = vmatprep.subr.bf16.mxu0 0
        %1631 = vmatpush1.bf16.msra.mxu0 %v1495
        %1632 = vmatprep.subr.bf16.mxu0 0
        %1633 = vmatpush1.bf16.msra.mxu0 %v1496
        %1634 = vmatprep.subr.bf16.mxu0 0
        %1635 = vmatpush1.bf16.msra.mxu0 %v1497
        %1636 = vmatprep.subr.bf16.mxu0 0
        %1637 = vmatpush1.bf16.msra.mxu0 0
        %1638 = vmatprep.subr.bf16.mxu0 0
        %1639 = vmatpush1.bf16.msra.mxu0 0
        %1640 = vmatprep.subr.bf16.mxu0 0
        %1641 = vmatpush1.bf16.msra.mxu0 0
        %1642 = vmatprep.subr.bf16.mxu0 0
        %1643 = vmatpush1.bf16.msra.mxu0 0
        %1644 = vmatprep.subr.bf16.mxu0 0
        %1645 = vmatpush1.bf16.msra.mxu0 0
        %1646 = vmatprep.subr.bf16.mxu0 0
        %1647 = vmatpush1.bf16.msra.mxu0 0
        %1648 = vmatprep.subr.bf16.mxu0 0
        %1649 = vmatpush1.bf16.msra.mxu0 0
        %1650 = vmatprep.subr.bf16.mxu0 0
        %1651 = vmatpush1.bf16.msra.mxu0 0
        %1652 = vmatprep.mubr.bf16.mxu0 0
        %1653 = vmatmul.mubr.bf16.gmra.mrb[0].mxu0 %v1210
        %v1654 = vpop.f32.mrb[0].mxu0
        %v1655 = vadd.f32 %v1614, %v1654
        %v1656 = vpop.f32.mrb[0].mxu0
        %v1657 = vpop.f32.mrb[0].mxu0
        %v1658 = vadd.f32 %v1617, %v1657
        %v1659 = vpop.f32.mrb[0].mxu0
        %1660 = vdwg.mxu0
        %v1661 = vadd.f32 %v1655, %v681
        %v1662 = vadd.f32 %v1658, %v684
        %v1663 = vrot.slane %v1661, 6
        %v1664 = vrot.slane %v1662, 6
        %v1665 = vsel %vm689, %v1663, %v1664
        %v1666 = vsel %vm689, %v1664, %v1663
        %v1667 = vsel %vm696, %v1666, 0.0
        %v1668 = vsel %vm697, %v1665, 0.0
        %v1669 = vpack.c.bf16 %v1668, %v1667
        %v1670 = vrot.slane %v1661, 7
        %v1671 = vrot.slane %v1662, 7
        %v1672 = vsel %vm378, %v1670, %v1671
        %v1673 = vsel %vm378, %v1671, %v1670
        %v1674 = vsel %vm386, %v1673, 0.0
        %v1675 = vsel %vm387, %v1672, 0.0
        %v1676 = vpack.c.bf16 %v1675, %v1674
        %v1677 = vpack.c.bf16 %v1662, %v1661
        %v1678 = vrot.slane %v1661, 1
        %v1679 = vrot.slane %v1662, 1
        %v1680 = vsel %vm394, %v1678, %v1679
        %v1681 = vsel %vm394, %v1679, %v1678
        %v1682 = vsel %vm401, %v1680, 0.0
        %v1683 = vsel %vm402, %v1681, 0.0
        %v1684 = vpack.c.bf16 %v1683, %v1682
        %v1685 = vrot.slane %v1661, 2
        %v1686 = vrot.slane %v1662, 2
        %v1687 = vsel %vm718, %v1685, %v1686
        %v1688 = vsel %vm718, %v1686, %v1685
        %v1689 = vsel %vm725, %v1687, 0.0
        %v1690 = vsel %vm726, %v1688, 0.0
        %v1691 = vpack.c.bf16 %v1690, %v1689
        %v1692 = vld [vmem:[#allocation8 + $0x340] sm:$0xf]
        %v1693 = vld [vmem:[#allocation8 + $0x344] sm:$0xf]
        %v1694 = vld [vmem:[#allocation8 + $0x348] sm:$0xf]
        %v1695 = vld [vmem:[#allocation8 + $0x34c] sm:$0xf]
        %v1696 = vld [vmem:[#allocation8 + $0x350] sm:$0xf]
        %v1697 = vld [vmem:[#allocation8 + $0x354] sm:$0xf]
        %v1698 = vld [vmem:[#allocation8 + $0x358] sm:$0xf]
        %v1699 = vld [vmem:[#allocation8 + $0x35c] sm:$0xf]
        %v1700 = vld [vmem:[#allocation8 + $0x360] sm:$0xf]
        %v1701 = vld [vmem:[#allocation8 + $0x364] sm:$0xf]
        %v1702 = vld [vmem:[#allocation8 + $0x368] sm:$0xf]
        %v1703 = vld [vmem:[#allocation8 + $0x36c] sm:$0xf]
        %v1704 = vld [vmem:[#allocation8 + $0x370] sm:$0xf]
        %v1705 = vld [vmem:[#allocation8 + $0x374] sm:$0xf]
        %v1706 = vld [vmem:[#allocation8 + $0x378] sm:$0xf]
        %v1707 = vld [vmem:[#allocation8 + $0x37c] sm:$0xf]
        %v1708 = vld [vmem:[#allocation8 + $0x380] sm:$0xf]
        %v1709 = vld [vmem:[#allocation8 + $0x384] sm:$0xf]
        %v1710 = vld [vmem:[#allocation8 + $0x388] sm:$0xf]
        %v1711 = vld [vmem:[#allocation8 + $0x38c] sm:$0xf]
        %v1712 = vld [vmem:[#allocation8 + $0x390] sm:$0xf]
        %v1713 = vld [vmem:[#allocation8 + $0x394] sm:$0xf]
        %v1714 = vld [vmem:[#allocation8 + $0x398] sm:$0xf]
        %v1715 = vld [vmem:[#allocation8 + $0x39c] sm:$0xf]
        %v1716 = vld [vmem:[#allocation8 + $0x3a0] sm:$0xf]
        %v1717 = vld [vmem:[#allocation8 + $0x3a4] sm:$0xf]
        %v1718 = vld [vmem:[#allocation8 + $0x3a8] sm:$0xf]
        %v1719 = vld [vmem:[#allocation8 + $0x3ac] sm:$0xf]
        %v1720 = vld [vmem:[#allocation8 + $0x3b0] sm:$0xf]
        %v1721 = vld [vmem:[#allocation8 + $0x3b4] sm:$0xf]
        %v1722 = vld [vmem:[#allocation8 + $0x3b8] sm:$0xf]
        %v1723 = vld [vmem:[#allocation8 + $0x3bc] sm:$0xf]
        %v1724 = vld [vmem:[#allocation8 + $0x3c0] sm:$0xf]
        %v1725 = vld [vmem:[#allocation8 + $0x3c4] sm:$0xf]
        %v1726 = vld [vmem:[#allocation8 + $0x3c8] sm:$0xf]
        %v1727 = vld [vmem:[#allocation8 + $0x3cc] sm:$0xf]
        %v1728 = vld [vmem:[#allocation8 + $0x3d0] sm:$0xf]
        %v1729 = vld [vmem:[#allocation8 + $0x3d4] sm:$0xf]
        %v1730 = vld [vmem:[#allocation8 + $0x3d8] sm:$0xf]
        %v1731 = vld [vmem:[#allocation8 + $0x3dc] sm:$0xf]
        %v1732 = vld [vmem:[#allocation8 + $0x3e0] sm:$0xf]
        %v1733 = vld [vmem:[#allocation8 + $0x3e4] sm:$0xf]
        %v1734 = vld [vmem:[#allocation8 + $0x3e8] sm:$0xf]
        %v1735 = vld [vmem:[#allocation8 + $0x3ec] sm:$0xf]
        %v1736 = vld [vmem:[#allocation8 + $0x3f0] sm:$0xf]
        %v1737 = vld [vmem:[#allocation8 + $0x3f4] sm:$0xf]
        %v1738 = vld [vmem:[#allocation8 + $0x3f8] sm:$0xf]
        %v1739 = vld [vmem:[#allocation8 + $0x3fc] sm:$0xf]
        %v1740 = vld [vmem:[#allocation8 + $0x400] sm:$0xf]
        %v1741 = vld [vmem:[#allocation8 + $0x404] sm:$0xf]
        %v1742 = vld [vmem:[#allocation8 + $0x408] sm:$0xf]
        %v1743 = vld [vmem:[#allocation8 + $0x40c] sm:$0xf]
        %v1744 = vld [vmem:[#allocation8 + $0x410] sm:$0xf]
        %v1745 = vld [vmem:[#allocation8 + $0x414] sm:$0xf]
        %v1746 = vld [vmem:[#allocation8 + $0x418] sm:$0xf]
        %v1747 = vld [vmem:[#allocation8 + $0x41c] sm:$0xf]
        %v1748 = vld [vmem:[#allocation8 + $0x420] sm:$0xf]
        %v1749 = vld [vmem:[#allocation8 + $0x424] sm:$0xf]
        %v1750 = vld [vmem:[#allocation8 + $0x428] sm:$0xf]
        %v1751 = vld [vmem:[#allocation8 + $0x42c] sm:$0xf]
        %v1752 = vld [vmem:[#allocation8 + $0x430] sm:$0xf]
        %v1753 = vld [vmem:[#allocation8 + $0x434] sm:$0xf]
        %v1754 = vld [vmem:[#allocation8 + $0x438] sm:$0xf]
        %v1755 = vld [vmem:[#allocation8 + $0x43c] sm:$0xf]
        %v1756 = vld [vmem:[#allocation8 + $0x440] sm:$0xf]
        %v1757 = vld [vmem:[#allocation8 + $0x444] sm:$0xf]
        %v1758 = vld [vmem:[#allocation8 + $0x448] sm:$0xf]
        %v1759 = vld [vmem:[#allocation8 + $0x44c] sm:$0xf]
        %v1760 = vld [vmem:[#allocation8 + $0x450] sm:$0xf]
        %v1761 = vld [vmem:[#allocation8 + $0x454] sm:$0xf]
        %v1762 = vld [vmem:[#allocation8 + $0x458] sm:$0xf]
        %v1763 = vld [vmem:[#allocation8 + $0x45c] sm:$0xf]
        %v1764 = vld [vmem:[#allocation8 + $0x460] sm:$0xf]
        %v1765 = vld [vmem:[#allocation8 + $0x464] sm:$0xf]
        %v1766 = vld [vmem:[#allocation8 + $0x468] sm:$0xf]
        %v1767 = vld [vmem:[#allocation8 + $0x46c] sm:$0xf]
        %v1768 = vld [vmem:[#allocation8 + $0x470] sm:$0xf]
        %v1769 = vld [vmem:[#allocation8 + $0x474] sm:$0xf]
        %v1770 = vld [vmem:[#allocation8 + $0x478] sm:$0xf]
        %v1771 = vld [vmem:[#allocation8 + $0x47c] sm:$0xf]
        %v1772 = vld [vmem:[#allocation10 + $0x3] sm:$0x1]
        %v1774 = vlaneseq
        %v1775 = vshrl.u32 %v1774, 7
        %v1776 = vsub.s32 0, %v1775
        %v1777 = vrot.slane %v1772, %v1776
        %v1859 = vunpack.c.l.b16 %v1692
        %v1860 = vunpack.c.l.b16 %v1693
        %v1861 = vunpack.c.l.b16 %v1694
        %v1862 = vunpack.c.l.b16 %v1695
        %v1863 = vunpack.c.l.b16 %v1696
        %v1864 = vunpack.c.l.b16 %v1697
        %v1865 = vunpack.c.l.b16 %v1698
        %v1866 = vunpack.c.l.b16 %v1699
        %v1867 = vunpack.c.l.b16 %v1700
        %v1868 = vunpack.c.l.b16 %v1701
        %v1869 = vunpack.c.l.b16 %v1702
        %v1870 = vunpack.c.l.b16 %v1703
        %v1871 = vunpack.c.l.b16 %v1704
        %v1872 = vunpack.c.l.b16 %v1705
        %v1873 = vunpack.c.l.b16 %v1706
        %v1874 = vunpack.c.l.b16 %v1707
        %v1875 = vunpack.c.l.b16 %v1708
        %v1876 = vunpack.c.l.b16 %v1709
        %v1877 = vunpack.c.l.b16 %v1710
        %v1878 = vunpack.c.l.b16 %v1711
        %v1879 = vunpack.c.l.b16 %v1712
        %v1880 = vunpack.c.l.b16 %v1713
        %v1881 = vunpack.c.l.b16 %v1714
        %v1882 = vunpack.c.l.b16 %v1715
        %v1883 = vunpack.c.l.b16 %v1716
        %v1884 = vunpack.c.l.b16 %v1717
        %v1885 = vunpack.c.l.b16 %v1718
        %v1886 = vunpack.c.l.b16 %v1719
        %v1887 = vunpack.c.l.b16 %v1720
        %v1888 = vunpack.c.l.b16 %v1721
        %v1889 = vunpack.c.l.b16 %v1722
        %v1890 = vunpack.c.l.b16 %v1723
        %v1891 = vunpack.c.l.b16 %v1724
        %v1892 = vunpack.c.l.b16 %v1725
        %v1893 = vunpack.c.l.b16 %v1726
        %v1894 = vunpack.c.l.b16 %v1727
        %v1895 = vunpack.c.l.b16 %v1728
        %v1896 = vunpack.c.l.b16 %v1729
        %v1897 = vunpack.c.l.b16 %v1730
        %v1898 = vunpack.c.l.b16 %v1731
        %v1899 = vunpack.c.l.b16 %v1732
        %v1900 = vunpack.c.l.b16 %v1733
        %v1901 = vunpack.c.l.b16 %v1734
        %v1902 = vunpack.c.l.b16 %v1735
        %v1903 = vunpack.c.l.b16 %v1736
        %v1904 = vunpack.c.l.b16 %v1737
        %v1905 = vunpack.c.l.b16 %v1738
        %v1906 = vunpack.c.l.b16 %v1739
        %v1907 = vunpack.c.l.b16 %v1740
        %v1908 = vunpack.c.l.b16 %v1741
        %v1909 = vunpack.c.l.b16 %v1742
        %v1910 = vunpack.c.l.b16 %v1743
        %v1911 = vunpack.c.l.b16 %v1744
        %v1912 = vunpack.c.l.b16 %v1745
        %v1913 = vunpack.c.l.b16 %v1746
        %v1914 = vunpack.c.l.b16 %v1747
        %v1915 = vunpack.c.l.b16 %v1748
        %v1916 = vunpack.c.l.b16 %v1749
        %v1917 = vunpack.c.l.b16 %v1750
        %v1918 = vunpack.c.l.b16 %v1751
        %v1919 = vunpack.c.l.b16 %v1752
        %v1920 = vunpack.c.l.b16 %v1753
        %v1921 = vunpack.c.l.b16 %v1754
        %v1922 = vunpack.c.l.b16 %v1755
        %v1923 = vunpack.c.l.b16 %v1756
        %v1924 = vunpack.c.l.b16 %v1757
        %v1925 = vunpack.c.l.b16 %v1758
        %v1926 = vunpack.c.l.b16 %v1759
        %v1927 = vunpack.c.l.b16 %v1760
        %v1928 = vunpack.c.l.b16 %v1761
        %v1929 = vunpack.c.l.b16 %v1762
        %v1930 = vunpack.c.l.b16 %v1763
        %v1931 = vunpack.c.l.b16 %v1764
        %v1932 = vunpack.c.l.b16 %v1765
        %v1933 = vunpack.c.l.b16 %v1766
        %v1934 = vunpack.c.l.b16 %v1767
        %v1935 = vunpack.c.l.b16 %v1768
        %v1936 = vunpack.c.l.b16 %v1769
        %v1937 = vunpack.c.l.b16 %v1770
        %v1938 = vunpack.c.l.b16 %v1771
        %v1939 = vpack.c.b16 %v1860, %v1859
        %v1940 = vpack.c.b16 %v1862, %v1861
        %v1941 = vpack.c.b16 %v1864, %v1863
        %v1942 = vpack.c.b16 %v1866, %v1865
        %v1943 = vpack.c.b16 %v1868, %v1867
        %v1944 = vpack.c.b16 %v1870, %v1869
        %v1945 = vpack.c.b16 %v1872, %v1871
        %v1946 = vpack.c.b16 %v1874, %v1873
        %v1947 = vpack.c.b16 %v1876, %v1875
        %v1948 = vpack.c.b16 %v1878, %v1877
        %v1949 = vpack.c.b16 %v1880, %v1879
        %v1950 = vpack.c.b16 %v1882, %v1881
        %v1951 = vpack.c.b16 %v1884, %v1883
        %v1952 = vpack.c.b16 %v1886, %v1885
        %v1953 = vpack.c.b16 %v1888, %v1887
        %v1954 = vpack.c.b16 %v1890, %v1889
        %v1955 = vpack.c.b16 %v1892, %v1891
        %v1956 = vpack.c.b16 %v1894, %v1893
        %v1957 = vpack.c.b16 %v1896, %v1895
        %v1958 = vpack.c.b16 %v1898, %v1897
        %v1959 = vpack.c.b16 %v1900, %v1899
        %v1960 = vpack.c.b16 %v1902, %v1901
        %v1961 = vpack.c.b16 %v1904, %v1903
        %v1962 = vpack.c.b16 %v1906, %v1905
        %v1963 = vpack.c.b16 %v1908, %v1907
        %v1964 = vpack.c.b16 %v1910, %v1909
        %v1965 = vpack.c.b16 %v1912, %v1911
        %v1966 = vpack.c.b16 %v1914, %v1913
        %v1967 = vpack.c.b16 %v1916, %v1915
        %v1968 = vpack.c.b16 %v1918, %v1917
        %v1969 = vpack.c.b16 %v1920, %v1919
        %v1970 = vpack.c.b16 %v1922, %v1921
        %v1971 = vpack.c.b16 %v1924, %v1923
        %v1972 = vpack.c.b16 %v1926, %v1925
        %v1973 = vpack.c.b16 %v1928, %v1927
        %v1974 = vpack.c.b16 %v1930, %v1929
        %v1975 = vpack.c.b16 %v1932, %v1931
        %v1976 = vpack.c.b16 %v1934, %v1933
        %v1977 = vpack.c.b16 %v1936, %v1935
        %v1978 = vpack.c.b16 %v1938, %v1937
        %2019 = vmatprep.subr.bf16.mxu0 0
        %2020 = vmatpush1.bf16.msra.mxu0 %v1939
        %2021 = vmatprep.subr.bf16.mxu0 0
        %2022 = vmatpush1.bf16.msra.mxu0 %v1940
        %2023 = vmatprep.subr.bf16.mxu0 0
        %2024 = vmatpush1.bf16.msra.mxu0 %v1941
        %2025 = vmatprep.subr.bf16.mxu0 0
        %2026 = vmatpush1.bf16.msra.mxu0 %v1942
        %2027 = vmatprep.subr.bf16.mxu0 0
        %2028 = vmatpush1.bf16.msra.mxu0 %v1943
        %2029 = vmatprep.subr.bf16.mxu0 0
        %2030 = vmatpush1.bf16.msra.mxu0 %v1944
        %2031 = vmatprep.subr.bf16.mxu0 0
        %2032 = vmatpush1.bf16.msra.mxu0 %v1945
        %2033 = vmatprep.subr.bf16.mxu0 0
        %2034 = vmatpush1.bf16.msra.mxu0 %v1946
        %2035 = vmatprep.subr.bf16.mxu0 0
        %2036 = vmatpush1.bf16.msra.mxu0 %v1947
        %2037 = vmatprep.subr.bf16.mxu0 0
        %2038 = vmatpush1.bf16.msra.mxu0 %v1948
        %2039 = vmatprep.subr.bf16.mxu0 0
        %2040 = vmatpush1.bf16.msra.mxu0 %v1949
        %2041 = vmatprep.subr.bf16.mxu0 0
        %2042 = vmatpush1.bf16.msra.mxu0 %v1950
        %2043 = vmatprep.subr.bf16.mxu0 0
        %2044 = vmatpush1.bf16.msra.mxu0 %v1951
        %2045 = vmatprep.subr.bf16.mxu0 0
        %2046 = vmatpush1.bf16.msra.mxu0 %v1952
        %2047 = vmatprep.subr.bf16.mxu0 0
        %2048 = vmatpush1.bf16.msra.mxu0 %v1953
        %2049 = vmatprep.subr.bf16.mxu0 0
        %2050 = vmatpush1.bf16.msra.mxu0 %v1954
        %2051 = vmatprep.mubr.bf16.mxu0 %v1676
        %2052 = vmatmul.mubr.bf16.gmra.mrb[0].mxu0 %v1669
        %v2053 = vpop.f32.mrb[0].mxu0
        %v2054 = vadd.f32 %v1777, %v2053
        %v2055 = vpop.f32.mrb[0].mxu0
        %v2056 = vpop.f32.mrb[0].mxu0
        %v2057 = vadd.f32 %v1777, %v2056
        %v2058 = vpop.f32.mrb[0].mxu0
        %2059 = vdwg.mxu0
        %2060 = vmatprep.subr.bf16.mxu0 0
        %2061 = vmatpush1.bf16.msra.mxu0 %v1955
        %2062 = vmatprep.subr.bf16.mxu0 0
        %2063 = vmatpush1.bf16.msra.mxu0 %v1956
        %2064 = vmatprep.subr.bf16.mxu0 0
        %2065 = vmatpush1.bf16.msra.mxu0 %v1957
        %2066 = vmatprep.subr.bf16.mxu0 0
        %2067 = vmatpush1.bf16.msra.mxu0 %v1958
        %2068 = vmatprep.subr.bf16.mxu0 0
        %2069 = vmatpush1.bf16.msra.mxu0 %v1959
        %2070 = vmatprep.subr.bf16.mxu0 0
        %2071 = vmatpush1.bf16.msra.mxu0 %v1960
        %2072 = vmatprep.subr.bf16.mxu0 0
        %2073 = vmatpush1.bf16.msra.mxu0 %v1961
        %2074 = vmatprep.subr.bf16.mxu0 0
        %2075 = vmatpush1.bf16.msra.mxu0 %v1962
        %2076 = vmatprep.subr.bf16.mxu0 0
        %2077 = vmatpush1.bf16.msra.mxu0 %v1963
        %2078 = vmatprep.subr.bf16.mxu0 0
        %2079 = vmatpush1.bf16.msra.mxu0 %v1964
        %2080 = vmatprep.subr.bf16.mxu0 0
        %2081 = vmatpush1.bf16.msra.mxu0 %v1965
        %2082 = vmatprep.subr.bf16.mxu0 0
        %2083 = vmatpush1.bf16.msra.mxu0 %v1966
        %2084 = vmatprep.subr.bf16.mxu0 0
        %2085 = vmatpush1.bf16.msra.mxu0 %v1967
        %2086 = vmatprep.subr.bf16.mxu0 0
        %2087 = vmatpush1.bf16.msra.mxu0 %v1968
        %2088 = vmatprep.subr.bf16.mxu0 0
        %2089 = vmatpush1.bf16.msra.mxu0 %v1969
        %2090 = vmatprep.subr.bf16.mxu0 0
        %2091 = vmatpush1.bf16.msra.mxu0 %v1970
        %2092 = vmatprep.mubr.bf16.mxu0 %v1684
        %2093 = vmatmul.mubr.bf16.gmra.mrb[0].mxu0 %v1677
        %v2094 = vpop.f32.mrb[0].mxu0
        %v2095 = vadd.f32 %v2054, %v2094
        %v2096 = vpop.f32.mrb[0].mxu0
        %v2097 = vpop.f32.mrb[0].mxu0
        %v2098 = vadd.f32 %v2057, %v2097
        %v2099 = vpop.f32.mrb[0].mxu0
        %2100 = vdwg.mxu0
        %2101 = vmatprep.subr.bf16.mxu0 0
        %2102 = vmatpush1.bf16.msra.mxu0 %v1971
        %2103 = vmatprep.subr.bf16.mxu0 0
        %2104 = vmatpush1.bf16.msra.mxu0 %v1972
        %2105 = vmatprep.subr.bf16.mxu0 0
        %2106 = vmatpush1.bf16.msra.mxu0 %v1973
        %2107 = vmatprep.subr.bf16.mxu0 0
        %2108 = vmatpush1.bf16.msra.mxu0 %v1974
        %2109 = vmatprep.subr.bf16.mxu0 0
        %2110 = vmatpush1.bf16.msra.mxu0 %v1975
        %2111 = vmatprep.subr.bf16.mxu0 0
        %2112 = vmatpush1.bf16.msra.mxu0 %v1976
        %2113 = vmatprep.subr.bf16.mxu0 0
        %2114 = vmatpush1.bf16.msra.mxu0 %v1977
        %2115 = vmatprep.subr.bf16.mxu0 0
        %2116 = vmatpush1.bf16.msra.mxu0 %v1978
        %2117 = vmatprep.subr.bf16.mxu0 0
        %2118 = vmatpush1.bf16.msra.mxu0 0
        %2119 = vmatprep.subr.bf16.mxu0 0
        %2120 = vmatpush1.bf16.msra.mxu0 0
        %2121 = vmatprep.subr.bf16.mxu0 0
        %2122 = vmatpush1.bf16.msra.mxu0 0
        %2123 = vmatprep.subr.bf16.mxu0 0
        %2124 = vmatpush1.bf16.msra.mxu0 0
        %2125 = vmatprep.subr.bf16.mxu0 0
        %2126 = vmatpush1.bf16.msra.mxu0 0
        %2127 = vmatprep.subr.bf16.mxu0 0
        %2128 = vmatpush1.bf16.msra.mxu0 0
        %2129 = vmatprep.subr.bf16.mxu0 0
        %2130 = vmatpush1.bf16.msra.mxu0 0
        %2131 = vmatprep.subr.bf16.mxu0 0
        %2132 = vmatpush1.bf16.msra.mxu0 0
        %2133 = vmatprep.mubr.bf16.mxu0 0
        %2134 = vmatmul.mubr.bf16.gmra.mrb[0].mxu0 %v1691
        %v2135 = vpop.f32.mrb[0].mxu0
        %v2136 = vadd.f32 %v2095, %v2135
        %v2137 = vpop.f32.mrb[0].mxu0
        %v2138 = vpop.f32.mrb[0].mxu0
        %v2139 = vadd.f32 %v2098, %v2138
        %v2140 = vpop.f32.mrb[0].mxu0
        %2141 = vdwg.mxu0
        %v2142 = vmax.f32 %v2136, 0.0
        %v2143 = vmax.f32 %v2139, 0.0
        %v2144 = vrot.slane %v2142, 6
        %v2145 = vrot.slane %v2143, 6
        %v2146 = vsel %vm689, %v2144, %v2145
        %v2147 = vsel %vm689, %v2145, %v2144
        %v2148 = vsel %vm696, %v2147, 0.0
        %v2149 = vsel %vm697, %v2146, 0.0
        %v2150 = vpack.c.bf16 %v2149, %v2148
        %v2151 = vrot.slane %v2142, 7
        %v2152 = vrot.slane %v2143, 7
        %v2153 = vsel %vm378, %v2151, %v2152
        %v2154 = vsel %vm378, %v2152, %v2151
        %v2155 = vsel %vm386, %v2154, 0.0
        %v2156 = vsel %vm387, %v2153, 0.0
        %v2157 = vpack.c.bf16 %v2156, %v2155
        %v2158 = vpack.c.bf16 %v2143, %v2142
        %v2159 = vrot.slane %v2142, 1
        %v2160 = vrot.slane %v2143, 1
        %v2161 = vsel %vm394, %v2159, %v2160
        %v2162 = vsel %vm394, %v2160, %v2159
        %v2163 = vsel %vm401, %v2161, 0.0
        %v2164 = vsel %vm402, %v2162, 0.0
        %v2165 = vpack.c.bf16 %v2164, %v2163
        %v2166 = vrot.slane %v2142, 2
        %v2167 = vrot.slane %v2143, 2
        %v2168 = vsel %vm718, %v2166, %v2167
        %v2169 = vsel %vm718, %v2167, %v2166
        %v2170 = vsel %vm725, %v2168, 0.0
        %v2171 = vsel %vm726, %v2169, 0.0
        %v2172 = vpack.c.bf16 %v2171, %v2170
        %v2173 = vld [vmem:[#allocation8 + $0x480] sm:$0xf]
        %v2174 = vld [vmem:[#allocation8 + $0x484] sm:$0xf]
        %v2175 = vld [vmem:[#allocation8 + $0x488] sm:$0xf]
        %v2176 = vld [vmem:[#allocation8 + $0x48c] sm:$0xf]
        %v2177 = vld [vmem:[#allocation8 + $0x490] sm:$0xf]
        %v2178 = vld [vmem:[#allocation8 + $0x494] sm:$0xf]
        %v2179 = vld [vmem:[#allocation8 + $0x498] sm:$0xf]
        %v2180 = vld [vmem:[#allocation8 + $0x49c] sm:$0xf]
        %v2181 = vld [vmem:[#allocation8 + $0x4a0] sm:$0xf]
        %v2182 = vld [vmem:[#allocation8 + $0x4a4] sm:$0xf]
        %v2183 = vld [vmem:[#allocation8 + $0x4a8] sm:$0xf]
        %v2184 = vld [vmem:[#allocation8 + $0x4ac] sm:$0xf]
        %v2185 = vld [vmem:[#allocation8 + $0x4b0] sm:$0xf]
        %v2186 = vld [vmem:[#allocation8 + $0x4b4] sm:$0xf]
        %v2187 = vld [vmem:[#allocation8 + $0x4b8] sm:$0xf]
        %v2188 = vld [vmem:[#allocation8 + $0x4bc] sm:$0xf]
        %v2189 = vld [vmem:[#allocation8 + $0x4c0] sm:$0xf]
        %v2190 = vld [vmem:[#allocation8 + $0x4c4] sm:$0xf]
        %v2191 = vld [vmem:[#allocation8 + $0x4c8] sm:$0xf]
        %v2192 = vld [vmem:[#allocation8 + $0x4cc] sm:$0xf]
        %v2193 = vld [vmem:[#allocation8 + $0x4d0] sm:$0xf]
        %v2194 = vld [vmem:[#allocation8 + $0x4d4] sm:$0xf]
        %v2195 = vld [vmem:[#allocation8 + $0x4d8] sm:$0xf]
        %v2196 = vld [vmem:[#allocation8 + $0x4dc] sm:$0xf]
        %v2197 = vld [vmem:[#allocation8 + $0x4e0] sm:$0xf]
        %v2198 = vld [vmem:[#allocation8 + $0x4e4] sm:$0xf]
        %v2199 = vld [vmem:[#allocation8 + $0x4e8] sm:$0xf]
        %v2200 = vld [vmem:[#allocation8 + $0x4ec] sm:$0xf]
        %v2201 = vld [vmem:[#allocation8 + $0x4f0] sm:$0xf]
        %v2202 = vld [vmem:[#allocation8 + $0x4f4] sm:$0xf]
        %v2203 = vld [vmem:[#allocation8 + $0x4f8] sm:$0xf]
        %v2204 = vld [vmem:[#allocation8 + $0x4fc] sm:$0xf]
        %v2205 = vld [vmem:[#allocation8 + $0x500] sm:$0xf]
        %v2206 = vld [vmem:[#allocation8 + $0x504] sm:$0xf]
        %v2207 = vld [vmem:[#allocation8 + $0x508] sm:$0xf]
        %v2208 = vld [vmem:[#allocation8 + $0x50c] sm:$0xf]
        %v2209 = vld [vmem:[#allocation8 + $0x510] sm:$0xf]
        %v2210 = vld [vmem:[#allocation8 + $0x514] sm:$0xf]
        %v2211 = vld [vmem:[#allocation8 + $0x518] sm:$0xf]
        %v2212 = vld [vmem:[#allocation8 + $0x51c] sm:$0xf]
        %v2213 = vld [vmem:[#allocation8 + $0x520] sm:$0xf]
        %v2214 = vld [vmem:[#allocation8 + $0x524] sm:$0xf]
        %v2215 = vld [vmem:[#allocation8 + $0x528] sm:$0xf]
        %v2216 = vld [vmem:[#allocation8 + $0x52c] sm:$0xf]
        %v2217 = vld [vmem:[#allocation8 + $0x530] sm:$0xf]
        %v2218 = vld [vmem:[#allocation8 + $0x534] sm:$0xf]
        %v2219 = vld [vmem:[#allocation8 + $0x538] sm:$0xf]
        %v2220 = vld [vmem:[#allocation8 + $0x53c] sm:$0xf]
        %v2221 = vld [vmem:[#allocation8 + $0x540] sm:$0xf]
        %v2222 = vld [vmem:[#allocation8 + $0x544] sm:$0xf]
        %v2223 = vld [vmem:[#allocation8 + $0x548] sm:$0xf]
        %v2224 = vld [vmem:[#allocation8 + $0x54c] sm:$0xf]
        %v2225 = vld [vmem:[#allocation8 + $0x550] sm:$0xf]
        %v2226 = vld [vmem:[#allocation8 + $0x554] sm:$0xf]
        %v2227 = vld [vmem:[#allocation8 + $0x558] sm:$0xf]
        %v2228 = vld [vmem:[#allocation8 + $0x55c] sm:$0xf]
        %v2229 = vld [vmem:[#allocation8 + $0x560] sm:$0xf]
        %v2230 = vld [vmem:[#allocation8 + $0x564] sm:$0xf]
        %v2231 = vld [vmem:[#allocation8 + $0x568] sm:$0xf]
        %v2232 = vld [vmem:[#allocation8 + $0x56c] sm:$0xf]
        %v2233 = vld [vmem:[#allocation8 + $0x570] sm:$0xf]
        %v2234 = vld [vmem:[#allocation8 + $0x574] sm:$0xf]
        %v2235 = vld [vmem:[#allocation8 + $0x578] sm:$0xf]
        %v2236 = vld [vmem:[#allocation8 + $0x57c] sm:$0xf]
        %v2237 = vld [vmem:[#allocation8 + $0x580] sm:$0xf]
        %v2238 = vld [vmem:[#allocation8 + $0x584] sm:$0xf]
        %v2239 = vld [vmem:[#allocation8 + $0x588] sm:$0xf]
        %v2240 = vld [vmem:[#allocation8 + $0x58c] sm:$0xf]
        %v2241 = vld [vmem:[#allocation8 + $0x590] sm:$0xf]
        %v2242 = vld [vmem:[#allocation8 + $0x594] sm:$0xf]
        %v2243 = vld [vmem:[#allocation8 + $0x598] sm:$0xf]
        %v2244 = vld [vmem:[#allocation8 + $0x59c] sm:$0xf]
        %v2245 = vld [vmem:[#allocation8 + $0x5a0] sm:$0xf]
        %v2246 = vld [vmem:[#allocation8 + $0x5a4] sm:$0xf]
        %v2247 = vld [vmem:[#allocation8 + $0x5a8] sm:$0xf]
        %v2248 = vld [vmem:[#allocation8 + $0x5ac] sm:$0xf]
        %v2249 = vld [vmem:[#allocation8 + $0x5b0] sm:$0xf]
        %v2250 = vld [vmem:[#allocation8 + $0x5b4] sm:$0xf]
        %v2251 = vld [vmem:[#allocation8 + $0x5b8] sm:$0xf]
        %v2252 = vld [vmem:[#allocation8 + $0x5bc] sm:$0xf]
        %v2253 = vld [vmem:[#allocation10 + $0x4] sm:$0x1]
        %v2255 = vlaneseq
        %v2256 = vshrl.u32 %v2255, 7
        %v2257 = vsub.s32 0, %v2256
        %v2258 = vrot.slane %v2253, %v2257
        %v2340 = vunpack.c.l.b16 %v2173
        %v2341 = vunpack.c.l.b16 %v2174
        %v2342 = vunpack.c.l.b16 %v2175
        %v2343 = vunpack.c.l.b16 %v2176
        %v2344 = vunpack.c.l.b16 %v2177
        %v2345 = vunpack.c.l.b16 %v2178
        %v2346 = vunpack.c.l.b16 %v2179
        %v2347 = vunpack.c.l.b16 %v2180
        %v2348 = vunpack.c.l.b16 %v2181
        %v2349 = vunpack.c.l.b16 %v2182
        %v2350 = vunpack.c.l.b16 %v2183
        %v2351 = vunpack.c.l.b16 %v2184
        %v2352 = vunpack.c.l.b16 %v2185
        %v2353 = vunpack.c.l.b16 %v2186
        %v2354 = vunpack.c.l.b16 %v2187
        %v2355 = vunpack.c.l.b16 %v2188
        %v2356 = vunpack.c.l.b16 %v2189
        %v2357 = vunpack.c.l.b16 %v2190
        %v2358 = vunpack.c.l.b16 %v2191
        %v2359 = vunpack.c.l.b16 %v2192
        %v2360 = vunpack.c.l.b16 %v2193
        %v2361 = vunpack.c.l.b16 %v2194
        %v2362 = vunpack.c.l.b16 %v2195
        %v2363 = vunpack.c.l.b16 %v2196
        %v2364 = vunpack.c.l.b16 %v2197
        %v2365 = vunpack.c.l.b16 %v2198
        %v2366 = vunpack.c.l.b16 %v2199
        %v2367 = vunpack.c.l.b16 %v2200
        %v2368 = vunpack.c.l.b16 %v2201
        %v2369 = vunpack.c.l.b16 %v2202
        %v2370 = vunpack.c.l.b16 %v2203
        %v2371 = vunpack.c.l.b16 %v2204
        %v2372 = vunpack.c.l.b16 %v2205
        %v2373 = vunpack.c.l.b16 %v2206
        %v2374 = vunpack.c.l.b16 %v2207
        %v2375 = vunpack.c.l.b16 %v2208
        %v2376 = vunpack.c.l.b16 %v2209
        %v2377 = vunpack.c.l.b16 %v2210
        %v2378 = vunpack.c.l.b16 %v2211
        %v2379 = vunpack.c.l.b16 %v2212
        %v2380 = vunpack.c.l.b16 %v2213
        %v2381 = vunpack.c.l.b16 %v2214
        %v2382 = vunpack.c.l.b16 %v2215
        %v2383 = vunpack.c.l.b16 %v2216
        %v2384 = vunpack.c.l.b16 %v2217
        %v2385 = vunpack.c.l.b16 %v2218
        %v2386 = vunpack.c.l.b16 %v2219
        %v2387 = vunpack.c.l.b16 %v2220
        %v2388 = vunpack.c.l.b16 %v2221
        %v2389 = vunpack.c.l.b16 %v2222
        %v2390 = vunpack.c.l.b16 %v2223
        %v2391 = vunpack.c.l.b16 %v2224
        %v2392 = vunpack.c.l.b16 %v2225
        %v2393 = vunpack.c.l.b16 %v2226
        %v2394 = vunpack.c.l.b16 %v2227
        %v2395 = vunpack.c.l.b16 %v2228
        %v2396 = vunpack.c.l.b16 %v2229
        %v2397 = vunpack.c.l.b16 %v2230
        %v2398 = vunpack.c.l.b16 %v2231
        %v2399 = vunpack.c.l.b16 %v2232
        %v2400 = vunpack.c.l.b16 %v2233
        %v2401 = vunpack.c.l.b16 %v2234
        %v2402 = vunpack.c.l.b16 %v2235
        %v2403 = vunpack.c.l.b16 %v2236
        %v2404 = vunpack.c.l.b16 %v2237
        %v2405 = vunpack.c.l.b16 %v2238
        %v2406 = vunpack.c.l.b16 %v2239
        %v2407 = vunpack.c.l.b16 %v2240
        %v2408 = vunpack.c.l.b16 %v2241
        %v2409 = vunpack.c.l.b16 %v2242
        %v2410 = vunpack.c.l.b16 %v2243
        %v2411 = vunpack.c.l.b16 %v2244
        %v2412 = vunpack.c.l.b16 %v2245
        %v2413 = vunpack.c.l.b16 %v2246
        %v2414 = vunpack.c.l.b16 %v2247
        %v2415 = vunpack.c.l.b16 %v2248
        %v2416 = vunpack.c.l.b16 %v2249
        %v2417 = vunpack.c.l.b16 %v2250
        %v2418 = vunpack.c.l.b16 %v2251
        %v2419 = vunpack.c.l.b16 %v2252
        %v2420 = vpack.c.b16 %v2341, %v2340
        %v2421 = vpack.c.b16 %v2343, %v2342
        %v2422 = vpack.c.b16 %v2345, %v2344
        %v2423 = vpack.c.b16 %v2347, %v2346
        %v2424 = vpack.c.b16 %v2349, %v2348
        %v2425 = vpack.c.b16 %v2351, %v2350
        %v2426 = vpack.c.b16 %v2353, %v2352
        %v2427 = vpack.c.b16 %v2355, %v2354
        %v2428 = vpack.c.b16 %v2357, %v2356
        %v2429 = vpack.c.b16 %v2359, %v2358
        %v2430 = vpack.c.b16 %v2361, %v2360
        %v2431 = vpack.c.b16 %v2363, %v2362
        %v2432 = vpack.c.b16 %v2365, %v2364
        %v2433 = vpack.c.b16 %v2367, %v2366
        %v2434 = vpack.c.b16 %v2369, %v2368
        %v2435 = vpack.c.b16 %v2371, %v2370
        %v2436 = vpack.c.b16 %v2373, %v2372
        %v2437 = vpack.c.b16 %v2375, %v2374
        %v2438 = vpack.c.b16 %v2377, %v2376
        %v2439 = vpack.c.b16 %v2379, %v2378
        %v2440 = vpack.c.b16 %v2381, %v2380
        %v2441 = vpack.c.b16 %v2383, %v2382
        %v2442 = vpack.c.b16 %v2385, %v2384
        %v2443 = vpack.c.b16 %v2387, %v2386
        %v2444 = vpack.c.b16 %v2389, %v2388
        %v2445 = vpack.c.b16 %v2391, %v2390
        %v2446 = vpack.c.b16 %v2393, %v2392
        %v2447 = vpack.c.b16 %v2395, %v2394
        %v2448 = vpack.c.b16 %v2397, %v2396
        %v2449 = vpack.c.b16 %v2399, %v2398
        %v2450 = vpack.c.b16 %v2401, %v2400
        %v2451 = vpack.c.b16 %v2403, %v2402
        %v2452 = vpack.c.b16 %v2405, %v2404
        %v2453 = vpack.c.b16 %v2407, %v2406
        %v2454 = vpack.c.b16 %v2409, %v2408
        %v2455 = vpack.c.b16 %v2411, %v2410
        %v2456 = vpack.c.b16 %v2413, %v2412
        %v2457 = vpack.c.b16 %v2415, %v2414
        %v2458 = vpack.c.b16 %v2417, %v2416
        %v2459 = vpack.c.b16 %v2419, %v2418
        %2500 = vmatprep.subr.bf16.mxu0 0
        %2501 = vmatpush1.bf16.msra.mxu0 %v2420
        %2502 = vmatprep.subr.bf16.mxu0 0
        %2503 = vmatpush1.bf16.msra.mxu0 %v2421
        %2504 = vmatprep.subr.bf16.mxu0 0
        %2505 = vmatpush1.bf16.msra.mxu0 %v2422
        %2506 = vmatprep.subr.bf16.mxu0 0
        %2507 = vmatpush1.bf16.msra.mxu0 %v2423
        %2508 = vmatprep.subr.bf16.mxu0 0
        %2509 = vmatpush1.bf16.msra.mxu0 %v2424
        %2510 = vmatprep.subr.bf16.mxu0 0
        %2511 = vmatpush1.bf16.msra.mxu0 %v2425
        %2512 = vmatprep.subr.bf16.mxu0 0
        %2513 = vmatpush1.bf16.msra.mxu0 %v2426
        %2514 = vmatprep.subr.bf16.mxu0 0
        %2515 = vmatpush1.bf16.msra.mxu0 %v2427
        %2516 = vmatprep.subr.bf16.mxu0 0
        %2517 = vmatpush1.bf16.msra.mxu0 %v2428
        %2518 = vmatprep.subr.bf16.mxu0 0
        %2519 = vmatpush1.bf16.msra.mxu0 %v2429
        %2520 = vmatprep.subr.bf16.mxu0 0
        %2521 = vmatpush1.bf16.msra.mxu0 %v2430
        %2522 = vmatprep.subr.bf16.mxu0 0
        %2523 = vmatpush1.bf16.msra.mxu0 %v2431
        %2524 = vmatprep.subr.bf16.mxu0 0
        %2525 = vmatpush1.bf16.msra.mxu0 %v2432
        %2526 = vmatprep.subr.bf16.mxu0 0
        %2527 = vmatpush1.bf16.msra.mxu0 %v2433
        %2528 = vmatprep.subr.bf16.mxu0 0
        %2529 = vmatpush1.bf16.msra.mxu0 %v2434
        %2530 = vmatprep.subr.bf16.mxu0 0
        %2531 = vmatpush1.bf16.msra.mxu0 %v2435
        %2532 = vmatprep.mubr.bf16.mxu0 %v2157
        %2533 = vmatmul.mubr.bf16.gmra.mrb[0].mxu0 %v2150
        %v2534 = vpop.f32.mrb[0].mxu0
        %v2535 = vadd.f32 %v2258, %v2534
        %v2536 = vpop.f32.mrb[0].mxu0
        %v2537 = vpop.f32.mrb[0].mxu0
        %v2538 = vadd.f32 %v2258, %v2537
        %v2539 = vpop.f32.mrb[0].mxu0
        %2540 = vdwg.mxu0
        %2541 = vmatprep.subr.bf16.mxu0 0
        %2542 = vmatpush1.bf16.msra.mxu0 %v2436
        %2543 = vmatprep.subr.bf16.mxu0 0
        %2544 = vmatpush1.bf16.msra.mxu0 %v2437
        %2545 = vmatprep.subr.bf16.mxu0 0
        %2546 = vmatpush1.bf16.msra.mxu0 %v2438
        %2547 = vmatprep.subr.bf16.mxu0 0
        %2548 = vmatpush1.bf16.msra.mxu0 %v2439
        %2549 = vmatprep.subr.bf16.mxu0 0
        %2550 = vmatpush1.bf16.msra.mxu0 %v2440
        %2551 = vmatprep.subr.bf16.mxu0 0
        %2552 = vmatpush1.bf16.msra.mxu0 %v2441
        %2553 = vmatprep.subr.bf16.mxu0 0
        %2554 = vmatpush1.bf16.msra.mxu0 %v2442
        %2555 = vmatprep.subr.bf16.mxu0 0
        %2556 = vmatpush1.bf16.msra.mxu0 %v2443
        %2557 = vmatprep.subr.bf16.mxu0 0
        %2558 = vmatpush1.bf16.msra.mxu0 %v2444
        %2559 = vmatprep.subr.bf16.mxu0 0
        %2560 = vmatpush1.bf16.msra.mxu0 %v2445
        %2561 = vmatprep.subr.bf16.mxu0 0
        %2562 = vmatpush1.bf16.msra.mxu0 %v2446
        %2563 = vmatprep.subr.bf16.mxu0 0
        %2564 = vmatpush1.bf16.msra.mxu0 %v2447
        %2565 = vmatprep.subr.bf16.mxu0 0
        %2566 = vmatpush1.bf16.msra.mxu0 %v2448
        %2567 = vmatprep.subr.bf16.mxu0 0
        %2568 = vmatpush1.bf16.msra.mxu0 %v2449
        %2569 = vmatprep.subr.bf16.mxu0 0
        %2570 = vmatpush1.bf16.msra.mxu0 %v2450
        %2571 = vmatprep.subr.bf16.mxu0 0
        %2572 = vmatpush1.bf16.msra.mxu0 %v2451
        %2573 = vmatprep.mubr.bf16.mxu0 %v2165
        %2574 = vmatmul.mubr.bf16.gmra.mrb[0].mxu0 %v2158
        %v2575 = vpop.f32.mrb[0].mxu0
        %v2576 = vadd.f32 %v2535, %v2575
        %v2577 = vpop.f32.mrb[0].mxu0
        %v2578 = vpop.f32.mrb[0].mxu0
        %v2579 = vadd.f32 %v2538, %v2578
        %v2580 = vpop.f32.mrb[0].mxu0
        %2581 = vdwg.mxu0
        %2582 = vmatprep.subr.bf16.mxu0 0
        %2583 = vmatpush1.bf16.msra.mxu0 %v2452
        %2584 = vmatprep.subr.bf16.mxu0 0
        %2585 = vmatpush1.bf16.msra.mxu0 %v2453
        %2586 = vmatprep.subr.bf16.mxu0 0
        %2587 = vmatpush1.bf16.msra.mxu0 %v2454
        %2588 = vmatprep.subr.bf16.mxu0 0
        %2589 = vmatpush1.bf16.msra.mxu0 %v2455
        %2590 = vmatprep.subr.bf16.mxu0 0
        %2591 = vmatpush1.bf16.msra.mxu0 %v2456
        %2592 = vmatprep.subr.bf16.mxu0 0
        %2593 = vmatpush1.bf16.msra.mxu0 %v2457
        %2594 = vmatprep.subr.bf16.mxu0 0
        %2595 = vmatpush1.bf16.msra.mxu0 %v2458
        %2596 = vmatprep.subr.bf16.mxu0 0
        %2597 = vmatpush1.bf16.msra.mxu0 %v2459
        %2598 = vmatprep.subr.bf16.mxu0 0
        %2599 = vmatpush1.bf16.msra.mxu0 0
        %2600 = vmatprep.subr.bf16.mxu0 0
        %2601 = vmatpush1.bf16.msra.mxu0 0
        %2602 = vmatprep.subr.bf16.mxu0 0
        %2603 = vmatpush1.bf16.msra.mxu0 0
        %2604 = vmatprep.subr.bf16.mxu0 0
        %2605 = vmatpush1.bf16.msra.mxu0 0
        %2606 = vmatprep.subr.bf16.mxu0 0
        %2607 = vmatpush1.bf16.msra.mxu0 0
        %2608 = vmatprep.subr.bf16.mxu0 0
        %2609 = vmatpush1.bf16.msra.mxu0 0
        %2610 = vmatprep.subr.bf16.mxu0 0
        %2611 = vmatpush1.bf16.msra.mxu0 0
        %2612 = vmatprep.subr.bf16.mxu0 0
        %2613 = vmatpush1.bf16.msra.mxu0 0
        %2614 = vmatprep.mubr.bf16.mxu0 0
        %2615 = vmatmul.mubr.bf16.gmra.mrb[0].mxu0 %v2172
        %v2616 = vpop.f32.mrb[0].mxu0
        %v2617 = vadd.f32 %v2576, %v2616
        %v2618 = vpop.f32.mrb[0].mxu0
        %v2619 = vpop.f32.mrb[0].mxu0
        %v2620 = vadd.f32 %v2579, %v2619
        %v2621 = vpop.f32.mrb[0].mxu0
        %2622 = vdwg.mxu0
        %v2623 = vadd.f32 %v2617, %v1661
        %v2624 = vadd.f32 %v2620, %v1662
        %v2625 = vrot.slane %v2623, 7
        %v2626 = vrot.slane %v2624, 7
        %v2627 = vsel %vm378, %v2625, %v2626
        %v2628 = vsel %vm378, %v2626, %v2625
        %v2629 = vsel %vm386, %v2628, 0.0
        %v2630 = vsel %vm387, %v2627, 0.0
        %v2631 = vpack.c.bf16 %v2630, %v2629
        %v2632 = vpack.c.bf16 %v2624, %v2623
        %v2633 = vrot.slane %v2623, 1
        %v2634 = vrot.slane %v2624, 1
        %v2635 = vsel %vm394, %v2633, %v2634
        %v2636 = vsel %vm394, %v2634, %v2633
        %v2637 = vsel %vm401, %v2635, 0.0
        %v2638 = vsel %vm402, %v2636, 0.0
        %v2639 = vpack.c.bf16 %v2638, %v2637
        %v2640 = vld [vmem:[#allocation8 + $0x5c0] sm:$0xf]
        %v2641 = vld [vmem:[#allocation8 + $0x5c4] sm:$0xf]
        %v2642 = vld [vmem:[#allocation8 + $0x5c8] sm:$0xf]
        %v2643 = vld [vmem:[#allocation8 + $0x5cc] sm:$0xf]
        %v2644 = vld [vmem:[#allocation8 + $0x5d0] sm:$0xf]
        %v2645 = vld [vmem:[#allocation8 + $0x5d4] sm:$0xf]
        %v2646 = vld [vmem:[#allocation8 + $0x5d8] sm:$0xf]
        %v2647 = vld [vmem:[#allocation8 + $0x5dc] sm:$0xf]
        %v2648 = vld [vmem:[#allocation8 + $0x5e0] sm:$0xf]
        %v2649 = vld [vmem:[#allocation8 + $0x5e4] sm:$0xf]
        %v2650 = vld [vmem:[#allocation8 + $0x5e8] sm:$0xf]
        %v2651 = vld [vmem:[#allocation8 + $0x5ec] sm:$0xf]
        %v2652 = vld [vmem:[#allocation8 + $0x5f0] sm:$0xf]
        %v2653 = vld [vmem:[#allocation8 + $0x5f4] sm:$0xf]
        %v2654 = vld [vmem:[#allocation8 + $0x5f8] sm:$0xf]
        %v2655 = vld [vmem:[#allocation8 + $0x5fc] sm:$0xf]
        %v2656 = vld [vmem:[#allocation8 + $0x600] sm:$0xf]
        %v2657 = vld [vmem:[#allocation8 + $0x604] sm:$0xf]
        %v2658 = vld [vmem:[#allocation8 + $0x608] sm:$0xf]
        %v2659 = vld [vmem:[#allocation8 + $0x60c] sm:$0xf]
        %v2660 = vld [vmem:[#allocation8 + $0x610] sm:$0xf]
        %v2661 = vld [vmem:[#allocation8 + $0x614] sm:$0xf]
        %v2662 = vld [vmem:[#allocation8 + $0x618] sm:$0xf]
        %v2663 = vld [vmem:[#allocation8 + $0x61c] sm:$0xf]
        %v2664 = vld [vmem:[#allocation8 + $0x620] sm:$0xf]
        %v2665 = vld [vmem:[#allocation8 + $0x624] sm:$0xf]
        %v2666 = vld [vmem:[#allocation8 + $0x628] sm:$0xf]
        %v2667 = vld [vmem:[#allocation8 + $0x62c] sm:$0xf]
        %v2668 = vld [vmem:[#allocation8 + $0x630] sm:$0xf]
        %v2669 = vld [vmem:[#allocation8 + $0x634] sm:$0xf]
        %v2670 = vld [vmem:[#allocation8 + $0x638] sm:$0xf]
        %v2671 = vld [vmem:[#allocation8 + $0x63c] sm:$0xf]
        %v2672 = vld [vmem:[#allocation8 + $0x640] sm:$0xf]
        %v2673 = vld [vmem:[#allocation8 + $0x644] sm:$0xf]
        %v2674 = vld [vmem:[#allocation8 + $0x648] sm:$0xf]
        %v2675 = vld [vmem:[#allocation8 + $0x64c] sm:$0xf]
        %v2676 = vld [vmem:[#allocation8 + $0x650] sm:$0xf]
        %v2677 = vld [vmem:[#allocation8 + $0x654] sm:$0xf]
        %v2678 = vld [vmem:[#allocation8 + $0x658] sm:$0xf]
        %v2679 = vld [vmem:[#allocation8 + $0x65c] sm:$0xf]
        %v2680 = vld [vmem:[#allocation8 + $0x660] sm:$0xf]
        %v2681 = vld [vmem:[#allocation8 + $0x664] sm:$0xf]
        %v2682 = vld [vmem:[#allocation8 + $0x668] sm:$0xf]
        %v2683 = vld [vmem:[#allocation8 + $0x66c] sm:$0xf]
        %v2684 = vld [vmem:[#allocation8 + $0x670] sm:$0xf]
        %v2685 = vld [vmem:[#allocation8 + $0x674] sm:$0xf]
        %v2686 = vld [vmem:[#allocation8 + $0x678] sm:$0xf]
        %v2687 = vld [vmem:[#allocation8 + $0x67c] sm:$0xf]
        %v2688 = vld [vmem:[#allocation10 + $0x5] sm:$0x1]
        %v2690 = vlaneseq
        %v2691 = vshrl.u32 %v2690, 7
        %v2692 = vsub.s32 0, %v2691
        %v2693 = vrot.slane %v2688, %v2692
        %v2743 = vunpack.c.l.b16 %v2640
        %v2744 = vunpack.c.l.b16 %v2641
        %v2745 = vunpack.c.l.b16 %v2642
        %v2746 = vunpack.c.l.b16 %v2643
        %v2747 = vunpack.c.l.b16 %v2644
        %v2748 = vunpack.c.l.b16 %v2645
        %v2749 = vunpack.c.l.b16 %v2646
        %v2750 = vunpack.c.l.b16 %v2647
        %v2751 = vunpack.c.l.b16 %v2648
        %v2752 = vunpack.c.l.b16 %v2649
        %v2753 = vunpack.c.l.b16 %v2650
        %v2754 = vunpack.c.l.b16 %v2651
        %v2755 = vunpack.c.l.b16 %v2652
        %v2756 = vunpack.c.l.b16 %v2653
        %v2757 = vunpack.c.l.b16 %v2654
        %v2758 = vunpack.c.l.b16 %v2655
        %v2759 = vunpack.c.l.b16 %v2656
        %v2760 = vunpack.c.l.b16 %v2657
        %v2761 = vunpack.c.l.b16 %v2658
        %v2762 = vunpack.c.l.b16 %v2659
        %v2763 = vunpack.c.l.b16 %v2660
        %v2764 = vunpack.c.l.b16 %v2661
        %v2765 = vunpack.c.l.b16 %v2662
        %v2766 = vunpack.c.l.b16 %v2663
        %v2767 = vunpack.c.l.b16 %v2664
        %v2768 = vunpack.c.l.b16 %v2665
        %v2769 = vunpack.c.l.b16 %v2666
        %v2770 = vunpack.c.l.b16 %v2667
        %v2771 = vunpack.c.l.b16 %v2668
        %v2772 = vunpack.c.l.b16 %v2669
        %v2773 = vunpack.c.l.b16 %v2670
        %v2774 = vunpack.c.l.b16 %v2671
        %v2775 = vunpack.c.l.b16 %v2672
        %v2776 = vunpack.c.l.b16 %v2673
        %v2777 = vunpack.c.l.b16 %v2674
        %v2778 = vunpack.c.l.b16 %v2675
        %v2779 = vunpack.c.l.b16 %v2676
        %v2780 = vunpack.c.l.b16 %v2677
        %v2781 = vunpack.c.l.b16 %v2678
        %v2782 = vunpack.c.l.b16 %v2679
        %v2783 = vunpack.c.l.b16 %v2680
        %v2784 = vunpack.c.l.b16 %v2681
        %v2785 = vunpack.c.l.b16 %v2682
        %v2786 = vunpack.c.l.b16 %v2683
        %v2787 = vunpack.c.l.b16 %v2684
        %v2788 = vunpack.c.l.b16 %v2685
        %v2789 = vunpack.c.l.b16 %v2686
        %v2790 = vunpack.c.l.b16 %v2687
        %v2791 = vpack.c.b16 %v2744, %v2743
        %v2792 = vpack.c.b16 %v2746, %v2745
        %v2793 = vpack.c.b16 %v2748, %v2747
        %v2794 = vpack.c.b16 %v2750, %v2749
        %v2795 = vpack.c.b16 %v2752, %v2751
        %v2796 = vpack.c.b16 %v2754, %v2753
        %v2797 = vpack.c.b16 %v2756, %v2755
        %v2798 = vpack.c.b16 %v2758, %v2757
        %v2799 = vpack.c.b16 %v2760, %v2759
        %v2800 = vpack.c.b16 %v2762, %v2761
        %v2801 = vpack.c.b16 %v2764, %v2763
        %v2802 = vpack.c.b16 %v2766, %v2765
        %v2803 = vpack.c.b16 %v2768, %v2767
        %v2804 = vpack.c.b16 %v2770, %v2769
        %v2805 = vpack.c.b16 %v2772, %v2771
        %v2806 = vpack.c.b16 %v2774, %v2773
        %v2807 = vpack.c.b16 %v2776, %v2775
        %v2808 = vpack.c.b16 %v2778, %v2777
        %v2809 = vpack.c.b16 %v2780, %v2779
        %v2810 = vpack.c.b16 %v2782, %v2781
        %v2811 = vpack.c.b16 %v2784, %v2783
        %v2812 = vpack.c.b16 %v2786, %v2785
        %v2813 = vpack.c.b16 %v2788, %v2787
        %v2814 = vpack.c.b16 %v2790, %v2789
        %2839 = vmatprep.subr.bf16.mxu0 0
        %2840 = vmatpush1.bf16.msra.mxu0 %v2791
        %2841 = vmatprep.subr.bf16.mxu0 0
        %2842 = vmatpush1.bf16.msra.mxu0 %v2792
        %2843 = vmatprep.subr.bf16.mxu0 0
        %2844 = vmatpush1.bf16.msra.mxu0 %v2793
        %2845 = vmatprep.subr.bf16.mxu0 0
        %2846 = vmatpush1.bf16.msra.mxu0 %v2794
        %2847 = vmatprep.subr.bf16.mxu0 0
        %2848 = vmatpush1.bf16.msra.mxu0 %v2795
        %2849 = vmatprep.subr.bf16.mxu0 0
        %2850 = vmatpush1.bf16.msra.mxu0 %v2796
        %2851 = vmatprep.subr.bf16.mxu0 0
        %2852 = vmatpush1.bf16.msra.mxu0 %v2797
        %2853 = vmatprep.subr.bf16.mxu0 0
        %2854 = vmatpush1.bf16.msra.mxu0 %v2798
        %2855 = vmatprep.subr.bf16.mxu0 0
        %2856 = vmatpush1.bf16.msra.mxu0 %v2799
        %2857 = vmatprep.subr.bf16.mxu0 0
        %2858 = vmatpush1.bf16.msra.mxu0 %v2800
        %2859 = vmatprep.subr.bf16.mxu0 0
        %2860 = vmatpush1.bf16.msra.mxu0 %v2801
        %2861 = vmatprep.subr.bf16.mxu0 0
        %2862 = vmatpush1.bf16.msra.mxu0 %v2802
        %2863 = vmatprep.subr.bf16.mxu0 0
        %2864 = vmatpush1.bf16.msra.mxu0 %v2803
        %2865 = vmatprep.subr.bf16.mxu0 0
        %2866 = vmatpush1.bf16.msra.mxu0 %v2804
        %2867 = vmatprep.subr.bf16.mxu0 0
        %2868 = vmatpush1.bf16.msra.mxu0 %v2805
        %2869 = vmatprep.subr.bf16.mxu0 0
        %2870 = vmatpush1.bf16.msra.mxu0 %v2806
        %2871 = vmatprep.mubr.bf16.mxu0 %v2632
        %2872 = vmatmul.mubr.bf16.gmra.mrb[0].mxu0 %v2631
        %v2873 = vpop.f32.mrb[0].mxu0
        %v2874 = vadd.f32 %v2693, %v2873
        %v2875 = vpop.f32.mrb[0].mxu0
        %v2876 = vpop.f32.mrb[0].mxu0
        %v2877 = vadd.f32 %v2693, %v2876
        %v2878 = vpop.f32.mrb[0].mxu0
        %2879 = vdwg.mxu0
        %2880 = vmatprep.subr.bf16.mxu0 0
        %2881 = vmatpush1.bf16.msra.mxu0 %v2807
        %2882 = vmatprep.subr.bf16.mxu0 0
        %2883 = vmatpush1.bf16.msra.mxu0 %v2808
        %2884 = vmatprep.subr.bf16.mxu0 0
        %2885 = vmatpush1.bf16.msra.mxu0 %v2809
        %2886 = vmatprep.subr.bf16.mxu0 0
        %2887 = vmatpush1.bf16.msra.mxu0 %v2810
        %2888 = vmatprep.subr.bf16.mxu0 0
        %2889 = vmatpush1.bf16.msra.mxu0 %v2811
        %2890 = vmatprep.subr.bf16.mxu0 0
        %2891 = vmatpush1.bf16.msra.mxu0 %v2812
        %2892 = vmatprep.subr.bf16.mxu0 0
        %2893 = vmatpush1.bf16.msra.mxu0 %v2813
        %2894 = vmatprep.subr.bf16.mxu0 0
        %2895 = vmatpush1.bf16.msra.mxu0 %v2814
        %2896 = vmatprep.subr.bf16.mxu0 0
        %2897 = vmatpush1.bf16.msra.mxu0 0
        %2898 = vmatprep.subr.bf16.mxu0 0
        %2899 = vmatpush1.bf16.msra.mxu0 0
        %2900 = vmatprep.subr.bf16.mxu0 0
        %2901 = vmatpush1.bf16.msra.mxu0 0
        %2902 = vmatprep.subr.bf16.mxu0 0
        %2903 = vmatpush1.bf16.msra.mxu0 0
        %2904 = vmatprep.subr.bf16.mxu0 0
        %2905 = vmatpush1.bf16.msra.mxu0 0
        %2906 = vmatprep.subr.bf16.mxu0 0
        %2907 = vmatpush1.bf16.msra.mxu0 0
        %2908 = vmatprep.subr.bf16.mxu0 0
        %2909 = vmatpush1.bf16.msra.mxu0 0
        %2910 = vmatprep.subr.bf16.mxu0 0
        %2911 = vmatpush1.bf16.msra.mxu0 0
        %2912 = vmatprep.mubr.bf16.mxu0 0
        %2913 = vmatmul.mubr.bf16.gmra.mrb[0].mxu0 %v2639
        %v2914 = vpop.f32.mrb[0].mxu0
        %v2915 = vadd.f32 %v2874, %v2914
        %v2916 = vpop.f32.mrb[0].mxu0
        %v2917 = vpop.f32.mrb[0].mxu0
        %v2918 = vadd.f32 %v2877, %v2917
        %v2919 = vpop.f32.mrb[0].mxu0
        %2920 = vdwg.mxu0
        %v2921 = vmax.f32 %v2915, 0.0
        %v2922 = vmax.f32 %v2918, 0.0
        %v2923 = vrot.slane %v2921, 7
        %v2924 = vrot.slane %v2922, 7
        %v2925 = vsel %vm378, %v2923, %v2924
        %v2926 = vsel %vm378, %v2924, %v2923
        %v2927 = vsel %vm386, %v2926, 0.0
        %v2928 = vsel %vm387, %v2925, 0.0
        %v2929 = vpack.c.bf16 %v2928, %v2927
        %v2930 = vpack.c.bf16 %v2922, %v2921
        %v2931 = vrot.slane %v2921, 1
        %v2932 = vrot.slane %v2922, 1
        %v2933 = vsel %vm394, %v2931, %v2932
        %v2934 = vsel %vm394, %v2932, %v2931
        %v2935 = vsel %vm401, %v2933, 0.0
        %v2936 = vsel %vm402, %v2934, 0.0
        %v2937 = vpack.c.bf16 %v2936, %v2935
        %v2938 = vld [vmem:[#allocation8 + $0x680] sm:$0xf]
        %v2939 = vld [vmem:[#allocation8 + $0x684] sm:$0xf]
        %v2940 = vld [vmem:[#allocation8 + $0x688] sm:$0xf]
        %v2941 = vld [vmem:[#allocation8 + $0x68c] sm:$0xf]
        %v2942 = vld [vmem:[#allocation8 + $0x690] sm:$0xf]
        %v2943 = vld [vmem:[#allocation8 + $0x694] sm:$0xf]
        %v2944 = vld [vmem:[#allocation8 + $0x698] sm:$0xf]
        %v2945 = vld [vmem:[#allocation8 + $0x69c] sm:$0xf]
        %v2946 = vld [vmem:[#allocation8 + $0x6a0] sm:$0xf]
        %v2947 = vld [vmem:[#allocation8 + $0x6a4] sm:$0xf]
        %v2948 = vld [vmem:[#allocation8 + $0x6a8] sm:$0xf]
        %v2949 = vld [vmem:[#allocation8 + $0x6ac] sm:$0xf]
        %v2950 = vld [vmem:[#allocation8 + $0x6b0] sm:$0xf]
        %v2951 = vld [vmem:[#allocation8 + $0x6b4] sm:$0xf]
        %v2952 = vld [vmem:[#allocation8 + $0x6b8] sm:$0xf]
        %v2953 = vld [vmem:[#allocation8 + $0x6bc] sm:$0xf]
        %v2954 = vld [vmem:[#allocation8 + $0x6c0] sm:$0xf]
        %v2955 = vld [vmem:[#allocation8 + $0x6c4] sm:$0xf]
        %v2956 = vld [vmem:[#allocation8 + $0x6c8] sm:$0xf]
        %v2957 = vld [vmem:[#allocation8 + $0x6cc] sm:$0xf]
        %v2958 = vld [vmem:[#allocation8 + $0x6d0] sm:$0xf]
        %v2959 = vld [vmem:[#allocation8 + $0x6d4] sm:$0xf]
        %v2960 = vld [vmem:[#allocation8 + $0x6d8] sm:$0xf]
        %v2961 = vld [vmem:[#allocation8 + $0x6dc] sm:$0xf]
        %v2962 = vld [vmem:[#allocation8 + $0x6e0] sm:$0xf]
        %v2963 = vld [vmem:[#allocation8 + $0x6e4] sm:$0xf]
        %v2964 = vld [vmem:[#allocation8 + $0x6e8] sm:$0xf]
        %v2965 = vld [vmem:[#allocation8 + $0x6ec] sm:$0xf]
        %v2966 = vld [vmem:[#allocation8 + $0x6f0] sm:$0xf]
        %v2967 = vld [vmem:[#allocation8 + $0x6f4] sm:$0xf]
        %v2968 = vld [vmem:[#allocation8 + $0x6f8] sm:$0xf]
        %v2969 = vld [vmem:[#allocation8 + $0x6fc] sm:$0xf]
        %v2970 = vld [vmem:[#allocation8 + $0x700] sm:$0xf]
        %v2971 = vld [vmem:[#allocation8 + $0x704] sm:$0xf]
        %v2972 = vld [vmem:[#allocation8 + $0x708] sm:$0xf]
        %v2973 = vld [vmem:[#allocation8 + $0x70c] sm:$0xf]
        %v2974 = vld [vmem:[#allocation8 + $0x710] sm:$0xf]
        %v2975 = vld [vmem:[#allocation8 + $0x714] sm:$0xf]
        %v2976 = vld [vmem:[#allocation8 + $0x718] sm:$0xf]
        %v2977 = vld [vmem:[#allocation8 + $0x71c] sm:$0xf]
        %v2978 = vld [vmem:[#allocation8 + $0x720] sm:$0xf]
        %v2979 = vld [vmem:[#allocation8 + $0x724] sm:$0xf]
        %v2980 = vld [vmem:[#allocation8 + $0x728] sm:$0xf]
        %v2981 = vld [vmem:[#allocation8 + $0x72c] sm:$0xf]
        %v2982 = vld [vmem:[#allocation8 + $0x730] sm:$0xf]
        %v2983 = vld [vmem:[#allocation8 + $0x734] sm:$0xf]
        %v2984 = vld [vmem:[#allocation8 + $0x738] sm:$0xf]
        %v2985 = vld [vmem:[#allocation8 + $0x73c] sm:$0xf]
        %v2986 = vld [vmem:[#allocation10 + $0x6] sm:$0x1]
        %v2988 = vlaneseq
        %v2989 = vshrl.u32 %v2988, 7
        %v2990 = vsub.s32 0, %v2989
        %v2991 = vrot.slane %v2986, %v2990
        %v3041 = vunpack.c.l.b16 %v2938
        %v3042 = vunpack.c.l.b16 %v2939
        %v3043 = vunpack.c.l.b16 %v2940
        %v3044 = vunpack.c.l.b16 %v2941
        %v3045 = vunpack.c.l.b16 %v2942
        %v3046 = vunpack.c.l.b16 %v2943
        %v3047 = vunpack.c.l.b16 %v2944
        %v3048 = vunpack.c.l.b16 %v2945
        %v3049 = vunpack.c.l.b16 %v2946
        %v3050 = vunpack.c.l.b16 %v2947
        %v3051 = vunpack.c.l.b16 %v2948
        %v3052 = vunpack.c.l.b16 %v2949
        %v3053 = vunpack.c.l.b16 %v2950
        %v3054 = vunpack.c.l.b16 %v2951
        %v3055 = vunpack.c.l.b16 %v2952
        %v3056 = vunpack.c.l.b16 %v2953
        %v3057 = vunpack.c.l.b16 %v2954
        %v3058 = vunpack.c.l.b16 %v2955
        %v3059 = vunpack.c.l.b16 %v2956
        %v3060 = vunpack.c.l.b16 %v2957
        %v3061 = vunpack.c.l.b16 %v2958
        %v3062 = vunpack.c.l.b16 %v2959
        %v3063 = vunpack.c.l.b16 %v2960
        %v3064 = vunpack.c.l.b16 %v2961
        %v3065 = vunpack.c.l.b16 %v2962
        %v3066 = vunpack.c.l.b16 %v2963
        %v3067 = vunpack.c.l.b16 %v2964
        %v3068 = vunpack.c.l.b16 %v2965
        %v3069 = vunpack.c.l.b16 %v2966
        %v3070 = vunpack.c.l.b16 %v2967
        %v3071 = vunpack.c.l.b16 %v2968
        %v3072 = vunpack.c.l.b16 %v2969
        %v3073 = vunpack.c.l.b16 %v2970
        %v3074 = vunpack.c.l.b16 %v2971
        %v3075 = vunpack.c.l.b16 %v2972
        %v3076 = vunpack.c.l.b16 %v2973
        %v3077 = vunpack.c.l.b16 %v2974
        %v3078 = vunpack.c.l.b16 %v2975
        %v3079 = vunpack.c.l.b16 %v2976
        %v3080 = vunpack.c.l.b16 %v2977
        %v3081 = vunpack.c.l.b16 %v2978
        %v3082 = vunpack.c.l.b16 %v2979
        %v3083 = vunpack.c.l.b16 %v2980
        %v3084 = vunpack.c.l.b16 %v2981
        %v3085 = vunpack.c.l.b16 %v2982
        %v3086 = vunpack.c.l.b16 %v2983
        %v3087 = vunpack.c.l.b16 %v2984
        %v3088 = vunpack.c.l.b16 %v2985
        %v3089 = vpack.c.b16 %v3042, %v3041
        %v3090 = vpack.c.b16 %v3044, %v3043
        %v3091 = vpack.c.b16 %v3046, %v3045
        %v3092 = vpack.c.b16 %v3048, %v3047
        %v3093 = vpack.c.b16 %v3050, %v3049
        %v3094 = vpack.c.b16 %v3052, %v3051
        %v3095 = vpack.c.b16 %v3054, %v3053
        %v3096 = vpack.c.b16 %v3056, %v3055
        %v3097 = vpack.c.b16 %v3058, %v3057
        %v3098 = vpack.c.b16 %v3060, %v3059
        %v3099 = vpack.c.b16 %v3062, %v3061
        %v3100 = vpack.c.b16 %v3064, %v3063
        %v3101 = vpack.c.b16 %v3066, %v3065
        %v3102 = vpack.c.b16 %v3068, %v3067
        %v3103 = vpack.c.b16 %v3070, %v3069
        %v3104 = vpack.c.b16 %v3072, %v3071
        %v3105 = vpack.c.b16 %v3074, %v3073
        %v3106 = vpack.c.b16 %v3076, %v3075
        %v3107 = vpack.c.b16 %v3078, %v3077
        %v3108 = vpack.c.b16 %v3080, %v3079
        %v3109 = vpack.c.b16 %v3082, %v3081
        %v3110 = vpack.c.b16 %v3084, %v3083
        %v3111 = vpack.c.b16 %v3086, %v3085
        %v3112 = vpack.c.b16 %v3088, %v3087
        %3137 = vmatprep.subr.bf16.mxu0 0
        %3138 = vmatpush1.bf16.msra.mxu0 %v3089
        %3139 = vmatprep.subr.bf16.mxu0 0
        %3140 = vmatpush1.bf16.msra.mxu0 %v3090
        %3141 = vmatprep.subr.bf16.mxu0 0
        %3142 = vmatpush1.bf16.msra.mxu0 %v3091
        %3143 = vmatprep.subr.bf16.mxu0 0
        %3144 = vmatpush1.bf16.msra.mxu0 %v3092
        %3145 = vmatprep.subr.bf16.mxu0 0
        %3146 = vmatpush1.bf16.msra.mxu0 %v3093
        %3147 = vmatprep.subr.bf16.mxu0 0
        %3148 = vmatpush1.bf16.msra.mxu0 %v3094
        %3149 = vmatprep.subr.bf16.mxu0 0
        %3150 = vmatpush1.bf16.msra.mxu0 %v3095
        %3151 = vmatprep.subr.bf16.mxu0 0
        %3152 = vmatpush1.bf16.msra.mxu0 %v3096
        %3153 = vmatprep.subr.bf16.mxu0 0
        %3154 = vmatpush1.bf16.msra.mxu0 %v3097
        %3155 = vmatprep.subr.bf16.mxu0 0
        %3156 = vmatpush1.bf16.msra.mxu0 %v3098
        %3157 = vmatprep.subr.bf16.mxu0 0
        %3158 = vmatpush1.bf16.msra.mxu0 %v3099
        %3159 = vmatprep.subr.bf16.mxu0 0
        %3160 = vmatpush1.bf16.msra.mxu0 %v3100
        %3161 = vmatprep.subr.bf16.mxu0 0
        %3162 = vmatpush1.bf16.msra.mxu0 %v3101
        %3163 = vmatprep.subr.bf16.mxu0 0
        %3164 = vmatpush1.bf16.msra.mxu0 %v3102
        %3165 = vmatprep.subr.bf16.mxu0 0
        %3166 = vmatpush1.bf16.msra.mxu0 %v3103
        %3167 = vmatprep.subr.bf16.mxu0 0
        %3168 = vmatpush1.bf16.msra.mxu0 %v3104
        %3169 = vmatprep.mubr.bf16.mxu0 %v2930
        %3170 = vmatmul.mubr.bf16.gmra.mrb[0].mxu0 %v2929
        %v3171 = vpop.f32.mrb[0].mxu0
        %v3172 = vadd.f32 %v2991, %v3171
        %v3173 = vpop.f32.mrb[0].mxu0
        %v3174 = vpop.f32.mrb[0].mxu0
        %v3175 = vadd.f32 %v2991, %v3174
        %v3176 = vpop.f32.mrb[0].mxu0
        %3177 = vdwg.mxu0
        %3178 = vmatprep.subr.bf16.mxu0 0
        %3179 = vmatpush1.bf16.msra.mxu0 %v3105
        %3180 = vmatprep.subr.bf16.mxu0 0
        %3181 = vmatpush1.bf16.msra.mxu0 %v3106
        %3182 = vmatprep.subr.bf16.mxu0 0
        %3183 = vmatpush1.bf16.msra.mxu0 %v3107
        %3184 = vmatprep.subr.bf16.mxu0 0
        %3185 = vmatpush1.bf16.msra.mxu0 %v3108
        %3186 = vmatprep.subr.bf16.mxu0 0
        %3187 = vmatpush1.bf16.msra.mxu0 %v3109
        %3188 = vmatprep.subr.bf16.mxu0 0
        %3189 = vmatpush1.bf16.msra.mxu0 %v3110
        %3190 = vmatprep.subr.bf16.mxu0 0
        %3191 = vmatpush1.bf16.msra.mxu0 %v3111
        %3192 = vmatprep.subr.bf16.mxu0 0
        %3193 = vmatpush1.bf16.msra.mxu0 %v3112
        %3194 = vmatprep.subr.bf16.mxu0 0
        %3195 = vmatpush1.bf16.msra.mxu0 0
        %3196 = vmatprep.subr.bf16.mxu0 0
        %3197 = vmatpush1.bf16.msra.mxu0 0
        %3198 = vmatprep.subr.bf16.mxu0 0
        %3199 = vmatpush1.bf16.msra.mxu0 0
        %3200 = vmatprep.subr.bf16.mxu0 0
        %3201 = vmatpush1.bf16.msra.mxu0 0
        %3202 = vmatprep.subr.bf16.mxu0 0
        %3203 = vmatpush1.bf16.msra.mxu0 0
        %3204 = vmatprep.subr.bf16.mxu0 0
        %3205 = vmatpush1.bf16.msra.mxu0 0
        %3206 = vmatprep.subr.bf16.mxu0 0
        %3207 = vmatpush1.bf16.msra.mxu0 0
        %3208 = vmatprep.subr.bf16.mxu0 0
        %3209 = vmatpush1.bf16.msra.mxu0 0
        %3210 = vmatprep.mubr.bf16.mxu0 0
        %3211 = vmatmul.mubr.bf16.gmra.mrb[0].mxu0 %v2937
        %v3212 = vpop.f32.mrb[0].mxu0
        %v3213 = vadd.f32 %v3172, %v3212
        %v3214 = vpop.f32.mrb[0].mxu0
        %v3215 = vpop.f32.mrb[0].mxu0
        %v3216 = vadd.f32 %v3175, %v3215
        %v3217 = vpop.f32.mrb[0].mxu0
        %3218 = vdwg.mxu0
        %v3219 = vadd.f32 %v3213, %v2623
        %v3220 = vadd.f32 %v3216, %v2624
        %v3221 = vrot.slane %v3219, 7
        %v3222 = vrot.slane %v3220, 7
        %v3223 = vsel %vm378, %v3221, %v3222
        %v3224 = vsel %vm378, %v3222, %v3221
        %v3225 = vsel %vm386, %v3224, 0.0
        %v3226 = vsel %vm387, %v3223, 0.0
        %v3227 = vpack.c.bf16 %v3226, %v3225
        %v3228 = vpack.c.bf16 %v3220, %v3219
        %v3229 = vrot.slane %v3219, 1
        %v3230 = vrot.slane %v3220, 1
        %v3231 = vsel %vm394, %v3229, %v3230
        %v3232 = vsel %vm394, %v3230, %v3229
        %v3233 = vsel %vm401, %v3231, 0.0
        %v3234 = vsel %vm402, %v3232, 0.0
        %v3235 = vpack.c.bf16 %v3234, %v3233
        %v3236 = vld [vmem:[#allocation8 + $0x740] sm:$0xf]
        %v3237 = vld [vmem:[#allocation8 + $0x744] sm:$0xf]
        %v3238 = vld [vmem:[#allocation8 + $0x748] sm:$0xf]
        %v3239 = vld [vmem:[#allocation8 + $0x74c] sm:$0xf]
        %v3240 = vld [vmem:[#allocation8 + $0x750] sm:$0xf]
        %v3241 = vld [vmem:[#allocation8 + $0x754] sm:$0xf]
        %v3242 = vld [vmem:[#allocation8 + $0x758] sm:$0xf]
        %v3243 = vld [vmem:[#allocation8 + $0x75c] sm:$0xf]
        %v3244 = vld [vmem:[#allocation8 + $0x760] sm:$0xf]
        %v3245 = vld [vmem:[#allocation8 + $0x764] sm:$0xf]
        %v3246 = vld [vmem:[#allocation8 + $0x768] sm:$0xf]
        %v3247 = vld [vmem:[#allocation8 + $0x76c] sm:$0xf]
        %v3248 = vld [vmem:[#allocation8 + $0x770] sm:$0xf]
        %v3249 = vld [vmem:[#allocation8 + $0x774] sm:$0xf]
        %v3250 = vld [vmem:[#allocation8 + $0x778] sm:$0xf]
        %v3251 = vld [vmem:[#allocation8 + $0x77c] sm:$0xf]
        %v3252 = vld [vmem:[#allocation8 + $0x780] sm:$0xf]
        %v3253 = vld [vmem:[#allocation8 + $0x784] sm:$0xf]
        %v3254 = vld [vmem:[#allocation8 + $0x788] sm:$0xf]
        %v3255 = vld [vmem:[#allocation8 + $0x78c] sm:$0xf]
        %v3256 = vld [vmem:[#allocation8 + $0x790] sm:$0xf]
        %v3257 = vld [vmem:[#allocation8 + $0x794] sm:$0xf]
        %v3258 = vld [vmem:[#allocation8 + $0x798] sm:$0xf]
        %v3259 = vld [vmem:[#allocation8 + $0x79c] sm:$0xf]
        %v3260 = vld [vmem:[#allocation8 + $0x7a0] sm:$0xf]
        %v3261 = vld [vmem:[#allocation8 + $0x7a4] sm:$0xf]
        %v3262 = vld [vmem:[#allocation8 + $0x7a8] sm:$0xf]
        %v3263 = vld [vmem:[#allocation8 + $0x7ac] sm:$0xf]
        %v3264 = vld [vmem:[#allocation8 + $0x7b0] sm:$0xf]
        %v3265 = vld [vmem:[#allocation8 + $0x7b4] sm:$0xf]
        %v3266 = vld [vmem:[#allocation8 + $0x7b8] sm:$0xf]
        %v3267 = vld [vmem:[#allocation8 + $0x7bc] sm:$0xf]
        %v3268 = vld [vmem:[#allocation8 + $0x7c0] sm:$0xf]
        %v3269 = vld [vmem:[#allocation8 + $0x7c4] sm:$0xf]
        %v3270 = vld [vmem:[#allocation8 + $0x7c8] sm:$0xf]
        %v3271 = vld [vmem:[#allocation8 + $0x7cc] sm:$0xf]
        %v3272 = vld [vmem:[#allocation8 + $0x7d0] sm:$0xf]
        %v3273 = vld [vmem:[#allocation8 + $0x7d4] sm:$0xf]
        %v3274 = vld [vmem:[#allocation8 + $0x7d8] sm:$0xf]
        %v3275 = vld [vmem:[#allocation8 + $0x7dc] sm:$0xf]
        %v3276 = vld [vmem:[#allocation8 + $0x7e0] sm:$0xf]
        %v3277 = vld [vmem:[#allocation8 + $0x7e4] sm:$0xf]
        %v3278 = vld [vmem:[#allocation8 + $0x7e8] sm:$0xf]
        %v3279 = vld [vmem:[#allocation8 + $0x7ec] sm:$0xf]
        %v3280 = vld [vmem:[#allocation8 + $0x7f0] sm:$0xf]
        %v3281 = vld [vmem:[#allocation8 + $0x7f4] sm:$0xf]
        %v3282 = vld [vmem:[#allocation8 + $0x7f8] sm:$0xf]
        %v3283 = vld [vmem:[#allocation8 + $0x7fc] sm:$0xf]
        %v3284 = vld [vmem:[#allocation10 + $0x7] sm:$0x1]
        %v3286 = vlaneseq
        %v3287 = vshrl.u32 %v3286, 7
        %v3288 = vsub.s32 0, %v3287
        %v3289 = vrot.slane %v3284, %v3288
        %v3339 = vunpack.c.l.b16 %v3236
        %v3340 = vunpack.c.l.b16 %v3237
        %v3341 = vunpack.c.l.b16 %v3238
        %v3342 = vunpack.c.l.b16 %v3239
        %v3343 = vunpack.c.l.b16 %v3240
        %v3344 = vunpack.c.l.b16 %v3241
        %v3345 = vunpack.c.l.b16 %v3242
        %v3346 = vunpack.c.l.b16 %v3243
        %v3347 = vunpack.c.l.b16 %v3244
        %v3348 = vunpack.c.l.b16 %v3245
        %v3349 = vunpack.c.l.b16 %v3246
        %v3350 = vunpack.c.l.b16 %v3247
        %v3351 = vunpack.c.l.b16 %v3248
        %v3352 = vunpack.c.l.b16 %v3249
        %v3353 = vunpack.c.l.b16 %v3250
        %v3354 = vunpack.c.l.b16 %v3251
        %v3355 = vunpack.c.l.b16 %v3252
        %v3356 = vunpack.c.l.b16 %v3253
        %v3357 = vunpack.c.l.b16 %v3254
        %v3358 = vunpack.c.l.b16 %v3255
        %v3359 = vunpack.c.l.b16 %v3256
        %v3360 = vunpack.c.l.b16 %v3257
        %v3361 = vunpack.c.l.b16 %v3258
        %v3362 = vunpack.c.l.b16 %v3259
        %v3363 = vunpack.c.l.b16 %v3260
        %v3364 = vunpack.c.l.b16 %v3261
        %v3365 = vunpack.c.l.b16 %v3262
        %v3366 = vunpack.c.l.b16 %v3263
        %v3367 = vunpack.c.l.b16 %v3264
        %v3368 = vunpack.c.l.b16 %v3265
        %v3369 = vunpack.c.l.b16 %v3266
        %v3370 = vunpack.c.l.b16 %v3267
        %v3371 = vunpack.c.l.b16 %v3268
        %v3372 = vunpack.c.l.b16 %v3269
        %v3373 = vunpack.c.l.b16 %v3270
        %v3374 = vunpack.c.l.b16 %v3271
        %v3375 = vunpack.c.l.b16 %v3272
        %v3376 = vunpack.c.l.b16 %v3273
        %v3377 = vunpack.c.l.b16 %v3274
        %v3378 = vunpack.c.l.b16 %v3275
        %v3379 = vunpack.c.l.b16 %v3276
        %v3380 = vunpack.c.l.b16 %v3277
        %v3381 = vunpack.c.l.b16 %v3278
        %v3382 = vunpack.c.l.b16 %v3279
        %v3383 = vunpack.c.l.b16 %v3280
        %v3384 = vunpack.c.l.b16 %v3281
        %v3385 = vunpack.c.l.b16 %v3282
        %v3386 = vunpack.c.l.b16 %v3283
        %v3387 = vpack.c.b16 %v3340, %v3339
        %v3388 = vpack.c.b16 %v3342, %v3341
        %v3389 = vpack.c.b16 %v3344, %v3343
        %v3390 = vpack.c.b16 %v3346, %v3345
        %v3391 = vpack.c.b16 %v3348, %v3347
        %v3392 = vpack.c.b16 %v3350, %v3349
        %v3393 = vpack.c.b16 %v3352, %v3351
        %v3394 = vpack.c.b16 %v3354, %v3353
        %v3395 = vpack.c.b16 %v3356, %v3355
        %v3396 = vpack.c.b16 %v3358, %v3357
        %v3397 = vpack.c.b16 %v3360, %v3359
        %v3398 = vpack.c.b16 %v3362, %v3361
        %v3399 = vpack.c.b16 %v3364, %v3363
        %v3400 = vpack.c.b16 %v3366, %v3365
        %v3401 = vpack.c.b16 %v3368, %v3367
        %v3402 = vpack.c.b16 %v3370, %v3369
        %v3403 = vpack.c.b16 %v3372, %v3371
        %v3404 = vpack.c.b16 %v3374, %v3373
        %v3405 = vpack.c.b16 %v3376, %v3375
        %v3406 = vpack.c.b16 %v3378, %v3377
        %v3407 = vpack.c.b16 %v3380, %v3379
        %v3408 = vpack.c.b16 %v3382, %v3381
        %v3409 = vpack.c.b16 %v3384, %v3383
        %v3410 = vpack.c.b16 %v3386, %v3385
        %3435 = vmatprep.subr.bf16.mxu0 0
        %3436 = vmatpush1.bf16.msra.mxu0 %v3387
        %3437 = vmatprep.subr.bf16.mxu0 0
        %3438 = vmatpush1.bf16.msra.mxu0 %v3388
        %3439 = vmatprep.subr.bf16.mxu0 0
        %3440 = vmatpush1.bf16.msra.mxu0 %v3389
        %3441 = vmatprep.subr.bf16.mxu0 0
        %3442 = vmatpush1.bf16.msra.mxu0 %v3390
        %3443 = vmatprep.subr.bf16.mxu0 0
        %3444 = vmatpush1.bf16.msra.mxu0 %v3391
        %3445 = vmatprep.subr.bf16.mxu0 0
        %3446 = vmatpush1.bf16.msra.mxu0 %v3392
        %3447 = vmatprep.subr.bf16.mxu0 0
        %3448 = vmatpush1.bf16.msra.mxu0 %v3393
        %3449 = vmatprep.subr.bf16.mxu0 0
        %3450 = vmatpush1.bf16.msra.mxu0 %v3394
        %3451 = vmatprep.subr.bf16.mxu0 0
        %3452 = vmatpush1.bf16.msra.mxu0 %v3395
        %3453 = vmatprep.subr.bf16.mxu0 0
        %3454 = vmatpush1.bf16.msra.mxu0 %v3396
        %3455 = vmatprep.subr.bf16.mxu0 0
        %3456 = vmatpush1.bf16.msra.mxu0 %v3397
        %3457 = vmatprep.subr.bf16.mxu0 0
        %3458 = vmatpush1.bf16.msra.mxu0 %v3398
        %3459 = vmatprep.subr.bf16.mxu0 0
        %3460 = vmatpush1.bf16.msra.mxu0 %v3399
        %3461 = vmatprep.subr.bf16.mxu0 0
        %3462 = vmatpush1.bf16.msra.mxu0 %v3400
        %3463 = vmatprep.subr.bf16.mxu0 0
        %3464 = vmatpush1.bf16.msra.mxu0 %v3401
        %3465 = vmatprep.subr.bf16.mxu0 0
        %3466 = vmatpush1.bf16.msra.mxu0 %v3402
        %3467 = vmatprep.mubr.bf16.mxu0 %v3228
        %3468 = vmatmul.mubr.bf16.gmra.mrb[0].mxu0 %v3227
        %v3469 = vpop.f32.mrb[0].mxu0
        %v3470 = vadd.f32 %v3289, %v3469
        %v3471 = vpop.f32.mrb[0].mxu0
        %v3472 = vpop.f32.mrb[0].mxu0
        %v3473 = vadd.f32 %v3289, %v3472
        %v3474 = vpop.f32.mrb[0].mxu0
        %3475 = vdwg.mxu0
        %3476 = vmatprep.subr.bf16.mxu0 0
        %3477 = vmatpush1.bf16.msra.mxu0 %v3403
        %3478 = vmatprep.subr.bf16.mxu0 0
        %3479 = vmatpush1.bf16.msra.mxu0 %v3404
        %3480 = vmatprep.subr.bf16.mxu0 0
        %3481 = vmatpush1.bf16.msra.mxu0 %v3405
        %3482 = vmatprep.subr.bf16.mxu0 0
        %3483 = vmatpush1.bf16.msra.mxu0 %v3406
        %3484 = vmatprep.subr.bf16.mxu0 0
        %3485 = vmatpush1.bf16.msra.mxu0 %v3407
        %3486 = vmatprep.subr.bf16.mxu0 0
        %3487 = vmatpush1.bf16.msra.mxu0 %v3408
        %3488 = vmatprep.subr.bf16.mxu0 0
        %3489 = vmatpush1.bf16.msra.mxu0 %v3409
        %3490 = vmatprep.subr.bf16.mxu0 0
        %3491 = vmatpush1.bf16.msra.mxu0 %v3410
        %3492 = vmatprep.subr.bf16.mxu0 0
        %3493 = vmatpush1.bf16.msra.mxu0 0
        %3494 = vmatprep.subr.bf16.mxu0 0
        %3495 = vmatpush1.bf16.msra.mxu0 0
        %3496 = vmatprep.subr.bf16.mxu0 0
        %3497 = vmatpush1.bf16.msra.mxu0 0
        %3498 = vmatprep.subr.bf16.mxu0 0
        %3499 = vmatpush1.bf16.msra.mxu0 0
        %3500 = vmatprep.subr.bf16.mxu0 0
        %3501 = vmatpush1.bf16.msra.mxu0 0
        %3502 = vmatprep.subr.bf16.mxu0 0
        %3503 = vmatpush1.bf16.msra.mxu0 0
        %3504 = vmatprep.subr.bf16.mxu0 0
        %3505 = vmatpush1.bf16.msra.mxu0 0
        %3506 = vmatprep.subr.bf16.mxu0 0
        %3507 = vmatpush1.bf16.msra.mxu0 0
        %3508 = vmatprep.mubr.bf16.mxu0 0
        %3509 = vmatmul.mubr.bf16.gmra.mrb[0].mxu0 %v3235
        %v3510 = vpop.f32.mrb[0].mxu0
        %v3511 = vadd.f32 %v3470, %v3510
        %v3512 = vpop.f32.mrb[0].mxu0
        %v3513 = vpop.f32.mrb[0].mxu0
        %v3514 = vadd.f32 %v3473, %v3513
        %v3515 = vpop.f32.mrb[0].mxu0
        %3516 = vdwg.mxu0
        %v3517 = vmax.f32 %v3511, 0.0
        %v3518 = vmax.f32 %v3514, 0.0
        %v3519 = vrot.slane %v3517, 7
        %v3520 = vrot.slane %v3518, 7
        %v3521 = vsel %vm378, %v3519, %v3520
        %v3522 = vsel %vm378, %v3520, %v3519
        %v3523 = vsel %vm386, %v3522, 0.0
        %v3524 = vsel %vm387, %v3521, 0.0
        %v3525 = vpack.c.bf16 %v3524, %v3523
        %v3526 = vpack.c.bf16 %v3518, %v3517
        %v3527 = vrot.slane %v3517, 1
        %v3528 = vrot.slane %v3518, 1
        %v3529 = vsel %vm394, %v3527, %v3528
        %v3530 = vsel %vm394, %v3528, %v3527
        %v3531 = vsel %vm401, %v3529, 0.0
        %v3532 = vsel %vm402, %v3530, 0.0
        %v3533 = vpack.c.bf16 %v3532, %v3531
        %v3534 = vld [vmem:[#allocation8 + $0x800] sm:$0xf]
        %v3535 = vld [vmem:[#allocation8 + $0x804] sm:$0xf]
        %v3536 = vld [vmem:[#allocation8 + $0x808] sm:$0xf]
        %v3537 = vld [vmem:[#allocation8 + $0x80c] sm:$0xf]
        %v3538 = vld [vmem:[#allocation8 + $0x810] sm:$0xf]
        %v3539 = vld [vmem:[#allocation8 + $0x814] sm:$0xf]
        %v3540 = vld [vmem:[#allocation8 + $0x818] sm:$0xf]
        %v3541 = vld [vmem:[#allocation8 + $0x81c] sm:$0xf]
        %v3542 = vld [vmem:[#allocation8 + $0x820] sm:$0xf]
        %v3543 = vld [vmem:[#allocation8 + $0x824] sm:$0xf]
        %v3544 = vld [vmem:[#allocation8 + $0x828] sm:$0xf]
        %v3545 = vld [vmem:[#allocation8 + $0x82c] sm:$0xf]
        %v3546 = vld [vmem:[#allocation8 + $0x830] sm:$0xf]
        %v3547 = vld [vmem:[#allocation8 + $0x834] sm:$0xf]
        %v3548 = vld [vmem:[#allocation8 + $0x838] sm:$0xf]
        %v3549 = vld [vmem:[#allocation8 + $0x83c] sm:$0xf]
        %v3550 = vld [vmem:[#allocation8 + $0x840] sm:$0xf]
        %v3551 = vld [vmem:[#allocation8 + $0x844] sm:$0xf]
        %v3552 = vld [vmem:[#allocation8 + $0x848] sm:$0xf]
        %v3553 = vld [vmem:[#allocation8 + $0x84c] sm:$0xf]
        %v3554 = vld [vmem:[#allocation8 + $0x850] sm:$0xf]
        %v3555 = vld [vmem:[#allocation8 + $0x854] sm:$0xf]
        %v3556 = vld [vmem:[#allocation8 + $0x858] sm:$0xf]
        %v3557 = vld [vmem:[#allocation8 + $0x85c] sm:$0xf]
        %v3558 = vld [vmem:[#allocation8 + $0x860] sm:$0xf]
        %v3559 = vld [vmem:[#allocation8 + $0x864] sm:$0xf]
        %v3560 = vld [vmem:[#allocation8 + $0x868] sm:$0xf]
        %v3561 = vld [vmem:[#allocation8 + $0x86c] sm:$0xf]
        %v3562 = vld [vmem:[#allocation8 + $0x870] sm:$0xf]
        %v3563 = vld [vmem:[#allocation8 + $0x874] sm:$0xf]
        %v3564 = vld [vmem:[#allocation8 + $0x878] sm:$0xf]
        %v3565 = vld [vmem:[#allocation8 + $0x87c] sm:$0xf]
        %v3566 = vld [vmem:[#allocation8 + $0x880] sm:$0xf]
        %v3567 = vld [vmem:[#allocation8 + $0x884] sm:$0xf]
        %v3568 = vld [vmem:[#allocation8 + $0x888] sm:$0xf]
        %v3569 = vld [vmem:[#allocation8 + $0x88c] sm:$0xf]
        %v3570 = vld [vmem:[#allocation8 + $0x890] sm:$0xf]
        %v3571 = vld [vmem:[#allocation8 + $0x894] sm:$0xf]
        %v3572 = vld [vmem:[#allocation8 + $0x898] sm:$0xf]
        %v3573 = vld [vmem:[#allocation8 + $0x89c] sm:$0xf]
        %v3574 = vld [vmem:[#allocation8 + $0x8a0] sm:$0xf]
        %v3575 = vld [vmem:[#allocation8 + $0x8a4] sm:$0xf]
        %v3576 = vld [vmem:[#allocation8 + $0x8a8] sm:$0xf]
        %v3577 = vld [vmem:[#allocation8 + $0x8ac] sm:$0xf]
        %v3578 = vld [vmem:[#allocation8 + $0x8b0] sm:$0xf]
        %v3579 = vld [vmem:[#allocation8 + $0x8b4] sm:$0xf]
        %v3580 = vld [vmem:[#allocation8 + $0x8b8] sm:$0xf]
        %v3581 = vld [vmem:[#allocation8 + $0x8bc] sm:$0xf]
        %v3582 = vld [vmem:[#allocation10 + $0x8] sm:$0x1]
        %v3584 = vlaneseq
        %v3585 = vshrl.u32 %v3584, 7
        %v3586 = vsub.s32 0, %v3585
        %v3587 = vrot.slane %v3582, %v3586
        %v3637 = vunpack.c.l.b16 %v3534
        %v3638 = vunpack.c.l.b16 %v3535
        %v3639 = vunpack.c.l.b16 %v3536
        %v3640 = vunpack.c.l.b16 %v3537
        %v3641 = vunpack.c.l.b16 %v3538
        %v3642 = vunpack.c.l.b16 %v3539
        %v3643 = vunpack.c.l.b16 %v3540
        %v3644 = vunpack.c.l.b16 %v3541
        %v3645 = vunpack.c.l.b16 %v3542
        %v3646 = vunpack.c.l.b16 %v3543
        %v3647 = vunpack.c.l.b16 %v3544
        %v3648 = vunpack.c.l.b16 %v3545
        %v3649 = vunpack.c.l.b16 %v3546
        %v3650 = vunpack.c.l.b16 %v3547
        %v3651 = vunpack.c.l.b16 %v3548
        %v3652 = vunpack.c.l.b16 %v3549
        %v3653 = vunpack.c.l.b16 %v3550
        %v3654 = vunpack.c.l.b16 %v3551
        %v3655 = vunpack.c.l.b16 %v3552
        %v3656 = vunpack.c.l.b16 %v3553
        %v3657 = vunpack.c.l.b16 %v3554
        %v3658 = vunpack.c.l.b16 %v3555
        %v3659 = vunpack.c.l.b16 %v3556
        %v3660 = vunpack.c.l.b16 %v3557
        %v3661 = vunpack.c.l.b16 %v3558
        %v3662 = vunpack.c.l.b16 %v3559
        %v3663 = vunpack.c.l.b16 %v3560
        %v3664 = vunpack.c.l.b16 %v3561
        %v3665 = vunpack.c.l.b16 %v3562
        %v3666 = vunpack.c.l.b16 %v3563
        %v3667 = vunpack.c.l.b16 %v3564
        %v3668 = vunpack.c.l.b16 %v3565
        %v3669 = vunpack.c.l.b16 %v3566
        %v3670 = vunpack.c.l.b16 %v3567
        %v3671 = vunpack.c.l.b16 %v3568
        %v3672 = vunpack.c.l.b16 %v3569
        %v3673 = vunpack.c.l.b16 %v3570
        %v3674 = vunpack.c.l.b16 %v3571
        %v3675 = vunpack.c.l.b16 %v3572
        %v3676 = vunpack.c.l.b16 %v3573
        %v3677 = vunpack.c.l.b16 %v3574
        %v3678 = vunpack.c.l.b16 %v3575
        %v3679 = vunpack.c.l.b16 %v3576
        %v3680 = vunpack.c.l.b16 %v3577
        %v3681 = vunpack.c.l.b16 %v3578
        %v3682 = vunpack.c.l.b16 %v3579
        %v3683 = vunpack.c.l.b16 %v3580
        %v3684 = vunpack.c.l.b16 %v3581
        %v3685 = vpack.c.b16 %v3638, %v3637
        %v3686 = vpack.c.b16 %v3640, %v3639
        %v3687 = vpack.c.b16 %v3642, %v3641
        %v3688 = vpack.c.b16 %v3644, %v3643
        %v3689 = vpack.c.b16 %v3646, %v3645
        %v3690 = vpack.c.b16 %v3648, %v3647
        %v3691 = vpack.c.b16 %v3650, %v3649
        %v3692 = vpack.c.b16 %v3652, %v3651
        %v3693 = vpack.c.b16 %v3654, %v3653
        %v3694 = vpack.c.b16 %v3656, %v3655
        %v3695 = vpack.c.b16 %v3658, %v3657
        %v3696 = vpack.c.b16 %v3660, %v3659
        %v3697 = vpack.c.b16 %v3662, %v3661
        %v3698 = vpack.c.b16 %v3664, %v3663
        %v3699 = vpack.c.b16 %v3666, %v3665
        %v3700 = vpack.c.b16 %v3668, %v3667
        %v3701 = vpack.c.b16 %v3670, %v3669
        %v3702 = vpack.c.b16 %v3672, %v3671
        %v3703 = vpack.c.b16 %v3674, %v3673
        %v3704 = vpack.c.b16 %v3676, %v3675
        %v3705 = vpack.c.b16 %v3678, %v3677
        %v3706 = vpack.c.b16 %v3680, %v3679
        %v3707 = vpack.c.b16 %v3682, %v3681
        %v3708 = vpack.c.b16 %v3684, %v3683
        %3733 = vmatprep.subr.bf16.mxu0 0
        %3734 = vmatpush1.bf16.msra.mxu0 %v3685
        %3735 = vmatprep.subr.bf16.mxu0 0
        %3736 = vmatpush1.bf16.msra.mxu0 %v3686
        %3737 = vmatprep.subr.bf16.mxu0 0
        %3738 = vmatpush1.bf16.msra.mxu0 %v3687
        %3739 = vmatprep.subr.bf16.mxu0 0
        %3740 = vmatpush1.bf16.msra.mxu0 %v3688
        %3741 = vmatprep.subr.bf16.mxu0 0
        %3742 = vmatpush1.bf16.msra.mxu0 %v3689
        %3743 = vmatprep.subr.bf16.mxu0 0
        %3744 = vmatpush1.bf16.msra.mxu0 %v3690
        %3745 = vmatprep.subr.bf16.mxu0 0
        %3746 = vmatpush1.bf16.msra.mxu0 %v3691
        %3747 = vmatprep.subr.bf16.mxu0 0
        %3748 = vmatpush1.bf16.msra.mxu0 %v3692
        %3749 = vmatprep.subr.bf16.mxu0 0
        %3750 = vmatpush1.bf16.msra.mxu0 %v3693
        %3751 = vmatprep.subr.bf16.mxu0 0
        %3752 = vmatpush1.bf16.msra.mxu0 %v3694
        %3753 = vmatprep.subr.bf16.mxu0 0
        %3754 = vmatpush1.bf16.msra.mxu0 %v3695
        %3755 = vmatprep.subr.bf16.mxu0 0
        %3756 = vmatpush1.bf16.msra.mxu0 %v3696
        %3757 = vmatprep.subr.bf16.mxu0 0
        %3758 = vmatpush1.bf16.msra.mxu0 %v3697
        %3759 = vmatprep.subr.bf16.mxu0 0
        %3760 = vmatpush1.bf16.msra.mxu0 %v3698
        %3761 = vmatprep.subr.bf16.mxu0 0
        %3762 = vmatpush1.bf16.msra.mxu0 %v3699
        %3763 = vmatprep.subr.bf16.mxu0 0
        %3764 = vmatpush1.bf16.msra.mxu0 %v3700
        %3765 = vmatprep.mubr.bf16.mxu0 %v3526
        %3766 = vmatmul.mubr.bf16.gmra.mrb[0].mxu0 %v3525
        %v3767 = vpop.f32.mrb[0].mxu0
        %v3768 = vadd.f32 %v3587, %v3767
        %v3769 = vpop.f32.mrb[0].mxu0
        %v3770 = vpop.f32.mrb[0].mxu0
        %v3771 = vadd.f32 %v3587, %v3770
        %v3772 = vpop.f32.mrb[0].mxu0
        %3773 = vdwg.mxu0
        %3774 = vmatprep.subr.bf16.mxu0 0
        %3775 = vmatpush1.bf16.msra.mxu0 %v3701
        %3776 = vmatprep.subr.bf16.mxu0 0
        %3777 = vmatpush1.bf16.msra.mxu0 %v3702
        %3778 = vmatprep.subr.bf16.mxu0 0
        %3779 = vmatpush1.bf16.msra.mxu0 %v3703
        %3780 = vmatprep.subr.bf16.mxu0 0
        %3781 = vmatpush1.bf16.msra.mxu0 %v3704
        %3782 = vmatprep.subr.bf16.mxu0 0
        %3783 = vmatpush1.bf16.msra.mxu0 %v3705
        %3784 = vmatprep.subr.bf16.mxu0 0
        %3785 = vmatpush1.bf16.msra.mxu0 %v3706
        %3786 = vmatprep.subr.bf16.mxu0 0
        %3787 = vmatpush1.bf16.msra.mxu0 %v3707
        %3788 = vmatprep.subr.bf16.mxu0 0
        %3789 = vmatpush1.bf16.msra.mxu0 %v3708
        %3790 = vmatprep.subr.bf16.mxu0 0
        %3791 = vmatpush1.bf16.msra.mxu0 0
        %3792 = vmatprep.subr.bf16.mxu0 0
        %3793 = vmatpush1.bf16.msra.mxu0 0
        %3794 = vmatprep.subr.bf16.mxu0 0
        %3795 = vmatpush1.bf16.msra.mxu0 0
        %3796 = vmatprep.subr.bf16.mxu0 0
        %3797 = vmatpush1.bf16.msra.mxu0 0
        %3798 = vmatprep.subr.bf16.mxu0 0
        %3799 = vmatpush1.bf16.msra.mxu0 0
        %3800 = vmatprep.subr.bf16.mxu0 0
        %3801 = vmatpush1.bf16.msra.mxu0 0
        %3802 = vmatprep.subr.bf16.mxu0 0
        %3803 = vmatpush1.bf16.msra.mxu0 0
        %3804 = vmatprep.subr.bf16.mxu0 0
        %3805 = vmatpush1.bf16.msra.mxu0 0
        %3806 = vmatprep.mubr.bf16.mxu0 0
        %3807 = vmatmul.mubr.bf16.gmra.mrb[0].mxu0 %v3533
        %v3808 = vpop.f32.mrb[0].mxu0
        %v3809 = vadd.f32 %v3768, %v3808
        %v3810 = vpop.f32.mrb[0].mxu0
        %v3811 = vpop.f32.mrb[0].mxu0
        %v3812 = vadd.f32 %v3771, %v3811
        %v3813 = vpop.f32.mrb[0].mxu0
        %3814 = vdwg.mxu0
        %v3815 = vadd.f32 %v3809, %v3219
        %v3816 = vadd.f32 %v3812, %v3220
        %v3817 = vrot.slane %v3815, 7
        %v3818 = vrot.slane %v3816, 7
        %v3819 = vsel %vm378, %v3817, %v3818
        %v3820 = vsel %vm378, %v3818, %v3817
        %v3821 = vsel %vm386, %v3820, 0.0
        %v3822 = vsel %vm387, %v3819, 0.0
        %v3823 = vpack.c.bf16 %v3822, %v3821
        %v3824 = vpack.c.bf16 %v3816, %v3815
        %v3825 = vrot.slane %v3815, 1
        %v3826 = vrot.slane %v3816, 1
        %v3827 = vsel %vm394, %v3825, %v3826
        %v3828 = vsel %vm394, %v3826, %v3825
        %v3829 = vsel %vm401, %v3827, 0.0
        %v3830 = vsel %vm402, %v3828, 0.0
        %v3831 = vpack.c.bf16 %v3830, %v3829
        %v3832 = vld [vmem:[#allocation8 + $0x8c0] sm:$0xf]
        %v3833 = vld [vmem:[#allocation8 + $0x8c4] sm:$0xf]
        %v3834 = vld [vmem:[#allocation8 + $0x8c8] sm:$0xf]
        %v3835 = vld [vmem:[#allocation8 + $0x8cc] sm:$0xf]
        %v3836 = vld [vmem:[#allocation8 + $0x8d0] sm:$0xf]
        %v3837 = vld [vmem:[#allocation8 + $0x8d4] sm:$0xf]
        %v3838 = vld [vmem:[#allocation8 + $0x8d8] sm:$0xf]
        %v3839 = vld [vmem:[#allocation8 + $0x8dc] sm:$0xf]
        %v3840 = vld [vmem:[#allocation8 + $0x8e0] sm:$0xf]
        %v3841 = vld [vmem:[#allocation8 + $0x8e4] sm:$0xf]
        %v3842 = vld [vmem:[#allocation8 + $0x8e8] sm:$0xf]
        %v3843 = vld [vmem:[#allocation8 + $0x8ec] sm:$0xf]
        %v3844 = vld [vmem:[#allocation8 + $0x8f0] sm:$0xf]
        %v3845 = vld [vmem:[#allocation8 + $0x8f4] sm:$0xf]
        %v3846 = vld [vmem:[#allocation8 + $0x8f8] sm:$0xf]
        %v3847 = vld [vmem:[#allocation8 + $0x8fc] sm:$0xf]
        %v3848 = vld [vmem:[#allocation8 + $0x900] sm:$0xf]
        %v3849 = vld [vmem:[#allocation8 + $0x904] sm:$0xf]
        %v3850 = vld [vmem:[#allocation8 + $0x908] sm:$0xf]
        %v3851 = vld [vmem:[#allocation8 + $0x90c] sm:$0xf]
        %v3852 = vld [vmem:[#allocation8 + $0x910] sm:$0xf]
        %v3853 = vld [vmem:[#allocation8 + $0x914] sm:$0xf]
        %v3854 = vld [vmem:[#allocation8 + $0x918] sm:$0xf]
        %v3855 = vld [vmem:[#allocation8 + $0x91c] sm:$0xf]
        %v3856 = vld [vmem:[#allocation8 + $0x920] sm:$0xf]
        %v3857 = vld [vmem:[#allocation8 + $0x924] sm:$0xf]
        %v3858 = vld [vmem:[#allocation8 + $0x928] sm:$0xf]
        %v3859 = vld [vmem:[#allocation8 + $0x92c] sm:$0xf]
        %v3860 = vld [vmem:[#allocation8 + $0x930] sm:$0xf]
        %v3861 = vld [vmem:[#allocation8 + $0x934] sm:$0xf]
        %v3862 = vld [vmem:[#allocation8 + $0x938] sm:$0xf]
        %v3863 = vld [vmem:[#allocation8 + $0x93c] sm:$0xf]
        %v3864 = vld [vmem:[#allocation8 + $0x940] sm:$0xf]
        %v3865 = vld [vmem:[#allocation8 + $0x944] sm:$0xf]
        %v3866 = vld [vmem:[#allocation8 + $0x948] sm:$0xf]
        %v3867 = vld [vmem:[#allocation8 + $0x94c] sm:$0xf]
        %v3868 = vld [vmem:[#allocation8 + $0x950] sm:$0xf]
        %v3869 = vld [vmem:[#allocation8 + $0x954] sm:$0xf]
        %v3870 = vld [vmem:[#allocation8 + $0x958] sm:$0xf]
        %v3871 = vld [vmem:[#allocation8 + $0x95c] sm:$0xf]
        %v3872 = vld [vmem:[#allocation8 + $0x960] sm:$0xf]
        %v3873 = vld [vmem:[#allocation8 + $0x964] sm:$0xf]
        %v3874 = vld [vmem:[#allocation8 + $0x968] sm:$0xf]
        %v3875 = vld [vmem:[#allocation8 + $0x96c] sm:$0xf]
        %v3876 = vld [vmem:[#allocation8 + $0x970] sm:$0xf]
        %v3877 = vld [vmem:[#allocation8 + $0x974] sm:$0xf]
        %v3878 = vld [vmem:[#allocation8 + $0x978] sm:$0xf]
        %v3879 = vld [vmem:[#allocation8 + $0x97c] sm:$0xf]
        %v3880 = vld [vmem:[#allocation10 + $0x9] sm:$0x1]
        %v3882 = vlaneseq
        %v3883 = vshrl.u32 %v3882, 7
        %v3884 = vsub.s32 0, %v3883
        %v3885 = vrot.slane %v3880, %v3884
        %v3935 = vunpack.c.l.b16 %v3832
        %v3936 = vunpack.c.l.b16 %v3833
        %v3937 = vunpack.c.l.b16 %v3834
        %v3938 = vunpack.c.l.b16 %v3835
        %v3939 = vunpack.c.l.b16 %v3836
        %v3940 = vunpack.c.l.b16 %v3837
        %v3941 = vunpack.c.l.b16 %v3838
        %v3942 = vunpack.c.l.b16 %v3839
        %v3943 = vunpack.c.l.b16 %v3840
        %v3944 = vunpack.c.l.b16 %v3841
        %v3945 = vunpack.c.l.b16 %v3842
        %v3946 = vunpack.c.l.b16 %v3843
        %v3947 = vunpack.c.l.b16 %v3844
        %v3948 = vunpack.c.l.b16 %v3845
        %v3949 = vunpack.c.l.b16 %v3846
        %v3950 = vunpack.c.l.b16 %v3847
        %v3951 = vunpack.c.l.b16 %v3848
        %v3952 = vunpack.c.l.b16 %v3849
        %v3953 = vunpack.c.l.b16 %v3850
        %v3954 = vunpack.c.l.b16 %v3851
        %v3955 = vunpack.c.l.b16 %v3852
        %v3956 = vunpack.c.l.b16 %v3853
        %v3957 = vunpack.c.l.b16 %v3854
        %v3958 = vunpack.c.l.b16 %v3855
        %v3959 = vunpack.c.l.b16 %v3856
        %v3960 = vunpack.c.l.b16 %v3857
        %v3961 = vunpack.c.l.b16 %v3858
        %v3962 = vunpack.c.l.b16 %v3859
        %v3963 = vunpack.c.l.b16 %v3860
        %v3964 = vunpack.c.l.b16 %v3861
        %v3965 = vunpack.c.l.b16 %v3862
        %v3966 = vunpack.c.l.b16 %v3863
        %v3967 = vunpack.c.l.b16 %v3864
        %v3968 = vunpack.c.l.b16 %v3865
        %v3969 = vunpack.c.l.b16 %v3866
        %v3970 = vunpack.c.l.b16 %v3867
        %v3971 = vunpack.c.l.b16 %v3868
        %v3972 = vunpack.c.l.b16 %v3869
        %v3973 = vunpack.c.l.b16 %v3870
        %v3974 = vunpack.c.l.b16 %v3871
        %v3975 = vunpack.c.l.b16 %v3872
        %v3976 = vunpack.c.l.b16 %v3873
        %v3977 = vunpack.c.l.b16 %v3874
        %v3978 = vunpack.c.l.b16 %v3875
        %v3979 = vunpack.c.l.b16 %v3876
        %v3980 = vunpack.c.l.b16 %v3877
        %v3981 = vunpack.c.l.b16 %v3878
        %v3982 = vunpack.c.l.b16 %v3879
        %v3983 = vpack.c.b16 %v3936, %v3935
        %v3984 = vpack.c.b16 %v3938, %v3937
        %v3985 = vpack.c.b16 %v3940, %v3939
        %v3986 = vpack.c.b16 %v3942, %v3941
        %v3987 = vpack.c.b16 %v3944, %v3943
        %v3988 = vpack.c.b16 %v3946, %v3945
        %v3989 = vpack.c.b16 %v3948, %v3947
        %v3990 = vpack.c.b16 %v3950, %v3949
        %v3991 = vpack.c.b16 %v3952, %v3951
        %v3992 = vpack.c.b16 %v3954, %v3953
        %v3993 = vpack.c.b16 %v3956, %v3955
        %v3994 = vpack.c.b16 %v3958, %v3957
        %v3995 = vpack.c.b16 %v3960, %v3959
        %v3996 = vpack.c.b16 %v3962, %v3961
        %v3997 = vpack.c.b16 %v3964, %v3963
        %v3998 = vpack.c.b16 %v3966, %v3965
        %v3999 = vpack.c.b16 %v3968, %v3967
        %v4000 = vpack.c.b16 %v3970, %v3969
        %v4001 = vpack.c.b16 %v3972, %v3971
        %v4002 = vpack.c.b16 %v3974, %v3973
        %v4003 = vpack.c.b16 %v3976, %v3975
        %v4004 = vpack.c.b16 %v3978, %v3977
        %v4005 = vpack.c.b16 %v3980, %v3979
        %v4006 = vpack.c.b16 %v3982, %v3981
        %4031 = vmatprep.subr.bf16.mxu0 0
        %4032 = vmatpush1.bf16.msra.mxu0 %v3983
        %4033 = vmatprep.subr.bf16.mxu0 0
        %4034 = vmatpush1.bf16.msra.mxu0 %v3984
        %4035 = vmatprep.subr.bf16.mxu0 0
        %4036 = vmatpush1.bf16.msra.mxu0 %v3985
        %4037 = vmatprep.subr.bf16.mxu0 0
        %4038 = vmatpush1.bf16.msra.mxu0 %v3986
        %4039 = vmatprep.subr.bf16.mxu0 0
        %4040 = vmatpush1.bf16.msra.mxu0 %v3987
        %4041 = vmatprep.subr.bf16.mxu0 0
        %4042 = vmatpush1.bf16.msra.mxu0 %v3988
        %4043 = vmatprep.subr.bf16.mxu0 0
        %4044 = vmatpush1.bf16.msra.mxu0 %v3989
        %4045 = vmatprep.subr.bf16.mxu0 0
        %4046 = vmatpush1.bf16.msra.mxu0 %v3990
        %4047 = vmatprep.subr.bf16.mxu0 0
        %4048 = vmatpush1.bf16.msra.mxu0 %v3991
        %4049 = vmatprep.subr.bf16.mxu0 0
        %4050 = vmatpush1.bf16.msra.mxu0 %v3992
        %4051 = vmatprep.subr.bf16.mxu0 0
        %4052 = vmatpush1.bf16.msra.mxu0 %v3993
        %4053 = vmatprep.subr.bf16.mxu0 0
        %4054 = vmatpush1.bf16.msra.mxu0 %v3994
        %4055 = vmatprep.subr.bf16.mxu0 0
        %4056 = vmatpush1.bf16.msra.mxu0 %v3995
        %4057 = vmatprep.subr.bf16.mxu0 0
        %4058 = vmatpush1.bf16.msra.mxu0 %v3996
        %4059 = vmatprep.subr.bf16.mxu0 0
        %4060 = vmatpush1.bf16.msra.mxu0 %v3997
        %4061 = vmatprep.subr.bf16.mxu0 0
        %4062 = vmatpush1.bf16.msra.mxu0 %v3998
        %4063 = vmatprep.mubr.bf16.mxu0 %v3824
        %4064 = vmatmul.mubr.bf16.gmra.mrb[0].mxu0 %v3823
        %v4065 = vpop.f32.mrb[0].mxu0
        %v4066 = vadd.f32 %v3885, %v4065
        %v4067 = vpop.f32.mrb[0].mxu0
        %v4068 = vpop.f32.mrb[0].mxu0
        %v4069 = vadd.f32 %v3885, %v4068
        %v4070 = vpop.f32.mrb[0].mxu0
        %4071 = vdwg.mxu0
        %4072 = vmatprep.subr.bf16.mxu0 0
        %4073 = vmatpush1.bf16.msra.mxu0 %v3999
        %4074 = vmatprep.subr.bf16.mxu0 0
        %4075 = vmatpush1.bf16.msra.mxu0 %v4000
        %4076 = vmatprep.subr.bf16.mxu0 0
        %4077 = vmatpush1.bf16.msra.mxu0 %v4001
        %4078 = vmatprep.subr.bf16.mxu0 0
        %4079 = vmatpush1.bf16.msra.mxu0 %v4002
        %4080 = vmatprep.subr.bf16.mxu0 0
        %4081 = vmatpush1.bf16.msra.mxu0 %v4003
        %4082 = vmatprep.subr.bf16.mxu0 0
        %4083 = vmatpush1.bf16.msra.mxu0 %v4004
        %4084 = vmatprep.subr.bf16.mxu0 0
        %4085 = vmatpush1.bf16.msra.mxu0 %v4005
        %4086 = vmatprep.subr.bf16.mxu0 0
        %4087 = vmatpush1.bf16.msra.mxu0 %v4006
        %4088 = vmatprep.subr.bf16.mxu0 0
        %4089 = vmatpush1.bf16.msra.mxu0 0
        %4090 = vmatprep.subr.bf16.mxu0 0
        %4091 = vmatpush1.bf16.msra.mxu0 0
        %4092 = vmatprep.subr.bf16.mxu0 0
        %4093 = vmatpush1.bf16.msra.mxu0 0
        %4094 = vmatprep.subr.bf16.mxu0 0
        %4095 = vmatpush1.bf16.msra.mxu0 0
        %4096 = vmatprep.subr.bf16.mxu0 0
        %4097 = vmatpush1.bf16.msra.mxu0 0
        %4098 = vmatprep.subr.bf16.mxu0 0
        %4099 = vmatpush1.bf16.msra.mxu0 0
        %4100 = vmatprep.subr.bf16.mxu0 0
        %4101 = vmatpush1.bf16.msra.mxu0 0
        %4102 = vmatprep.subr.bf16.mxu0 0
        %4103 = vmatpush1.bf16.msra.mxu0 0
        %4104 = vmatprep.mubr.bf16.mxu0 0
        %4105 = vmatmul.mubr.bf16.gmra.mrb[0].mxu0 %v3831
        %v4106 = vpop.f32.mrb[0].mxu0
        %v4107 = vadd.f32 %v4066, %v4106
        %v4108 = vpop.f32.mrb[0].mxu0
        %v4109 = vpop.f32.mrb[0].mxu0
        %v4110 = vadd.f32 %v4069, %v4109
        %v4111 = vpop.f32.mrb[0].mxu0
        %4112 = vdwg.mxu0
        %v4113 = vadd.f32 %v4107, %v2623
        %v4114 = vadd.f32 %v4110, %v2624
        %s4115 = smul.u32 4, 288
        %s4116 = smul.u32 %s4115, 2
        %s4117 = sshll.u32 %s4116, 4
        %4118 = dma.done [#allocation4], %s4117
        %v4119 = vrot.slane %v4113, 7
        %v4120 = vrot.slane %v4114, 7
        %v4121 = vsel %vm378, %v4119, %v4120
        %v4122 = vsel %vm378, %v4120, %v4119
        %v4123 = vsel %vm386, %v4122, 0.0
        %v4124 = vsel %vm387, %v4121, 0.0
        %v4125 = vpack.c.bf16 %v4124, %v4123
        %v4126 = vpack.c.bf16 %v4114, %v4113
        %v4127 = vrot.slane %v4113, 1
        %v4128 = vrot.slane %v4114, 1
        %v4129 = vsel %vm394, %v4127, %v4128
        %v4130 = vsel %vm394, %v4128, %v4127
        %v4131 = vsel %vm401, %v4129, 0.0
        %v4132 = vsel %vm402, %v4130, 0.0
        %v4133 = vpack.c.bf16 %v4132, %v4131
        %v4134 = vld [vmem:[#allocation2] sm:$0xff]
        %v4135 = vld [vmem:[#allocation2 + $0x8] sm:$0xff]
        %v4136 = vld [vmem:[#allocation2 + $0x10] sm:$0xff]
        %v4137 = vld [vmem:[#allocation2 + $0x18] sm:$0xff]
        %v4138 = vld [vmem:[#allocation2 + $0x20] sm:$0xff]
        %v4139 = vld [vmem:[#allocation2 + $0x28] sm:$0xff]
        %v4140 = vld [vmem:[#allocation2 + $0x30] sm:$0xff]
        %v4141 = vld [vmem:[#allocation2 + $0x38] sm:$0xff]
        %v4142 = vld [vmem:[#allocation2 + $0x40] sm:$0xff]
        %v4143 = vld [vmem:[#allocation2 + $0x48] sm:$0xff]
        %v4144 = vld [vmem:[#allocation2 + $0x50] sm:$0xff]
        %v4145 = vld [vmem:[#allocation2 + $0x58] sm:$0xff]
        %v4146 = vld [vmem:[#allocation2 + $0x60] sm:$0xff]
        %v4147 = vld [vmem:[#allocation2 + $0x68] sm:$0xff]
        %v4148 = vld [vmem:[#allocation2 + $0x70] sm:$0xff]
        %v4149 = vld [vmem:[#allocation2 + $0x78] sm:$0xff]
        %v4150 = vld [vmem:[#allocation2 + $0x80] sm:$0xff]
        %v4151 = vld [vmem:[#allocation2 + $0x88] sm:$0xff]
        %v4152 = vld [vmem:[#allocation2 + $0x90] sm:$0xff]
        %v4153 = vld [vmem:[#allocation2 + $0x98] sm:$0xff]
        %v4154 = vld [vmem:[#allocation2 + $0xa0] sm:$0xff]
        %v4155 = vld [vmem:[#allocation2 + $0xa8] sm:$0xff]
        %v4156 = vld [vmem:[#allocation2 + $0xb0] sm:$0xff]
        %v4157 = vld [vmem:[#allocation2 + $0xb8] sm:$0xff]
        %v4158 = vld [vmem:[#allocation2 + $0xc0] sm:$0xff]
        %v4159 = vld [vmem:[#allocation2 + $0xc8] sm:$0xff]
        %v4160 = vld [vmem:[#allocation2 + $0xd0] sm:$0xff]
        %v4161 = vld [vmem:[#allocation2 + $0xd8] sm:$0xff]
        %v4162 = vld [vmem:[#allocation2 + $0xe0] sm:$0xff]
        %v4163 = vld [vmem:[#allocation2 + $0xe8] sm:$0xff]
        %v4164 = vld [vmem:[#allocation2 + $0xf0] sm:$0xff]
        %v4165 = vld [vmem:[#allocation2 + $0xf8] sm:$0xff]
        %v4166 = vld [vmem:[#allocation2 + $0x100] sm:$0xff]
        %v4167 = vld [vmem:[#allocation2 + $0x108] sm:$0xff]
        %v4168 = vld [vmem:[#allocation2 + $0x110] sm:$0xff]
        %v4169 = vld [vmem:[#allocation2 + $0x118] sm:$0xff]
        %v4170 = vld [vmem:[#allocation2 + $0x120] sm:$0xff]
        %v4171 = vld [vmem:[#allocation2 + $0x128] sm:$0xff]
        %v4172 = vld [vmem:[#allocation2 + $0x130] sm:$0xff]
        %v4173 = vld [vmem:[#allocation2 + $0x138] sm:$0xff]
        %v4174 = vld [vmem:[#allocation2 + $0x140] sm:$0xff]
        %v4175 = vld [vmem:[#allocation2 + $0x148] sm:$0xff]
        %v4176 = vld [vmem:[#allocation2 + $0x150] sm:$0xff]
        %v4177 = vld [vmem:[#allocation2 + $0x158] sm:$0xff]
        %v4178 = vld [vmem:[#allocation2 + $0x160] sm:$0xff]
        %v4179 = vld [vmem:[#allocation2 + $0x168] sm:$0xff]
        %v4180 = vld [vmem:[#allocation2 + $0x170] sm:$0xff]
        %v4181 = vld [vmem:[#allocation2 + $0x178] sm:$0xff]
        %v4182 = vld [vmem:[#allocation10 + $0xa] sm:$0x3]
        %v4184 = vlaneseq
        %v4185 = vshrl.u32 %v4184, 7
        %v4186 = vsub.s32 0, %v4185
        %v4187 = vrot.slane %v4182, %v4186
        %v4188 = vlaneseq
        %v4189 = vshrl.u32 %v4188, 7
        %v4190 = vsub.s32 1, %v4189
        %v4191 = vrot.slane %v4182, %v4190
        %4194 = vmatprep.subr.bf16.mxu0 %v4135
        %4195 = vmatpush1.bf16.msra.mxu0 %v4134
        %4196 = vmatprep.subr.bf16.mxu0 %v4137
        %4197 = vmatpush1.bf16.msra.mxu0 %v4136
        %4198 = vmatprep.subr.bf16.mxu0 %v4139
        %4199 = vmatpush1.bf16.msra.mxu0 %v4138
        %4200 = vmatprep.subr.bf16.mxu0 %v4141
        %4201 = vmatpush1.bf16.msra.mxu0 %v4140
        %4202 = vmatprep.subr.bf16.mxu0 %v4143
        %4203 = vmatpush1.bf16.msra.mxu0 %v4142
        %4204 = vmatprep.subr.bf16.mxu0 %v4145
        %4205 = vmatpush1.bf16.msra.mxu0 %v4144
        %4206 = vmatprep.subr.bf16.mxu0 %v4147
        %4207 = vmatpush1.bf16.msra.mxu0 %v4146
        %4208 = vmatprep.subr.bf16.mxu0 %v4149
        %4209 = vmatpush1.bf16.msra.mxu0 %v4148
        %4210 = vmatprep.subr.bf16.mxu0 %v4151
        %4211 = vmatpush1.bf16.msra.mxu0 %v4150
        %4212 = vmatprep.subr.bf16.mxu0 %v4153
        %4213 = vmatpush1.bf16.msra.mxu0 %v4152
        %4214 = vmatprep.subr.bf16.mxu0 %v4155
        %4215 = vmatpush1.bf16.msra.mxu0 %v4154
        %4216 = vmatprep.subr.bf16.mxu0 %v4157
        %4217 = vmatpush1.bf16.msra.mxu0 %v4156
        %4218 = vmatprep.subr.bf16.mxu0 %v4159
        %4219 = vmatpush1.bf16.msra.mxu0 %v4158
        %4220 = vmatprep.subr.bf16.mxu0 %v4161
        %4221 = vmatpush1.bf16.msra.mxu0 %v4160
        %4222 = vmatprep.subr.bf16.mxu0 %v4163
        %4223 = vmatpush1.bf16.msra.mxu0 %v4162
        %4224 = vmatprep.subr.bf16.mxu0 %v4165
        %4225 = vmatpush1.bf16.msra.mxu0 %v4164
        %4226 = vmatprep.mubr.bf16.mxu0 %v4126
        %4227 = vmatmul.mubr.bf16.gmra.mrb[0].mxu0 %v4125
        %v4228 = vpop.f32.mrb[0].mxu0
        %v4229 = vadd.f32 %v4187, %v4228
        %v4230 = vpop.f32.mrb[0].mxu0
        %v4231 = vadd.f32 %v4191, %v4230
        %v4232 = vpop.f32.mrb[0].mxu0
        %v4233 = vadd.f32 %v4187, %v4232
        %v4234 = vpop.f32.mrb[0].mxu0
        %v4235 = vadd.f32 %v4191, %v4234
        %4236 = vdwg.mxu0
        %4237 = vmatprep.subr.bf16.mxu0 %v4167
        %4238 = vmatpush1.bf16.msra.mxu0 %v4166
        %4239 = vmatprep.subr.bf16.mxu0 %v4169
        %4240 = vmatpush1.bf16.msra.mxu0 %v4168
        %4241 = vmatprep.subr.bf16.mxu0 %v4171
        %4242 = vmatpush1.bf16.msra.mxu0 %v4170
        %4243 = vmatprep.subr.bf16.mxu0 %v4173
        %4244 = vmatpush1.bf16.msra.mxu0 %v4172
        %4245 = vmatprep.subr.bf16.mxu0 %v4175
        %4246 = vmatpush1.bf16.msra.mxu0 %v4174
        %4247 = vmatprep.subr.bf16.mxu0 %v4177
        %4248 = vmatpush1.bf16.msra.mxu0 %v4176
        %4249 = vmatprep.subr.bf16.mxu0 %v4179
        %4250 = vmatpush1.bf16.msra.mxu0 %v4178
        %4251 = vmatprep.subr.bf16.mxu0 %v4181
        %4252 = vmatpush1.bf16.msra.mxu0 %v4180
        %4253 = vmatprep.subr.bf16.mxu0 0
        %4254 = vmatpush1.bf16.msra.mxu0 0
        %4255 = vmatprep.subr.bf16.mxu0 0
        %4256 = vmatpush1.bf16.msra.mxu0 0
        %4257 = vmatprep.subr.bf16.mxu0 0
        %4258 = vmatpush1.bf16.msra.mxu0 0
        %4259 = vmatprep.subr.bf16.mxu0 0
        %4260 = vmatpush1.bf16.msra.mxu0 0
        %4261 = vmatprep.subr.bf16.mxu0 0
        %4262 = vmatpush1.bf16.msra.mxu0 0
        %4263 = vmatprep.subr.bf16.mxu0 0
        %4264 = vmatpush1.bf16.msra.mxu0 0
        %4265 = vmatprep.subr.bf16.mxu0 0
        %4266 = vmatpush1.bf16.msra.mxu0 0
        %4267 = vmatprep.subr.bf16.mxu0 0
        %4268 = vmatpush1.bf16.msra.mxu0 0
        %4269 = vmatprep.mubr.bf16.mxu0 0
        %4270 = vmatmul.mubr.bf16.gmra.mrb[0].mxu0 %v4133
        %v4271 = vpop.f32.mrb[0].mxu0
        %v4272 = vadd.f32 %v4229, %v4271
        %v4273 = vpop.f32.mrb[0].mxu0
        %v4274 = vadd.f32 %v4231, %v4273
        %v4275 = vpop.f32.mrb[0].mxu0
        %v4276 = vadd.f32 %v4233, %v4275
        %v4277 = vpop.f32.mrb[0].mxu0
        %v4278 = vadd.f32 %v4235, %v4277
        %4279 = vdwg.mxu0
        %v4280 = vld [vmem:[#allocation2 + $0x180] sm:$0xff]
        %v4281 = vld [vmem:[#allocation2 + $0x188] sm:$0xff]
        %v4282 = vld [vmem:[#allocation2 + $0x190] sm:$0xff]
        %v4283 = vld [vmem:[#allocation2 + $0x198] sm:$0xff]
        %v4284 = vld [vmem:[#allocation2 + $0x1a0] sm:$0xff]
        %v4285 = vld [vmem:[#allocation2 + $0x1a8] sm:$0xff]
        %v4286 = vld [vmem:[#allocation2 + $0x1b0] sm:$0xff]
        %v4287 = vld [vmem:[#allocation2 + $0x1b8] sm:$0xff]
        %v4288 = vld [vmem:[#allocation2 + $0x1c0] sm:$0xff]
        %v4289 = vld [vmem:[#allocation2 + $0x1c8] sm:$0xff]
        %v4290 = vld [vmem:[#allocation2 + $0x1d0] sm:$0xff]
        %v4291 = vld [vmem:[#allocation2 + $0x1d8] sm:$0xff]
        %v4292 = vld [vmem:[#allocation2 + $0x1e0] sm:$0xff]
        %v4293 = vld [vmem:[#allocation2 + $0x1e8] sm:$0xff]
        %v4294 = vld [vmem:[#allocation2 + $0x1f0] sm:$0xff]
        %v4295 = vld [vmem:[#allocation2 + $0x1f8] sm:$0xff]
        %v4296 = vld [vmem:[#allocation2 + $0x200] sm:$0xff]
        %v4297 = vld [vmem:[#allocation2 + $0x208] sm:$0xff]
        %v4298 = vld [vmem:[#allocation2 + $0x210] sm:$0xff]
        %v4299 = vld [vmem:[#allocation2 + $0x218] sm:$0xff]
        %v4300 = vld [vmem:[#allocation2 + $0x220] sm:$0xff]
        %v4301 = vld [vmem:[#allocation2 + $0x228] sm:$0xff]
        %v4302 = vld [vmem:[#allocation2 + $0x230] sm:$0xff]
        %v4303 = vld [vmem:[#allocation2 + $0x238] sm:$0xff]
        %v4304 = vld [vmem:[#allocation2 + $0x240] sm:$0xff]
        %v4305 = vld [vmem:[#allocation2 + $0x248] sm:$0xff]
        %v4306 = vld [vmem:[#allocation2 + $0x250] sm:$0xff]
        %v4307 = vld [vmem:[#allocation2 + $0x258] sm:$0xff]
        %v4308 = vld [vmem:[#allocation2 + $0x260] sm:$0xff]
        %v4309 = vld [vmem:[#allocation2 + $0x268] sm:$0xff]
        %v4310 = vld [vmem:[#allocation2 + $0x270] sm:$0xff]
        %v4311 = vld [vmem:[#allocation2 + $0x278] sm:$0xff]
        %v4312 = vld [vmem:[#allocation2 + $0x280] sm:$0xff]
        %v4313 = vld [vmem:[#allocation2 + $0x288] sm:$0xff]
        %v4314 = vld [vmem:[#allocation2 + $0x290] sm:$0xff]
        %v4315 = vld [vmem:[#allocation2 + $0x298] sm:$0xff]
        %v4316 = vld [vmem:[#allocation2 + $0x2a0] sm:$0xff]
        %v4317 = vld [vmem:[#allocation2 + $0x2a8] sm:$0xff]
        %v4318 = vld [vmem:[#allocation2 + $0x2b0] sm:$0xff]
        %v4319 = vld [vmem:[#allocation2 + $0x2b8] sm:$0xff]
        %v4320 = vld [vmem:[#allocation2 + $0x2c0] sm:$0xff]
        %v4321 = vld [vmem:[#allocation2 + $0x2c8] sm:$0xff]
        %v4322 = vld [vmem:[#allocation2 + $0x2d0] sm:$0xff]
        %v4323 = vld [vmem:[#allocation2 + $0x2d8] sm:$0xff]
        %v4324 = vld [vmem:[#allocation2 + $0x2e0] sm:$0xff]
        %v4325 = vld [vmem:[#allocation2 + $0x2e8] sm:$0xff]
        %v4326 = vld [vmem:[#allocation2 + $0x2f0] sm:$0xff]
        %v4327 = vld [vmem:[#allocation2 + $0x2f8] sm:$0xff]
        %v4328 = vld [vmem:[#allocation10 + $0xc] sm:$0x3]
        %v4330 = vlaneseq
        %v4331 = vshrl.u32 %v4330, 7
        %v4332 = vsub.s32 0, %v4331
        %v4333 = vrot.slane %v4328, %v4332
        %v4334 = vlaneseq
        %v4335 = vshrl.u32 %v4334, 7
        %v4336 = vsub.s32 1, %v4335
        %v4337 = vrot.slane %v4328, %v4336
        %4340 = vmatprep.subr.bf16.mxu0 %v4281
        %4341 = vmatpush1.bf16.msra.mxu0 %v4280
        %4342 = vmatprep.subr.bf16.mxu0 %v4283
        %4343 = vmatpush1.bf16.msra.mxu0 %v4282
        %4344 = vmatprep.subr.bf16.mxu0 %v4285
        %4345 = vmatpush1.bf16.msra.mxu0 %v4284
        %4346 = vmatprep.subr.bf16.mxu0 %v4287
        %4347 = vmatpush1.bf16.msra.mxu0 %v4286
        %4348 = vmatprep.subr.bf16.mxu0 %v4289
        %4349 = vmatpush1.bf16.msra.mxu0 %v4288
        %4350 = vmatprep.subr.bf16.mxu0 %v4291
        %4351 = vmatpush1.bf16.msra.mxu0 %v4290
        %4352 = vmatprep.subr.bf16.mxu0 %v4293
        %4353 = vmatpush1.bf16.msra.mxu0 %v4292
        %4354 = vmatprep.subr.bf16.mxu0 %v4295
        %4355 = vmatpush1.bf16.msra.mxu0 %v4294
        %4356 = vmatprep.subr.bf16.mxu0 %v4297
        %4357 = vmatpush1.bf16.msra.mxu0 %v4296
        %4358 = vmatprep.subr.bf16.mxu0 %v4299
        %4359 = vmatpush1.bf16.msra.mxu0 %v4298
        %4360 = vmatprep.subr.bf16.mxu0 %v4301
        %4361 = vmatpush1.bf16.msra.mxu0 %v4300
        %4362 = vmatprep.subr.bf16.mxu0 %v4303
        %4363 = vmatpush1.bf16.msra.mxu0 %v4302
        %4364 = vmatprep.subr.bf16.mxu0 %v4305
        %4365 = vmatpush1.bf16.msra.mxu0 %v4304
        %4366 = vmatprep.subr.bf16.mxu0 %v4307
        %4367 = vmatpush1.bf16.msra.mxu0 %v4306
        %4368 = vmatprep.subr.bf16.mxu0 %v4309
        %4369 = vmatpush1.bf16.msra.mxu0 %v4308
        %4370 = vmatprep.subr.bf16.mxu0 %v4311
        %4371 = vmatpush1.bf16.msra.mxu0 %v4310
        %4372 = vmatprep.mubr.bf16.mxu0 %v4126
        %4373 = vmatmul.mubr.bf16.gmra.mrb[0].mxu0 %v4125
        %v4374 = vpop.f32.mrb[0].mxu0
        %v4375 = vadd.f32 %v4333, %v4374
        %v4376 = vpop.f32.mrb[0].mxu0
        %v4377 = vadd.f32 %v4337, %v4376
        %v4378 = vpop.f32.mrb[0].mxu0
        %v4379 = vadd.f32 %v4333, %v4378
        %v4380 = vpop.f32.mrb[0].mxu0
        %v4381 = vadd.f32 %v4337, %v4380
        %4382 = vdwg.mxu0
        %4383 = vmatprep.subr.bf16.mxu0 %v4313
        %4384 = vmatpush1.bf16.msra.mxu0 %v4312
        %4385 = vmatprep.subr.bf16.mxu0 %v4315
        %4386 = vmatpush1.bf16.msra.mxu0 %v4314
        %4387 = vmatprep.subr.bf16.mxu0 %v4317
        %4388 = vmatpush1.bf16.msra.mxu0 %v4316
        %4389 = vmatprep.subr.bf16.mxu0 %v4319
        %4390 = vmatpush1.bf16.msra.mxu0 %v4318
        %4391 = vmatprep.subr.bf16.mxu0 %v4321
        %4392 = vmatpush1.bf16.msra.mxu0 %v4320
        %4393 = vmatprep.subr.bf16.mxu0 %v4323
        %4394 = vmatpush1.bf16.msra.mxu0 %v4322
        %4395 = vmatprep.subr.bf16.mxu0 %v4325
        %4396 = vmatpush1.bf16.msra.mxu0 %v4324
        %4397 = vmatprep.subr.bf16.mxu0 %v4327
        %4398 = vmatpush1.bf16.msra.mxu0 %v4326
        %4399 = vmatprep.subr.bf16.mxu0 0
        %4400 = vmatpush1.bf16.msra.mxu0 0
        %4401 = vmatprep.subr.bf16.mxu0 0
        %4402 = vmatpush1.bf16.msra.mxu0 0
        %4403 = vmatprep.subr.bf16.mxu0 0
        %4404 = vmatpush1.bf16.msra.mxu0 0
        %4405 = vmatprep.subr.bf16.mxu0 0
        %4406 = vmatpush1.bf16.msra.mxu0 0
        %4407 = vmatprep.subr.bf16.mxu0 0
        %4408 = vmatpush1.bf16.msra.mxu0 0
        %4409 = vmatprep.subr.bf16.mxu0 0
        %4410 = vmatpush1.bf16.msra.mxu0 0
        %4411 = vmatprep.subr.bf16.mxu0 0
        %4412 = vmatpush1.bf16.msra.mxu0 0
        %4413 = vmatprep.subr.bf16.mxu0 0
        %4414 = vmatpush1.bf16.msra.mxu0 0
        %4415 = vmatprep.mubr.bf16.mxu0 0
        %4416 = vmatmul.mubr.bf16.gmra.mrb[0].mxu0 %v4133
        %v4417 = vpop.f32.mrb[0].mxu0
        %v4418 = vadd.f32 %v4375, %v4417
        %v4419 = vpop.f32.mrb[0].mxu0
        %v4420 = vadd.f32 %v4377, %v4419
        %v4421 = vpop.f32.mrb[0].mxu0
        %v4422 = vadd.f32 %v4379, %v4421
        %v4423 = vpop.f32.mrb[0].mxu0
        %v4424 = vadd.f32 %v4381, %v4423
        %4425 = vdwg.mxu0
        %v4426 = vpack.c.bf16 %v4276, %v4272
        %v4427 = vpack.c.bf16 %v4278, %v4274
        %v4428 = vpack.c.bf16 %v4422, %v4418
        %v4429 = vpack.c.bf16 %v4424, %v4420
        %v4430 = vld [vmem:[#allocation11] sm:$0xf]
        %v4431 = vld [vmem:[#allocation11 + $0x4] sm:$0xf]
        %v4432 = vld [vmem:[#allocation11 + $0x8] sm:$0xf]
        %v4433 = vld [vmem:[#allocation11 + $0xc] sm:$0xf]
        %v4438 = vunpack.c.l.b16 %v4430
        %v4439 = vunpack.c.l.b16 %v4431
        %v4440 = vunpack.c.l.b16 %v4432
        %v4441 = vunpack.c.l.b16 %v4433
        %v4442 = vpack.c.b16 %v4439, %v4438
        %v4443 = vpack.c.b16 %v4441, %v4440
        %vm4444 = vcmask 261120
        %v4446 = vsel %vm4444, %v4442, 0
        %v4449 = vsel %vm4444, %v4443, 0
        %4451 = vmatprep.subr.bf16.mxu0 %v4427
        %4452 = vmatpush1.bf16.msra.mxu0 %v4426
        %4453 = vmatprep.subr.bf16.mxu0 %v4429
        %4454 = vmatpush1.bf16.msra.mxu0 %v4428
        %4455 = vmatprep.subr.bf16.mxu0 0
        %4456 = vmatpush1.bf16.msra.mxu0 0
        %4457 = vmatprep.subr.bf16.mxu0 0
        %4458 = vmatpush1.bf16.msra.mxu0 0
        %4459 = vmatprep.subr.bf16.mxu0 0
        %4460 = vmatpush1.bf16.msra.mxu0 0
        %4461 = vmatprep.subr.bf16.mxu0 0
        %4462 = vmatpush1.bf16.msra.mxu0 0
        %4463 = vmatprep.subr.bf16.mxu0 0
        %4464 = vmatpush1.bf16.msra.mxu0 0
        %4465 = vmatprep.subr.bf16.mxu0 0
        %4466 = vmatpush1.bf16.msra.mxu0 0
        %4467 = vmatprep.subr.bf16.mxu0 0
        %4468 = vmatpush1.bf16.msra.mxu0 0
        %4469 = vmatprep.subr.bf16.mxu0 0
        %4470 = vmatpush1.bf16.msra.mxu0 0
        %4471 = vmatprep.subr.bf16.mxu0 0
        %4472 = vmatpush1.bf16.msra.mxu0 0
        %4473 = vmatprep.subr.bf16.mxu0 0
        %4474 = vmatpush1.bf16.msra.mxu0 0
        %4475 = vmatprep.subr.bf16.mxu0 0
        %4476 = vmatpush1.bf16.msra.mxu0 0
        %4477 = vmatprep.subr.bf16.mxu0 0
        %4478 = vmatpush1.bf16.msra.mxu0 0
        %4479 = vmatprep.subr.bf16.mxu0 0
        %4480 = vmatpush1.bf16.msra.mxu0 0
        %4481 = vmatprep.subr.bf16.mxu0 0
        %4482 = vmatpush1.bf16.msra.mxu0 0
        %4483 = vmatprep.mubr.bf16.mxu0 0
        %4484 = vmatmul.mubr.bf16.gmra.mrb[0].mxu0 %v4446
        %v4485 = vpop.f32.mrb[0].mxu0
        %v4486 = vadd.f32 0.0, %v4485
        %v4487 = vpop.f32.mrb[0].mxu0
        %v4488 = vadd.f32 0.0, %v4487
        %v4489 = vpop.f32.mrb[0].mxu0
        %v4490 = vadd.f32 0.0, %v4489
        %v4491 = vpop.f32.mrb[0].mxu0
        %v4492 = vadd.f32 0.0, %v4491
        %4493 = vmatprep.mubr.bf16.mxu0 0
        %4494 = vmatmul.mubr.bf16.gmra.mrb[0].mxu0 %v4449
        %v4495 = vpop.f32.mrb[0].mxu0
        %v4496 = vadd.f32 0.0, %v4495
        %v4497 = vpop.f32.mrb[0].mxu0
        %v4498 = vadd.f32 0.0, %v4497
        %v4499 = vpop.f32.mrb[0].mxu0
        %v4500 = vadd.f32 0.0, %v4499
        %v4501 = vpop.f32.mrb[0].mxu0
        %v4502 = vadd.f32 0.0, %v4501
        %4503 = vdwg.mxu0
        %s4504 = smul.u32 4, 192
        %s4505 = smul.u32 %s4504, 4
        %s4506 = sshll.u32 %s4505, 4
        %4507 = dma.done %s337, %s4506
        %v4508 = vrot.slane %v4486, 7
        %v4509 = vrot.slane %v4488, 7
        %v4510 = vrot.slane %v4490, 7
        %v4511 = vrot.slane %v4492, 7
        %v4512 = vrot.slane %v4496, 7
        %v4513 = vrot.slane %v4498, 7
        %v4514 = vrot.slane %v4500, 7
        %v4515 = vrot.slane %v4502, 7
        %v4516 = vsel %vm378, %v4512, %v4514
        %v4517 = vsel %vm378, %v4513, %v4515
        %v4518 = vsel %vm378, %v4510, %v4512
        %v4519 = vsel %vm378, %v4511, %v4513
        %v4520 = vsel %vm378, %v4508, %v4510
        %v4521 = vsel %vm378, %v4509, %v4511
        %v4522 = vsel %vm378, %v4514, %v4508
        %v4523 = vsel %vm378, %v4515, %v4509
        %v4524 = vadd.s32 %v377, 16
        %v4525 = vadd.s32 %v377, 24
        %vm4526 = vcmp.ge.s32.totalorder %v4524, 1
        %vm4527 = vcmp.ge.s32.totalorder %v4525, 1
        %v4528 = vsel %vm4526, 1, 0
        %v4529 = vsel %vm4527, 1, 0
        %vm4530 = vcmp.eq.s32.totalorder %v4528, 1
        %vm4531 = vcmp.eq.s32.totalorder %v4529, 1
        %v4532 = vsel %vm386, %v4522, 0.0
        %v4533 = vsel %vm386, %v4523, 0.0
        %v4534 = vsel %vm387, %v4520, 0.0
        %v4535 = vsel %vm387, %v4521, 0.0
        %v4536 = vsel %vm4530, %v4518, 0.0
        %v4537 = vsel %vm4530, %v4519, 0.0
        %v4538 = vsel %vm4531, %v4516, 0.0
        %v4539 = vsel %vm4531, %v4517, 0.0
        %v4540 = vpack.c.bf16 %v4534, %v4532
        %v4541 = vpack.c.bf16 %v4535, %v4533
        %v4542 = vpack.c.bf16 %v4538, %v4536
        %v4543 = vpack.c.bf16 %v4539, %v4537
        %v4544 = vpack.c.bf16 %v4490, %v4486
        %v4545 = vpack.c.bf16 %v4492, %v4488
        %v4546 = vpack.c.bf16 %v4500, %v4496
        %v4547 = vpack.c.bf16 %v4502, %v4498
        %v4548 = vrot.slane %v4486, 1
        %v4549 = vrot.slane %v4488, 1
        %v4550 = vrot.slane %v4490, 1
        %v4551 = vrot.slane %v4492, 1
        %v4552 = vrot.slane %v4496, 1
        %v4553 = vrot.slane %v4498, 1
        %v4554 = vrot.slane %v4500, 1
        %v4555 = vrot.slane %v4502, 1
        %v4556 = vsel %vm394, %v4552, %v4554
        %v4557 = vsel %vm394, %v4553, %v4555
        %v4558 = vsel %vm394, %v4550, %v4552
        %v4559 = vsel %vm394, %v4551, %v4553
        %v4560 = vsel %vm394, %v4548, %v4550
        %v4561 = vsel %vm394, %v4549, %v4551
        %v4562 = vsel %vm394, %v4554, %v4548
        %v4563 = vsel %vm394, %v4555, %v4549
        %vm4564 = vcmp.lt.s32.totalorder %v377, 31
        %vm4565 = vcmp.lt.s32.totalorder %v381, 31
        %vm4566 = vcmp.lt.s32.totalorder %v4524, 31
        %vm4567 = vcmp.lt.s32.totalorder %v4525, 31
        %v4568 = vsel %vm4564, 1, 0
        %v4569 = vsel %vm4565, 1, 0
        %v4570 = vsel %vm4566, 1, 0
        %v4571 = vsel %vm4567, 1, 0
        %vm4572 = vcmp.eq.s32.totalorder %v4568, 1
        %vm4573 = vcmp.eq.s32.totalorder %v4569, 1
        %vm4574 = vcmp.eq.s32.totalorder %v4570, 1
        %vm4575 = vcmp.eq.s32.totalorder %v4571, 1
        %v4576 = vsel %vm4572, %v4560, 0.0
        %v4577 = vsel %vm4572, %v4561, 0.0
        %v4578 = vsel %vm4573, %v4558, 0.0
        %v4579 = vsel %vm4573, %v4559, 0.0
        %v4580 = vsel %vm4574, %v4556, 0.0
        %v4581 = vsel %vm4574, %v4557, 0.0
        %v4582 = vsel %vm4575, %v4562, 0.0
        %v4583 = vsel %vm4575, %v4563, 0.0
        %v4584 = vpack.c.bf16 %v4578, %v4576
        %v4585 = vpack.c.bf16 %v4579, %v4577
        %v4586 = vpack.c.bf16 %v4582, %v4580
        %v4587 = vpack.c.bf16 %v4583, %v4581
        %v4588 = vld [vmem:[#allocation3] sm:$0xff]
        %v4589 = vld [vmem:[#allocation3 + $0x8] sm:$0xff]
        %v4590 = vld [vmem:[#allocation3 + $0x10] sm:$0xff]
        %v4591 = vld [vmem:[#allocation3 + $0x18] sm:$0xff]
        %v4592 = vld [vmem:[#allocation3 + $0x20] sm:$0xff]
        %v4593 = vld [vmem:[#allocation3 + $0x28] sm:$0xff]
        %v4594 = vld [vmem:[#allocation3 + $0x30] sm:$0xff]
        %v4595 = vld [vmem:[#allocation3 + $0x38] sm:$0xff]
        %v4596 = vld [vmem:[#allocation3 + $0x40] sm:$0xff]
        %v4597 = vld [vmem:[#allocation3 + $0x48] sm:$0xff]
        %v4598 = vld [vmem:[#allocation3 + $0x50] sm:$0xff]
        %v4599 = vld [vmem:[#allocation3 + $0x58] sm:$0xff]
        %v4600 = vld [vmem:[#allocation3 + $0x60] sm:$0xff]
        %v4601 = vld [vmem:[#allocation3 + $0x68] sm:$0xff]
        %v4602 = vld [vmem:[#allocation3 + $0x70] sm:$0xff]
        %v4603 = vld [vmem:[#allocation3 + $0x78] sm:$0xff]
        %v4604 = vld [vmem:[#allocation3 + $0x80] sm:$0xff]
        %v4605 = vld [vmem:[#allocation3 + $0x88] sm:$0xff]
        %v4606 = vld [vmem:[#allocation3 + $0x90] sm:$0xff]
        %v4607 = vld [vmem:[#allocation3 + $0x98] sm:$0xff]
        %v4608 = vld [vmem:[#allocation3 + $0xa0] sm:$0xff]
        %v4609 = vld [vmem:[#allocation3 + $0xa8] sm:$0xff]
        %v4610 = vld [vmem:[#allocation3 + $0xb0] sm:$0xff]
        %v4611 = vld [vmem:[#allocation3 + $0xb8] sm:$0xff]
        %v4612 = vld [vmem:[#allocation3 + $0xc0] sm:$0xff]
        %v4613 = vld [vmem:[#allocation3 + $0xc8] sm:$0xff]
        %v4614 = vld [vmem:[#allocation3 + $0xd0] sm:$0xff]
        %v4615 = vld [vmem:[#allocation3 + $0xd8] sm:$0xff]
        %v4616 = vld [vmem:[#allocation3 + $0xe0] sm:$0xff]
        %v4617 = vld [vmem:[#allocation3 + $0xe8] sm:$0xff]
        %v4618 = vld [vmem:[#allocation3 + $0xf0] sm:$0xff]
        %v4619 = vld [vmem:[#allocation3 + $0xf8] sm:$0xff]
        %v4620 = vld [vmem:[#allocation3 + $0x100] sm:$0xff]
        %v4621 = vld [vmem:[#allocation3 + $0x108] sm:$0xff]
        %v4622 = vld [vmem:[#allocation3 + $0x110] sm:$0xff]
        %v4623 = vld [vmem:[#allocation3 + $0x118] sm:$0xff]
        %v4624 = vld [vmem:[#allocation3 + $0x120] sm:$0xff]
        %v4625 = vld [vmem:[#allocation3 + $0x128] sm:$0xff]
        %v4626 = vld [vmem:[#allocation3 + $0x130] sm:$0xff]
        %v4627 = vld [vmem:[#allocation3 + $0x138] sm:$0xff]
        %v4628 = vld [vmem:[#allocation3 + $0x140] sm:$0xff]
        %v4629 = vld [vmem:[#allocation3 + $0x148] sm:$0xff]
        %v4630 = vld [vmem:[#allocation3 + $0x150] sm:$0xff]
        %v4631 = vld [vmem:[#allocation3 + $0x158] sm:$0xff]
        %v4632 = vld [vmem:[#allocation3 + $0x160] sm:$0xff]
        %v4633 = vld [vmem:[#allocation3 + $0x168] sm:$0xff]
        %v4634 = vld [vmem:[#allocation3 + $0x170] sm:$0xff]
        %v4635 = vld [vmem:[#allocation3 + $0x178] sm:$0xff]
        %v4636 = vld [vmem:[#allocation3 + $0x180] sm:$0xff]
        %v4637 = vld [vmem:[#allocation3 + $0x188] sm:$0xff]
        %v4638 = vld [vmem:[#allocation3 + $0x190] sm:$0xff]
        %v4639 = vld [vmem:[#allocation3 + $0x198] sm:$0xff]
        %v4640 = vld [vmem:[#allocation3 + $0x1a0] sm:$0xff]
        %v4641 = vld [vmem:[#allocation3 + $0x1a8] sm:$0xff]
        %v4642 = vld [vmem:[#allocation3 + $0x1b0] sm:$0xff]
        %v4643 = vld [vmem:[#allocation3 + $0x1b8] sm:$0xff]
        %v4644 = vld [vmem:[#allocation3 + $0x1c0] sm:$0xff]
        %v4645 = vld [vmem:[#allocation3 + $0x1c8] sm:$0xff]
        %v4646 = vld [vmem:[#allocation3 + $0x1d0] sm:$0xff]
        %v4647 = vld [vmem:[#allocation3 + $0x1d8] sm:$0xff]
        %v4648 = vld [vmem:[#allocation3 + $0x1e0] sm:$0xff]
        %v4649 = vld [vmem:[#allocation3 + $0x1e8] sm:$0xff]
        %v4650 = vld [vmem:[#allocation3 + $0x1f0] sm:$0xff]
        %v4651 = vld [vmem:[#allocation3 + $0x1f8] sm:$0xff]
        %v4652 = vld [vmem:[#allocation3 + $0x200] sm:$0xff]
        %v4653 = vld [vmem:[#allocation3 + $0x208] sm:$0xff]
        %v4654 = vld [vmem:[#allocation3 + $0x210] sm:$0xff]
        %v4655 = vld [vmem:[#allocation3 + $0x218] sm:$0xff]
        %v4656 = vld [vmem:[#allocation3 + $0x220] sm:$0xff]
        %v4657 = vld [vmem:[#allocation3 + $0x228] sm:$0xff]
        %v4658 = vld [vmem:[#allocation3 + $0x230] sm:$0xff]
        %v4659 = vld [vmem:[#allocation3 + $0x238] sm:$0xff]
        %v4660 = vld [vmem:[#allocation3 + $0x240] sm:$0xff]
        %v4661 = vld [vmem:[#allocation3 + $0x248] sm:$0xff]
        %v4662 = vld [vmem:[#allocation3 + $0x250] sm:$0xff]
        %v4663 = vld [vmem:[#allocation3 + $0x258] sm:$0xff]
        %v4664 = vld [vmem:[#allocation3 + $0x260] sm:$0xff]
        %v4665 = vld [vmem:[#allocation3 + $0x268] sm:$0xff]
        %v4666 = vld [vmem:[#allocation3 + $0x270] sm:$0xff]
        %v4667 = vld [vmem:[#allocation3 + $0x278] sm:$0xff]
        %v4668 = vld [vmem:[#allocation3 + $0x280] sm:$0xff]
        %v4669 = vld [vmem:[#allocation3 + $0x288] sm:$0xff]
        %v4670 = vld [vmem:[#allocation3 + $0x290] sm:$0xff]
        %v4671 = vld [vmem:[#allocation3 + $0x298] sm:$0xff]
        %v4672 = vld [vmem:[#allocation3 + $0x2a0] sm:$0xff]
        %v4673 = vld [vmem:[#allocation3 + $0x2a8] sm:$0xff]
        %v4674 = vld [vmem:[#allocation3 + $0x2b0] sm:$0xff]
        %v4675 = vld [vmem:[#allocation3 + $0x2b8] sm:$0xff]
        %v4676 = vld [vmem:[#allocation3 + $0x2c0] sm:$0xff]
        %v4677 = vld [vmem:[#allocation3 + $0x2c8] sm:$0xff]
        %v4678 = vld [vmem:[#allocation3 + $0x2d0] sm:$0xff]
        %v4679 = vld [vmem:[#allocation3 + $0x2d8] sm:$0xff]
        %v4680 = vld [vmem:[#allocation3 + $0x2e0] sm:$0xff]
        %v4681 = vld [vmem:[#allocation3 + $0x2e8] sm:$0xff]
        %v4682 = vld [vmem:[#allocation3 + $0x2f0] sm:$0xff]
        %v4683 = vld [vmem:[#allocation3 + $0x2f8] sm:$0xff]
        %v4684 = vld [vmem:[#allocation3 + $0x300] sm:$0xff]
        %v4685 = vld [vmem:[#allocation3 + $0x308] sm:$0xff]
        %v4686 = vld [vmem:[#allocation3 + $0x310] sm:$0xff]
        %v4687 = vld [vmem:[#allocation3 + $0x318] sm:$0xff]
        %v4688 = vld [vmem:[#allocation3 + $0x320] sm:$0xff]
        %v4689 = vld [vmem:[#allocation3 + $0x328] sm:$0xff]
        %v4690 = vld [vmem:[#allocation3 + $0x330] sm:$0xff]
        %v4691 = vld [vmem:[#allocation3 + $0x338] sm:$0xff]
        %v4692 = vld [vmem:[#allocation3 + $0x340] sm:$0xff]
        %v4693 = vld [vmem:[#allocation3 + $0x348] sm:$0xff]
        %v4694 = vld [vmem:[#allocation3 + $0x350] sm:$0xff]
        %v4695 = vld [vmem:[#allocation3 + $0x358] sm:$0xff]
        %v4696 = vld [vmem:[#allocation3 + $0x360] sm:$0xff]
        %v4697 = vld [vmem:[#allocation3 + $0x368] sm:$0xff]
        %v4698 = vld [vmem:[#allocation3 + $0x370] sm:$0xff]
        %v4699 = vld [vmem:[#allocation3 + $0x378] sm:$0xff]
        %v4700 = vld [vmem:[#allocation3 + $0x380] sm:$0xff]
        %v4701 = vld [vmem:[#allocation3 + $0x388] sm:$0xff]
        %v4702 = vld [vmem:[#allocation3 + $0x390] sm:$0xff]
        %v4703 = vld [vmem:[#allocation3 + $0x398] sm:$0xff]
        %v4704 = vld [vmem:[#allocation3 + $0x3a0] sm:$0xff]
        %v4705 = vld [vmem:[#allocation3 + $0x3a8] sm:$0xff]
        %v4706 = vld [vmem:[#allocation3 + $0x3b0] sm:$0xff]
        %v4707 = vld [vmem:[#allocation3 + $0x3b8] sm:$0xff]
        %v4708 = vld [vmem:[#allocation3 + $0x3c0] sm:$0xff]
        %v4709 = vld [vmem:[#allocation3 + $0x3c8] sm:$0xff]
        %v4710 = vld [vmem:[#allocation3 + $0x3d0] sm:$0xff]
        %v4711 = vld [vmem:[#allocation3 + $0x3d8] sm:$0xff]
        %v4712 = vld [vmem:[#allocation3 + $0x3e0] sm:$0xff]
        %v4713 = vld [vmem:[#allocation3 + $0x3e8] sm:$0xff]
        %v4714 = vld [vmem:[#allocation3 + $0x3f0] sm:$0xff]
        %v4715 = vld [vmem:[#allocation3 + $0x3f8] sm:$0xff]
        %v4716 = vld [vmem:[#allocation3 + $0x400] sm:$0xff]
        %v4717 = vld [vmem:[#allocation3 + $0x408] sm:$0xff]
        %v4718 = vld [vmem:[#allocation3 + $0x410] sm:$0xff]
        %v4719 = vld [vmem:[#allocation3 + $0x418] sm:$0xff]
        %v4720 = vld [vmem:[#allocation3 + $0x420] sm:$0xff]
        %v4721 = vld [vmem:[#allocation3 + $0x428] sm:$0xff]
        %v4722 = vld [vmem:[#allocation3 + $0x430] sm:$0xff]
        %v4723 = vld [vmem:[#allocation3 + $0x438] sm:$0xff]
        %v4724 = vld [vmem:[#allocation3 + $0x440] sm:$0xff]
        %v4725 = vld [vmem:[#allocation3 + $0x448] sm:$0xff]
        %v4726 = vld [vmem:[#allocation3 + $0x450] sm:$0xff]
        %v4727 = vld [vmem:[#allocation3 + $0x458] sm:$0xff]
        %v4728 = vld [vmem:[#allocation3 + $0x460] sm:$0xff]
        %v4729 = vld [vmem:[#allocation3 + $0x468] sm:$0xff]
        %v4730 = vld [vmem:[#allocation3 + $0x470] sm:$0xff]
        %v4731 = vld [vmem:[#allocation3 + $0x478] sm:$0xff]
        %v4732 = vld [vmem:[#allocation3 + $0x480] sm:$0xff]
        %v4733 = vld [vmem:[#allocation3 + $0x488] sm:$0xff]
        %v4734 = vld [vmem:[#allocation3 + $0x490] sm:$0xff]
        %v4735 = vld [vmem:[#allocation3 + $0x498] sm:$0xff]
        %v4736 = vld [vmem:[#allocation3 + $0x4a0] sm:$0xff]
        %v4737 = vld [vmem:[#allocation3 + $0x4a8] sm:$0xff]
        %v4738 = vld [vmem:[#allocation3 + $0x4b0] sm:$0xff]
        %v4739 = vld [vmem:[#allocation3 + $0x4b8] sm:$0xff]
        %v4740 = vld [vmem:[#allocation3 + $0x4c0] sm:$0xff]
        %v4741 = vld [vmem:[#allocation3 + $0x4c8] sm:$0xff]
        %v4742 = vld [vmem:[#allocation3 + $0x4d0] sm:$0xff]
        %v4743 = vld [vmem:[#allocation3 + $0x4d8] sm:$0xff]
        %v4744 = vld [vmem:[#allocation3 + $0x4e0] sm:$0xff]
        %v4745 = vld [vmem:[#allocation3 + $0x4e8] sm:$0xff]
        %v4746 = vld [vmem:[#allocation3 + $0x4f0] sm:$0xff]
        %v4747 = vld [vmem:[#allocation3 + $0x4f8] sm:$0xff]
        %v4748 = vld [vmem:[#allocation3 + $0x500] sm:$0xff]
        %v4749 = vld [vmem:[#allocation3 + $0x508] sm:$0xff]
        %v4750 = vld [vmem:[#allocation3 + $0x510] sm:$0xff]
        %v4751 = vld [vmem:[#allocation3 + $0x518] sm:$0xff]
        %v4752 = vld [vmem:[#allocation3 + $0x520] sm:$0xff]
        %v4753 = vld [vmem:[#allocation3 + $0x528] sm:$0xff]
        %v4754 = vld [vmem:[#allocation3 + $0x530] sm:$0xff]
        %v4755 = vld [vmem:[#allocation3 + $0x538] sm:$0xff]
        %v4756 = vld [vmem:[#allocation3 + $0x540] sm:$0xff]
        %v4757 = vld [vmem:[#allocation3 + $0x548] sm:$0xff]
        %v4758 = vld [vmem:[#allocation3 + $0x550] sm:$0xff]
        %v4759 = vld [vmem:[#allocation3 + $0x558] sm:$0xff]
        %v4760 = vld [vmem:[#allocation3 + $0x560] sm:$0xff]
        %v4761 = vld [vmem:[#allocation3 + $0x568] sm:$0xff]
        %v4762 = vld [vmem:[#allocation3 + $0x570] sm:$0xff]
        %v4763 = vld [vmem:[#allocation3 + $0x578] sm:$0xff]
        %v4764 = vld [vmem:[#allocation3 + $0x580] sm:$0xff]
        %v4765 = vld [vmem:[#allocation3 + $0x588] sm:$0xff]
        %v4766 = vld [vmem:[#allocation3 + $0x590] sm:$0xff]
        %v4767 = vld [vmem:[#allocation3 + $0x598] sm:$0xff]
        %v4768 = vld [vmem:[#allocation3 + $0x5a0] sm:$0xff]
        %v4769 = vld [vmem:[#allocation3 + $0x5a8] sm:$0xff]
        %v4770 = vld [vmem:[#allocation3 + $0x5b0] sm:$0xff]
        %v4771 = vld [vmem:[#allocation3 + $0x5b8] sm:$0xff]
        %v4772 = vld [vmem:[#allocation3 + $0x5c0] sm:$0xff]
        %v4773 = vld [vmem:[#allocation3 + $0x5c8] sm:$0xff]
        %v4774 = vld [vmem:[#allocation3 + $0x5d0] sm:$0xff]
        %v4775 = vld [vmem:[#allocation3 + $0x5d8] sm:$0xff]
        %v4776 = vld [vmem:[#allocation3 + $0x5e0] sm:$0xff]
        %v4777 = vld [vmem:[#allocation3 + $0x5e8] sm:$0xff]
        %v4778 = vld [vmem:[#allocation3 + $0x5f0] sm:$0xff]
        %v4779 = vld [vmem:[#allocation3 + $0x5f8] sm:$0xff]
        %v4780 = vld [vmem:[#allocation10 + $0xe] sm:$0xf]
        %v4782 = vlaneseq
        %v4783 = vshrl.u32 %v4782, 7
        %v4784 = vsub.s32 0, %v4783
        %v4785 = vrot.slane %v4780, %v4784
        %v4786 = vlaneseq
        %v4787 = vshrl.u32 %v4786, 7
        %v4788 = vsub.s32 1, %v4787
        %v4789 = vrot.slane %v4780, %v4788
        %v4790 = vlaneseq
        %v4791 = vshrl.u32 %v4790, 7
        %v4792 = vsub.s32 2, %v4791
        %v4793 = vrot.slane %v4780, %v4792
        %v4794 = vlaneseq
        %v4795 = vshrl.u32 %v4794, 7
        %v4796 = vsub.s32 3, %v4795
        %v4797 = vrot.slane %v4780, %v4796
        %4802 = vmatprep.subr.bf16.mxu0 %v4589
        %4803 = vmatpush1.bf16.msra.mxu0 %v4588
        %4804 = vmatprep.subr.bf16.mxu0 %v4593
        %4805 = vmatpush1.bf16.msra.mxu0 %v4592
        %4806 = vmatprep.subr.bf16.mxu0 %v4597
        %4807 = vmatpush1.bf16.msra.mxu0 %v4596
        %4808 = vmatprep.subr.bf16.mxu0 %v4601
        %4809 = vmatpush1.bf16.msra.mxu0 %v4600
        %4810 = vmatprep.subr.bf16.mxu0 %v4605
        %4811 = vmatpush1.bf16.msra.mxu0 %v4604
        %4812 = vmatprep.subr.bf16.mxu0 %v4609
        %4813 = vmatpush1.bf16.msra.mxu0 %v4608
        %4814 = vmatprep.subr.bf16.mxu0 %v4613
        %4815 = vmatpush1.bf16.msra.mxu0 %v4612
        %4816 = vmatprep.subr.bf16.mxu0 %v4617
        %4817 = vmatpush1.bf16.msra.mxu0 %v4616
        %4818 = vmatprep.subr.bf16.mxu0 %v4621
        %4819 = vmatpush1.bf16.msra.mxu0 %v4620
        %4820 = vmatprep.subr.bf16.mxu0 %v4625
        %4821 = vmatpush1.bf16.msra.mxu0 %v4624
        %4822 = vmatprep.subr.bf16.mxu0 %v4629
        %4823 = vmatpush1.bf16.msra.mxu0 %v4628
        %4824 = vmatprep.subr.bf16.mxu0 %v4633
        %4825 = vmatpush1.bf16.msra.mxu0 %v4632
        %4826 = vmatprep.subr.bf16.mxu0 %v4637
        %4827 = vmatpush1.bf16.msra.mxu0 %v4636
        %4828 = vmatprep.subr.bf16.mxu0 %v4641
        %4829 = vmatpush1.bf16.msra.mxu0 %v4640
        %4830 = vmatprep.subr.bf16.mxu0 %v4645
        %4831 = vmatpush1.bf16.msra.mxu0 %v4644
        %4832 = vmatprep.subr.bf16.mxu0 %v4649
        %4833 = vmatpush1.bf16.msra.mxu0 %v4648
        %4834 = vmatprep.mubr.bf16.mxu0 %v4541
        %4835 = vmatmul.mubr.bf16.gmra.mrb[0].mxu0 %v4540
        %v4836 = vpop.f32.mrb[0].mxu0
        %v4837 = vadd.f32 %v4785, %v4836
        %v4838 = vpop.f32.mrb[0].mxu0
        %v4839 = vadd.f32 %v4789, %v4838
        %v4840 = vpop.f32.mrb[0].mxu0
        %v4841 = vadd.f32 %v4785, %v4840
        %v4842 = vpop.f32.mrb[0].mxu0
        %v4843 = vadd.f32 %v4789, %v4842
        %4844 = vmatprep.mubr.bf16.mxu0 %v4543
        %4845 = vmatmul.mubr.bf16.gmra.mrb[0].mxu0 %v4542
        %v4846 = vpop.f32.mrb[0].mxu0
        %v4847 = vadd.f32 %v4785, %v4846
        %v4848 = vpop.f32.mrb[0].mxu0
        %v4849 = vadd.f32 %v4789, %v4848
        %v4850 = vpop.f32.mrb[0].mxu0
        %v4851 = vadd.f32 %v4785, %v4850
        %v4852 = vpop.f32.mrb[0].mxu0
        %v4853 = vadd.f32 %v4789, %v4852
        %4854 = vdwg.mxu0
        %4855 = vmatprep.subr.bf16.mxu0 %v4653
        %4856 = vmatpush1.bf16.msra.mxu0 %v4652
        %4857 = vmatprep.subr.bf16.mxu0 %v4657
        %4858 = vmatpush1.bf16.msra.mxu0 %v4656
        %4859 = vmatprep.subr.bf16.mxu0 %v4661
        %4860 = vmatpush1.bf16.msra.mxu0 %v4660
        %4861 = vmatprep.subr.bf16.mxu0 %v4665
        %4862 = vmatpush1.bf16.msra.mxu0 %v4664
        %4863 = vmatprep.subr.bf16.mxu0 %v4669
        %4864 = vmatpush1.bf16.msra.mxu0 %v4668
        %4865 = vmatprep.subr.bf16.mxu0 %v4673
        %4866 = vmatpush1.bf16.msra.mxu0 %v4672
        %4867 = vmatprep.subr.bf16.mxu0 %v4677
        %4868 = vmatpush1.bf16.msra.mxu0 %v4676
        %4869 = vmatprep.subr.bf16.mxu0 %v4681
        %4870 = vmatpush1.bf16.msra.mxu0 %v4680
        %4871 = vmatprep.subr.bf16.mxu0 %v4685
        %4872 = vmatpush1.bf16.msra.mxu0 %v4684
        %4873 = vmatprep.subr.bf16.mxu0 %v4689
        %4874 = vmatpush1.bf16.msra.mxu0 %v4688
        %4875 = vmatprep.subr.bf16.mxu0 %v4693
        %4876 = vmatpush1.bf16.msra.mxu0 %v4692
        %4877 = vmatprep.subr.bf16.mxu0 %v4697
        %4878 = vmatpush1.bf16.msra.mxu0 %v4696
        %4879 = vmatprep.subr.bf16.mxu0 %v4701
        %4880 = vmatpush1.bf16.msra.mxu0 %v4700
        %4881 = vmatprep.subr.bf16.mxu0 %v4705
        %4882 = vmatpush1.bf16.msra.mxu0 %v4704
        %4883 = vmatprep.subr.bf16.mxu0 %v4709
        %4884 = vmatpush1.bf16.msra.mxu0 %v4708
        %4885 = vmatprep.subr.bf16.mxu0 %v4713
        %4886 = vmatpush1.bf16.msra.mxu0 %v4712
        %4887 = vmatprep.mubr.bf16.mxu0 %v4545
        %4888 = vmatmul.mubr.bf16.gmra.mrb[0].mxu0 %v4544
        %v4889 = vpop.f32.mrb[0].mxu0
        %v4890 = vadd.f32 %v4837, %v4889
        %v4891 = vpop.f32.mrb[0].mxu0
        %v4892 = vadd.f32 %v4839, %v4891
        %v4893 = vpop.f32.mrb[0].mxu0
        %v4894 = vadd.f32 %v4841, %v4893
        %v4895 = vpop.f32.mrb[0].mxu0
        %v4896 = vadd.f32 %v4843, %v4895
        %4897 = vmatprep.mubr.bf16.mxu0 %v4547
        %4898 = vmatmul.mubr.bf16.gmra.mrb[0].mxu0 %v4546
        %v4899 = vpop.f32.mrb[0].mxu0
        %v4900 = vadd.f32 %v4847, %v4899
        %v4901 = vpop.f32.mrb[0].mxu0
        %v4902 = vadd.f32 %v4849, %v4901
        %v4903 = vpop.f32.mrb[0].mxu0
        %v4904 = vadd.f32 %v4851, %v4903
        %v4905 = vpop.f32.mrb[0].mxu0
        %v4906 = vadd.f32 %v4853, %v4905
        %4907 = vdwg.mxu0
        %4908 = vmatprep.subr.bf16.mxu0 %v4717
        %4909 = vmatpush1.bf16.msra.mxu0 %v4716
        %4910 = vmatprep.subr.bf16.mxu0 %v4721
        %4911 = vmatpush1.bf16.msra.mxu0 %v4720
        %4912 = vmatprep.subr.bf16.mxu0 %v4725
        %4913 = vmatpush1.bf16.msra.mxu0 %v4724
        %4914 = vmatprep.subr.bf16.mxu0 %v4729
        %4915 = vmatpush1.bf16.msra.mxu0 %v4728
        %4916 = vmatprep.subr.bf16.mxu0 %v4733
        %4917 = vmatpush1.bf16.msra.mxu0 %v4732
        %4918 = vmatprep.subr.bf16.mxu0 %v4737
        %4919 = vmatpush1.bf16.msra.mxu0 %v4736
        %4920 = vmatprep.subr.bf16.mxu0 %v4741
        %4921 = vmatpush1.bf16.msra.mxu0 %v4740
        %4922 = vmatprep.subr.bf16.mxu0 %v4745
        %4923 = vmatpush1.bf16.msra.mxu0 %v4744
        %4924 = vmatprep.subr.bf16.mxu0 %v4749
        %4925 = vmatpush1.bf16.msra.mxu0 %v4748
        %4926 = vmatprep.subr.bf16.mxu0 %v4753
        %4927 = vmatpush1.bf16.msra.mxu0 %v4752
        %4928 = vmatprep.subr.bf16.mxu0 %v4757
        %4929 = vmatpush1.bf16.msra.mxu0 %v4756
        %4930 = vmatprep.subr.bf16.mxu0 %v4761
        %4931 = vmatpush1.bf16.msra.mxu0 %v4760
        %4932 = vmatprep.subr.bf16.mxu0 %v4765
        %4933 = vmatpush1.bf16.msra.mxu0 %v4764
        %4934 = vmatprep.subr.bf16.mxu0 %v4769
        %4935 = vmatpush1.bf16.msra.mxu0 %v4768
        %4936 = vmatprep.subr.bf16.mxu0 %v4773
        %4937 = vmatpush1.bf16.msra.mxu0 %v4772
        %4938 = vmatprep.subr.bf16.mxu0 %v4777
        %4939 = vmatpush1.bf16.msra.mxu0 %v4776
        %4940 = vmatprep.mubr.bf16.mxu0 %v4585
        %4941 = vmatmul.mubr.bf16.gmra.mrb[0].mxu0 %v4584
        %v4942 = vpop.f32.mrb[0].mxu0
        %v4943 = vadd.f32 %v4890, %v4942
        %v4944 = vpop.f32.mrb[0].mxu0
        %v4945 = vadd.f32 %v4892, %v4944
        %v4946 = vpop.f32.mrb[0].mxu0
        %v4947 = vadd.f32 %v4894, %v4946
        %v4948 = vpop.f32.mrb[0].mxu0
        %v4949 = vadd.f32 %v4896, %v4948
        %4950 = vmatprep.mubr.bf16.mxu0 %v4587
        %4951 = vmatmul.mubr.bf16.gmra.mrb[0].mxu0 %v4586
        %v4952 = vpop.f32.mrb[0].mxu0
        %v4953 = vadd.f32 %v4900, %v4952
        %v4954 = vpop.f32.mrb[0].mxu0
        %v4955 = vadd.f32 %v4902, %v4954
        %v4956 = vpop.f32.mrb[0].mxu0
        %v4957 = vadd.f32 %v4904, %v4956
        %v4958 = vpop.f32.mrb[0].mxu0
        %v4959 = vadd.f32 %v4906, %v4958
        %4960 = vdwg.mxu0
        %4961 = vmatprep.subr.bf16.mxu0 %v4591
        %4962 = vmatpush1.bf16.msra.mxu0 %v4590
        %4963 = vmatprep.subr.bf16.mxu0 %v4595
        %4964 = vmatpush1.bf16.msra.mxu0 %v4594
        %4965 = vmatprep.subr.bf16.mxu0 %v4599
        %4966 = vmatpush1.bf16.msra.mxu0 %v4598
        %4967 = vmatprep.subr.bf16.mxu0 %v4603
        %4968 = vmatpush1.bf16.msra.mxu0 %v4602
        %4969 = vmatprep.subr.bf16.mxu0 %v4607
        %4970 = vmatpush1.bf16.msra.mxu0 %v4606
        %4971 = vmatprep.subr.bf16.mxu0 %v4611
        %4972 = vmatpush1.bf16.msra.mxu0 %v4610
        %4973 = vmatprep.subr.bf16.mxu0 %v4615
        %4974 = vmatpush1.bf16.msra.mxu0 %v4614
        %4975 = vmatprep.subr.bf16.mxu0 %v4619
        %4976 = vmatpush1.bf16.msra.mxu0 %v4618
        %4977 = vmatprep.subr.bf16.mxu0 %v4623
        %4978 = vmatpush1.bf16.msra.mxu0 %v4622
        %4979 = vmatprep.subr.bf16.mxu0 %v4627
        %4980 = vmatpush1.bf16.msra.mxu0 %v4626
        %4981 = vmatprep.subr.bf16.mxu0 %v4631
        %4982 = vmatpush1.bf16.msra.mxu0 %v4630
        %4983 = vmatprep.subr.bf16.mxu0 %v4635
        %4984 = vmatpush1.bf16.msra.mxu0 %v4634
        %4985 = vmatprep.subr.bf16.mxu0 %v4639
        %4986 = vmatpush1.bf16.msra.mxu0 %v4638
        %4987 = vmatprep.subr.bf16.mxu0 %v4643
        %4988 = vmatpush1.bf16.msra.mxu0 %v4642
        %4989 = vmatprep.subr.bf16.mxu0 %v4647
        %4990 = vmatpush1.bf16.msra.mxu0 %v4646
        %4991 = vmatprep.subr.bf16.mxu0 %v4651
        %4992 = vmatpush1.bf16.msra.mxu0 %v4650
        %4993 = vmatprep.mubr.bf16.mxu0 %v4541
        %4994 = vmatmul.mubr.bf16.gmra.mrb[0].mxu0 %v4540
        %v4995 = vpop.f32.mrb[0].mxu0
        %v4996 = vadd.f32 %v4793, %v4995
        %v4997 = vpop.f32.mrb[0].mxu0
        %v4998 = vadd.f32 %v4797, %v4997
        %v4999 = vpop.f32.mrb[0].mxu0
        %v5000 = vadd.f32 %v4793, %v4999
        %v5001 = vpop.f32.mrb[0].mxu0
        %v5002 = vadd.f32 %v4797, %v5001
        %5003 = vmatprep.mubr.bf16.mxu0 %v4543
        %5004 = vmatmul.mubr.bf16.gmra.mrb[0].mxu0 %v4542
        %v5005 = vpop.f32.mrb[0].mxu0
        %v5006 = vadd.f32 %v4793, %v5005
        %v5007 = vpop.f32.mrb[0].mxu0
        %v5008 = vadd.f32 %v4797, %v5007
        %v5009 = vpop.f32.mrb[0].mxu0
        %v5010 = vadd.f32 %v4793, %v5009
        %v5011 = vpop.f32.mrb[0].mxu0
        %v5012 = vadd.f32 %v4797, %v5011
        %5013 = vdwg.mxu0
        %5014 = vmatprep.subr.bf16.mxu0 %v4655
        %5015 = vmatpush1.bf16.msra.mxu0 %v4654
        %5016 = vmatprep.subr.bf16.mxu0 %v4659
        %5017 = vmatpush1.bf16.msra.mxu0 %v4658
        %5018 = vmatprep.subr.bf16.mxu0 %v4663
        %5019 = vmatpush1.bf16.msra.mxu0 %v4662
        %5020 = vmatprep.subr.bf16.mxu0 %v4667
        %5021 = vmatpush1.bf16.msra.mxu0 %v4666
        %5022 = vmatprep.subr.bf16.mxu0 %v4671
        %5023 = vmatpush1.bf16.msra.mxu0 %v4670
        %5024 = vmatprep.subr.bf16.mxu0 %v4675
        %5025 = vmatpush1.bf16.msra.mxu0 %v4674
        %5026 = vmatprep.subr.bf16.mxu0 %v4679
        %5027 = vmatpush1.bf16.msra.mxu0 %v4678
        %5028 = vmatprep.subr.bf16.mxu0 %v4683
        %5029 = vmatpush1.bf16.msra.mxu0 %v4682
        %5030 = vmatprep.subr.bf16.mxu0 %v4687
        %5031 = vmatpush1.bf16.msra.mxu0 %v4686
        %5032 = vmatprep.subr.bf16.mxu0 %v4691
        %5033 = vmatpush1.bf16.msra.mxu0 %v4690
        %5034 = vmatprep.subr.bf16.mxu0 %v4695
        %5035 = vmatpush1.bf16.msra.mxu0 %v4694
        %5036 = vmatprep.subr.bf16.mxu0 %v4699
        %5037 = vmatpush1.bf16.msra.mxu0 %v4698
        %5038 = vmatprep.subr.bf16.mxu0 %v4703
        %5039 = vmatpush1.bf16.msra.mxu0 %v4702
        %5040 = vmatprep.subr.bf16.mxu0 %v4707
        %5041 = vmatpush1.bf16.msra.mxu0 %v4706
        %5042 = vmatprep.subr.bf16.mxu0 %v4711
        %5043 = vmatpush1.bf16.msra.mxu0 %v4710
        %5044 = vmatprep.subr.bf16.mxu0 %v4715
        %5045 = vmatpush1.bf16.msra.mxu0 %v4714
        %5046 = vmatprep.mubr.bf16.mxu0 %v4545
        %5047 = vmatmul.mubr.bf16.gmra.mrb[0].mxu0 %v4544
        %v5048 = vpop.f32.mrb[0].mxu0
        %v5049 = vadd.f32 %v4996, %v5048
        %v5050 = vpop.f32.mrb[0].mxu0
        %v5051 = vadd.f32 %v4998, %v5050
        %v5052 = vpop.f32.mrb[0].mxu0
        %v5053 = vadd.f32 %v5000, %v5052
        %v5054 = vpop.f32.mrb[0].mxu0
        %v5055 = vadd.f32 %v5002, %v5054
        %5056 = vmatprep.mubr.bf16.mxu0 %v4547
        %5057 = vmatmul.mubr.bf16.gmra.mrb[0].mxu0 %v4546
        %v5058 = vpop.f32.mrb[0].mxu0
        %v5059 = vadd.f32 %v5006, %v5058
        %v5060 = vpop.f32.mrb[0].mxu0
        %v5061 = vadd.f32 %v5008, %v5060
        %v5062 = vpop.f32.mrb[0].mxu0
        %v5063 = vadd.f32 %v5010, %v5062
        %v5064 = vpop.f32.mrb[0].mxu0
        %v5065 = vadd.f32 %v5012, %v5064
        %5066 = vdwg.mxu0
        %5067 = vmatprep.subr.bf16.mxu0 %v4719
        %5068 = vmatpush1.bf16.msra.mxu0 %v4718
        %5069 = vmatprep.subr.bf16.mxu0 %v4723
        %5070 = vmatpush1.bf16.msra.mxu0 %v4722
        %5071 = vmatprep.subr.bf16.mxu0 %v4727
        %5072 = vmatpush1.bf16.msra.mxu0 %v4726
        %5073 = vmatprep.subr.bf16.mxu0 %v4731
        %5074 = vmatpush1.bf16.msra.mxu0 %v4730
        %5075 = vmatprep.subr.bf16.mxu0 %v4735
        %5076 = vmatpush1.bf16.msra.mxu0 %v4734
        %5077 = vmatprep.subr.bf16.mxu0 %v4739
        %5078 = vmatpush1.bf16.msra.mxu0 %v4738
        %5079 = vmatprep.subr.bf16.mxu0 %v4743
        %5080 = vmatpush1.bf16.msra.mxu0 %v4742
        %5081 = vmatprep.subr.bf16.mxu0 %v4747
        %5082 = vmatpush1.bf16.msra.mxu0 %v4746
        %5083 = vmatprep.subr.bf16.mxu0 %v4751
        %5084 = vmatpush1.bf16.msra.mxu0 %v4750
        %5085 = vmatprep.subr.bf16.mxu0 %v4755
        %5086 = vmatpush1.bf16.msra.mxu0 %v4754
        %5087 = vmatprep.subr.bf16.mxu0 %v4759
        %5088 = vmatpush1.bf16.msra.mxu0 %v4758
        %5089 = vmatprep.subr.bf16.mxu0 %v4763
        %5090 = vmatpush1.bf16.msra.mxu0 %v4762
        %5091 = vmatprep.subr.bf16.mxu0 %v4767
        %5092 = vmatpush1.bf16.msra.mxu0 %v4766
        %5093 = vmatprep.subr.bf16.mxu0 %v4771
        %5094 = vmatpush1.bf16.msra.mxu0 %v4770
        %5095 = vmatprep.subr.bf16.mxu0 %v4775
        %5096 = vmatpush1.bf16.msra.mxu0 %v4774
        %5097 = vmatprep.subr.bf16.mxu0 %v4779
        %5098 = vmatpush1.bf16.msra.mxu0 %v4778
        %5099 = vmatprep.mubr.bf16.mxu0 %v4585
        %5100 = vmatmul.mubr.bf16.gmra.mrb[0].mxu0 %v4584
        %v5101 = vpop.f32.mrb[0].mxu0
        %v5102 = vadd.f32 %v5049, %v5101
        %v5103 = vpop.f32.mrb[0].mxu0
        %v5104 = vadd.f32 %v5051, %v5103
        %v5105 = vpop.f32.mrb[0].mxu0
        %v5106 = vadd.f32 %v5053, %v5105
        %v5107 = vpop.f32.mrb[0].mxu0
        %v5108 = vadd.f32 %v5055, %v5107
        %5109 = vmatprep.mubr.bf16.mxu0 %v4587
        %5110 = vmatmul.mubr.bf16.gmra.mrb[0].mxu0 %v4586
        %v5111 = vpop.f32.mrb[0].mxu0
        %v5112 = vadd.f32 %v5059, %v5111
        %v5113 = vpop.f32.mrb[0].mxu0
        %v5114 = vadd.f32 %v5061, %v5113
        %v5115 = vpop.f32.mrb[0].mxu0
        %v5116 = vadd.f32 %v5063, %v5115
        %v5117 = vpop.f32.mrb[0].mxu0
        %v5118 = vadd.f32 %v5065, %v5117
        %5119 = vdwg.mxu0
        %v5120 = vld [vmem:[#allocation3 + $0x600] sm:$0xff]
        %v5121 = vld [vmem:[#allocation3 + $0x608] sm:$0xff]
        %v5122 = vld [vmem:[#allocation3 + $0x610] sm:$0xff]
        %v5123 = vld [vmem:[#allocation3 + $0x618] sm:$0xff]
        %v5124 = vld [vmem:[#allocation3 + $0x620] sm:$0xff]
        %v5125 = vld [vmem:[#allocation3 + $0x628] sm:$0xff]
        %v5126 = vld [vmem:[#allocation3 + $0x630] sm:$0xff]
        %v5127 = vld [vmem:[#allocation3 + $0x638] sm:$0xff]
        %v5128 = vld [vmem:[#allocation3 + $0x640] sm:$0xff]
        %v5129 = vld [vmem:[#allocation3 + $0x648] sm:$0xff]
        %v5130 = vld [vmem:[#allocation3 + $0x650] sm:$0xff]
        %v5131 = vld [vmem:[#allocation3 + $0x658] sm:$0xff]
        %v5132 = vld [vmem:[#allocation3 + $0x660] sm:$0xff]
        %v5133 = vld [vmem:[#allocation3 + $0x668] sm:$0xff]
        %v5134 = vld [vmem:[#allocation3 + $0x670] sm:$0xff]
        %v5135 = vld [vmem:[#allocation3 + $0x678] sm:$0xff]
        %v5136 = vld [vmem:[#allocation3 + $0x680] sm:$0xff]
        %v5137 = vld [vmem:[#allocation3 + $0x688] sm:$0xff]
        %v5138 = vld [vmem:[#allocation3 + $0x690] sm:$0xff]
        %v5139 = vld [vmem:[#allocation3 + $0x698] sm:$0xff]
        %v5140 = vld [vmem:[#allocation3 + $0x6a0] sm:$0xff]
        %v5141 = vld [vmem:[#allocation3 + $0x6a8] sm:$0xff]
        %v5142 = vld [vmem:[#allocation3 + $0x6b0] sm:$0xff]
        %v5143 = vld [vmem:[#allocation3 + $0x6b8] sm:$0xff]
        %v5144 = vld [vmem:[#allocation3 + $0x6c0] sm:$0xff]
        %v5145 = vld [vmem:[#allocation3 + $0x6c8] sm:$0xff]
        %v5146 = vld [vmem:[#allocation3 + $0x6d0] sm:$0xff]
        %v5147 = vld [vmem:[#allocation3 + $0x6d8] sm:$0xff]
        %v5148 = vld [vmem:[#allocation3 + $0x6e0] sm:$0xff]
        %v5149 = vld [vmem:[#allocation3 + $0x6e8] sm:$0xff]
        %v5150 = vld [vmem:[#allocation3 + $0x6f0] sm:$0xff]
        %v5151 = vld [vmem:[#allocation3 + $0x6f8] sm:$0xff]
        %v5152 = vld [vmem:[#allocation3 + $0x700] sm:$0xff]
        %v5153 = vld [vmem:[#allocation3 + $0x708] sm:$0xff]
        %v5154 = vld [vmem:[#allocation3 + $0x710] sm:$0xff]
        %v5155 = vld [vmem:[#allocation3 + $0x718] sm:$0xff]
        %v5156 = vld [vmem:[#allocation3 + $0x720] sm:$0xff]
        %v5157 = vld [vmem:[#allocation3 + $0x728] sm:$0xff]
        %v5158 = vld [vmem:[#allocation3 + $0x730] sm:$0xff]
        %v5159 = vld [vmem:[#allocation3 + $0x738] sm:$0xff]
        %v5160 = vld [vmem:[#allocation3 + $0x740] sm:$0xff]
        %v5161 = vld [vmem:[#allocation3 + $0x748] sm:$0xff]
        %v5162 = vld [vmem:[#allocation3 + $0x750] sm:$0xff]
        %v5163 = vld [vmem:[#allocation3 + $0x758] sm:$0xff]
        %v5164 = vld [vmem:[#allocation3 + $0x760] sm:$0xff]
        %v5165 = vld [vmem:[#allocation3 + $0x768] sm:$0xff]
        %v5166 = vld [vmem:[#allocation3 + $0x770] sm:$0xff]
        %v5167 = vld [vmem:[#allocation3 + $0x778] sm:$0xff]
        %v5168 = vld [vmem:[#allocation3 + $0x780] sm:$0xff]
        %v5169 = vld [vmem:[#allocation3 + $0x788] sm:$0xff]
        %v5170 = vld [vmem:[#allocation3 + $0x790] sm:$0xff]
        %v5171 = vld [vmem:[#allocation3 + $0x798] sm:$0xff]
        %v5172 = vld [vmem:[#allocation3 + $0x7a0] sm:$0xff]
        %v5173 = vld [vmem:[#allocation3 + $0x7a8] sm:$0xff]
        %v5174 = vld [vmem:[#allocation3 + $0x7b0] sm:$0xff]
        %v5175 = vld [vmem:[#allocation3 + $0x7b8] sm:$0xff]
        %v5176 = vld [vmem:[#allocation3 + $0x7c0] sm:$0xff]
        %v5177 = vld [vmem:[#allocation3 + $0x7c8] sm:$0xff]
        %v5178 = vld [vmem:[#allocation3 + $0x7d0] sm:$0xff]
        %v5179 = vld [vmem:[#allocation3 + $0x7d8] sm:$0xff]
        %v5180 = vld [vmem:[#allocation3 + $0x7e0] sm:$0xff]
        %v5181 = vld [vmem:[#allocation3 + $0x7e8] sm:$0xff]
        %v5182 = vld [vmem:[#allocation3 + $0x7f0] sm:$0xff]
        %v5183 = vld [vmem:[#allocation3 + $0x7f8] sm:$0xff]
        %v5184 = vld [vmem:[#allocation3 + $0x800] sm:$0xff]
        %v5185 = vld [vmem:[#allocation3 + $0x808] sm:$0xff]
        %v5186 = vld [vmem:[#allocation3 + $0x810] sm:$0xff]
        %v5187 = vld [vmem:[#allocation3 + $0x818] sm:$0xff]
        %v5188 = vld [vmem:[#allocation3 + $0x820] sm:$0xff]
        %v5189 = vld [vmem:[#allocation3 + $0x828] sm:$0xff]
        %v5190 = vld [vmem:[#allocation3 + $0x830] sm:$0xff]
        %v5191 = vld [vmem:[#allocation3 + $0x838] sm:$0xff]
        %v5192 = vld [vmem:[#allocation3 + $0x840] sm:$0xff]
        %v5193 = vld [vmem:[#allocation3 + $0x848] sm:$0xff]
        %v5194 = vld [vmem:[#allocation3 + $0x850] sm:$0xff]
        %v5195 = vld [vmem:[#allocation3 + $0x858] sm:$0xff]
        %v5196 = vld [vmem:[#allocation3 + $0x860] sm:$0xff]
        %v5197 = vld [vmem:[#allocation3 + $0x868] sm:$0xff]
        %v5198 = vld [vmem:[#allocation3 + $0x870] sm:$0xff]
        %v5199 = vld [vmem:[#allocation3 + $0x878] sm:$0xff]
        %v5200 = vld [vmem:[#allocation3 + $0x880] sm:$0xff]
        %v5201 = vld [vmem:[#allocation3 + $0x888] sm:$0xff]
        %v5202 = vld [vmem:[#allocation3 + $0x890] sm:$0xff]
        %v5203 = vld [vmem:[#allocation3 + $0x898] sm:$0xff]
        %v5204 = vld [vmem:[#allocation3 + $0x8a0] sm:$0xff]
        %v5205 = vld [vmem:[#allocation3 + $0x8a8] sm:$0xff]
        %v5206 = vld [vmem:[#allocation3 + $0x8b0] sm:$0xff]
        %v5207 = vld [vmem:[#allocation3 + $0x8b8] sm:$0xff]
        %v5208 = vld [vmem:[#allocation3 + $0x8c0] sm:$0xff]
        %v5209 = vld [vmem:[#allocation3 + $0x8c8] sm:$0xff]
        %v5210 = vld [vmem:[#allocation3 + $0x8d0] sm:$0xff]
        %v5211 = vld [vmem:[#allocation3 + $0x8d8] sm:$0xff]
        %v5212 = vld [vmem:[#allocation3 + $0x8e0] sm:$0xff]
        %v5213 = vld [vmem:[#allocation3 + $0x8e8] sm:$0xff]
        %v5214 = vld [vmem:[#allocation3 + $0x8f0] sm:$0xff]
        %v5215 = vld [vmem:[#allocation3 + $0x8f8] sm:$0xff]
        %v5216 = vld [vmem:[#allocation3 + $0x900] sm:$0xff]
        %v5217 = vld [vmem:[#allocation3 + $0x908] sm:$0xff]
        %v5218 = vld [vmem:[#allocation3 + $0x910] sm:$0xff]
        %v5219 = vld [vmem:[#allocation3 + $0x918] sm:$0xff]
        %v5220 = vld [vmem:[#allocation3 + $0x920] sm:$0xff]
        %v5221 = vld [vmem:[#allocation3 + $0x928] sm:$0xff]
        %v5222 = vld [vmem:[#allocation3 + $0x930] sm:$0xff]
        %v5223 = vld [vmem:[#allocation3 + $0x938] sm:$0xff]
        %v5224 = vld [vmem:[#allocation3 + $0x940] sm:$0xff]
        %v5225 = vld [vmem:[#allocation3 + $0x948] sm:$0xff]
        %v5226 = vld [vmem:[#allocation3 + $0x950] sm:$0xff]
        %v5227 = vld [vmem:[#allocation3 + $0x958] sm:$0xff]
        %v5228 = vld [vmem:[#allocation3 + $0x960] sm:$0xff]
        %v5229 = vld [vmem:[#allocation3 + $0x968] sm:$0xff]
        %v5230 = vld [vmem:[#allocation3 + $0x970] sm:$0xff]
        %v5231 = vld [vmem:[#allocation3 + $0x978] sm:$0xff]
        %v5232 = vld [vmem:[#allocation3 + $0x980] sm:$0xff]
        %v5233 = vld [vmem:[#allocation3 + $0x988] sm:$0xff]
        %v5234 = vld [vmem:[#allocation3 + $0x990] sm:$0xff]
        %v5235 = vld [vmem:[#allocation3 + $0x998] sm:$0xff]
        %v5236 = vld [vmem:[#allocation3 + $0x9a0] sm:$0xff]
        %v5237 = vld [vmem:[#allocation3 + $0x9a8] sm:$0xff]
        %v5238 = vld [vmem:[#allocation3 + $0x9b0] sm:$0xff]
        %v5239 = vld [vmem:[#allocation3 + $0x9b8] sm:$0xff]
        %v5240 = vld [vmem:[#allocation3 + $0x9c0] sm:$0xff]
        %v5241 = vld [vmem:[#allocation3 + $0x9c8] sm:$0xff]
        %v5242 = vld [vmem:[#allocation3 + $0x9d0] sm:$0xff]
        %v5243 = vld [vmem:[#allocation3 + $0x9d8] sm:$0xff]
        %v5244 = vld [vmem:[#allocation3 + $0x9e0] sm:$0xff]
        %v5245 = vld [vmem:[#allocation3 + $0x9e8] sm:$0xff]
        %v5246 = vld [vmem:[#allocation3 + $0x9f0] sm:$0xff]
        %v5247 = vld [vmem:[#allocation3 + $0x9f8] sm:$0xff]
        %v5248 = vld [vmem:[#allocation3 + $0xa00] sm:$0xff]
        %v5249 = vld [vmem:[#allocation3 + $0xa08] sm:$0xff]
        %v5250 = vld [vmem:[#allocation3 + $0xa10] sm:$0xff]
        %v5251 = vld [vmem:[#allocation3 + $0xa18] sm:$0xff]
        %v5252 = vld [vmem:[#allocation3 + $0xa20] sm:$0xff]
        %v5253 = vld [vmem:[#allocation3 + $0xa28] sm:$0xff]
        %v5254 = vld [vmem:[#allocation3 + $0xa30] sm:$0xff]
        %v5255 = vld [vmem:[#allocation3 + $0xa38] sm:$0xff]
        %v5256 = vld [vmem:[#allocation3 + $0xa40] sm:$0xff]
        %v5257 = vld [vmem:[#allocation3 + $0xa48] sm:$0xff]
        %v5258 = vld [vmem:[#allocation3 + $0xa50] sm:$0xff]
        %v5259 = vld [vmem:[#allocation3 + $0xa58] sm:$0xff]
        %v5260 = vld [vmem:[#allocation3 + $0xa60] sm:$0xff]
        %v5261 = vld [vmem:[#allocation3 + $0xa68] sm:$0xff]
        %v5262 = vld [vmem:[#allocation3 + $0xa70] sm:$0xff]
        %v5263 = vld [vmem:[#allocation3 + $0xa78] sm:$0xff]
        %v5264 = vld [vmem:[#allocation3 + $0xa80] sm:$0xff]
        %v5265 = vld [vmem:[#allocation3 + $0xa88] sm:$0xff]
        %v5266 = vld [vmem:[#allocation3 + $0xa90] sm:$0xff]
        %v5267 = vld [vmem:[#allocation3 + $0xa98] sm:$0xff]
        %v5268 = vld [vmem:[#allocation3 + $0xaa0] sm:$0xff]
        %v5269 = vld [vmem:[#allocation3 + $0xaa8] sm:$0xff]
        %v5270 = vld [vmem:[#allocation3 + $0xab0] sm:$0xff]
        %v5271 = vld [vmem:[#allocation3 + $0xab8] sm:$0xff]
        %v5272 = vld [vmem:[#allocation3 + $0xac0] sm:$0xff]
        %v5273 = vld [vmem:[#allocation3 + $0xac8] sm:$0xff]
        %v5274 = vld [vmem:[#allocation3 + $0xad0] sm:$0xff]
        %v5275 = vld [vmem:[#allocation3 + $0xad8] sm:$0xff]
        %v5276 = vld [vmem:[#allocation3 + $0xae0] sm:$0xff]
        %v5277 = vld [vmem:[#allocation3 + $0xae8] sm:$0xff]
        %v5278 = vld [vmem:[#allocation3 + $0xaf0] sm:$0xff]
        %v5279 = vld [vmem:[#allocation3 + $0xaf8] sm:$0xff]
        %v5280 = vld [vmem:[#allocation3 + $0xb00] sm:$0xff]
        %v5281 = vld [vmem:[#allocation3 + $0xb08] sm:$0xff]
        %v5282 = vld [vmem:[#allocation3 + $0xb10] sm:$0xff]
        %v5283 = vld [vmem:[#allocation3 + $0xb18] sm:$0xff]
        %v5284 = vld [vmem:[#allocation3 + $0xb20] sm:$0xff]
        %v5285 = vld [vmem:[#allocation3 + $0xb28] sm:$0xff]
        %v5286 = vld [vmem:[#allocation3 + $0xb30] sm:$0xff]
        %v5287 = vld [vmem:[#allocation3 + $0xb38] sm:$0xff]
        %v5288 = vld [vmem:[#allocation3 + $0xb40] sm:$0xff]
        %v5289 = vld [vmem:[#allocation3 + $0xb48] sm:$0xff]
        %v5290 = vld [vmem:[#allocation3 + $0xb50] sm:$0xff]
        %v5291 = vld [vmem:[#allocation3 + $0xb58] sm:$0xff]
        %v5292 = vld [vmem:[#allocation3 + $0xb60] sm:$0xff]
        %v5293 = vld [vmem:[#allocation3 + $0xb68] sm:$0xff]
        %v5294 = vld [vmem:[#allocation3 + $0xb70] sm:$0xff]
        %v5295 = vld [vmem:[#allocation3 + $0xb78] sm:$0xff]
        %v5296 = vld [vmem:[#allocation3 + $0xb80] sm:$0xff]
        %v5297 = vld [vmem:[#allocation3 + $0xb88] sm:$0xff]
        %v5298 = vld [vmem:[#allocation3 + $0xb90] sm:$0xff]
        %v5299 = vld [vmem:[#allocation3 + $0xb98] sm:$0xff]
        %v5300 = vld [vmem:[#allocation3 + $0xba0] sm:$0xff]
        %v5301 = vld [vmem:[#allocation3 + $0xba8] sm:$0xff]
        %v5302 = vld [vmem:[#allocation3 + $0xbb0] sm:$0xff]
        %v5303 = vld [vmem:[#allocation3 + $0xbb8] sm:$0xff]
        %v5304 = vld [vmem:[#allocation3 + $0xbc0] sm:$0xff]
        %v5305 = vld [vmem:[#allocation3 + $0xbc8] sm:$0xff]
        %v5306 = vld [vmem:[#allocation3 + $0xbd0] sm:$0xff]
        %v5307 = vld [vmem:[#allocation3 + $0xbd8] sm:$0xff]
        %v5308 = vld [vmem:[#allocation3 + $0xbe0] sm:$0xff]
        %v5309 = vld [vmem:[#allocation3 + $0xbe8] sm:$0xff]
        %v5310 = vld [vmem:[#allocation3 + $0xbf0] sm:$0xff]
        %v5311 = vld [vmem:[#allocation3 + $0xbf8] sm:$0xff]
        %v5312 = vld [vmem:[#allocation10 + $0x12] sm:$0xf]
        %v5314 = vlaneseq
        %v5315 = vshrl.u32 %v5314, 7
        %v5316 = vsub.s32 0, %v5315
        %v5317 = vrot.slane %v5312, %v5316
        %v5318 = vlaneseq
        %v5319 = vshrl.u32 %v5318, 7
        %v5320 = vsub.s32 1, %v5319
        %v5321 = vrot.slane %v5312, %v5320
        %v5322 = vlaneseq
        %v5323 = vshrl.u32 %v5322, 7
        %v5324 = vsub.s32 2, %v5323
        %v5325 = vrot.slane %v5312, %v5324
        %v5326 = vlaneseq
        %v5327 = vshrl.u32 %v5326, 7
        %v5328 = vsub.s32 3, %v5327
        %v5329 = vrot.slane %v5312, %v5328
        %5334 = vmatprep.subr.bf16.mxu0 %v5121
        %5335 = vmatpush1.bf16.msra.mxu0 %v5120
        %5336 = vmatprep.subr.bf16.mxu0 %v5125
        %5337 = vmatpush1.bf16.msra.mxu0 %v5124
        %5338 = vmatprep.subr.bf16.mxu0 %v5129
        %5339 = vmatpush1.bf16.msra.mxu0 %v5128
        %5340 = vmatprep.subr.bf16.mxu0 %v5133
        %5341 = vmatpush1.bf16.msra.mxu0 %v5132
        %5342 = vmatprep.subr.bf16.mxu0 %v5137
        %5343 = vmatpush1.bf16.msra.mxu0 %v5136
        %5344 = vmatprep.subr.bf16.mxu0 %v5141
        %5345 = vmatpush1.bf16.msra.mxu0 %v5140
        %5346 = vmatprep.subr.bf16.mxu0 %v5145
        %5347 = vmatpush1.bf16.msra.mxu0 %v5144
        %5348 = vmatprep.subr.bf16.mxu0 %v5149
        %5349 = vmatpush1.bf16.msra.mxu0 %v5148
        %5350 = vmatprep.subr.bf16.mxu0 %v5153
        %5351 = vmatpush1.bf16.msra.mxu0 %v5152
        %5352 = vmatprep.subr.bf16.mxu0 %v5157
        %5353 = vmatpush1.bf16.msra.mxu0 %v5156
        %5354 = vmatprep.subr.bf16.mxu0 %v5161
        %5355 = vmatpush1.bf16.msra.mxu0 %v5160
        %5356 = vmatprep.subr.bf16.mxu0 %v5165
        %5357 = vmatpush1.bf16.msra.mxu0 %v5164
        %5358 = vmatprep.subr.bf16.mxu0 %v5169
        %5359 = vmatpush1.bf16.msra.mxu0 %v5168
        %5360 = vmatprep.subr.bf16.mxu0 %v5173
        %5361 = vmatpush1.bf16.msra.mxu0 %v5172
        %5362 = vmatprep.subr.bf16.mxu0 %v5177
        %5363 = vmatpush1.bf16.msra.mxu0 %v5176
        %5364 = vmatprep.subr.bf16.mxu0 %v5181
        %5365 = vmatpush1.bf16.msra.mxu0 %v5180
        %5366 = vmatprep.mubr.bf16.mxu0 %v4541
        %5367 = vmatmul.mubr.bf16.gmra.mrb[0].mxu0 %v4540
        %v5368 = vpop.f32.mrb[0].mxu0
        %v5369 = vadd.f32 %v5317, %v5368
        %v5370 = vpop.f32.mrb[0].mxu0
        %v5371 = vadd.f32 %v5321, %v5370
        %v5372 = vpop.f32.mrb[0].mxu0
        %v5373 = vadd.f32 %v5317, %v5372
        %v5374 = vpop.f32.mrb[0].mxu0
        %v5375 = vadd.f32 %v5321, %v5374
        %5376 = vmatprep.mubr.bf16.mxu0 %v4543
        %5377 = vmatmul.mubr.bf16.gmra.mrb[0].mxu0 %v4542
        %v5378 = vpop.f32.mrb[0].mxu0
        %v5379 = vadd.f32 %v5317, %v5378
        %v5380 = vpop.f32.mrb[0].mxu0
        %v5381 = vadd.f32 %v5321, %v5380
        %v5382 = vpop.f32.mrb[0].mxu0
        %v5383 = vadd.f32 %v5317, %v5382
        %v5384 = vpop.f32.mrb[0].mxu0
        %v5385 = vadd.f32 %v5321, %v5384
        %5386 = vdwg.mxu0
        %5387 = vmatprep.subr.bf16.mxu0 %v5185
        %5388 = vmatpush1.bf16.msra.mxu0 %v5184
        %5389 = vmatprep.subr.bf16.mxu0 %v5189
        %5390 = vmatpush1.bf16.msra.mxu0 %v5188
        %5391 = vmatprep.subr.bf16.mxu0 %v5193
        %5392 = vmatpush1.bf16.msra.mxu0 %v5192
        %5393 = vmatprep.subr.bf16.mxu0 %v5197
        %5394 = vmatpush1.bf16.msra.mxu0 %v5196
        %5395 = vmatprep.subr.bf16.mxu0 %v5201
        %5396 = vmatpush1.bf16.msra.mxu0 %v5200
        %5397 = vmatprep.subr.bf16.mxu0 %v5205
        %5398 = vmatpush1.bf16.msra.mxu0 %v5204
        %5399 = vmatprep.subr.bf16.mxu0 %v5209
        %5400 = vmatpush1.bf16.msra.mxu0 %v5208
        %5401 = vmatprep.subr.bf16.mxu0 %v5213
        %5402 = vmatpush1.bf16.msra.mxu0 %v5212
        %5403 = vmatprep.subr.bf16.mxu0 %v5217
        %5404 = vmatpush1.bf16.msra.mxu0 %v5216
        %5405 = vmatprep.subr.bf16.mxu0 %v5221
        %5406 = vmatpush1.bf16.msra.mxu0 %v5220
        %5407 = vmatprep.subr.bf16.mxu0 %v5225
        %5408 = vmatpush1.bf16.msra.mxu0 %v5224
        %5409 = vmatprep.subr.bf16.mxu0 %v5229
        %5410 = vmatpush1.bf16.msra.mxu0 %v5228
        %5411 = vmatprep.subr.bf16.mxu0 %v5233
        %5412 = vmatpush1.bf16.msra.mxu0 %v5232
        %5413 = vmatprep.subr.bf16.mxu0 %v5237
        %5414 = vmatpush1.bf16.msra.mxu0 %v5236
        %5415 = vmatprep.subr.bf16.mxu0 %v5241
        %5416 = vmatpush1.bf16.msra.mxu0 %v5240
        %5417 = vmatprep.subr.bf16.mxu0 %v5245
        %5418 = vmatpush1.bf16.msra.mxu0 %v5244
        %5419 = vmatprep.mubr.bf16.mxu0 %v4545
        %5420 = vmatmul.mubr.bf16.gmra.mrb[0].mxu0 %v4544
        %v5421 = vpop.f32.mrb[0].mxu0
        %v5422 = vadd.f32 %v5369, %v5421
        %v5423 = vpop.f32.mrb[0].mxu0
        %v5424 = vadd.f32 %v5371, %v5423
        %v5425 = vpop.f32.mrb[0].mxu0
        %v5426 = vadd.f32 %v5373, %v5425
        %v5427 = vpop.f32.mrb[0].mxu0
        %v5428 = vadd.f32 %v5375, %v5427
        %5429 = vmatprep.mubr.bf16.mxu0 %v4547
        %5430 = vmatmul.mubr.bf16.gmra.mrb[0].mxu0 %v4546
        %v5431 = vpop.f32.mrb[0].mxu0
        %v5432 = vadd.f32 %v5379, %v5431
        %v5433 = vpop.f32.mrb[0].mxu0
        %v5434 = vadd.f32 %v5381, %v5433
        %v5435 = vpop.f32.mrb[0].mxu0
        %v5436 = vadd.f32 %v5383, %v5435
        %v5437 = vpop.f32.mrb[0].mxu0
        %v5438 = vadd.f32 %v5385, %v5437
        %5439 = vdwg.mxu0
        %5440 = vmatprep.subr.bf16.mxu0 %v5249
        %5441 = vmatpush1.bf16.msra.mxu0 %v5248
        %5442 = vmatprep.subr.bf16.mxu0 %v5253
        %5443 = vmatpush1.bf16.msra.mxu0 %v5252
        %5444 = vmatprep.subr.bf16.mxu0 %v5257
        %5445 = vmatpush1.bf16.msra.mxu0 %v5256
        %5446 = vmatprep.subr.bf16.mxu0 %v5261
        %5447 = vmatpush1.bf16.msra.mxu0 %v5260
        %5448 = vmatprep.subr.bf16.mxu0 %v5265
        %5449 = vmatpush1.bf16.msra.mxu0 %v5264
        %5450 = vmatprep.subr.bf16.mxu0 %v5269
        %5451 = vmatpush1.bf16.msra.mxu0 %v5268
        %5452 = vmatprep.subr.bf16.mxu0 %v5273
        %5453 = vmatpush1.bf16.msra.mxu0 %v5272
        %5454 = vmatprep.subr.bf16.mxu0 %v5277
        %5455 = vmatpush1.bf16.msra.mxu0 %v5276
        %5456 = vmatprep.subr.bf16.mxu0 %v5281
        %5457 = vmatpush1.bf16.msra.mxu0 %v5280
        %5458 = vmatprep.subr.bf16.mxu0 %v5285
        %5459 = vmatpush1.bf16.msra.mxu0 %v5284
        %5460 = vmatprep.subr.bf16.mxu0 %v5289
        %5461 = vmatpush1.bf16.msra.mxu0 %v5288
        %5462 = vmatprep.subr.bf16.mxu0 %v5293
        %5463 = vmatpush1.bf16.msra.mxu0 %v5292
        %5464 = vmatprep.subr.bf16.mxu0 %v5297
        %5465 = vmatpush1.bf16.msra.mxu0 %v5296
        %5466 = vmatprep.subr.bf16.mxu0 %v5301
        %5467 = vmatpush1.bf16.msra.mxu0 %v5300
        %5468 = vmatprep.subr.bf16.mxu0 %v5305
        %5469 = vmatpush1.bf16.msra.mxu0 %v5304
        %5470 = vmatprep.subr.bf16.mxu0 %v5309
        %5471 = vmatpush1.bf16.msra.mxu0 %v5308
        %5472 = vmatprep.mubr.bf16.mxu0 %v4585
        %5473 = vmatmul.mubr.bf16.gmra.mrb[0].mxu0 %v4584
        %v5474 = vpop.f32.mrb[0].mxu0
        %v5475 = vadd.f32 %v5422, %v5474
        %v5476 = vpop.f32.mrb[0].mxu0
        %v5477 = vadd.f32 %v5424, %v5476
        %v5478 = vpop.f32.mrb[0].mxu0
        %v5479 = vadd.f32 %v5426, %v5478
        %v5480 = vpop.f32.mrb[0].mxu0
        %v5481 = vadd.f32 %v5428, %v5480
        %5482 = vmatprep.mubr.bf16.mxu0 %v4587
        %5483 = vmatmul.mubr.bf16.gmra.mrb[0].mxu0 %v4586
        %v5484 = vpop.f32.mrb[0].mxu0
        %v5485 = vadd.f32 %v5432, %v5484
        %v5486 = vpop.f32.mrb[0].mxu0
        %v5487 = vadd.f32 %v5434, %v5486
        %v5488 = vpop.f32.mrb[0].mxu0
        %v5489 = vadd.f32 %v5436, %v5488
        %v5490 = vpop.f32.mrb[0].mxu0
        %v5491 = vadd.f32 %v5438, %v5490
        %5492 = vdwg.mxu0
        %5493 = vmatprep.subr.bf16.mxu0 %v5123
        %5494 = vmatpush1.bf16.msra.mxu0 %v5122
        %5495 = vmatprep.subr.bf16.mxu0 %v5127
        %5496 = vmatpush1.bf16.msra.mxu0 %v5126
        %5497 = vmatprep.subr.bf16.mxu0 %v5131
        %5498 = vmatpush1.bf16.msra.mxu0 %v5130
        %5499 = vmatprep.subr.bf16.mxu0 %v5135
        %5500 = vmatpush1.bf16.msra.mxu0 %v5134
        %5501 = vmatprep.subr.bf16.mxu0 %v5139
        %5502 = vmatpush1.bf16.msra.mxu0 %v5138
        %5503 = vmatprep.subr.bf16.mxu0 %v5143
        %5504 = vmatpush1.bf16.msra.mxu0 %v5142
        %5505 = vmatprep.subr.bf16.mxu0 %v5147
        %5506 = vmatpush1.bf16.msra.mxu0 %v5146
        %5507 = vmatprep.subr.bf16.mxu0 %v5151
        %5508 = vmatpush1.bf16.msra.mxu0 %v5150
        %5509 = vmatprep.subr.bf16.mxu0 %v5155
        %5510 = vmatpush1.bf16.msra.mxu0 %v5154
        %5511 = vmatprep.subr.bf16.mxu0 %v5159
        %5512 = vmatpush1.bf16.msra.mxu0 %v5158
        %5513 = vmatprep.subr.bf16.mxu0 %v5163
        %5514 = vmatpush1.bf16.msra.mxu0 %v5162
        %5515 = vmatprep.subr.bf16.mxu0 %v5167
        %5516 = vmatpush1.bf16.msra.mxu0 %v5166
        %5517 = vmatprep.subr.bf16.mxu0 %v5171
        %5518 = vmatpush1.bf16.msra.mxu0 %v5170
        %5519 = vmatprep.subr.bf16.mxu0 %v5175
        %5520 = vmatpush1.bf16.msra.mxu0 %v5174
        %5521 = vmatprep.subr.bf16.mxu0 %v5179
        %5522 = vmatpush1.bf16.msra.mxu0 %v5178
        %5523 = vmatprep.subr.bf16.mxu0 %v5183
        %5524 = vmatpush1.bf16.msra.mxu0 %v5182
        %5525 = vmatprep.mubr.bf16.mxu0 %v4541
        %5526 = vmatmul.mubr.bf16.gmra.mrb[0].mxu0 %v4540
        %v5527 = vpop.f32.mrb[0].mxu0
        %v5528 = vadd.f32 %v5325, %v5527
        %v5529 = vpop.f32.mrb[0].mxu0
        %v5530 = vadd.f32 %v5329, %v5529
        %v5531 = vpop.f32.mrb[0].mxu0
        %v5532 = vadd.f32 %v5325, %v5531
        %v5533 = vpop.f32.mrb[0].mxu0
        %v5534 = vadd.f32 %v5329, %v5533
        %5535 = vmatprep.mubr.bf16.mxu0 %v4543
        %5536 = vmatmul.mubr.bf16.gmra.mrb[0].mxu0 %v4542
        %v5537 = vpop.f32.mrb[0].mxu0
        %v5538 = vadd.f32 %v5325, %v5537
        %v5539 = vpop.f32.mrb[0].mxu0
        %v5540 = vadd.f32 %v5329, %v5539
        %v5541 = vpop.f32.mrb[0].mxu0
        %v5542 = vadd.f32 %v5325, %v5541
        %v5543 = vpop.f32.mrb[0].mxu0
        %v5544 = vadd.f32 %v5329, %v5543
        %5545 = vdwg.mxu0
        %5546 = vmatprep.subr.bf16.mxu0 %v5187
        %5547 = vmatpush1.bf16.msra.mxu0 %v5186
        %5548 = vmatprep.subr.bf16.mxu0 %v5191
        %5549 = vmatpush1.bf16.msra.mxu0 %v5190
        %5550 = vmatprep.subr.bf16.mxu0 %v5195
        %5551 = vmatpush1.bf16.msra.mxu0 %v5194
        %5552 = vmatprep.subr.bf16.mxu0 %v5199
        %5553 = vmatpush1.bf16.msra.mxu0 %v5198
        %5554 = vmatprep.subr.bf16.mxu0 %v5203
        %5555 = vmatpush1.bf16.msra.mxu0 %v5202
        %5556 = vmatprep.subr.bf16.mxu0 %v5207
        %5557 = vmatpush1.bf16.msra.mxu0 %v5206
        %5558 = vmatprep.subr.bf16.mxu0 %v5211
        %5559 = vmatpush1.bf16.msra.mxu0 %v5210
        %5560 = vmatprep.subr.bf16.mxu0 %v5215
        %5561 = vmatpush1.bf16.msra.mxu0 %v5214
        %5562 = vmatprep.subr.bf16.mxu0 %v5219
        %5563 = vmatpush1.bf16.msra.mxu0 %v5218
        %5564 = vmatprep.subr.bf16.mxu0 %v5223
        %5565 = vmatpush1.bf16.msra.mxu0 %v5222
        %5566 = vmatprep.subr.bf16.mxu0 %v5227
        %5567 = vmatpush1.bf16.msra.mxu0 %v5226
        %5568 = vmatprep.subr.bf16.mxu0 %v5231
        %5569 = vmatpush1.bf16.msra.mxu0 %v5230
        %5570 = vmatprep.subr.bf16.mxu0 %v5235
        %5571 = vmatpush1.bf16.msra.mxu0 %v5234
        %5572 = vmatprep.subr.bf16.mxu0 %v5239
        %5573 = vmatpush1.bf16.msra.mxu0 %v5238
        %5574 = vmatprep.subr.bf16.mxu0 %v5243
        %5575 = vmatpush1.bf16.msra.mxu0 %v5242
        %5576 = vmatprep.subr.bf16.mxu0 %v5247
        %5577 = vmatpush1.bf16.msra.mxu0 %v5246
        %5578 = vmatprep.mubr.bf16.mxu0 %v4545
        %5579 = vmatmul.mubr.bf16.gmra.mrb[0].mxu0 %v4544
        %v5580 = vpop.f32.mrb[0].mxu0
        %v5581 = vadd.f32 %v5528, %v5580
        %v5582 = vpop.f32.mrb[0].mxu0
        %v5583 = vadd.f32 %v5530, %v5582
        %v5584 = vpop.f32.mrb[0].mxu0
        %v5585 = vadd.f32 %v5532, %v5584
        %v5586 = vpop.f32.mrb[0].mxu0
        %v5587 = vadd.f32 %v5534, %v5586
        %5588 = vmatprep.mubr.bf16.mxu0 %v4547
        %5589 = vmatmul.mubr.bf16.gmra.mrb[0].mxu0 %v4546
        %v5590 = vpop.f32.mrb[0].mxu0
        %v5591 = vadd.f32 %v5538, %v5590
        %v5592 = vpop.f32.mrb[0].mxu0
        %v5593 = vadd.f32 %v5540, %v5592
        %v5594 = vpop.f32.mrb[0].mxu0
        %v5595 = vadd.f32 %v5542, %v5594
        %v5596 = vpop.f32.mrb[0].mxu0
        %v5597 = vadd.f32 %v5544, %v5596
        %5598 = vdwg.mxu0
        %5599 = vmatprep.subr.bf16.mxu0 %v5251
        %5600 = vmatpush1.bf16.msra.mxu0 %v5250
        %5601 = vmatprep.subr.bf16.mxu0 %v5255
        %5602 = vmatpush1.bf16.msra.mxu0 %v5254
        %5603 = vmatprep.subr.bf16.mxu0 %v5259
        %5604 = vmatpush1.bf16.msra.mxu0 %v5258
        %5605 = vmatprep.subr.bf16.mxu0 %v5263
        %5606 = vmatpush1.bf16.msra.mxu0 %v5262
        %5607 = vmatprep.subr.bf16.mxu0 %v5267
        %5608 = vmatpush1.bf16.msra.mxu0 %v5266
        %5609 = vmatprep.subr.bf16.mxu0 %v5271
        %5610 = vmatpush1.bf16.msra.mxu0 %v5270
        %5611 = vmatprep.subr.bf16.mxu0 %v5275
        %5612 = vmatpush1.bf16.msra.mxu0 %v5274
        %5613 = vmatprep.subr.bf16.mxu0 %v5279
        %5614 = vmatpush1.bf16.msra.mxu0 %v5278
        %5615 = vmatprep.subr.bf16.mxu0 %v5283
        %5616 = vmatpush1.bf16.msra.mxu0 %v5282
        %5617 = vmatprep.subr.bf16.mxu0 %v5287
        %5618 = vmatpush1.bf16.msra.mxu0 %v5286
        %5619 = vmatprep.subr.bf16.mxu0 %v5291
        %5620 = vmatpush1.bf16.msra.mxu0 %v5290
        %5621 = vmatprep.subr.bf16.mxu0 %v5295
        %5622 = vmatpush1.bf16.msra.mxu0 %v5294
        %5623 = vmatprep.subr.bf16.mxu0 %v5299
        %5624 = vmatpush1.bf16.msra.mxu0 %v5298
        %5625 = vmatprep.subr.bf16.mxu0 %v5303
        %5626 = vmatpush1.bf16.msra.mxu0 %v5302
        %5627 = vmatprep.subr.bf16.mxu0 %v5307
        %5628 = vmatpush1.bf16.msra.mxu0 %v5306
        %5629 = vmatprep.subr.bf16.mxu0 %v5311
        %5630 = vmatpush1.bf16.msra.mxu0 %v5310
        %5631 = vmatprep.mubr.bf16.mxu0 %v4585
        %5632 = vmatmul.mubr.bf16.gmra.mrb[0].mxu0 %v4584
        %v5633 = vpop.f32.mrb[0].mxu0
        %v5634 = vadd.f32 %v5581, %v5633
        %v5635 = vpop.f32.mrb[0].mxu0
        %v5636 = vadd.f32 %v5583, %v5635
        %v5637 = vpop.f32.mrb[0].mxu0
        %v5638 = vadd.f32 %v5585, %v5637
        %v5639 = vpop.f32.mrb[0].mxu0
        %v5640 = vadd.f32 %v5587, %v5639
        %5641 = vmatprep.mubr.bf16.mxu0 %v4587
        %5642 = vmatmul.mubr.bf16.gmra.mrb[0].mxu0 %v4586
        %v5643 = vpop.f32.mrb[0].mxu0
        %v5644 = vadd.f32 %v5591, %v5643
        %v5645 = vpop.f32.mrb[0].mxu0
        %v5646 = vadd.f32 %v5593, %v5645
        %v5647 = vpop.f32.mrb[0].mxu0
        %v5648 = vadd.f32 %v5595, %v5647
        %v5649 = vpop.f32.mrb[0].mxu0
        %v5650 = vadd.f32 %v5597, %v5649
        %5651 = vdwg.mxu0
        %v5652 = vpack.c.bf16 %v4947, %v4943
        %v5653 = vpack.c.bf16 %v4949, %v4945
        %v5654 = vpack.c.bf16 %v5106, %v5102
        %v5655 = vpack.c.bf16 %v5108, %v5104
        %v5656 = vpack.c.bf16 %v4957, %v4953
        %v5657 = vpack.c.bf16 %v4959, %v4955
        %v5658 = vpack.c.bf16 %v5116, %v5112
        %v5659 = vpack.c.bf16 %v5118, %v5114
        %v5660 = vpack.c.bf16 %v5479, %v5475
        %v5661 = vpack.c.bf16 %v5481, %v5477
        %v5662 = vpack.c.bf16 %v5638, %v5634
        %v5663 = vpack.c.bf16 %v5640, %v5636
        %v5664 = vpack.c.bf16 %v5489, %v5485
        %v5665 = vpack.c.bf16 %v5491, %v5487
        %v5666 = vpack.c.bf16 %v5648, %v5644
        %v5667 = vpack.c.bf16 %v5650, %v5646
        %v5668 = vld [vmem:[#allocation13] sm:$0xf]
        %v5669 = vld [vmem:[#allocation13 + $0x4] sm:$0xf]
        %v5670 = vld [vmem:[#allocation13 + $0x8] sm:$0xf]
        %v5671 = vld [vmem:[#allocation13 + $0xc] sm:$0xf]
        %v5672 = vld [vmem:[#allocation13 + $0x10] sm:$0xf]
        %v5673 = vld [vmem:[#allocation13 + $0x14] sm:$0xf]
        %v5674 = vld [vmem:[#allocation13 + $0x18] sm:$0xf]
        %v5675 = vld [vmem:[#allocation13 + $0x1c] sm:$0xf]
        %v5684 = vunpack.c.l.b16 %v5668
        %v5685 = vunpack.c.l.b16 %v5669
        %v5686 = vunpack.c.l.b16 %v5670
        %v5687 = vunpack.c.l.b16 %v5671
        %v5688 = vunpack.c.l.b16 %v5672
        %v5689 = vunpack.c.l.b16 %v5673
        %v5690 = vunpack.c.l.b16 %v5674
        %v5691 = vunpack.c.l.b16 %v5675
        %v5692 = vpack.c.b16 %v5685, %v5684
        %v5693 = vpack.c.b16 %v5687, %v5686
        %v5694 = vpack.c.b16 %v5689, %v5688
        %v5695 = vpack.c.b16 %v5691, %v5690
        %vm5696 = vcmask 523264
        %v5698 = vsel %vm5696, %v5692, 0
        %v5701 = vsel %vm5696, %v5693, 0
        %v5704 = vsel %vm5696, %v5694, 0
        %v5707 = vsel %vm5696, %v5695, 0
        %5709 = vmatprep.subr.bf16.mxu0 %v5653
        %5710 = vmatpush1.bf16.msra.mxu0 %v5652
        %5711 = vmatprep.subr.bf16.mxu0 %v5657
        %5712 = vmatpush1.bf16.msra.mxu0 %v5656
        %5713 = vmatprep.subr.bf16.mxu0 %v5661
        %5714 = vmatpush1.bf16.msra.mxu0 %v5660
        %5715 = vmatprep.subr.bf16.mxu0 %v5665
        %5716 = vmatpush1.bf16.msra.mxu0 %v5664
        %5717 = vmatprep.subr.bf16.mxu0 0
        %5718 = vmatpush1.bf16.msra.mxu0 0
        %5719 = vmatprep.subr.bf16.mxu0 0
        %5720 = vmatpush1.bf16.msra.mxu0 0
        %5721 = vmatprep.subr.bf16.mxu0 0
        %5722 = vmatpush1.bf16.msra.mxu0 0
        %5723 = vmatprep.subr.bf16.mxu0 0
        %5724 = vmatpush1.bf16.msra.mxu0 0
        %5725 = vmatprep.subr.bf16.mxu0 0
        %5726 = vmatpush1.bf16.msra.mxu0 0
        %5727 = vmatprep.subr.bf16.mxu0 0
        %5728 = vmatpush1.bf16.msra.mxu0 0
        %5729 = vmatprep.subr.bf16.mxu0 0
        %5730 = vmatpush1.bf16.msra.mxu0 0
        %5731 = vmatprep.subr.bf16.mxu0 0
        %5732 = vmatpush1.bf16.msra.mxu0 0
        %5733 = vmatprep.subr.bf16.mxu0 0
        %5734 = vmatpush1.bf16.msra.mxu0 0
        %5735 = vmatprep.subr.bf16.mxu0 0
        %5736 = vmatpush1.bf16.msra.mxu0 0
        %5737 = vmatprep.subr.bf16.mxu0 0
        %5738 = vmatpush1.bf16.msra.mxu0 0
        %5739 = vmatprep.subr.bf16.mxu0 0
        %5740 = vmatpush1.bf16.msra.mxu0 0
        %5741 = vmatprep.mubr.bf16.mxu0 0
        %5742 = vmatmul.mubr.bf16.gmra.mrb[0].mxu0 %v5698
        %v5743 = vpop.f32.mrb[0].mxu0
        %v5744 = vadd.f32 0.0, %v5743
        %v5745 = vpop.f32.mrb[0].mxu0
        %v5746 = vadd.f32 0.0, %v5745
        %v5747 = vpop.f32.mrb[0].mxu0
        %v5748 = vadd.f32 0.0, %v5747
        %v5749 = vpop.f32.mrb[0].mxu0
        %v5750 = vadd.f32 0.0, %v5749
        %5751 = vmatprep.mubr.bf16.mxu0 0
        %5752 = vmatmul.mubr.bf16.gmra.mrb[0].mxu0 %v5701
        %v5753 = vpop.f32.mrb[0].mxu0
        %v5754 = vadd.f32 0.0, %v5753
        %v5755 = vpop.f32.mrb[0].mxu0
        %v5756 = vadd.f32 0.0, %v5755
        %v5757 = vpop.f32.mrb[0].mxu0
        %v5758 = vadd.f32 0.0, %v5757
        %v5759 = vpop.f32.mrb[0].mxu0
        %v5760 = vadd.f32 0.0, %v5759
        %5761 = vmatprep.mubr.bf16.mxu0 0
        %5762 = vmatmul.mubr.bf16.gmra.mrb[0].mxu0 %v5704
        %v5763 = vpop.f32.mrb[0].mxu0
        %v5764 = vadd.f32 0.0, %v5763
        %v5765 = vpop.f32.mrb[0].mxu0
        %v5766 = vadd.f32 0.0, %v5765
        %v5767 = vpop.f32.mrb[0].mxu0
        %v5768 = vadd.f32 0.0, %v5767
        %v5769 = vpop.f32.mrb[0].mxu0
        %v5770 = vadd.f32 0.0, %v5769
        %5771 = vmatprep.mubr.bf16.mxu0 0
        %5772 = vmatmul.mubr.bf16.gmra.mrb[0].mxu0 %v5707
        %v5773 = vpop.f32.mrb[0].mxu0
        %v5774 = vadd.f32 0.0, %v5773
        %v5775 = vpop.f32.mrb[0].mxu0
        %v5776 = vadd.f32 0.0, %v5775
        %v5777 = vpop.f32.mrb[0].mxu0
        %v5778 = vadd.f32 0.0, %v5777
        %v5779 = vpop.f32.mrb[0].mxu0
        %v5780 = vadd.f32 0.0, %v5779
        %5781 = vdwg.mxu0
        %5782 = vmatprep.subr.bf16.mxu0 %v5655
        %5783 = vmatpush1.bf16.msra.mxu0 %v5654
        %5784 = vmatprep.subr.bf16.mxu0 %v5659
        %5785 = vmatpush1.bf16.msra.mxu0 %v5658
        %5786 = vmatprep.subr.bf16.mxu0 %v5663
        %5787 = vmatpush1.bf16.msra.mxu0 %v5662
        %5788 = vmatprep.subr.bf16.mxu0 %v5667
        %5789 = vmatpush1.bf16.msra.mxu0 %v5666
        %5790 = vmatprep.subr.bf16.mxu0 0
        %5791 = vmatpush1.bf16.msra.mxu0 0
        %5792 = vmatprep.subr.bf16.mxu0 0
        %5793 = vmatpush1.bf16.msra.mxu0 0
        %5794 = vmatprep.subr.bf16.mxu0 0
        %5795 = vmatpush1.bf16.msra.mxu0 0
        %5796 = vmatprep.subr.bf16.mxu0 0
        %5797 = vmatpush1.bf16.msra.mxu0 0
        %5798 = vmatprep.subr.bf16.mxu0 0
        %5799 = vmatpush1.bf16.msra.mxu0 0
        %5800 = vmatprep.subr.bf16.mxu0 0
        %5801 = vmatpush1.bf16.msra.mxu0 0
        %5802 = vmatprep.subr.bf16.mxu0 0
        %5803 = vmatpush1.bf16.msra.mxu0 0
        %5804 = vmatprep.subr.bf16.mxu0 0
        %5805 = vmatpush1.bf16.msra.mxu0 0
        %5806 = vmatprep.subr.bf16.mxu0 0
        %5807 = vmatpush1.bf16.msra.mxu0 0
        %5808 = vmatprep.subr.bf16.mxu0 0
        %5809 = vmatpush1.bf16.msra.mxu0 0
        %5810 = vmatprep.subr.bf16.mxu0 0
        %5811 = vmatpush1.bf16.msra.mxu0 0
        %5812 = vmatprep.subr.bf16.mxu0 0
        %5813 = vmatpush1.bf16.msra.mxu0 0
        %5814 = vmatprep.mubr.bf16.mxu0 0
        %5815 = vmatmul.mubr.bf16.gmra.mrb[0].mxu0 %v5698
        %v5816 = vpop.f32.mrb[0].mxu0
        %v5817 = vadd.f32 0.0, %v5816
        %v5818 = vpop.f32.mrb[0].mxu0
        %v5819 = vadd.f32 0.0, %v5818
        %v5820 = vpop.f32.mrb[0].mxu0
        %v5821 = vadd.f32 0.0, %v5820
        %v5822 = vpop.f32.mrb[0].mxu0
        %v5823 = vadd.f32 0.0, %v5822
        %5824 = vmatprep.mubr.bf16.mxu0 0
        %5825 = vmatmul.mubr.bf16.gmra.mrb[0].mxu0 %v5701
        %v5826 = vpop.f32.mrb[0].mxu0
        %v5827 = vadd.f32 0.0, %v5826
        %v5828 = vpop.f32.mrb[0].mxu0
        %v5829 = vadd.f32 0.0, %v5828
        %v5830 = vpop.f32.mrb[0].mxu0
        %v5831 = vadd.f32 0.0, %v5830
        %v5832 = vpop.f32.mrb[0].mxu0
        %v5833 = vadd.f32 0.0, %v5832
        %5834 = vmatprep.mubr.bf16.mxu0 0
        %5835 = vmatmul.mubr.bf16.gmra.mrb[0].mxu0 %v5704
        %v5836 = vpop.f32.mrb[0].mxu0
        %v5837 = vadd.f32 0.0, %v5836
        %v5838 = vpop.f32.mrb[0].mxu0
        %v5839 = vadd.f32 0.0, %v5838
        %v5840 = vpop.f32.mrb[0].mxu0
        %v5841 = vadd.f32 0.0, %v5840
        %v5842 = vpop.f32.mrb[0].mxu0
        %v5843 = vadd.f32 0.0, %v5842
        %5844 = vmatprep.mubr.bf16.mxu0 0
        %5845 = vmatmul.mubr.bf16.gmra.mrb[0].mxu0 %v5707
        %v5846 = vpop.f32.mrb[0].mxu0
        %v5847 = vadd.f32 0.0, %v5846
        %v5848 = vpop.f32.mrb[0].mxu0
        %v5849 = vadd.f32 0.0, %v5848
        %v5850 = vpop.f32.mrb[0].mxu0
        %v5851 = vadd.f32 0.0, %v5850
        %v5852 = vpop.f32.mrb[0].mxu0
        %v5853 = vadd.f32 0.0, %v5852
        %5854 = vdwg.mxu0
        %v5855 = vrot.slane %v5744, 7
        %v5856 = vrot.slane %v5746, 7
        %v5857 = vrot.slane %v5817, 7
        %v5858 = vrot.slane %v5819, 7
        %v5859 = vrot.slane %v5748, 7
        %v5860 = vrot.slane %v5750, 7
        %v5861 = vrot.slane %v5821, 7
        %v5862 = vrot.slane %v5823, 7
        %v5863 = vrot.slane %v5754, 7
        %v5864 = vrot.slane %v5756, 7
        %v5865 = vrot.slane %v5827, 7
        %v5866 = vrot.slane %v5829, 7
        %v5867 = vrot.slane %v5758, 7
        %v5868 = vrot.slane %v5760, 7
        %v5869 = vrot.slane %v5831, 7
        %v5870 = vrot.slane %v5833, 7
        %v5871 = vrot.slane %v5764, 7
        %v5872 = vrot.slane %v5766, 7
        %v5873 = vrot.slane %v5837, 7
        %v5874 = vrot.slane %v5839, 7
        %v5875 = vrot.slane %v5768, 7
        %v5876 = vrot.slane %v5770, 7
        %v5877 = vrot.slane %v5841, 7
        %v5878 = vrot.slane %v5843, 7
        %v5879 = vrot.slane %v5774, 7
        %v5880 = vrot.slane %v5776, 7
        %v5881 = vrot.slane %v5847, 7
        %v5882 = vrot.slane %v5849, 7
        %v5883 = vrot.slane %v5778, 7
        %v5884 = vrot.slane %v5780, 7
        %v5885 = vrot.slane %v5851, 7
        %v5886 = vrot.slane %v5853, 7
        %v5887 = vsel %vm378, %v5879, %v5883
        %v5888 = vsel %vm378, %v5880, %v5884
        %v5889 = vsel %vm378, %v5881, %v5885
        %v5890 = vsel %vm378, %v5882, %v5886
        %v5891 = vsel %vm378, %v5875, %v5879
        %v5892 = vsel %vm378, %v5876, %v5880
        %v5893 = vsel %vm378, %v5877, %v5881
        %v5894 = vsel %vm378, %v5878, %v5882
        %v5895 = vsel %vm378, %v5871, %v5875
        %v5896 = vsel %vm378, %v5872, %v5876
        %v5897 = vsel %vm378, %v5873, %v5877
        %v5898 = vsel %vm378, %v5874, %v5878
        %v5899 = vsel %vm378, %v5867, %v5871
        %v5900 = vsel %vm378, %v5868, %v5872
        %v5901 = vsel %vm378, %v5869, %v5873
        %v5902 = vsel %vm378, %v5870, %v5874
        %v5903 = vsel %vm378, %v5863, %v5867
        %v5904 = vsel %vm378, %v5864, %v5868
        %v5905 = vsel %vm378, %v5865, %v5869
        %v5906 = vsel %vm378, %v5866, %v5870
        %v5907 = vsel %vm378, %v5859, %v5863
        %v5908 = vsel %vm378, %v5860, %v5864
        %v5909 = vsel %vm378, %v5861, %v5865
        %v5910 = vsel %vm378, %v5862, %v5866
        %v5911 = vsel %vm378, %v5855, %v5859
        %v5912 = vsel %vm378, %v5856, %v5860
        %v5913 = vsel %vm378, %v5857, %v5861
        %v5914 = vsel %vm378, %v5858, %v5862
        %v5915 = vsel %vm378, %v5883, %v5855
        %v5916 = vsel %vm378, %v5884, %v5856
        %v5917 = vsel %vm378, %v5885, %v5857
        %v5918 = vsel %vm378, %v5886, %v5858
        %v5919 = vadd.s32 %v377, 32
        %v5920 = vadd.s32 %v377, 40
        %v5921 = vadd.s32 %v377, 48
        %v5922 = vadd.s32 %v377, 56
        %vm5923 = vcmp.ge.s32.totalorder %v5919, 1
        %vm5924 = vcmp.ge.s32.totalorder %v5920, 1
        %vm5925 = vcmp.ge.s32.totalorder %v5921, 1
        %vm5926 = vcmp.ge.s32.totalorder %v5922, 1
        %v5927 = vsel %vm5923, 1, 0
        %v5928 = vsel %vm5924, 1, 0
        %v5929 = vsel %vm5925, 1, 0
        %v5930 = vsel %vm5926, 1, 0
        %vm5931 = vcmp.eq.s32.totalorder %v5927, 1
        %vm5932 = vcmp.eq.s32.totalorder %v5928, 1
        %vm5933 = vcmp.eq.s32.totalorder %v5929, 1
        %vm5934 = vcmp.eq.s32.totalorder %v5930, 1
        %v5935 = vsel %vm386, %v5915, 0.0
        %v5936 = vsel %vm386, %v5916, 0.0
        %v5937 = vsel %vm386, %v5917, 0.0
        %v5938 = vsel %vm386, %v5918, 0.0
        %v5939 = vsel %vm387, %v5911, 0.0
        %v5940 = vsel %vm387, %v5912, 0.0
        %v5941 = vsel %vm387, %v5913, 0.0
        %v5942 = vsel %vm387, %v5914, 0.0
        %v5943 = vsel %vm4530, %v5907, 0.0
        %v5944 = vsel %vm4530, %v5908, 0.0
        %v5945 = vsel %vm4530, %v5909, 0.0
        %v5946 = vsel %vm4530, %v5910, 0.0
        %v5947 = vsel %vm4531, %v5903, 0.0
        %v5948 = vsel %vm4531, %v5904, 0.0
        %v5949 = vsel %vm4531, %v5905, 0.0
        %v5950 = vsel %vm4531, %v5906, 0.0
        %v5951 = vsel %vm5931, %v5899, 0.0
        %v5952 = vsel %vm5931, %v5900, 0.0
        %v5953 = vsel %vm5931, %v5901, 0.0
        %v5954 = vsel %vm5931, %v5902, 0.0
        %v5955 = vsel %vm5932, %v5895, 0.0
        %v5956 = vsel %vm5932, %v5896, 0.0
        %v5957 = vsel %vm5932, %v5897, 0.0
        %v5958 = vsel %vm5932, %v5898, 0.0
        %v5959 = vsel %vm5933, %v5891, 0.0
        %v5960 = vsel %vm5933, %v5892, 0.0
        %v5961 = vsel %vm5933, %v5893, 0.0
        %v5962 = vsel %vm5933, %v5894, 0.0
        %v5963 = vsel %vm5934, %v5887, 0.0
        %v5964 = vsel %vm5934, %v5888, 0.0
        %v5965 = vsel %vm5934, %v5889, 0.0
        %v5966 = vsel %vm5934, %v5890, 0.0
        %v5967 = vpack.c.bf16 %v5939, %v5935
        %v5968 = vpack.c.bf16 %v5940, %v5936
        %v5969 = vpack.c.bf16 %v5941, %v5937
        %v5970 = vpack.c.bf16 %v5942, %v5938
        %v5971 = vpack.c.bf16 %v5947, %v5943
        %v5972 = vpack.c.bf16 %v5948, %v5944
        %v5973 = vpack.c.bf16 %v5949, %v5945
        %v5974 = vpack.c.bf16 %v5950, %v5946
        %v5975 = vpack.c.bf16 %v5955, %v5951
        %v5976 = vpack.c.bf16 %v5956, %v5952
        %v5977 = vpack.c.bf16 %v5957, %v5953
        %v5978 = vpack.c.bf16 %v5958, %v5954
        %v5979 = vpack.c.bf16 %v5963, %v5959
        %v5980 = vpack.c.bf16 %v5964, %v5960
        %v5981 = vpack.c.bf16 %v5965, %v5961
        %v5982 = vpack.c.bf16 %v5966, %v5962
        %v5983 = vpack.c.bf16 %v5748, %v5744
        %v5984 = vpack.c.bf16 %v5750, %v5746
        %v5985 = vpack.c.bf16 %v5821, %v5817
        %v5986 = vpack.c.bf16 %v5823, %v5819
        %v5987 = vpack.c.bf16 %v5758, %v5754
        %v5988 = vpack.c.bf16 %v5760, %v5756
        %v5989 = vpack.c.bf16 %v5831, %v5827
        %v5990 = vpack.c.bf16 %v5833, %v5829
        %v5991 = vpack.c.bf16 %v5768, %v5764
        %v5992 = vpack.c.bf16 %v5770, %v5766
        %v5993 = vpack.c.bf16 %v5841, %v5837
        %v5994 = vpack.c.bf16 %v5843, %v5839
        %v5995 = vpack.c.bf16 %v5778, %v5774
        %v5996 = vpack.c.bf16 %v5780, %v5776
        %v5997 = vpack.c.bf16 %v5851, %v5847
        %v5998 = vpack.c.bf16 %v5853, %v5849
        %v5999 = vrot.slane %v5744, 1
        %v6000 = vrot.slane %v5746, 1
        %v6001 = vrot.slane %v5817, 1
        %v6002 = vrot.slane %v5819, 1
        %v6003 = vrot.slane %v5748, 1
        %v6004 = vrot.slane %v5750, 1
        %v6005 = vrot.slane %v5821, 1
        %v6006 = vrot.slane %v5823, 1
        %v6007 = vrot.slane %v5754, 1
        %v6008 = vrot.slane %v5756, 1
        %v6009 = vrot.slane %v5827, 1
        %v6010 = vrot.slane %v5829, 1
        %v6011 = vrot.slane %v5758, 1
        %v6012 = vrot.slane %v5760, 1
        %v6013 = vrot.slane %v5831, 1
        %v6014 = vrot.slane %v5833, 1
        %v6015 = vrot.slane %v5764, 1
        %v6016 = vrot.slane %v5766, 1
        %v6017 = vrot.slane %v5837, 1
        %v6018 = vrot.slane %v5839, 1
        %v6019 = vrot.slane %v5768, 1
        %v6020 = vrot.slane %v5770, 1
        %v6021 = vrot.slane %v5841, 1
        %v6022 = vrot.slane %v5843, 1
        %v6023 = vrot.slane %v5774, 1
        %v6024 = vrot.slane %v5776, 1
        %v6025 = vrot.slane %v5847, 1
        %v6026 = vrot.slane %v5849, 1
        %v6027 = vrot.slane %v5778, 1
        %v6028 = vrot.slane %v5780, 1
        %v6029 = vrot.slane %v5851, 1
        %v6030 = vrot.slane %v5853, 1
        %v6031 = vsel %vm394, %v6023, %v6027
        %v6032 = vsel %vm394, %v6024, %v6028
        %v6033 = vsel %vm394, %v6025, %v6029
        %v6034 = vsel %vm394, %v6026, %v6030
        %v6035 = vsel %vm394, %v6019, %v6023
        %v6036 = vsel %vm394, %v6020, %v6024
        %v6037 = vsel %vm394, %v6021, %v6025
        %v6038 = vsel %vm394, %v6022, %v6026
        %v6039 = vsel %vm394, %v6015, %v6019
        %v6040 = vsel %vm394, %v6016, %v6020
        %v6041 = vsel %vm394, %v6017, %v6021
        %v6042 = vsel %vm394, %v6018, %v6022
        %v6043 = vsel %vm394, %v6011, %v6015
        %v6044 = vsel %vm394, %v6012, %v6016
        %v6045 = vsel %vm394, %v6013, %v6017
        %v6046 = vsel %vm394, %v6014, %v6018
        %v6047 = vsel %vm394, %v6007, %v6011
        %v6048 = vsel %vm394, %v6008, %v6012
        %v6049 = vsel %vm394, %v6009, %v6013
        %v6050 = vsel %vm394, %v6010, %v6014
        %v6051 = vsel %vm394, %v6003, %v6007
        %v6052 = vsel %vm394, %v6004, %v6008
        %v6053 = vsel %vm394, %v6005, %v6009
        %v6054 = vsel %vm394, %v6006, %v6010
        %v6055 = vsel %vm394, %v5999, %v6003
        %v6056 = vsel %vm394, %v6000, %v6004
        %v6057 = vsel %vm394, %v6001, %v6005
        %v6058 = vsel %vm394, %v6002, %v6006
        %v6059 = vsel %vm394, %v6027, %v5999
        %v6060 = vsel %vm394, %v6028, %v6000
        %v6061 = vsel %vm394, %v6029, %v6001
        %v6062 = vsel %vm394, %v6030, %v6002
        %vm6063 = vcmp.lt.s32.totalorder %v377, 63
        %vm6064 = vcmp.lt.s32.totalorder %v381, 63
        %vm6065 = vcmp.lt.s32.totalorder %v4524, 63
        %vm6066 = vcmp.lt.s32.totalorder %v4525, 63
        %vm6067 = vcmp.lt.s32.totalorder %v5919, 63
        %vm6068 = vcmp.lt.s32.totalorder %v5920, 63
        %vm6069 = vcmp.lt.s32.totalorder %v5921, 63
        %vm6070 = vcmp.lt.s32.totalorder %v5922, 63
        %v6071 = vsel %vm6063, 1, 0
        %v6072 = vsel %vm6064, 1, 0
        %v6073 = vsel %vm6065, 1, 0
        %v6074 = vsel %vm6066, 1, 0
        %v6075 = vsel %vm6067, 1, 0
        %v6076 = vsel %vm6068, 1, 0
        %v6077 = vsel %vm6069, 1, 0
        %v6078 = vsel %vm6070, 1, 0
        %vm6079 = vcmp.eq.s32.totalorder %v6071, 1
        %vm6080 = vcmp.eq.s32.totalorder %v6072, 1
        %vm6081 = vcmp.eq.s32.totalorder %v6073, 1
        %vm6082 = vcmp.eq.s32.totalorder %v6074, 1
        %vm6083 = vcmp.eq.s32.totalorder %v6075, 1
        %vm6084 = vcmp.eq.s32.totalorder %v6076, 1
        %vm6085 = vcmp.eq.s32.totalorder %v6077, 1
        %vm6086 = vcmp.eq.s32.totalorder %v6078, 1
        %v6087 = vsel %vm6079, %v6055, 0.0
        %v6088 = vsel %vm6079, %v6056, 0.0
        %v6089 = vsel %vm6079, %v6057, 0.0
        %v6090 = vsel %vm6079, %v6058, 0.0
        %v6091 = vsel %vm6080, %v6051, 0.0
        %v6092 = vsel %vm6080, %v6052, 0.0
        %v6093 = vsel %vm6080, %v6053, 0.0
        %v6094 = vsel %vm6080, %v6054, 0.0
        %v6095 = vsel %vm6081, %v6047, 0.0
        %v6096 = vsel %vm6081, %v6048, 0.0
        %v6097 = vsel %vm6081, %v6049, 0.0
        %v6098 = vsel %vm6081, %v6050, 0.0
        %v6099 = vsel %vm6082, %v6043, 0.0
        %v6100 = vsel %vm6082, %v6044, 0.0
        %v6101 = vsel %vm6082, %v6045, 0.0
        %v6102 = vsel %vm6082, %v6046, 0.0
        %v6103 = vsel %vm6083, %v6039, 0.0
        %v6104 = vsel %vm6083, %v6040, 0.0
        %v6105 = vsel %vm6083, %v6041, 0.0
        %v6106 = vsel %vm6083, %v6042, 0.0
        %v6107 = vsel %vm6084, %v6035, 0.0
        %v6108 = vsel %vm6084, %v6036, 0.0
        %v6109 = vsel %vm6084, %v6037, 0.0
        %v6110 = vsel %vm6084, %v6038, 0.0
        %v6111 = vsel %vm6085, %v6031, 0.0
        %v6112 = vsel %vm6085, %v6032, 0.0
        %v6113 = vsel %vm6085, %v6033, 0.0
        %v6114 = vsel %vm6085, %v6034, 0.0
        %v6115 = vsel %vm6086, %v6059, 0.0
        %v6116 = vsel %vm6086, %v6060, 0.0
        %v6117 = vsel %vm6086, %v6061, 0.0
        %v6118 = vsel %vm6086, %v6062, 0.0
        %v6119 = vpack.c.bf16 %v6091, %v6087
        %v6120 = vpack.c.bf16 %v6092, %v6088
        %v6121 = vpack.c.bf16 %v6093, %v6089
        %v6122 = vpack.c.bf16 %v6094, %v6090
        %v6123 = vpack.c.bf16 %v6099, %v6095
        %v6124 = vpack.c.bf16 %v6100, %v6096
        %v6125 = vpack.c.bf16 %v6101, %v6097
        %v6126 = vpack.c.bf16 %v6102, %v6098
        %v6127 = vpack.c.bf16 %v6107, %v6103
        %v6128 = vpack.c.bf16 %v6108, %v6104
        %v6129 = vpack.c.bf16 %v6109, %v6105
        %v6130 = vpack.c.bf16 %v6110, %v6106
        %v6131 = vpack.c.bf16 %v6115, %v6111
        %v6132 = vpack.c.bf16 %v6116, %v6112
        %v6133 = vpack.c.bf16 %v6117, %v6113
        %v6134 = vpack.c.bf16 %v6118, %v6114
        %v6135 = vld [vmem:[#allocation2 + $0x300] sm:$0xff]
        %v6136 = vld [vmem:[#allocation2 + $0x308] sm:$0xff]
        %v6137 = vld [vmem:[#allocation2 + $0x310] sm:$0xff]
        %v6138 = vld [vmem:[#allocation2 + $0x318] sm:$0xff]
        %v6139 = vld [vmem:[#allocation2 + $0x320] sm:$0xff]
        %v6140 = vld [vmem:[#allocation2 + $0x328] sm:$0xff]
        %v6141 = vld [vmem:[#allocation2 + $0x330] sm:$0xff]
        %v6142 = vld [vmem:[#allocation2 + $0x338] sm:$0xff]
        %v6143 = vld [vmem:[#allocation2 + $0x340] sm:$0xff]
        %v6144 = vld [vmem:[#allocation2 + $0x348] sm:$0xff]
        %v6145 = vld [vmem:[#allocation2 + $0x350] sm:$0xff]
        %v6146 = vld [vmem:[#allocation2 + $0x358] sm:$0xff]
        %v6147 = vld [vmem:[#allocation2 + $0x360] sm:$0xff]
        %v6148 = vld [vmem:[#allocation2 + $0x368] sm:$0xff]
        %v6149 = vld [vmem:[#allocation2 + $0x370] sm:$0xff]
        %v6150 = vld [vmem:[#allocation2 + $0x378] sm:$0xff]
        %v6151 = vld [vmem:[#allocation2 + $0x380] sm:$0xff]
        %v6152 = vld [vmem:[#allocation2 + $0x388] sm:$0xff]
        %v6153 = vld [vmem:[#allocation2 + $0x390] sm:$0xff]
        %v6154 = vld [vmem:[#allocation2 + $0x398] sm:$0xff]
        %v6155 = vld [vmem:[#allocation2 + $0x3a0] sm:$0xff]
        %v6156 = vld [vmem:[#allocation2 + $0x3a8] sm:$0xff]
        %v6157 = vld [vmem:[#allocation2 + $0x3b0] sm:$0xff]
        %v6158 = vld [vmem:[#allocation2 + $0x3b8] sm:$0xff]
        %v6159 = vld [vmem:[#allocation2 + $0x3c0] sm:$0xff]
        %v6160 = vld [vmem:[#allocation2 + $0x3c8] sm:$0xff]
        %v6161 = vld [vmem:[#allocation2 + $0x3d0] sm:$0xff]
        %v6162 = vld [vmem:[#allocation2 + $0x3d8] sm:$0xff]
        %v6163 = vld [vmem:[#allocation2 + $0x3e0] sm:$0xff]
        %v6164 = vld [vmem:[#allocation2 + $0x3e8] sm:$0xff]
        %v6165 = vld [vmem:[#allocation2 + $0x3f0] sm:$0xff]
        %v6166 = vld [vmem:[#allocation2 + $0x3f8] sm:$0xff]
        %v6167 = vld [vmem:[#allocation2 + $0x400] sm:$0xff]
        %v6168 = vld [vmem:[#allocation2 + $0x408] sm:$0xff]
        %v6169 = vld [vmem:[#allocation2 + $0x410] sm:$0xff]
        %v6170 = vld [vmem:[#allocation2 + $0x418] sm:$0xff]
        %v6171 = vld [vmem:[#allocation2 + $0x420] sm:$0xff]
        %v6172 = vld [vmem:[#allocation2 + $0x428] sm:$0xff]
        %v6173 = vld [vmem:[#allocation2 + $0x430] sm:$0xff]
        %v6174 = vld [vmem:[#allocation2 + $0x438] sm:$0xff]
        %v6175 = vld [vmem:[#allocation2 + $0x440] sm:$0xff]
        %v6176 = vld [vmem:[#allocation2 + $0x448] sm:$0xff]
        %v6177 = vld [vmem:[#allocation2 + $0x450] sm:$0xff]
        %v6178 = vld [vmem:[#allocation2 + $0x458] sm:$0xff]
        %v6179 = vld [vmem:[#allocation2 + $0x460] sm:$0xff]
        %v6180 = vld [vmem:[#allocation2 + $0x468] sm:$0xff]
        %v6181 = vld [vmem:[#allocation2 + $0x470] sm:$0xff]
        %v6182 = vld [vmem:[#allocation2 + $0x478] sm:$0xff]
        %v6183 = vld [vmem:[#allocation2 + $0x480] sm:$0xff]
        %v6184 = vld [vmem:[#allocation2 + $0x488] sm:$0xff]
        %v6185 = vld [vmem:[#allocation2 + $0x490] sm:$0xff]
        %v6186 = vld [vmem:[#allocation2 + $0x498] sm:$0xff]
        %v6187 = vld [vmem:[#allocation2 + $0x4a0] sm:$0xff]
        %v6188 = vld [vmem:[#allocation2 + $0x4a8] sm:$0xff]
        %v6189 = vld [vmem:[#allocation2 + $0x4b0] sm:$0xff]
        %v6190 = vld [vmem:[#allocation2 + $0x4b8] sm:$0xff]
        %v6191 = vld [vmem:[#allocation2 + $0x4c0] sm:$0xff]
        %v6192 = vld [vmem:[#allocation2 + $0x4c8] sm:$0xff]
        %v6193 = vld [vmem:[#allocation2 + $0x4d0] sm:$0xff]
        %v6194 = vld [vmem:[#allocation2 + $0x4d8] sm:$0xff]
        %v6195 = vld [vmem:[#allocation2 + $0x4e0] sm:$0xff]
        %v6196 = vld [vmem:[#allocation2 + $0x4e8] sm:$0xff]
        %v6197 = vld [vmem:[#allocation2 + $0x4f0] sm:$0xff]
        %v6198 = vld [vmem:[#allocation2 + $0x4f8] sm:$0xff]
        %v6199 = vld [vmem:[#allocation2 + $0x500] sm:$0xff]
        %v6200 = vld [vmem:[#allocation2 + $0x508] sm:$0xff]
        %v6201 = vld [vmem:[#allocation2 + $0x510] sm:$0xff]
        %v6202 = vld [vmem:[#allocation2 + $0x518] sm:$0xff]
        %v6203 = vld [vmem:[#allocation2 + $0x520] sm:$0xff]
        %v6204 = vld [vmem:[#allocation2 + $0x528] sm:$0xff]
        %v6205 = vld [vmem:[#allocation2 + $0x530] sm:$0xff]
        %v6206 = vld [vmem:[#allocation2 + $0x538] sm:$0xff]
        %v6207 = vld [vmem:[#allocation2 + $0x540] sm:$0xff]
        %v6208 = vld [vmem:[#allocation2 + $0x548] sm:$0xff]
        %v6209 = vld [vmem:[#allocation2 + $0x550] sm:$0xff]
        %v6210 = vld [vmem:[#allocation2 + $0x558] sm:$0xff]
        %v6211 = vld [vmem:[#allocation2 + $0x560] sm:$0xff]
        %v6212 = vld [vmem:[#allocation2 + $0x568] sm:$0xff]
        %v6213 = vld [vmem:[#allocation2 + $0x570] sm:$0xff]
        %v6214 = vld [vmem:[#allocation2 + $0x578] sm:$0xff]
        %v6215 = vld [vmem:[#allocation2 + $0x580] sm:$0xff]
        %v6216 = vld [vmem:[#allocation2 + $0x588] sm:$0xff]
        %v6217 = vld [vmem:[#allocation2 + $0x590] sm:$0xff]
        %v6218 = vld [vmem:[#allocation2 + $0x598] sm:$0xff]
        %v6219 = vld [vmem:[#allocation2 + $0x5a0] sm:$0xff]
        %v6220 = vld [vmem:[#allocation2 + $0x5a8] sm:$0xff]
        %v6221 = vld [vmem:[#allocation2 + $0x5b0] sm:$0xff]
        %v6222 = vld [vmem:[#allocation2 + $0x5b8] sm:$0xff]
        %v6223 = vld [vmem:[#allocation2 + $0x5c0] sm:$0xff]
        %v6224 = vld [vmem:[#allocation2 + $0x5c8] sm:$0xff]
        %v6225 = vld [vmem:[#allocation2 + $0x5d0] sm:$0xff]
        %v6226 = vld [vmem:[#allocation2 + $0x5d8] sm:$0xff]
        %v6227 = vld [vmem:[#allocation2 + $0x5e0] sm:$0xff]
        %v6228 = vld [vmem:[#allocation2 + $0x5e8] sm:$0xff]
        %v6229 = vld [vmem:[#allocation2 + $0x5f0] sm:$0xff]
        %v6230 = vld [vmem:[#allocation2 + $0x5f8] sm:$0xff]
        %v6231 = vld [vmem:[#allocation2 + $0x600] sm:$0xff]
        %v6232 = vld [vmem:[#allocation2 + $0x608] sm:$0xff]
        %v6233 = vld [vmem:[#allocation2 + $0x610] sm:$0xff]
        %v6234 = vld [vmem:[#allocation2 + $0x618] sm:$0xff]
        %v6235 = vld [vmem:[#allocation2 + $0x620] sm:$0xff]
        %v6236 = vld [vmem:[#allocation2 + $0x628] sm:$0xff]
        %v6237 = vld [vmem:[#allocation2 + $0x630] sm:$0xff]
        %v6238 = vld [vmem:[#allocation2 + $0x638] sm:$0xff]
        %v6239 = vld [vmem:[#allocation2 + $0x640] sm:$0xff]
        %v6240 = vld [vmem:[#allocation2 + $0x648] sm:$0xff]
        %v6241 = vld [vmem:[#allocation2 + $0x650] sm:$0xff]
        %v6242 = vld [vmem:[#allocation2 + $0x658] sm:$0xff]
        %v6243 = vld [vmem:[#allocation2 + $0x660] sm:$0xff]
        %v6244 = vld [vmem:[#allocation2 + $0x668] sm:$0xff]
        %v6245 = vld [vmem:[#allocation2 + $0x670] sm:$0xff]
        %v6246 = vld [vmem:[#allocation2 + $0x678] sm:$0xff]
        %v6247 = vld [vmem:[#allocation2 + $0x680] sm:$0xff]
        %v6248 = vld [vmem:[#allocation2 + $0x688] sm:$0xff]
        %v6249 = vld [vmem:[#allocation2 + $0x690] sm:$0xff]
        %v6250 = vld [vmem:[#allocation2 + $0x698] sm:$0xff]
        %v6251 = vld [vmem:[#allocation2 + $0x6a0] sm:$0xff]
        %v6252 = vld [vmem:[#allocation2 + $0x6a8] sm:$0xff]
        %v6253 = vld [vmem:[#allocation2 + $0x6b0] sm:$0xff]
        %v6254 = vld [vmem:[#allocation2 + $0x6b8] sm:$0xff]
        %v6255 = vld [vmem:[#allocation2 + $0x6c0] sm:$0xff]
        %v6256 = vld [vmem:[#allocation2 + $0x6c8] sm:$0xff]
        %v6257 = vld [vmem:[#allocation2 + $0x6d0] sm:$0xff]
        %v6258 = vld [vmem:[#allocation2 + $0x6d8] sm:$0xff]
        %v6259 = vld [vmem:[#allocation2 + $0x6e0] sm:$0xff]
        %v6260 = vld [vmem:[#allocation2 + $0x6e8] sm:$0xff]
        %v6261 = vld [vmem:[#allocation2 + $0x6f0] sm:$0xff]
        %v6262 = vld [vmem:[#allocation2 + $0x6f8] sm:$0xff]
        %v6263 = vld [vmem:[#allocation2 + $0x700] sm:$0xff]
        %v6264 = vld [vmem:[#allocation2 + $0x708] sm:$0xff]
        %v6265 = vld [vmem:[#allocation2 + $0x710] sm:$0xff]
        %v6266 = vld [vmem:[#allocation2 + $0x718] sm:$0xff]
        %v6267 = vld [vmem:[#allocation2 + $0x720] sm:$0xff]
        %v6268 = vld [vmem:[#allocation2 + $0x728] sm:$0xff]
        %v6269 = vld [vmem:[#allocation2 + $0x730] sm:$0xff]
        %v6270 = vld [vmem:[#allocation2 + $0x738] sm:$0xff]
        %v6271 = vld [vmem:[#allocation2 + $0x740] sm:$0xff]
        %v6272 = vld [vmem:[#allocation2 + $0x748] sm:$0xff]
        %v6273 = vld [vmem:[#allocation2 + $0x750] sm:$0xff]
        %v6274 = vld [vmem:[#allocation2 + $0x758] sm:$0xff]
        %v6275 = vld [vmem:[#allocation2 + $0x760] sm:$0xff]
        %v6276 = vld [vmem:[#allocation2 + $0x768] sm:$0xff]
        %v6277 = vld [vmem:[#allocation2 + $0x770] sm:$0xff]
        %v6278 = vld [vmem:[#allocation2 + $0x778] sm:$0xff]
        %v6279 = vld [vmem:[#allocation2 + $0x780] sm:$0xff]
        %v6280 = vld [vmem:[#allocation2 + $0x788] sm:$0xff]
        %v6281 = vld [vmem:[#allocation2 + $0x790] sm:$0xff]
        %v6282 = vld [vmem:[#allocation2 + $0x798] sm:$0xff]
        %v6283 = vld [vmem:[#allocation2 + $0x7a0] sm:$0xff]
        %v6284 = vld [vmem:[#allocation2 + $0x7a8] sm:$0xff]
        %v6285 = vld [vmem:[#allocation2 + $0x7b0] sm:$0xff]
        %v6286 = vld [vmem:[#allocation2 + $0x7b8] sm:$0xff]
        %v6287 = vld [vmem:[#allocation2 + $0x7c0] sm:$0xff]
        %v6288 = vld [vmem:[#allocation2 + $0x7c8] sm:$0xff]
        %v6289 = vld [vmem:[#allocation2 + $0x7d0] sm:$0xff]
        %v6290 = vld [vmem:[#allocation2 + $0x7d8] sm:$0xff]
        %v6291 = vld [vmem:[#allocation2 + $0x7e0] sm:$0xff]
        %v6292 = vld [vmem:[#allocation2 + $0x7e8] sm:$0xff]
        %v6293 = vld [vmem:[#allocation2 + $0x7f0] sm:$0xff]
        %v6294 = vld [vmem:[#allocation2 + $0x7f8] sm:$0xff]
        %v6295 = vld [vmem:[#allocation2 + $0x800] sm:$0xff]
        %v6296 = vld [vmem:[#allocation2 + $0x808] sm:$0xff]
        %v6297 = vld [vmem:[#allocation2 + $0x810] sm:$0xff]
        %v6298 = vld [vmem:[#allocation2 + $0x818] sm:$0xff]
        %v6299 = vld [vmem:[#allocation2 + $0x820] sm:$0xff]
        %v6300 = vld [vmem:[#allocation2 + $0x828] sm:$0xff]
        %v6301 = vld [vmem:[#allocation2 + $0x830] sm:$0xff]
        %v6302 = vld [vmem:[#allocation2 + $0x838] sm:$0xff]
        %v6303 = vld [vmem:[#allocation2 + $0x840] sm:$0xff]
        %v6304 = vld [vmem:[#allocation2 + $0x848] sm:$0xff]
        %v6305 = vld [vmem:[#allocation2 + $0x850] sm:$0xff]
        %v6306 = vld [vmem:[#allocation2 + $0x858] sm:$0xff]
        %v6307 = vld [vmem:[#allocation2 + $0x860] sm:$0xff]
        %v6308 = vld [vmem:[#allocation2 + $0x868] sm:$0xff]
        %v6309 = vld [vmem:[#allocation2 + $0x870] sm:$0xff]
        %v6310 = vld [vmem:[#allocation2 + $0x878] sm:$0xff]
        %v6311 = vld [vmem:[#allocation2 + $0x880] sm:$0xff]
        %v6312 = vld [vmem:[#allocation2 + $0x888] sm:$0xff]
        %v6313 = vld [vmem:[#allocation2 + $0x890] sm:$0xff]
        %v6314 = vld [vmem:[#allocation2 + $0x898] sm:$0xff]
        %v6315 = vld [vmem:[#allocation2 + $0x8a0] sm:$0xff]
        %v6316 = vld [vmem:[#allocation2 + $0x8a8] sm:$0xff]
        %v6317 = vld [vmem:[#allocation2 + $0x8b0] sm:$0xff]
        %v6318 = vld [vmem:[#allocation2 + $0x8b8] sm:$0xff]
        %v6319 = vld [vmem:[#allocation2 + $0x8c0] sm:$0xff]
        %v6320 = vld [vmem:[#allocation2 + $0x8c8] sm:$0xff]
        %v6321 = vld [vmem:[#allocation2 + $0x8d0] sm:$0xff]
        %v6322 = vld [vmem:[#allocation2 + $0x8d8] sm:$0xff]
        %v6323 = vld [vmem:[#allocation2 + $0x8e0] sm:$0xff]
        %v6324 = vld [vmem:[#allocation2 + $0x8e8] sm:$0xff]
        %v6325 = vld [vmem:[#allocation2 + $0x8f0] sm:$0xff]
        %v6326 = vld [vmem:[#allocation2 + $0x8f8] sm:$0xff]
        %v6327 = vld [vmem:[#allocation10 + $0x16] sm:$0x3]
        %v6329 = vlaneseq
        %v6330 = vshrl.u32 %v6329, 7
        %v6331 = vsub.s32 0, %v6330
        %v6332 = vrot.slane %v6327, %v6331
        %v6333 = vlaneseq
        %v6334 = vshrl.u32 %v6333, 7
        %v6335 = vsub.s32 1, %v6334
        %v6336 = vrot.slane %v6327, %v6335
        %6339 = vmatprep.subr.bf16.mxu0 %v6136
        %6340 = vmatpush1.bf16.msra.mxu0 %v6135
        %6341 = vmatprep.subr.bf16.mxu0 %v6138
        %6342 = vmatpush1.bf16.msra.mxu0 %v6137
        %6343 = vmatprep.subr.bf16.mxu0 %v6140
        %6344 = vmatpush1.bf16.msra.mxu0 %v6139
        %6345 = vmatprep.subr.bf16.mxu0 %v6142
        %6346 = vmatpush1.bf16.msra.mxu0 %v6141
        %6347 = vmatprep.subr.bf16.mxu0 %v6144
        %6348 = vmatpush1.bf16.msra.mxu0 %v6143
        %6349 = vmatprep.subr.bf16.mxu0 %v6146
        %6350 = vmatpush1.bf16.msra.mxu0 %v6145
        %6351 = vmatprep.subr.bf16.mxu0 %v6148
        %6352 = vmatpush1.bf16.msra.mxu0 %v6147
        %6353 = vmatprep.subr.bf16.mxu0 %v6150
        %6354 = vmatpush1.bf16.msra.mxu0 %v6149
        %6355 = vmatprep.subr.bf16.mxu0 %v6152
        %6356 = vmatpush1.bf16.msra.mxu0 %v6151
        %6357 = vmatprep.subr.bf16.mxu0 %v6154
        %6358 = vmatpush1.bf16.msra.mxu0 %v6153
        %6359 = vmatprep.subr.bf16.mxu0 %v6156
        %6360 = vmatpush1.bf16.msra.mxu0 %v6155
        %6361 = vmatprep.subr.bf16.mxu0 %v6158
        %6362 = vmatpush1.bf16.msra.mxu0 %v6157
        %6363 = vmatprep.subr.bf16.mxu0 %v6160
        %6364 = vmatpush1.bf16.msra.mxu0 %v6159
        %6365 = vmatprep.subr.bf16.mxu0 %v6162
        %6366 = vmatpush1.bf16.msra.mxu0 %v6161
        %6367 = vmatprep.subr.bf16.mxu0 %v6164
        %6368 = vmatpush1.bf16.msra.mxu0 %v6163
        %6369 = vmatprep.subr.bf16.mxu0 %v6166
        %6370 = vmatpush1.bf16.msra.mxu0 %v6165
        %6371 = vmatprep.mubr.bf16.mxu0 %v5968
        %6372 = vmatmul.mubr.bf16.gmra.mrb[0].mxu0 %v5967
        %v6373 = vpop.f32.mrb[0].mxu0
        %v6374 = vadd.f32 %v6332, %v6373
        %v6375 = vpop.f32.mrb[0].mxu0
        %v6376 = vadd.f32 %v6336, %v6375
        %v6377 = vpop.f32.mrb[0].mxu0
        %v6378 = vadd.f32 %v6332, %v6377
        %v6379 = vpop.f32.mrb[0].mxu0
        %v6380 = vadd.f32 %v6336, %v6379
        %6381 = vmatprep.mubr.bf16.mxu0 %v5972
        %6382 = vmatmul.mubr.bf16.gmra.mrb[0].mxu0 %v5971
        %v6383 = vpop.f32.mrb[0].mxu0
        %v6384 = vadd.f32 %v6332, %v6383
        %v6385 = vpop.f32.mrb[0].mxu0
        %v6386 = vadd.f32 %v6336, %v6385
        %v6387 = vpop.f32.mrb[0].mxu0
        %v6388 = vadd.f32 %v6332, %v6387
        %v6389 = vpop.f32.mrb[0].mxu0
        %v6390 = vadd.f32 %v6336, %v6389
        %6391 = vmatprep.mubr.bf16.mxu0 %v5976
        %6392 = vmatmul.mubr.bf16.gmra.mrb[0].mxu0 %v5975
        %v6393 = vpop.f32.mrb[0].mxu0
        %v6394 = vadd.f32 %v6332, %v6393
        %v6395 = vpop.f32.mrb[0].mxu0
        %v6396 = vadd.f32 %v6336, %v6395
        %v6397 = vpop.f32.mrb[0].mxu0
        %v6398 = vadd.f32 %v6332, %v6397
        %v6399 = vpop.f32.mrb[0].mxu0
        %v6400 = vadd.f32 %v6336, %v6399
        %6401 = vmatprep.mubr.bf16.mxu0 %v5980
        %6402 = vmatmul.mubr.bf16.gmra.mrb[0].mxu0 %v5979
        %v6403 = vpop.f32.mrb[0].mxu0
        %v6404 = vadd.f32 %v6332, %v6403
        %v6405 = vpop.f32.mrb[0].mxu0
        %v6406 = vadd.f32 %v6336, %v6405
        %v6407 = vpop.f32.mrb[0].mxu0
        %v6408 = vadd.f32 %v6332, %v6407
        %v6409 = vpop.f32.mrb[0].mxu0
        %v6410 = vadd.f32 %v6336, %v6409
        %6411 = vdwg.mxu0
        %6412 = vmatprep.subr.bf16.mxu0 %v6168
        %6413 = vmatpush1.bf16.msra.mxu0 %v6167
        %6414 = vmatprep.subr.bf16.mxu0 %v6170
        %6415 = vmatpush1.bf16.msra.mxu0 %v6169
        %6416 = vmatprep.subr.bf16.mxu0 %v6172
        %6417 = vmatpush1.bf16.msra.mxu0 %v6171
        %6418 = vmatprep.subr.bf16.mxu0 %v6174
        %6419 = vmatpush1.bf16.msra.mxu0 %v6173
        %6420 = vmatprep.subr.bf16.mxu0 %v6176
        %6421 = vmatpush1.bf16.msra.mxu0 %v6175
        %6422 = vmatprep.subr.bf16.mxu0 %v6178
        %6423 = vmatpush1.bf16.msra.mxu0 %v6177
        %6424 = vmatprep.subr.bf16.mxu0 %v6180
        %6425 = vmatpush1.bf16.msra.mxu0 %v6179
        %6426 = vmatprep.subr.bf16.mxu0 %v6182
        %6427 = vmatpush1.bf16.msra.mxu0 %v6181
        %6428 = vmatprep.subr.bf16.mxu0 %v6184
        %6429 = vmatpush1.bf16.msra.mxu0 %v6183
        %6430 = vmatprep.subr.bf16.mxu0 %v6186
        %6431 = vmatpush1.bf16.msra.mxu0 %v6185
        %6432 = vmatprep.subr.bf16.mxu0 %v6188
        %6433 = vmatpush1.bf16.msra.mxu0 %v6187
        %6434 = vmatprep.subr.bf16.mxu0 %v6190
        %6435 = vmatpush1.bf16.msra.mxu0 %v6189
        %6436 = vmatprep.subr.bf16.mxu0 %v6192
        %6437 = vmatpush1.bf16.msra.mxu0 %v6191
        %6438 = vmatprep.subr.bf16.mxu0 %v6194
        %6439 = vmatpush1.bf16.msra.mxu0 %v6193
        %6440 = vmatprep.subr.bf16.mxu0 %v6196
        %6441 = vmatpush1.bf16.msra.mxu0 %v6195
        %6442 = vmatprep.subr.bf16.mxu0 %v6198
        %6443 = vmatpush1.bf16.msra.mxu0 %v6197
        %6444 = vmatprep.mubr.bf16.mxu0 %v5970
        %6445 = vmatmul.mubr.bf16.gmra.mrb[0].mxu0 %v5969
        %v6446 = vpop.f32.mrb[0].mxu0
        %v6447 = vadd.f32 %v6374, %v6446
        %v6448 = vpop.f32.mrb[0].mxu0
        %v6449 = vadd.f32 %v6376, %v6448
        %v6450 = vpop.f32.mrb[0].mxu0
        %v6451 = vadd.f32 %v6378, %v6450
        %v6452 = vpop.f32.mrb[0].mxu0
        %v6453 = vadd.f32 %v6380, %v6452
        %6454 = vmatprep.mubr.bf16.mxu0 %v5974
        %6455 = vmatmul.mubr.bf16.gmra.mrb[0].mxu0 %v5973
        %v6456 = vpop.f32.mrb[0].mxu0
        %v6457 = vadd.f32 %v6384, %v6456
        %v6458 = vpop.f32.mrb[0].mxu0
        %v6459 = vadd.f32 %v6386, %v6458
        %v6460 = vpop.f32.mrb[0].mxu0
        %v6461 = vadd.f32 %v6388, %v6460
        %v6462 = vpop.f32.mrb[0].mxu0
        %v6463 = vadd.f32 %v6390, %v6462
        %6464 = vmatprep.mubr.bf16.mxu0 %v5978
        %6465 = vmatmul.mubr.bf16.gmra.mrb[0].mxu0 %v5977
        %v6466 = vpop.f32.mrb[0].mxu0
        %v6467 = vadd.f32 %v6394, %v6466
        %v6468 = vpop.f32.mrb[0].mxu0
        %v6469 = vadd.f32 %v6396, %v6468
        %v6470 = vpop.f32.mrb[0].mxu0
        %v6471 = vadd.f32 %v6398, %v6470
        %v6472 = vpop.f32.mrb[0].mxu0
        %v6473 = vadd.f32 %v6400, %v6472
        %6474 = vmatprep.mubr.bf16.mxu0 %v5982
        %6475 = vmatmul.mubr.bf16.gmra.mrb[0].mxu0 %v5981
        %v6476 = vpop.f32.mrb[0].mxu0
        %v6477 = vadd.f32 %v6404, %v6476
        %v6478 = vpop.f32.mrb[0].mxu0
        %v6479 = vadd.f32 %v6406, %v6478
        %v6480 = vpop.f32.mrb[0].mxu0
        %v6481 = vadd.f32 %v6408, %v6480
        %v6482 = vpop.f32.mrb[0].mxu0
        %v6483 = vadd.f32 %v6410, %v6482
        %6484 = vdwg.mxu0
        %6485 = vmatprep.subr.bf16.mxu0 %v6200
        %6486 = vmatpush1.bf16.msra.mxu0 %v6199
        %6487 = vmatprep.subr.bf16.mxu0 %v6202
        %6488 = vmatpush1.bf16.msra.mxu0 %v6201
        %6489 = vmatprep.subr.bf16.mxu0 %v6204
        %6490 = vmatpush1.bf16.msra.mxu0 %v6203
        %6491 = vmatprep.subr.bf16.mxu0 %v6206
        %6492 = vmatpush1.bf16.msra.mxu0 %v6205
        %6493 = vmatprep.subr.bf16.mxu0 %v6208
        %6494 = vmatpush1.bf16.msra.mxu0 %v6207
        %6495 = vmatprep.subr.bf16.mxu0 %v6210
        %6496 = vmatpush1.bf16.msra.mxu0 %v6209
        %6497 = vmatprep.subr.bf16.mxu0 %v6212
        %6498 = vmatpush1.bf16.msra.mxu0 %v6211
        %6499 = vmatprep.subr.bf16.mxu0 %v6214
        %6500 = vmatpush1.bf16.msra.mxu0 %v6213
        %6501 = vmatprep.subr.bf16.mxu0 %v6216
        %6502 = vmatpush1.bf16.msra.mxu0 %v6215
        %6503 = vmatprep.subr.bf16.mxu0 %v6218
        %6504 = vmatpush1.bf16.msra.mxu0 %v6217
        %6505 = vmatprep.subr.bf16.mxu0 %v6220
        %6506 = vmatpush1.bf16.msra.mxu0 %v6219
        %6507 = vmatprep.subr.bf16.mxu0 %v6222
        %6508 = vmatpush1.bf16.msra.mxu0 %v6221
        %6509 = vmatprep.subr.bf16.mxu0 %v6224
        %6510 = vmatpush1.bf16.msra.mxu0 %v6223
        %6511 = vmatprep.subr.bf16.mxu0 %v6226
        %6512 = vmatpush1.bf16.msra.mxu0 %v6225
        %6513 = vmatprep.subr.bf16.mxu0 %v6228
        %6514 = vmatpush1.bf16.msra.mxu0 %v6227
        %6515 = vmatprep.subr.bf16.mxu0 %v6230
        %6516 = vmatpush1.bf16.msra.mxu0 %v6229
        %6517 = vmatprep.mubr.bf16.mxu0 %v5984
        %6518 = vmatmul.mubr.bf16.gmra.mrb[0].mxu0 %v5983
        %v6519 = vpop.f32.mrb[0].mxu0
        %v6520 = vadd.f32 %v6447, %v6519
        %v6521 = vpop.f32.mrb[0].mxu0
        %v6522 = vadd.f32 %v6449, %v6521
        %v6523 = vpop.f32.mrb[0].mxu0
        %v6524 = vadd.f32 %v6451, %v6523
        %v6525 = vpop.f32.mrb[0].mxu0
        %v6526 = vadd.f32 %v6453, %v6525
        %6527 = vmatprep.mubr.bf16.mxu0 %v5988
        %6528 = vmatmul.mubr.bf16.gmra.mrb[0].mxu0 %v5987
        %v6529 = vpop.f32.mrb[0].mxu0
        %v6530 = vadd.f32 %v6457, %v6529
        %v6531 = vpop.f32.mrb[0].mxu0
        %v6532 = vadd.f32 %v6459, %v6531
        %v6533 = vpop.f32.mrb[0].mxu0
        %v6534 = vadd.f32 %v6461, %v6533
        %v6535 = vpop.f32.mrb[0].mxu0
        %v6536 = vadd.f32 %v6463, %v6535
        %6537 = vmatprep.mubr.bf16.mxu0 %v5992
        %6538 = vmatmul.mubr.bf16.gmra.mrb[0].mxu0 %v5991
        %v6539 = vpop.f32.mrb[0].mxu0
        %v6540 = vadd.f32 %v6467, %v6539
        %v6541 = vpop.f32.mrb[0].mxu0
        %v6542 = vadd.f32 %v6469, %v6541
        %v6543 = vpop.f32.mrb[0].mxu0
        %v6544 = vadd.f32 %v6471, %v6543
        %v6545 = vpop.f32.mrb[0].mxu0
        %v6546 = vadd.f32 %v6473, %v6545
        %6547 = vmatprep.mubr.bf16.mxu0 %v5996
        %6548 = vmatmul.mubr.bf16.gmra.mrb[0].mxu0 %v5995
        %v6549 = vpop.f32.mrb[0].mxu0
        %v6550 = vadd.f32 %v6477, %v6549
        %v6551 = vpop.f32.mrb[0].mxu0
        %v6552 = vadd.f32 %v6479, %v6551
        %v6553 = vpop.f32.mrb[0].mxu0
        %v6554 = vadd.f32 %v6481, %v6553
        %v6555 = vpop.f32.mrb[0].mxu0
        %v6556 = vadd.f32 %v6483, %v6555
        %6557 = vdwg.mxu0
        %6558 = vmatprep.subr.bf16.mxu0 %v6232
        %6559 = vmatpush1.bf16.msra.mxu0 %v6231
        %6560 = vmatprep.subr.bf16.mxu0 %v6234
        %6561 = vmatpush1.bf16.msra.mxu0 %v6233
        %6562 = vmatprep.subr.bf16.mxu0 %v6236
        %6563 = vmatpush1.bf16.msra.mxu0 %v6235
        %6564 = vmatprep.subr.bf16.mxu0 %v6238
        %6565 = vmatpush1.bf16.msra.mxu0 %v6237
        %6566 = vmatprep.subr.bf16.mxu0 %v6240
        %6567 = vmatpush1.bf16.msra.mxu0 %v6239
        %6568 = vmatprep.subr.bf16.mxu0 %v6242
        %6569 = vmatpush1.bf16.msra.mxu0 %v6241
        %6570 = vmatprep.subr.bf16.mxu0 %v6244
        %6571 = vmatpush1.bf16.msra.mxu0 %v6243
        %6572 = vmatprep.subr.bf16.mxu0 %v6246
        %6573 = vmatpush1.bf16.msra.mxu0 %v6245
        %6574 = vmatprep.subr.bf16.mxu0 %v6248
        %6575 = vmatpush1.bf16.msra.mxu0 %v6247
        %6576 = vmatprep.subr.bf16.mxu0 %v6250
        %6577 = vmatpush1.bf16.msra.mxu0 %v6249
        %6578 = vmatprep.subr.bf16.mxu0 %v6252
        %6579 = vmatpush1.bf16.msra.mxu0 %v6251
        %6580 = vmatprep.subr.bf16.mxu0 %v6254
        %6581 = vmatpush1.bf16.msra.mxu0 %v6253
        %6582 = vmatprep.subr.bf16.mxu0 %v6256
        %6583 = vmatpush1.bf16.msra.mxu0 %v6255
        %6584 = vmatprep.subr.bf16.mxu0 %v6258
        %6585 = vmatpush1.bf16.msra.mxu0 %v6257
        %6586 = vmatprep.subr.bf16.mxu0 %v6260
        %6587 = vmatpush1.bf16.msra.mxu0 %v6259
        %6588 = vmatprep.subr.bf16.mxu0 %v6262
        %6589 = vmatpush1.bf16.msra.mxu0 %v6261
        %6590 = vmatprep.mubr.bf16.mxu0 %v5986
        %6591 = vmatmul.mubr.bf16.gmra.mrb[0].mxu0 %v5985
        %v6592 = vpop.f32.mrb[0].mxu0
        %v6593 = vadd.f32 %v6520, %v6592
        %v6594 = vpop.f32.mrb[0].mxu0
        %v6595 = vadd.f32 %v6522, %v6594
        %v6596 = vpop.f32.mrb[0].mxu0
        %v6597 = vadd.f32 %v6524, %v6596
        %v6598 = vpop.f32.mrb[0].mxu0
        %v6599 = vadd.f32 %v6526, %v6598
        %6600 = vmatprep.mubr.bf16.mxu0 %v5990
        %6601 = vmatmul.mubr.bf16.gmra.mrb[0].mxu0 %v5989
        %v6602 = vpop.f32.mrb[0].mxu0
        %v6603 = vadd.f32 %v6530, %v6602
        %v6604 = vpop.f32.mrb[0].mxu0
        %v6605 = vadd.f32 %v6532, %v6604
        %v6606 = vpop.f32.mrb[0].mxu0
        %v6607 = vadd.f32 %v6534, %v6606
        %v6608 = vpop.f32.mrb[0].mxu0
        %v6609 = vadd.f32 %v6536, %v6608
        %6610 = vmatprep.mubr.bf16.mxu0 %v5994
        %6611 = vmatmul.mubr.bf16.gmra.mrb[0].mxu0 %v5993
        %v6612 = vpop.f32.mrb[0].mxu0
        %v6613 = vadd.f32 %v6540, %v6612
        %v6614 = vpop.f32.mrb[0].mxu0
        %v6615 = vadd.f32 %v6542, %v6614
        %v6616 = vpop.f32.mrb[0].mxu0
        %v6617 = vadd.f32 %v6544, %v6616
        %v6618 = vpop.f32.mrb[0].mxu0
        %v6619 = vadd.f32 %v6546, %v6618
        %6620 = vmatprep.mubr.bf16.mxu0 %v5998
        %6621 = vmatmul.mubr.bf16.gmra.mrb[0].mxu0 %v5997
        %v6622 = vpop.f32.mrb[0].mxu0
        %v6623 = vadd.f32 %v6550, %v6622
        %v6624 = vpop.f32.mrb[0].mxu0
        %v6625 = vadd.f32 %v6552, %v6624
        %v6626 = vpop.f32.mrb[0].mxu0
        %v6627 = vadd.f32 %v6554, %v6626
        %v6628 = vpop.f32.mrb[0].mxu0
        %v6629 = vadd.f32 %v6556, %v6628
        %6630 = vdwg.mxu0
        %6631 = vmatprep.subr.bf16.mxu0 %v6264
        %6632 = vmatpush1.bf16.msra.mxu0 %v6263
        %6633 = vmatprep.subr.bf16.mxu0 %v6266
        %6634 = vmatpush1.bf16.msra.mxu0 %v6265
        %6635 = vmatprep.subr.bf16.mxu0 %v6268
        %6636 = vmatpush1.bf16.msra.mxu0 %v6267
        %6637 = vmatprep.subr.bf16.mxu0 %v6270
        %6638 = vmatpush1.bf16.msra.mxu0 %v6269
        %6639 = vmatprep.subr.bf16.mxu0 %v6272
        %6640 = vmatpush1.bf16.msra.mxu0 %v6271
        %6641 = vmatprep.subr.bf16.mxu0 %v6274
        %6642 = vmatpush1.bf16.msra.mxu0 %v6273
        %6643 = vmatprep.subr.bf16.mxu0 %v6276
        %6644 = vmatpush1.bf16.msra.mxu0 %v6275
        %6645 = vmatprep.subr.bf16.mxu0 %v6278
        %6646 = vmatpush1.bf16.msra.mxu0 %v6277
        %6647 = vmatprep.subr.bf16.mxu0 %v6280
        %6648 = vmatpush1.bf16.msra.mxu0 %v6279
        %6649 = vmatprep.subr.bf16.mxu0 %v6282
        %6650 = vmatpush1.bf16.msra.mxu0 %v6281
        %6651 = vmatprep.subr.bf16.mxu0 %v6284
        %6652 = vmatpush1.bf16.msra.mxu0 %v6283
        %6653 = vmatprep.subr.bf16.mxu0 %v6286
        %6654 = vmatpush1.bf16.msra.mxu0 %v6285
        %6655 = vmatprep.subr.bf16.mxu0 %v6288
        %6656 = vmatpush1.bf16.msra.mxu0 %v6287
        %6657 = vmatprep.subr.bf16.mxu0 %v6290
        %6658 = vmatpush1.bf16.msra.mxu0 %v6289
        %6659 = vmatprep.subr.bf16.mxu0 %v6292
        %6660 = vmatpush1.bf16.msra.mxu0 %v6291
        %6661 = vmatprep.subr.bf16.mxu0 %v6294
        %6662 = vmatpush1.bf16.msra.mxu0 %v6293
        %6663 = vmatprep.mubr.bf16.mxu0 %v6120
        %6664 = vmatmul.mubr.bf16.gmra.mrb[0].mxu0 %v6119
        %v6665 = vpop.f32.mrb[0].mxu0
        %v6666 = vadd.f32 %v6593, %v6665
        %v6667 = vpop.f32.mrb[0].mxu0
        %v6668 = vadd.f32 %v6595, %v6667
        %v6669 = vpop.f32.mrb[0].mxu0
        %v6670 = vadd.f32 %v6597, %v6669
        %v6671 = vpop.f32.mrb[0].mxu0
        %v6672 = vadd.f32 %v6599, %v6671
        %6673 = vmatprep.mubr.bf16.mxu0 %v6124
        %6674 = vmatmul.mubr.bf16.gmra.mrb[0].mxu0 %v6123
        %v6675 = vpop.f32.mrb[0].mxu0
        %v6676 = vadd.f32 %v6603, %v6675
        %v6677 = vpop.f32.mrb[0].mxu0
        %v6678 = vadd.f32 %v6605, %v6677
        %v6679 = vpop.f32.mrb[0].mxu0
        %v6680 = vadd.f32 %v6607, %v6679
        %v6681 = vpop.f32.mrb[0].mxu0
        %v6682 = vadd.f32 %v6609, %v6681
        %6683 = vmatprep.mubr.bf16.mxu0 %v6128
        %6684 = vmatmul.mubr.bf16.gmra.mrb[0].mxu0 %v6127
        %v6685 = vpop.f32.mrb[0].mxu0
        %v6686 = vadd.f32 %v6613, %v6685
        %v6687 = vpop.f32.mrb[0].mxu0
        %v6688 = vadd.f32 %v6615, %v6687
        %v6689 = vpop.f32.mrb[0].mxu0
        %v6690 = vadd.f32 %v6617, %v6689
        %v6691 = vpop.f32.mrb[0].mxu0
        %v6692 = vadd.f32 %v6619, %v6691
        %6693 = vmatprep.mubr.bf16.mxu0 %v6132
        %6694 = vmatmul.mubr.bf16.gmra.mrb[0].mxu0 %v6131
        %v6695 = vpop.f32.mrb[0].mxu0
        %v6696 = vadd.f32 %v6623, %v6695
        %v6697 = vpop.f32.mrb[0].mxu0
        %v6698 = vadd.f32 %v6625, %v6697
        %v6699 = vpop.f32.mrb[0].mxu0
        %v6700 = vadd.f32 %v6627, %v6699
        %v6701 = vpop.f32.mrb[0].mxu0
        %v6702 = vadd.f32 %v6629, %v6701
        %6703 = vdwg.mxu0
        %6704 = vmatprep.subr.bf16.mxu0 %v6296
        %6705 = vmatpush1.bf16.msra.mxu0 %v6295
        %6706 = vmatprep.subr.bf16.mxu0 %v6298
        %6707 = vmatpush1.bf16.msra.mxu0 %v6297
        %6708 = vmatprep.subr.bf16.mxu0 %v6300
        %6709 = vmatpush1.bf16.msra.mxu0 %v6299
        %6710 = vmatprep.subr.bf16.mxu0 %v6302
        %6711 = vmatpush1.bf16.msra.mxu0 %v6301
        %6712 = vmatprep.subr.bf16.mxu0 %v6304
        %6713 = vmatpush1.bf16.msra.mxu0 %v6303
        %6714 = vmatprep.subr.bf16.mxu0 %v6306
        %6715 = vmatpush1.bf16.msra.mxu0 %v6305
        %6716 = vmatprep.subr.bf16.mxu0 %v6308
        %6717 = vmatpush1.bf16.msra.mxu0 %v6307
        %6718 = vmatprep.subr.bf16.mxu0 %v6310
        %6719 = vmatpush1.bf16.msra.mxu0 %v6309
        %6720 = vmatprep.subr.bf16.mxu0 %v6312
        %6721 = vmatpush1.bf16.msra.mxu0 %v6311
        %6722 = vmatprep.subr.bf16.mxu0 %v6314
        %6723 = vmatpush1.bf16.msra.mxu0 %v6313
        %6724 = vmatprep.subr.bf16.mxu0 %v6316
        %6725 = vmatpush1.bf16.msra.mxu0 %v6315
        %6726 = vmatprep.subr.bf16.mxu0 %v6318
        %6727 = vmatpush1.bf16.msra.mxu0 %v6317
        %6728 = vmatprep.subr.bf16.mxu0 %v6320
        %6729 = vmatpush1.bf16.msra.mxu0 %v6319
        %6730 = vmatprep.subr.bf16.mxu0 %v6322
        %6731 = vmatpush1.bf16.msra.mxu0 %v6321
        %6732 = vmatprep.subr.bf16.mxu0 %v6324
        %6733 = vmatpush1.bf16.msra.mxu0 %v6323
        %6734 = vmatprep.subr.bf16.mxu0 %v6326
        %6735 = vmatpush1.bf16.msra.mxu0 %v6325
        %6736 = vmatprep.mubr.bf16.mxu0 %v6122
        %6737 = vmatmul.mubr.bf16.gmra.mrb[0].mxu0 %v6121
        %v6738 = vpop.f32.mrb[0].mxu0
        %v6739 = vadd.f32 %v6666, %v6738
        %v6740 = vpop.f32.mrb[0].mxu0
        %v6741 = vadd.f32 %v6668, %v6740
        %v6742 = vpop.f32.mrb[0].mxu0
        %v6743 = vadd.f32 %v6670, %v6742
        %v6744 = vpop.f32.mrb[0].mxu0
        %v6745 = vadd.f32 %v6672, %v6744
        %6746 = vmatprep.mubr.bf16.mxu0 %v6126
        %6747 = vmatmul.mubr.bf16.gmra.mrb[0].mxu0 %v6125
        %v6748 = vpop.f32.mrb[0].mxu0
        %v6749 = vadd.f32 %v6676, %v6748
        %v6750 = vpop.f32.mrb[0].mxu0
        %v6751 = vadd.f32 %v6678, %v6750
        %v6752 = vpop.f32.mrb[0].mxu0
        %v6753 = vadd.f32 %v6680, %v6752
        %v6754 = vpop.f32.mrb[0].mxu0
        %v6755 = vadd.f32 %v6682, %v6754
        %6756 = vmatprep.mubr.bf16.mxu0 %v6130
        %6757 = vmatmul.mubr.bf16.gmra.mrb[0].mxu0 %v6129
        %v6758 = vpop.f32.mrb[0].mxu0
        %v6759 = vadd.f32 %v6686, %v6758
        %v6760 = vpop.f32.mrb[0].mxu0
        %v6761 = vadd.f32 %v6688, %v6760
        %v6762 = vpop.f32.mrb[0].mxu0
        %v6763 = vadd.f32 %v6690, %v6762
        %v6764 = vpop.f32.mrb[0].mxu0
        %v6765 = vadd.f32 %v6692, %v6764
        %6766 = vmatprep.mubr.bf16.mxu0 %v6134
        %6767 = vmatmul.mubr.bf16.gmra.mrb[0].mxu0 %v6133
        %v6768 = vpop.f32.mrb[0].mxu0
        %v6769 = vadd.f32 %v6696, %v6768
        %v6770 = vpop.f32.mrb[0].mxu0
        %v6771 = vadd.f32 %v6698, %v6770
        %v6772 = vpop.f32.mrb[0].mxu0
        %v6773 = vadd.f32 %v6700, %v6772
        %v6774 = vpop.f32.mrb[0].mxu0
        %v6775 = vadd.f32 %v6702, %v6774
        %6776 = vdwg.mxu0
        %6777 = vst [vmem:[%s300] sm:$0xff] %v6739
        %6778 = vst [vmem:[%s300 + $0x8] sm:$0xff] %v6741
        %6779 = vst [vmem:[%s300 + $0x10] sm:$0xff] %v6743
        %6780 = vst [vmem:[%s300 + $0x18] sm:$0xff] %v6745
        %6781 = vst [vmem:[%s300 + $0x20] sm:$0xff] %v6749
        %6782 = vst [vmem:[%s300 + $0x28] sm:$0xff] %v6751
        %6783 = vst [vmem:[%s300 + $0x30] sm:$0xff] %v6753
        %6784 = vst [vmem:[%s300 + $0x38] sm:$0xff] %v6755
        %6785 = vst [vmem:[%s300 + $0x40] sm:$0xff] %v6759
        %6786 = vst [vmem:[%s300 + $0x48] sm:$0xff] %v6761
        %6787 = vst [vmem:[%s300 + $0x50] sm:$0xff] %v6763
        %6788 = vst [vmem:[%s300 + $0x58] sm:$0xff] %v6765
        %6789 = vst [vmem:[%s300 + $0x60] sm:$0xff] %v6769
        %6790 = vst [vmem:[%s300 + $0x68] sm:$0xff] %v6771
        %6791 = vst [vmem:[%s300 + $0x70] sm:$0xff] %v6773
        %6792 = vst [vmem:[%s300 + $0x78] sm:$0xff] %v6775
        %s6793 = sand.u32 %s144, 1
        %s6794 = scalar_lea.sflag [#allocation7], %s6793
        %s6795 = sand.u32 %s144, 1
        %s6796 = smul.addr %s6795, 128
        %s6797 = scalar_lea.vmem [#allocation14], %s6796
        // Predicated region
        $region61: #{tpu_custom_call.1} parent=39 // pred_check
          %p6798 = pneg %p154
        $region62: #{tpu_custom_call.1} parent=39 // pred_check_branch
          %6800 = sbr.rel (%p6798) target = $region64
        $region63: #{tpu_custom_call.1} parent=39 // pred_region
          %s6802 = ssub.s32 2048, 2048
          %6803 = vsyncadd %s6794, %s6802
          %s6804 = smul.addr %s26, 16
          %s6805 = smul.addr %s6804, 128
          %s6806 = scalar_lea.hbm %s7, %s6805
          %s6807 = sshll.u32 %s6797, 4
          %s6808 = int_to_ptr.vmem [resolvable:$true] %s6807
          %6813 = dma.vmem_to_hbm [thread:$0]  %s6808, 2048, %s6806, %s6794, 256, 256, 16
        $region64: #{tpu_custom_call.1} parent=39 // pred_fallthru
          _
      $region40: #{tpu_custom_call.1} parent=5 // pred_fallthru
        _
      %p6814 = scmp.le.s32.totalorder 2, %s21
      // Predicated region
      $region65: #{tpu_custom_call.1} parent=5 // pred_check
        %p6815 = pneg %p6814
      $region66: #{tpu_custom_call.1} parent=5 // pred_check_branch
        %6817 = sbr.rel (%p6815) target = $region68
      $region67: #{tpu_custom_call.1} parent=5 // pred_region
        %s6818 = ssub.s32 %s21, 2
        // Predicated region
        $region69: #{tpu_custom_call.1} parent=67 // pred_check
          %p6819 = pneg %p160
        $region70: #{tpu_custom_call.1} parent=67 // pred_check_branch
          %6821 = sbr.rel (%p6819) target = $region72
        $region71: #{tpu_custom_call.1} parent=67 // pred_region
          %s6822 = sand.u32 %s145, 1
          %s6823 = scalar_lea.sflag [#allocation7], %s6822
          %s6824 = sand.u32 %s145, 1
          %s6825 = smul.addr %s6824, 128
          %s6826 = scalar_lea.vmem [#allocation14], %s6825
          %6827 = dma.done %s6823, 2048
        $region72: #{tpu_custom_call.1} parent=67 // pred_fallthru
          _
      $region68: #{tpu_custom_call.1} parent=5 // pred_fallthru
        _
    $region6: #{tpu_custom_call.1} parent=1 // loop_footer
      %s25 = sadd.s32 1, %s21
    $region7: #{tpu_custom_call.1} parent=1 // loop_footer_branch
      %20 = sbr.rel target = $region3
    $region8: #{tpu_custom_call.1} parent=1 // loop_exit
      _
    %6828 = vsyncpa [#allocation6], 1
    %s6829 = scalar_lea.sflag [#allocation6], 1
    %6830 = vsyncpa %s6829, 1
    %6831 = vsyncpa [#allocation9], 1
    %6832 = vsyncpa [#allocation12], 1
    %6833 = vsyncpa [#allocation7], 1
    %s6834 = scalar_lea.sflag [#allocation7], 1
    %6835 = vsyncpa %s6834, 1
  %6836 = vsyncmov [#allocation4]
  %s6837 = vpop.sfrf %6836
  %p6838 = scmp.eq.s32.totalorder %s6837, 0
  %p6839 = pneg %p6838
  %6841 = shalt.err (%p6839)
  %s6842 = scalar_lea.sflag [#allocation4], 1
  %6843 = vsyncmov %s6842
  %s6844 = vpop.sfrf %6843
  %p6845 = scmp.eq.s32.totalorder %s6844, 0
  %p6846 = pneg %p6845
  %6848 = shalt.err (%p6846)

</llo_original>
